<compile_context>
chip_gen: v7x
topology: tpu7x:2x2x1
jax: 0.10.0
libtpu: 0.0.40
codegen_flags: <defaults>
</compile_context>

<pallas_src>
import jax
import jax.numpy as jnp
from jax.experimental import pallas as pl
from jax.experimental.pallas import tpu as pltpu

EPS = 1e-5


def _fold_bn(gamma, beta, mean, var):
    scale = gamma / jnp.sqrt(var + EPS)
    bias = beta - mean * scale
    return scale.reshape(1, -1), bias.reshape(1, -1)


# ---------------------------------------------------------------------------
# Parameter setup (deterministic, synthetic)
# ---------------------------------------------------------------------------
def init_params(key, inplanes, planes, cardinality=1, bottleneck_width=64, radix=1):
    group_width = int(planes * (bottleneck_width / 64.0)) * cardinality
    inter = max(group_width * radix // 4, 32)
    c4 = planes * 4
    cd = planes // 4
    keys = iter(jax.random.split(key, 32))

    def conv_w(shape):
        return 0.1 * jax.random.normal(next(keys), shape, jnp.float32)

    def bn(c):
        gamma = 0.5 + jax.random.uniform(next(keys), (c,), jnp.float32)
        beta = 0.1 * jax.random.normal(next(keys), (c,), jnp.float32)
        mean = 0.1 * jax.random.normal(next(keys), (c,), jnp.float32)
        var = 0.5 + jax.random.uniform(next(keys), (c,), jnp.float32)
        return gamma, beta, mean, var

    p = {}
    p["conv1_w"] = conv_w((group_width, inplanes, 1, 1))
    p["bn1"] = bn(group_width)
    p["conv2_w"] = conv_w((group_width * radix, group_width, 3, 3))   # groups == 1
    p["bn0"] = bn(group_width * radix)
    p["fc1_w"] = conv_w((inter, group_width, 1, 1))
    p["fc1_b"] = 0.1 * jax.random.normal(next(keys), (inter,), jnp.float32)
    p["bn1s"] = bn(inter)
    p["fc2_w"] = conv_w((group_width * radix, inter, 1, 1))
    p["fc2_b"] = 0.1 * jax.random.normal(next(keys), (group_width * radix,), jnp.float32)
    p["conv3_w"] = conv_w((c4, group_width, 1, 1))
    p["bn3"] = bn(c4)
    p["down_w"] = conv_w((cd, c4, 1, 1))
    p["up_w"] = conv_w((c4, cd, 1, 1))
    return p


def kernel_params(p):
    """Fold BN, lay out weights matmul-ready; matmul weights in bf16."""
    kp = {}
    kp["w1"] = p["conv1_w"][:, :, 0, 0].T.astype(jnp.bfloat16)            # (Cin, Cg)
    kp["s1"], kp["b1"] = _fold_bn(*p["bn1"])
    # 3x3 weight -> (9, Ci, Co): tap (dy, dx) pairs with padded window offset (dy, dx).
    w2 = jnp.transpose(p["conv2_w"], (2, 3, 1, 0))                        # (3,3,Ci,Co)
    kp["w2"] = w2.reshape(9, w2.shape[2], w2.shape[3]).astype(jnp.bfloat16)
    kp["s0"], kp["b0"] = _fold_bn(*p["bn0"])
    kp["wf1"] = p["fc1_w"][:, :, 0, 0].T                                  # (Cg, inter)
    kp["bf1"] = p["fc1_b"].reshape(1, -1)
    kp["s1s"], kp["b1s"] = _fold_bn(*p["bn1s"])
    kp["wf2"] = p["fc2_w"][:, :, 0, 0].T                                  # (inter, Cg)
    kp["bf2"] = p["fc2_b"].reshape(1, -1)
    kp["w3"] = p["conv3_w"][:, :, 0, 0].T.astype(jnp.bfloat16)            # (Cg, C4)
    kp["s3"], kp["b3"] = _fold_bn(*p["bn3"])
    kp["wd"] = p["down_w"][:, :, 0, 0].T                                  # (C4, Cd)
    kp["wu"] = p["up_w"][:, :, 0, 0].T                                    # (Cd, C4)
    return kp


# ---------------------------------------------------------------------------
# Fused bottleneck kernel: NCHW in -> NCHW out
# ---------------------------------------------------------------------------
def bottleneck_forward(x_nchw, kp):
    N, Cin, H, W = x_nchw.shape
    Cg = kp["w1"].shape[1]
    C4 = kp["w3"].shape[1]
    assert Cin == C4, "downsample=None requires inplanes == planes * expansion"
    Hp, Wp = H + 2, W + 2
    HW, HWp = H * W, Hp * Wp

    # layout glue: NCHW -> NHWC, zero-pad spatially for the 3x3 conv halo.
    x_nhwc = jnp.transpose(x_nchw, (0, 2, 3, 1))
    x_pad = jnp.pad(x_nhwc, ((0, 0), (1, 1), (1, 1), (0, 0)))             # (N,Hp,Wp,Cin)

    # interior mask (1 inside the original image, 0 on the padding ring); used to
    # restore true zero padding after conv1+bn1+relu touches the pad ring.
    mask = (jnp.zeros((Hp, Wp), jnp.float32)
            .at[1:H + 1, 1:W + 1].set(1.0)
            .reshape(HWp, 1))

    def kernel(xp_ref, m_ref, w1_ref, s1_ref, b1_ref,
               w2_ref, s0_ref, b0_ref,
               wf1_ref, bf1_ref, s1s_ref, b1s_ref, wf2_ref, bf2_ref,
               w3_ref, s3_ref, b3_ref, wd_ref, wu_ref, o_ref):
        xp = xp_ref[0]                                                    # (Hp,Wp,Cin) f32

        # ---- conv1 (1x1) + bn1 + WReLU on the padded image (stays in VMEM) ----
        h1 = jnp.dot(xp.reshape(HWp, Cin).astype(jnp.bfloat16), w1_ref[...],
                     preferred_element_type=jnp.float32)
        h1 = jnp.maximum(h1 * s1_ref[...] + b1_ref[...], 0.0)
        h1 = (h1 * m_ref[...]).reshape(Hp, Wp, Cg)                        # zero the ring

        # ---- conv2: 3x3 conv as 9 shifted in-VMEM matmuls (no im2col) ----------
        acc = jnp.zeros((HW, Cg), jnp.float32)
        for k in range(9):
            dy, dx = k // 3, k % 3
            win = h1[dy:dy + H, dx:dx + W, :].reshape(HW, Cg).astype(jnp.bfloat16)
            acc = acc + jnp.dot(win, w2_ref[k], preferred_element_type=jnp.float32)
        h2 = jnp.maximum(acc * s0_ref[...] + b0_ref[...], 0.0)            # bn0 + ReLU

        # ---- SplAt gate (radix=1 -> rSoftMax == sigmoid) ------------------------
        gap = jnp.mean(h2, axis=0, keepdims=True)                         # (1, Cg)
        a = jnp.dot(gap, wf1_ref[...], preferred_element_type=jnp.float32) + bf1_ref[...]
        a = jnp.maximum(a * s1s_ref[...] + b1s_ref[...], 0.0)             # bn1 + ReLU
        a = jnp.dot(a, wf2_ref[...], preferred_element_type=jnp.float32) + bf2_ref[...]
        a = jax.nn.sigmoid(a)
        hg = (h2 * a).astype(jnp.bfloat16)

        # ---- conv3 (1x1) + bn3 --------------------------------------------------
        o3 = jnp.dot(hg, w3_ref[...], preferred_element_type=jnp.float32)
        o3 = o3 * s3_ref[...] + b3_ref[...]                               # (HW, C4)

        # ---- SE gate: gap -> conv_down -> LWReLU -> conv_up -> sigmoid ----------
        g2 = jnp.mean(o3, axis=0, keepdims=True)                          # (1, C4)
        d = jnp.dot(g2, wd_ref[...], preferred_element_type=jnp.float32)  # (1, Cd)
        d = jnp.where(d >= 0.0, d, 0.01 * d)  # TODO(synk): LWReLU modeled as LeakyReLU(0.01)
        u = jax.nn.sigmoid(jnp.dot(d, wu_ref[...],
                                   preferred_element_type=jnp.float32))   # (1, C4)

        # ---- gate * out + residual, WReLU ---------------------------------------
        res = xp[1:H + 1, 1:W + 1, :].reshape(HW, C4)                     # f32 residual
        out = jnp.maximum(u * o3 + res, 0.0)
        o_ref[0] = out.reshape(H, W, C4).astype(o_ref.dtype)

    def rep(a):
        r = a.ndim

        def idx(n):
            return (0,) * r

        return pl.BlockSpec(a.shape, idx)

    weights = [kp["w1"], kp["s1"], kp["b1"],
               kp["w2"], kp["s0"], kp["b0"],
               kp["wf1"], kp["bf1"], kp["s1s"], kp["b1s"], kp["wf2"], kp["bf2"],
               kp["w3"], kp["s3"], kp["b3"], kp["wd"], kp["wu"]]

    # Explicit scoped-VMEM budget sized from the per-sample blocks (clamped so it is
    # valid on v5e/v6e/v7x regardless of their default scoped limits).
    block_bytes = (HWp * Cin + HW * C4) * 4
    vmem_limit = int(min(max(8 * block_bytes, 32 << 20), 56 << 20))

    out = pl.pallas_call(
        kernel,
        out_shape=jax.ShapeDtypeStruct((N, H, W, C4), jnp.float32),
        grid=(N,),
        in_specs=[pl.BlockSpec((1, Hp, Wp, Cin), lambda n: (n, 0, 0, 0)),
                  rep(mask)] + [rep(a) for a in weights],
        out_specs=pl.BlockSpec((1, H, W, C4), lambda n: (n, 0, 0, 0)),
        compiler_params=pltpu.CompilerParams(
            dimension_semantics=("parallel",),
            vmem_limit_bytes=vmem_limit),
    )(x_pad, mask, *weights)

    return jnp.transpose(out, (0, 3, 1, 2))


# ---------------------------------------------------------------------------
# Pure-JAX reference (NCHW, f32), for a numerical sanity check
# ---------------------------------------------------------------------------
def reference_forward(x, p):
    relu = lambda t: jnp.maximum(t, 0.0)

    def bn(h, prm):
        g, b, m, v = prm
        sh = (1, -1, 1, 1)
        return (h - m.reshape(sh)) / jnp.sqrt(v.reshape(sh) + EPS) * g.reshape(sh) + b.reshape(sh)

    def conv(h, w, pad=0):
        return jax.lax.conv_general_dilated(
            h, w, window_strides=(1, 1), padding=[(pad, pad), (pad, pad)],
            dimension_numbers=("NCHW", "OIHW", "NCHW"))

    out = relu(bn(conv(x, p["conv1_w"]), p["bn1"]))
    h = relu(bn(conv(out, p["conv2_w"], pad=1), p["bn0"]))
    gap = jnp.mean(h, axis=(2, 3), keepdims=True)
    a = conv(gap, p["fc1_w"]) + p["fc1_b"].reshape(1, -1, 1, 1)
    a = relu(bn(a, p["bn1s"]))
    a = conv(a, p["fc2_w"]) + p["fc2_b"].reshape(1, -1, 1, 1)
    h = jax.nn.sigmoid(a) * h
    out = bn(conv(h, p["conv3_w"]), p["bn3"])
    g2 = jnp.mean(out, axis=(2, 3), keepdims=True)
    d = conv(g2, p["down_w"])
    d = jnp.where(d >= 0.0, d, 0.01 * d)
    u = jax.nn.sigmoid(conv(d, p["up_w"]))
    return relu(u * out + x)


if __name__ == "__main__":
    key = jax.random.PRNGKey(0)
    kx, kparam = jax.random.split(key)

    N, H, W = 2, 16, 16
    planes = 4
    inplanes = planes * 4          # downsample=None requires inplanes == planes*expansion
    x = jax.random.normal(kx, (N, inplanes, H, W), jnp.float32)

    raw = init_params(kparam, inplanes, planes)
    kp = kernel_params(raw)

    out = jax.block_until_ready(bottleneck_forward(x, kp))

    ref = reference_forward(x, raw)
    assert out.shape == ref.shape == (N, planes * 4, H, W)
    # normalized max error (bf16 MXU inputs, f32 accumulation / epilogue / residual)
    err = float(jnp.max(jnp.abs(out - ref) / (1.0 + jnp.abs(ref))))
    if err > 3e-2:
        raise AssertionError(f"kernel vs reference mismatch, max normalized err = {err}")
    print("KERNEL_OK")
</pallas_src>

<mosaic_0001>
module attributes {stable_mosaic.version = 11 : i64} {
  func.func @kernel(%arg0: i32, %arg1: memref<1x18x18x16xf32, #tpu.memory_space<vmem>>, %arg2: memref<324x1xf32, #tpu.memory_space<vmem>>, %arg3: memref<16x4xbf16, #tpu.memory_space<vmem>>, %arg4: memref<1x4xf32, #tpu.memory_space<vmem>>, %arg5: memref<1x4xf32, #tpu.memory_space<vmem>>, %arg6: memref<9x4x4xbf16, #tpu.memory_space<vmem>>, %arg7: memref<1x4xf32, #tpu.memory_space<vmem>>, %arg8: memref<1x4xf32, #tpu.memory_space<vmem>>, %arg9: memref<4x32xf32, #tpu.memory_space<vmem>>, %arg10: memref<1x32xf32, #tpu.memory_space<vmem>>, %arg11: memref<1x32xf32, #tpu.memory_space<vmem>>, %arg12: memref<1x32xf32, #tpu.memory_space<vmem>>, %arg13: memref<32x4xf32, #tpu.memory_space<vmem>>, %arg14: memref<1x4xf32, #tpu.memory_space<vmem>>, %arg15: memref<4x16xbf16, #tpu.memory_space<vmem>>, %arg16: memref<1x16xf32, #tpu.memory_space<vmem>>, %arg17: memref<1x16xf32, #tpu.memory_space<vmem>>, %arg18: memref<16x1xf32, #tpu.memory_space<vmem>>, %arg19: memref<1x16xf32, #tpu.memory_space<vmem>>, %arg20: memref<1x16x16x16xf32, #tpu.memory_space<vmem>>) attributes {dimension_semantics = [#tpu.dimension_semantics<parallel>], iteration_bounds = array<i64: 2>, scalar_prefetch = 0 : i64, scratch_operands = 0 : i64, tpu.core_type = #tpu.core_type<tc>, window_params = [{transform_indices = @transform_0, window_bounds = array<i64: 1, 18, 18, 16>}, {pipeline_mode = #tpu.pipeline_mode<synchronous>, transform_indices = @transform_1, window_bounds = array<i64: 324, 1>}, {pipeline_mode = #tpu.pipeline_mode<synchronous>, transform_indices = @transform_2, window_bounds = array<i64: 16, 4>}, {pipeline_mode = #tpu.pipeline_mode<synchronous>, transform_indices = @transform_3, window_bounds = array<i64: 1, 4>}, {pipeline_mode = #tpu.pipeline_mode<synchronous>, transform_indices = @transform_4, window_bounds = array<i64: 1, 4>}, {pipeline_mode = #tpu.pipeline_mode<synchronous>, transform_indices = @transform_5, window_bounds = array<i64: 9, 4, 4>}, {pipeline_mode = #tpu.pipeline_mode<synchronous>, transform_indices = @transform_6, window_bounds = array<i64: 1, 4>}, {pipeline_mode = #tpu.pipeline_mode<synchronous>, transform_indices = @transform_7, window_bounds = array<i64: 1, 4>}, {pipeline_mode = #tpu.pipeline_mode<synchronous>, transform_indices = @transform_8, window_bounds = array<i64: 4, 32>}, {pipeline_mode = #tpu.pipeline_mode<synchronous>, transform_indices = @transform_9, window_bounds = array<i64: 1, 32>}, {pipeline_mode = #tpu.pipeline_mode<synchronous>, transform_indices = @transform_10, window_bounds = array<i64: 1, 32>}, {pipeline_mode = #tpu.pipeline_mode<synchronous>, transform_indices = @transform_11, window_bounds = array<i64: 1, 32>}, {pipeline_mode = #tpu.pipeline_mode<synchronous>, transform_indices = @transform_12, window_bounds = array<i64: 32, 4>}, {pipeline_mode = #tpu.pipeline_mode<synchronous>, transform_indices = @transform_13, window_bounds = array<i64: 1, 4>}, {pipeline_mode = #tpu.pipeline_mode<synchronous>, transform_indices = @transform_14, window_bounds = array<i64: 4, 16>}, {pipeline_mode = #tpu.pipeline_mode<synchronous>, transform_indices = @transform_15, window_bounds = array<i64: 1, 16>}, {pipeline_mode = #tpu.pipeline_mode<synchronous>, transform_indices = @transform_16, window_bounds = array<i64: 1, 16>}, {pipeline_mode = #tpu.pipeline_mode<synchronous>, transform_indices = @transform_17, window_bounds = array<i64: 16, 1>}, {pipeline_mode = #tpu.pipeline_mode<synchronous>, transform_indices = @transform_18, window_bounds = array<i64: 1, 16>}, {transform_indices = @transform_19, window_bounds = array<i64: 1, 16, 16, 16>}]} {
    %c0 = arith.constant 0 : index
    %c0_0 = arith.constant 0 : index
    %c0_1 = arith.constant 0 : index
    %c0_2 = arith.constant 0 : index
    %0 = vector.load %arg1[%c0, %c0_0, %c0_1, %c0_2] : memref<1x18x18x16xf32, #tpu.memory_space<vmem>>, vector<1x18x18x16xf32>
    %1 = vector.shape_cast %0 : vector<1x18x18x16xf32> to vector<18x18x16xf32>
    %2 = vector.shape_cast %1 : vector<18x18x16xf32> to vector<324x16xf32>
    %3 = arith.truncf %2 : vector<324x16xf32> to vector<324x16xbf16>
    %c0_3 = arith.constant 0 : index
    %c0_4 = arith.constant 0 : index
    %4 = vector.load %arg3[%c0_3, %c0_4] : memref<16x4xbf16, #tpu.memory_space<vmem>>, vector<16x4xbf16>
    %cst = arith.constant dense<0.000000e+00> : vector<324x4xf32>
    %5 = tpu.matmul %3, %4, %cst {dimension_numbers = #tpu.dot_dimension_numbers<[1], [0], [0], [1], [0, 0, 1, 1], [], []>} : vector<324x16xbf16>, vector<16x4xbf16>, vector<324x4xf32> -> vector<324x4xf32>
    %c0_5 = arith.constant 0 : index
    %c0_6 = arith.constant 0 : index
    %6 = vector.load %arg4[%c0_5, %c0_6] : memref<1x4xf32, #tpu.memory_space<vmem>>, vector<1x4xf32>
    %7 = vector.broadcast %6 : vector<1x4xf32> to vector<324x4xf32>
    %8 = arith.mulf %5, %7 : vector<324x4xf32>
    %c0_7 = arith.constant 0 : index
    %c0_8 = arith.constant 0 : index
    %9 = vector.load %arg5[%c0_7, %c0_8] : memref<1x4xf32, #tpu.memory_space<vmem>>, vector<1x4xf32>
    %10 = vector.broadcast %9 : vector<1x4xf32> to vector<324x4xf32>
    %11 = arith.addf %8, %10 : vector<324x4xf32>
    %cst_9 = arith.constant 0.000000e+00 : f32
    %12 = vector.broadcast %cst_9 : f32 to vector<324x4xf32>
    %13 = arith.maximumf %11, %12 : vector<324x4xf32>
    %c0_10 = arith.constant 0 : index
    %c0_11 = arith.constant 0 : index
    %14 = vector.load %arg2[%c0_10, %c0_11] : memref<324x1xf32, #tpu.memory_space<vmem>>, vector<324x1xf32>
    %15 = vector.broadcast %14 : vector<324x1xf32> to vector<324x4xf32>
    %16 = arith.mulf %13, %15 : vector<324x4xf32>
    %17 = vector.shape_cast %16 : vector<324x4xf32> to vector<18x18x4xf32>
    %cst_12 = arith.constant 0.000000e+00 : f32
    %18 = vector.broadcast %cst_12 : f32 to vector<256x4xf32>
    %19 = vector.extract_strided_slice %17 {offsets = [0, 0, 0], sizes = [16, 16, 4], strides = [1, 1, 1]} : vector<18x18x4xf32> to vector<16x16x4xf32>
    %20 = vector.shape_cast %19 : vector<16x16x4xf32> to vector<256x4xf32>
    %21 = arith.truncf %20 : vector<256x4xf32> to vector<256x4xbf16>
    %c0_13 = arith.constant 0 : index
    %c0_14 = arith.constant 0 : index
    %c0_15 = arith.constant 0 : index
    %22 = vector.load %arg6[%c0_13, %c0_14, %c0_15] : memref<9x4x4xbf16, #tpu.memory_space<vmem>>, vector<1x4x4xbf16>
    %23 = vector.shape_cast %22 : vector<1x4x4xbf16> to vector<4x4xbf16>
    %cst_16 = arith.constant dense<0.000000e+00> : vector<256x4xf32>
    %24 = tpu.matmul %21, %23, %cst_16 {dimension_numbers = #tpu.dot_dimension_numbers<[1], [0], [0], [1], [0, 0, 1, 1], [], []>} : vector<256x4xbf16>, vector<4x4xbf16>, vector<256x4xf32> -> vector<256x4xf32>
    %25 = arith.addf %18, %24 : vector<256x4xf32>
    %26 = vector.extract_strided_slice %17 {offsets = [0, 1, 0], sizes = [16, 16, 4], strides = [1, 1, 1]} : vector<18x18x4xf32> to vector<16x16x4xf32>
    %27 = vector.shape_cast %26 : vector<16x16x4xf32> to vector<256x4xf32>
    %28 = arith.truncf %27 : vector<256x4xf32> to vector<256x4xbf16>
    %c1 = arith.constant 1 : index
    %c0_17 = arith.constant 0 : index
    %c0_18 = arith.constant 0 : index
    %29 = vector.load %arg6[%c1, %c0_17, %c0_18] : memref<9x4x4xbf16, #tpu.memory_space<vmem>>, vector<1x4x4xbf16>
    %30 = vector.shape_cast %29 : vector<1x4x4xbf16> to vector<4x4xbf16>
    %cst_19 = arith.constant dense<0.000000e+00> : vector<256x4xf32>
    %31 = tpu.matmul %28, %30, %cst_19 {dimension_numbers = #tpu.dot_dimension_numbers<[1], [0], [0], [1], [0, 0, 1, 1], [], []>} : vector<256x4xbf16>, vector<4x4xbf16>, vector<256x4xf32> -> vector<256x4xf32>
    %32 = arith.addf %25, %31 : vector<256x4xf32>
    %33 = vector.extract_strided_slice %17 {offsets = [0, 2, 0], sizes = [16, 16, 4], strides = [1, 1, 1]} : vector<18x18x4xf32> to vector<16x16x4xf32>
    %34 = vector.shape_cast %33 : vector<16x16x4xf32> to vector<256x4xf32>
    %35 = arith.truncf %34 : vector<256x4xf32> to vector<256x4xbf16>
    %c2 = arith.constant 2 : index
    %c0_20 = arith.constant 0 : index
    %c0_21 = arith.constant 0 : index
    %36 = vector.load %arg6[%c2, %c0_20, %c0_21] : memref<9x4x4xbf16, #tpu.memory_space<vmem>>, vector<1x4x4xbf16>
    %37 = vector.shape_cast %36 : vector<1x4x4xbf16> to vector<4x4xbf16>
    %cst_22 = arith.constant dense<0.000000e+00> : vector<256x4xf32>
    %38 = tpu.matmul %35, %37, %cst_22 {dimension_numbers = #tpu.dot_dimension_numbers<[1], [0], [0], [1], [0, 0, 1, 1], [], []>} : vector<256x4xbf16>, vector<4x4xbf16>, vector<256x4xf32> -> vector<256x4xf32>
    %39 = arith.addf %32, %38 : vector<256x4xf32>
    %40 = vector.extract_strided_slice %17 {offsets = [1, 0, 0], sizes = [16, 16, 4], strides = [1, 1, 1]} : vector<18x18x4xf32> to vector<16x16x4xf32>
    %41 = vector.shape_cast %40 : vector<16x16x4xf32> to vector<256x4xf32>
    %42 = arith.truncf %41 : vector<256x4xf32> to vector<256x4xbf16>
    %c3 = arith.constant 3 : index
    %c0_23 = arith.constant 0 : index
    %c0_24 = arith.constant 0 : index
    %43 = vector.load %arg6[%c3, %c0_23, %c0_24] : memref<9x4x4xbf16, #tpu.memory_space<vmem>>, vector<1x4x4xbf16>
    %44 = vector.shape_cast %43 : vector<1x4x4xbf16> to vector<4x4xbf16>
    %cst_25 = arith.constant dense<0.000000e+00> : vector<256x4xf32>
    %45 = tpu.matmul %42, %44, %cst_25 {dimension_numbers = #tpu.dot_dimension_numbers<[1], [0], [0], [1], [0, 0, 1, 1], [], []>} : vector<256x4xbf16>, vector<4x4xbf16>, vector<256x4xf32> -> vector<256x4xf32>
    %46 = arith.addf %39, %45 : vector<256x4xf32>
    %47 = vector.extract_strided_slice %17 {offsets = [1, 1, 0], sizes = [16, 16, 4], strides = [1, 1, 1]} : vector<18x18x4xf32> to vector<16x16x4xf32>
    %48 = vector.shape_cast %47 : vector<16x16x4xf32> to vector<256x4xf32>
    %49 = arith.truncf %48 : vector<256x4xf32> to vector<256x4xbf16>
    %c4 = arith.constant 4 : index
    %c0_26 = arith.constant 0 : index
    %c0_27 = arith.constant 0 : index
    %50 = vector.load %arg6[%c4, %c0_26, %c0_27] : memref<9x4x4xbf16, #tpu.memory_space<vmem>>, vector<1x4x4xbf16>
    %51 = vector.shape_cast %50 : vector<1x4x4xbf16> to vector<4x4xbf16>
    %cst_28 = arith.constant dense<0.000000e+00> : vector<256x4xf32>
    %52 = tpu.matmul %49, %51, %cst_28 {dimension_numbers = #tpu.dot_dimension_numbers<[1], [0], [0], [1], [0, 0, 1, 1], [], []>} : vector<256x4xbf16>, vector<4x4xbf16>, vector<256x4xf32> -> vector<256x4xf32>
    %53 = arith.addf %46, %52 : vector<256x4xf32>
    %54 = vector.extract_strided_slice %17 {offsets = [1, 2, 0], sizes = [16, 16, 4], strides = [1, 1, 1]} : vector<18x18x4xf32> to vector<16x16x4xf32>
    %55 = vector.shape_cast %54 : vector<16x16x4xf32> to vector<256x4xf32>
    %56 = arith.truncf %55 : vector<256x4xf32> to vector<256x4xbf16>
    %c5 = arith.constant 5 : index
    %c0_29 = arith.constant 0 : index
    %c0_30 = arith.constant 0 : index
    %57 = vector.load %arg6[%c5, %c0_29, %c0_30] : memref<9x4x4xbf16, #tpu.memory_space<vmem>>, vector<1x4x4xbf16>
    %58 = vector.shape_cast %57 : vector<1x4x4xbf16> to vector<4x4xbf16>
    %cst_31 = arith.constant dense<0.000000e+00> : vector<256x4xf32>
    %59 = tpu.matmul %56, %58, %cst_31 {dimension_numbers = #tpu.dot_dimension_numbers<[1], [0], [0], [1], [0, 0, 1, 1], [], []>} : vector<256x4xbf16>, vector<4x4xbf16>, vector<256x4xf32> -> vector<256x4xf32>
    %60 = arith.addf %53, %59 : vector<256x4xf32>
    %61 = vector.extract_strided_slice %17 {offsets = [2, 0, 0], sizes = [16, 16, 4], strides = [1, 1, 1]} : vector<18x18x4xf32> to vector<16x16x4xf32>
    %62 = vector.shape_cast %61 : vector<16x16x4xf32> to vector<256x4xf32>
    %63 = arith.truncf %62 : vector<256x4xf32> to vector<256x4xbf16>
    %c6 = arith.constant 6 : index
    %c0_32 = arith.constant 0 : index
    %c0_33 = arith.constant 0 : index
    %64 = vector.load %arg6[%c6, %c0_32, %c0_33] : memref<9x4x4xbf16, #tpu.memory_space<vmem>>, vector<1x4x4xbf16>
    %65 = vector.shape_cast %64 : vector<1x4x4xbf16> to vector<4x4xbf16>
    %cst_34 = arith.constant dense<0.000000e+00> : vector<256x4xf32>
    %66 = tpu.matmul %63, %65, %cst_34 {dimension_numbers = #tpu.dot_dimension_numbers<[1], [0], [0], [1], [0, 0, 1, 1], [], []>} : vector<256x4xbf16>, vector<4x4xbf16>, vector<256x4xf32> -> vector<256x4xf32>
    %67 = arith.addf %60, %66 : vector<256x4xf32>
    %68 = vector.extract_strided_slice %17 {offsets = [2, 1, 0], sizes = [16, 16, 4], strides = [1, 1, 1]} : vector<18x18x4xf32> to vector<16x16x4xf32>
    %69 = vector.shape_cast %68 : vector<16x16x4xf32> to vector<256x4xf32>
    %70 = arith.truncf %69 : vector<256x4xf32> to vector<256x4xbf16>
    %c7 = arith.constant 7 : index
    %c0_35 = arith.constant 0 : index
    %c0_36 = arith.constant 0 : index
    %71 = vector.load %arg6[%c7, %c0_35, %c0_36] : memref<9x4x4xbf16, #tpu.memory_space<vmem>>, vector<1x4x4xbf16>
    %72 = vector.shape_cast %71 : vector<1x4x4xbf16> to vector<4x4xbf16>
    %cst_37 = arith.constant dense<0.000000e+00> : vector<256x4xf32>
    %73 = tpu.matmul %70, %72, %cst_37 {dimension_numbers = #tpu.dot_dimension_numbers<[1], [0], [0], [1], [0, 0, 1, 1], [], []>} : vector<256x4xbf16>, vector<4x4xbf16>, vector<256x4xf32> -> vector<256x4xf32>
    %74 = arith.addf %67, %73 : vector<256x4xf32>
    %75 = vector.extract_strided_slice %17 {offsets = [2, 2, 0], sizes = [16, 16, 4], strides = [1, 1, 1]} : vector<18x18x4xf32> to vector<16x16x4xf32>
    %76 = vector.shape_cast %75 : vector<16x16x4xf32> to vector<256x4xf32>
    %77 = arith.truncf %76 : vector<256x4xf32> to vector<256x4xbf16>
    %c8 = arith.constant 8 : index
    %c0_38 = arith.constant 0 : index
    %c0_39 = arith.constant 0 : index
    %78 = vector.load %arg6[%c8, %c0_38, %c0_39] : memref<9x4x4xbf16, #tpu.memory_space<vmem>>, vector<1x4x4xbf16>
    %79 = vector.shape_cast %78 : vector<1x4x4xbf16> to vector<4x4xbf16>
    %cst_40 = arith.constant dense<0.000000e+00> : vector<256x4xf32>
    %80 = tpu.matmul %77, %79, %cst_40 {dimension_numbers = #tpu.dot_dimension_numbers<[1], [0], [0], [1], [0, 0, 1, 1], [], []>} : vector<256x4xbf16>, vector<4x4xbf16>, vector<256x4xf32> -> vector<256x4xf32>
    %81 = arith.addf %74, %80 : vector<256x4xf32>
    %c0_41 = arith.constant 0 : index
    %c0_42 = arith.constant 0 : index
    %82 = vector.load %arg7[%c0_41, %c0_42] : memref<1x4xf32, #tpu.memory_space<vmem>>, vector<1x4xf32>
    %83 = vector.broadcast %82 : vector<1x4xf32> to vector<256x4xf32>
    %84 = arith.mulf %81, %83 : vector<256x4xf32>
    %c0_43 = arith.constant 0 : index
    %c0_44 = arith.constant 0 : index
    %85 = vector.load %arg8[%c0_43, %c0_44] : memref<1x4xf32, #tpu.memory_space<vmem>>, vector<1x4xf32>
    %86 = vector.broadcast %85 : vector<1x4xf32> to vector<256x4xf32>
    %87 = arith.addf %84, %86 : vector<256x4xf32>
    %cst_45 = arith.constant 0.000000e+00 : f32
    %88 = vector.broadcast %cst_45 : f32 to vector<256x4xf32>
    %89 = arith.maximumf %87, %88 : vector<256x4xf32>
    %cst_46 = arith.constant dense<0.000000e+00> : vector<4xf32>
    %90 = vector.multi_reduction <add>, %89, %cst_46 [0] : vector<256x4xf32> to vector<4xf32>
    %91 = vector.shape_cast %90 : vector<4xf32> to vector<1x4xf32>
    %cst_47 = arith.constant 2.560000e+02 : f32
    %92 = vector.broadcast %cst_47 : f32 to vector<1x4xf32>
    %93 = arith.divf %91, %92 : vector<1x4xf32>
    %c0_48 = arith.constant 0 : index
    %c0_49 = arith.constant 0 : index
    %94 = vector.load %arg9[%c0_48, %c0_49] : memref<4x32xf32, #tpu.memory_space<vmem>>, vector<4x32xf32>
    %cst_50 = arith.constant dense<0.000000e+00> : vector<1x32xf32>
    %95 = tpu.matmul %93, %94, %cst_50 {dimension_numbers = #tpu.dot_dimension_numbers<[1], [0], [0], [1], [0, 0, 1, 1], [], []>} : vector<1x4xf32>, vector<4x32xf32>, vector<1x32xf32> -> vector<1x32xf32>
    %c0_51 = arith.constant 0 : index
    %c0_52 = arith.constant 0 : index
    %96 = vector.load %arg10[%c0_51, %c0_52] : memref<1x32xf32, #tpu.memory_space<vmem>>, vector<1x32xf32>
    %97 = arith.addf %95, %96 : vector<1x32xf32>
    %c0_53 = arith.constant 0 : index
    %c0_54 = arith.constant 0 : index
    %98 = vector.load %arg11[%c0_53, %c0_54] : memref<1x32xf32, #tpu.memory_space<vmem>>, vector<1x32xf32>
    %99 = arith.mulf %97, %98 : vector<1x32xf32>
    %c0_55 = arith.constant 0 : index
    %c0_56 = arith.constant 0 : index
    %100 = vector.load %arg12[%c0_55, %c0_56] : memref<1x32xf32, #tpu.memory_space<vmem>>, vector<1x32xf32>
    %101 = arith.addf %99, %100 : vector<1x32xf32>
    %cst_57 = arith.constant 0.000000e+00 : f32
    %102 = vector.broadcast %cst_57 : f32 to vector<1x32xf32>
    %103 = arith.maximumf %101, %102 : vector<1x32xf32>
    %c0_58 = arith.constant 0 : index
    %c0_59 = arith.constant 0 : index
    %104 = vector.load %arg13[%c0_58, %c0_59] : memref<32x4xf32, #tpu.memory_space<vmem>>, vector<32x4xf32>
    %cst_60 = arith.constant dense<0.000000e+00> : vector<1x4xf32>
    %105 = tpu.matmul %103, %104, %cst_60 {dimension_numbers = #tpu.dot_dimension_numbers<[1], [0], [0], [1], [0, 0, 1, 1], [], []>} : vector<1x32xf32>, vector<32x4xf32>, vector<1x4xf32> -> vector<1x4xf32>
    %c0_61 = arith.constant 0 : index
    %c0_62 = arith.constant 0 : index
    %106 = vector.load %arg14[%c0_61, %c0_62] : memref<1x4xf32, #tpu.memory_space<vmem>>, vector<1x4xf32>
    %107 = arith.addf %105, %106 : vector<1x4xf32>
    %108 = arith.negf %107 : vector<1x4xf32>
    %109 = math.exp %108 : vector<1x4xf32>
    %cst_63 = arith.constant 1.000000e+00 : f32
    %110 = vector.broadcast %cst_63 : f32 to vector<1x4xf32>
    %111 = arith.addf %110, %109 : vector<1x4xf32>
    %112 = arith.divf %110, %111 : vector<1x4xf32>
    %113 = vector.broadcast %112 : vector<1x4xf32> to vector<256x4xf32>
    %114 = arith.mulf %89, %113 : vector<256x4xf32>
    %115 = arith.truncf %114 : vector<256x4xf32> to vector<256x4xbf16>
    %c0_64 = arith.constant 0 : index
    %c0_65 = arith.constant 0 : index
    %116 = vector.load %arg15[%c0_64, %c0_65] : memref<4x16xbf16, #tpu.memory_space<vmem>>, vector<4x16xbf16>
    %cst_66 = arith.constant dense<0.000000e+00> : vector<256x16xf32>
    %117 = tpu.matmul %115, %116, %cst_66 {dimension_numbers = #tpu.dot_dimension_numbers<[1], [0], [0], [1], [0, 0, 1, 1], [], []>} : vector<256x4xbf16>, vector<4x16xbf16>, vector<256x16xf32> -> vector<256x16xf32>
    %c0_67 = arith.constant 0 : index
    %c0_68 = arith.constant 0 : index
    %118 = vector.load %arg16[%c0_67, %c0_68] : memref<1x16xf32, #tpu.memory_space<vmem>>, vector<1x16xf32>
    %119 = vector.broadcast %118 : vector<1x16xf32> to vector<256x16xf32>
    %120 = arith.mulf %117, %119 : vector<256x16xf32>
    %c0_69 = arith.constant 0 : index
    %c0_70 = arith.constant 0 : index
    %121 = vector.load %arg17[%c0_69, %c0_70] : memref<1x16xf32, #tpu.memory_space<vmem>>, vector<1x16xf32>
    %122 = vector.broadcast %121 : vector<1x16xf32> to vector<256x16xf32>
    %123 = arith.addf %120, %122 : vector<256x16xf32>
    %cst_71 = arith.constant dense<0.000000e+00> : vector<16xf32>
    %124 = vector.multi_reduction <add>, %123, %cst_71 [0] : vector<256x16xf32> to vector<16xf32>
    %125 = vector.shape_cast %124 : vector<16xf32> to vector<1x16xf32>
    %cst_72 = arith.constant 2.560000e+02 : f32
    %126 = vector.broadcast %cst_72 : f32 to vector<1x16xf32>
    %127 = arith.divf %125, %126 : vector<1x16xf32>
    %c0_73 = arith.constant 0 : index
    %c0_74 = arith.constant 0 : index
    %128 = vector.load %arg18[%c0_73, %c0_74] : memref<16x1xf32, #tpu.memory_space<vmem>>, vector<16x1xf32>
    %cst_75 = arith.constant dense<0.000000e+00> : vector<1x1xf32>
    %129 = tpu.matmul %127, %128, %cst_75 {dimension_numbers = #tpu.dot_dimension_numbers<[1], [0], [0], [1], [0, 0, 1, 1], [], []>} : vector<1x16xf32>, vector<16x1xf32>, vector<1x1xf32> -> vector<1x1xf32>
    %cst_76 = arith.constant 0.000000e+00 : f32
    %130 = vector.broadcast %cst_76 : f32 to vector<1x1xf32>
    %131 = arith.cmpf oge, %129, %130 : vector<1x1xf32>
    %cst_77 = arith.constant 0.00999999977 : f32
    %132 = vector.broadcast %cst_77 : f32 to vector<1x1xf32>
    %133 = arith.mulf %132, %129 : vector<1x1xf32>
    %134 = arith.select %131, %129, %133 : vector<1x1xi1>, vector<1x1xf32>
    %c0_78 = arith.constant 0 : index
    %c0_79 = arith.constant 0 : index
    %135 = vector.load %arg19[%c0_78, %c0_79] : memref<1x16xf32, #tpu.memory_space<vmem>>, vector<1x16xf32>
    %cst_80 = arith.constant dense<0.000000e+00> : vector<1x16xf32>
    %136 = tpu.matmul %134, %135, %cst_80 {dimension_numbers = #tpu.dot_dimension_numbers<[1], [0], [0], [1], [0, 0, 1, 1], [], []>} : vector<1x1xf32>, vector<1x16xf32>, vector<1x16xf32> -> vector<1x16xf32>
    %137 = arith.negf %136 : vector<1x16xf32>
    %138 = math.exp %137 : vector<1x16xf32>
    %cst_81 = arith.constant 1.000000e+00 : f32
    %139 = vector.broadcast %cst_81 : f32 to vector<1x16xf32>
    %140 = arith.addf %139, %138 : vector<1x16xf32>
    %141 = arith.divf %139, %140 : vector<1x16xf32>
    %142 = vector.extract_strided_slice %1 {offsets = [1, 1, 0], sizes = [16, 16, 16], strides = [1, 1, 1]} : vector<18x18x16xf32> to vector<16x16x16xf32>
    %143 = vector.shape_cast %142 : vector<16x16x16xf32> to vector<256x16xf32>
    %144 = vector.broadcast %141 : vector<1x16xf32> to vector<256x16xf32>
    %145 = arith.mulf %144, %123 : vector<256x16xf32>
    %146 = arith.addf %145, %143 : vector<256x16xf32>
    %cst_82 = arith.constant 0.000000e+00 : f32
    %147 = vector.broadcast %cst_82 : f32 to vector<256x16xf32>
    %148 = arith.maximumf %146, %147 : vector<256x16xf32>
    %149 = vector.shape_cast %148 : vector<256x16xf32> to vector<16x16x16xf32>
    %c0_83 = arith.constant 0 : index
    %c0_84 = arith.constant 0 : index
    %c0_85 = arith.constant 0 : index
    %c0_86 = arith.constant 0 : index
    %150 = vector.load %arg20[%c0_83, %c0_84, %c0_85, %c0_86] : memref<1x16x16x16xf32, #tpu.memory_space<vmem>>, vector<1x16x16x16xf32>
    %151 = vector.shape_cast %150 : vector<1x16x16x16xf32> to vector<16x16x16xf32>
    %152 = vector.shape_cast %149 : vector<16x16x16xf32> to vector<1x16x16x16xf32>
    tpu.vector_store %arg20[%c0_83, %c0_84, %c0_85, %c0_86], %152 {strides = array<i32>} : memref<1x16x16x16xf32, #tpu.memory_space<vmem>>, vector<1x16x16x16xf32>,
    return
  }
  func.func @transform_0(%arg0: i32) -> (i32, i32, i32, i32) {
    %c0_i32 = arith.constant 0 : i32
    %c0_i32_0 = arith.constant 0 : i32
    %c0_i32_1 = arith.constant 0 : i32
    %c0_i32_2 = arith.constant 0 : i32
    return %arg0, %c0_i32, %c0_i32_0, %c0_i32_1 : i32, i32, i32, i32
  }
  func.func @transform_1(%arg0: i32) -> (i32, i32) {
    %c0_i32 = arith.constant 0 : i32
    %c0_i32_0 = arith.constant 0 : i32
    %c0_i32_1 = arith.constant 0 : i32
    return %c0_i32, %c0_i32_0 : i32, i32
  }
  func.func @transform_2(%arg0: i32) -> (i32, i32) {
    %c0_i32 = arith.constant 0 : i32
    %c0_i32_0 = arith.constant 0 : i32
    %c0_i32_1 = arith.constant 0 : i32
    return %c0_i32, %c0_i32_0 : i32, i32
  }
  func.func @transform_3(%arg0: i32) -> (i32, i32) {
    %c0_i32 = arith.constant 0 : i32
    %c0_i32_0 = arith.constant 0 : i32
    %c0_i32_1 = arith.constant 0 : i32
    return %c0_i32, %c0_i32_0 : i32, i32
  }
  func.func @transform_4(%arg0: i32) -> (i32, i32) {
    %c0_i32 = arith.constant 0 : i32
    %c0_i32_0 = arith.constant 0 : i32
    %c0_i32_1 = arith.constant 0 : i32
    return %c0_i32, %c0_i32_0 : i32, i32
  }
  func.func @transform_5(%arg0: i32) -> (i32, i32, i32) {
    %c0_i32 = arith.constant 0 : i32
    %c0_i32_0 = arith.constant 0 : i32
    %c0_i32_1 = arith.constant 0 : i32
    %c0_i32_2 = arith.constant 0 : i32
    return %c0_i32, %c0_i32_0, %c0_i32_1 : i32, i32, i32
  }
  func.func @transform_6(%arg0: i32) -> (i32, i32) {
    %c0_i32 = arith.constant 0 : i32
    %c0_i32_0 = arith.constant 0 : i32
    %c0_i32_1 = arith.constant 0 : i32
    return %c0_i32, %c0_i32_0 : i32, i32
  }
  func.func @transform_7(%arg0: i32) -> (i32, i32) {
    %c0_i32 = arith.constant 0 : i32
    %c0_i32_0 = arith.constant 0 : i32
    %c0_i32_1 = arith.constant 0 : i32
    return %c0_i32, %c0_i32_0 : i32, i32
  }
  func.func @transform_8(%arg0: i32) -> (i32, i32) {
    %c0_i32 = arith.constant 0 : i32
    %c0_i32_0 = arith.constant 0 : i32
    %c0_i32_1 = arith.constant 0 : i32
    return %c0_i32, %c0_i32_0 : i32, i32
  }
  func.func @transform_9(%arg0: i32) -> (i32, i32) {
    %c0_i32 = arith.constant 0 : i32
    %c0_i32_0 = arith.constant 0 : i32
    %c0_i32_1 = arith.constant 0 : i32
    return %c0_i32, %c0_i32_0 : i32, i32
  }
  func.func @transform_10(%arg0: i32) -> (i32, i32) {
    %c0_i32 = arith.constant 0 : i32
    %c0_i32_0 = arith.constant 0 : i32
    %c0_i32_1 = arith.constant 0 : i32
    return %c0_i32, %c0_i32_0 : i32, i32
  }
  func.func @transform_11(%arg0: i32) -> (i32, i32) {
    %c0_i32 = arith.constant 0 : i32
    %c0_i32_0 = arith.constant 0 : i32
    %c0_i32_1 = arith.constant 0 : i32
    return %c0_i32, %c0_i32_0 : i32, i32
  }
  func.func @transform_12(%arg0: i32) -> (i32, i32) {
    %c0_i32 = arith.constant 0 : i32
    %c0_i32_0 = arith.constant 0 : i32
    %c0_i32_1 = arith.constant 0 : i32
    return %c0_i32, %c0_i32_0 : i32, i32
  }
  func.func @transform_13(%arg0: i32) -> (i32, i32) {
    %c0_i32 = arith.constant 0 : i32
    %c0_i32_0 = arith.constant 0 : i32
    %c0_i32_1 = arith.constant 0 : i32
    return %c0_i32, %c0_i32_0 : i32, i32
  }
  func.func @transform_14(%arg0: i32) -> (i32, i32) {
    %c0_i32 = arith.constant 0 : i32
    %c0_i32_0 = arith.constant 0 : i32
    %c0_i32_1 = arith.constant 0 : i32
    return %c0_i32, %c0_i32_0 : i32, i32
  }
  func.func @transform_15(%arg0: i32) -> (i32, i32) {
    %c0_i32 = arith.constant 0 : i32
    %c0_i32_0 = arith.constant 0 : i32
    %c0_i32_1 = arith.constant 0 : i32
    return %c0_i32, %c0_i32_0 : i32, i32
  }
  func.func @transform_16(%arg0: i32) -> (i32, i32) {
    %c0_i32 = arith.constant 0 : i32
    %c0_i32_0 = arith.constant 0 : i32
    %c0_i32_1 = arith.constant 0 : i32
    return %c0_i32, %c0_i32_0 : i32, i32
  }
  func.func @transform_17(%arg0: i32) -> (i32, i32) {
    %c0_i32 = arith.constant 0 : i32
    %c0_i32_0 = arith.constant 0 : i32
    %c0_i32_1 = arith.constant 0 : i32
    return %c0_i32, %c0_i32_0 : i32, i32
  }
  func.func @transform_18(%arg0: i32) -> (i32, i32) {
    %c0_i32 = arith.constant 0 : i32
    %c0_i32_0 = arith.constant 0 : i32
    %c0_i32_1 = arith.constant 0 : i32
    return %c0_i32, %c0_i32_0 : i32, i32
  }
  func.func @transform_19(%arg0: i32) -> (i32, i32, i32, i32) {
    %c0_i32 = arith.constant 0 : i32
    %c0_i32_0 = arith.constant 0 : i32
    %c0_i32_1 = arith.constant 0 : i32
    %c0_i32_2 = arith.constant 0 : i32
    return %arg0, %c0_i32, %c0_i32_0, %c0_i32_1 : i32, i32, i32, i32
  }
}

</mosaic_0001>

<llo_original>
// kernel: tpu_custom_call.1
$region0: #{tpu_custom_call.1}
  #allocation0 [shape = 'u32[]', space=smem, size = 0x4, offset = 0x4, fixed_abs, tag = 'smem constant byte address 0x4 - core index']
  #allocation1 [shape = 'u32[144,128]{1,0:T(1,128)}', space=vmem, size = 0x12000, scoped, tag = 'internal scratch']
  %s0 = inlined_call_operand.vmem [shape: f32[2,18,18,16], index: 0, kind: input, shape index: {}]
  %s1 = inlined_call_operand.vmem [shape: f32[324,1], index: 1, kind: input, shape index: {}]
  %s2 = inlined_call_operand.vmem [shape: bf16[16,4], index: 2, kind: input, shape index: {}]
  %s3 = inlined_call_operand.vmem [shape: f32[1,4], index: 3, kind: input, shape index: {}]
  %s4 = inlined_call_operand.vmem [shape: f32[1,4], index: 4, kind: input, shape index: {}]
  %s5 = inlined_call_operand.vmem [shape: bf16[9,4,4], index: 5, kind: input, shape index: {}]
  %s6 = inlined_call_operand.vmem [shape: f32[1,4], index: 6, kind: input, shape index: {}]
  %s7 = inlined_call_operand.vmem [shape: f32[1,4], index: 7, kind: input, shape index: {}]
  %s8 = inlined_call_operand.vmem [shape: f32[4,32], index: 8, kind: input, shape index: {}]
  %s9 = inlined_call_operand.vmem [shape: f32[1,32], index: 9, kind: input, shape index: {}]
  %s10 = inlined_call_operand.vmem [shape: f32[1,32], index: 10, kind: input, shape index: {}]
  %s11 = inlined_call_operand.vmem [shape: f32[1,32], index: 11, kind: input, shape index: {}]
  %s12 = inlined_call_operand.vmem [shape: f32[32,4], index: 12, kind: input, shape index: {}]
  %s13 = inlined_call_operand.vmem [shape: f32[1,4], index: 13, kind: input, shape index: {}]
  %s14 = inlined_call_operand.vmem [shape: bf16[4,16], index: 14, kind: input, shape index: {}]
  %s15 = inlined_call_operand.vmem [shape: f32[1,16], index: 15, kind: input, shape index: {}]
  %s16 = inlined_call_operand.vmem [shape: f32[1,16], index: 16, kind: input, shape index: {}]
  %s17 = inlined_call_operand.vmem [shape: f32[16,1], index: 17, kind: input, shape index: {}]
  %s18 = inlined_call_operand.vmem [shape: f32[1,16], index: 18, kind: input, shape index: {}]
  %s19 = inlined_call_operand.hbm [shape: f32[2,16,16,16], index: 19, kind: output, shape index: {}]
  %s20 = sld [smem:[#allocation0]]
  $region109: #{tpu_custom_call.1} parent=0
    _
  %s22 = ssub.s32 1, %s20
  %s23 = scalar_select 0, %s22, %s20
  $region1: #{tpu_custom_call.1} parent=0
    #allocation2 [shape = 'u8[262144]{0}', space=vmem, size = 0x40000, scoped, tag = 'output window, operand 0']
    #allocation3 [shape = 's32[2]{0}', space=sflag, size = 0x8, scoped, tag = 'scoped memory for tpu_custom_call.1']
    %24 = vsyncpa [#allocation3], 0
    %s25 = scalar_lea.sflag [#allocation3], 1
    %26 = vsyncpa %s25, 0
    loop: start=0, step=1, limit=4
    $region2: #{tpu_custom_call.1} parent=1 // loop_pre_header
      _
    $region3: #{tpu_custom_call.1} parent=1 // loop_header
      %s28 = sphi 0, %s32
      %p29 = scmp.ge.s32.totalorder %s28, 4
      %s38 = sphi 0, %s40
      %s41 = sphi 0, %s38
      %s42 = sphi 0, %s41
      %s58 = sphi 0, %s42
      %s62 = sphi 0, %s62
      %s64 = sphi 0, %s62
      %s65 = sphi 0, %s64
      %s79 = sphi 0, %s65
      %s83 = sphi 0, %s83
      %s85 = sphi 0, %s83
      %s86 = sphi 0, %s85
      %s100 = sphi 0, %s86
      %s104 = sphi 0, %s104
      %s106 = sphi 0, %s104
      %s107 = sphi 0, %s106
      %s121 = sphi 0, %s107
      %s125 = sphi 0, %s125
      %s127 = sphi 0, %s125
      %s128 = sphi 0, %s127
      %s142 = sphi 0, %s128
      %s146 = sphi 0, %s146
      %s148 = sphi 0, %s146
      %s149 = sphi 0, %s148
      %s163 = sphi 0, %s149
      %s167 = sphi 0, %s167
      %s169 = sphi 0, %s167
      %s170 = sphi 0, %s169
      %s184 = sphi 0, %s170
      %s188 = sphi 0, %s188
      %s190 = sphi 0, %s188
      %s191 = sphi 0, %s190
      %s205 = sphi 0, %s191
      %s209 = sphi 0, %s209
      %s211 = sphi 0, %s209
      %s212 = sphi 0, %s211
      %s226 = sphi 0, %s212
      %s230 = sphi 0, %s230
      %s232 = sphi 0, %s230
      %s233 = sphi 0, %s232
      %s247 = sphi 0, %s233
      %s251 = sphi 0, %s251
      %s253 = sphi 0, %s251
      %s254 = sphi 0, %s253
      %s268 = sphi 0, %s254
      %s272 = sphi 0, %s272
      %s274 = sphi 0, %s272
      %s275 = sphi 0, %s274
      %s289 = sphi 0, %s275
      %s293 = sphi 0, %s293
      %s295 = sphi 0, %s293
      %s296 = sphi 0, %s295
      %s310 = sphi 0, %s296
      %s314 = sphi 0, %s314
      %s316 = sphi 0, %s314
      %s317 = sphi 0, %s316
      %s331 = sphi 0, %s317
      %s335 = sphi 0, %s335
      %s337 = sphi 0, %s335
      %s338 = sphi 0, %s337
      %s352 = sphi 0, %s338
      %s356 = sphi 0, %s356
      %s358 = sphi 0, %s356
      %s359 = sphi 0, %s358
      %s373 = sphi 0, %s359
      %s377 = sphi 0, %s377
      %s379 = sphi 0, %s377
      %s380 = sphi 0, %s379
      %s394 = sphi 0, %s380
      %s398 = sphi 0, %s398
      %s400 = sphi 0, %s398
      %s401 = sphi 0, %s400
      %s415 = sphi 0, %s401
      %s419 = sphi 0, %s419
      %s421 = sphi 0, %s419
      %s422 = sphi 0, %s421
      %s436 = sphi 0, %s422
      %s442 = sphi 0, %s444
      %s445 = sphi 0, %s442
      %s446 = sphi 0, %s445
      %s462 = sphi 0, %s446
    $region4: #{tpu_custom_call.1} parent=1 // loop_header_branch
      %31 = sbr.rel (%p29) target = $region8
    $region5: #{tpu_custom_call.1} parent=1 // loop_body
      %s33 = ssub.s32 %s28, 1
      %s34 = ssub.s32 %s28, 2
      %s35 = sadd.s32 %s28, 1
      %s36 = ssub.s32 %s28, %s35
      %p37 = scmp.eq.s32.totalorder %s36, 0
      %s39 = sadd.s32 %s38, 1
      %s40 = scalar_select %p37, %s38, %s39
      %p43 = pneg %p37
      %p44 = scmp.eq.s32.totalorder %s28, 1
      %p45 = por %p43, %p44
      %p46 = scmp.ne.s32.totalorder %s38, %s41
      %p47 = scmp.eq.s32.totalorder %s28, 0
      %p48 = por %p46, %p47
      %p49 = scmp.ne.s32.totalorder %s38, %s41
      %p50 = scmp.eq.s32.totalorder %s33, 1
      %p51 = por %p49, %p50
      %p52 = scmp.ne.s32.totalorder %s41, %s42
      %p53 = scmp.eq.s32.totalorder %s33, 0
      %p54 = por %p52, %p53
      %p55 = scmp.ne.s32.totalorder %s41, %s42
      %p56 = scmp.eq.s32.totalorder %s34, 1
      %p57 = por %p55, %p56
      %p59 = scmp.ne.s32.totalorder %s42, %s58
      %p60 = scmp.eq.s32.totalorder %s34, 0
      %p61 = por %p59, %p60
      %s63 = sadd.s32 %s62, 1
      %p66 = scmp.eq.s32.totalorder %s28, 1
      %p67 = scmp.ne.s32.totalorder %s62, %s64
      %p68 = scmp.eq.s32.totalorder %s28, 0
      %p69 = por %p67, %p68
      %p70 = scmp.ne.s32.totalorder %s62, %s64
      %p71 = scmp.eq.s32.totalorder %s33, 1
      %p72 = por %p70, %p71
      %p73 = scmp.ne.s32.totalorder %s64, %s65
      %p74 = scmp.eq.s32.totalorder %s33, 0
      %p75 = por %p73, %p74
      %p76 = scmp.ne.s32.totalorder %s64, %s65
      %p77 = scmp.eq.s32.totalorder %s34, 1
      %p78 = por %p76, %p77
      %p80 = scmp.ne.s32.totalorder %s65, %s79
      %p81 = scmp.eq.s32.totalorder %s34, 0
      %p82 = por %p80, %p81
      %s84 = sadd.s32 %s83, 1
      %p87 = scmp.eq.s32.totalorder %s28, 1
      %p88 = scmp.ne.s32.totalorder %s83, %s85
      %p89 = scmp.eq.s32.totalorder %s28, 0
      %p90 = por %p88, %p89
      %p91 = scmp.ne.s32.totalorder %s83, %s85
      %p92 = scmp.eq.s32.totalorder %s33, 1
      %p93 = por %p91, %p92
      %p94 = scmp.ne.s32.totalorder %s85, %s86
      %p95 = scmp.eq.s32.totalorder %s33, 0
      %p96 = por %p94, %p95
      %p97 = scmp.ne.s32.totalorder %s85, %s86
      %p98 = scmp.eq.s32.totalorder %s34, 1
      %p99 = por %p97, %p98
      %p101 = scmp.ne.s32.totalorder %s86, %s100
      %p102 = scmp.eq.s32.totalorder %s34, 0
      %p103 = por %p101, %p102
      %s105 = sadd.s32 %s104, 1
      %p108 = scmp.eq.s32.totalorder %s28, 1
      %p109 = scmp.ne.s32.totalorder %s104, %s106
      %p110 = scmp.eq.s32.totalorder %s28, 0
      %p111 = por %p109, %p110
      %p112 = scmp.ne.s32.totalorder %s104, %s106
      %p113 = scmp.eq.s32.totalorder %s33, 1
      %p114 = por %p112, %p113
      %p115 = scmp.ne.s32.totalorder %s106, %s107
      %p116 = scmp.eq.s32.totalorder %s33, 0
      %p117 = por %p115, %p116
      %p118 = scmp.ne.s32.totalorder %s106, %s107
      %p119 = scmp.eq.s32.totalorder %s34, 1
      %p120 = por %p118, %p119
      %p122 = scmp.ne.s32.totalorder %s107, %s121
      %p123 = scmp.eq.s32.totalorder %s34, 0
      %p124 = por %p122, %p123
      %s126 = sadd.s32 %s125, 1
      %p129 = scmp.eq.s32.totalorder %s28, 1
      %p130 = scmp.ne.s32.totalorder %s125, %s127
      %p131 = scmp.eq.s32.totalorder %s28, 0
      %p132 = por %p130, %p131
      %p133 = scmp.ne.s32.totalorder %s125, %s127
      %p134 = scmp.eq.s32.totalorder %s33, 1
      %p135 = por %p133, %p134
      %p136 = scmp.ne.s32.totalorder %s127, %s128
      %p137 = scmp.eq.s32.totalorder %s33, 0
      %p138 = por %p136, %p137
      %p139 = scmp.ne.s32.totalorder %s127, %s128
      %p140 = scmp.eq.s32.totalorder %s34, 1
      %p141 = por %p139, %p140
      %p143 = scmp.ne.s32.totalorder %s128, %s142
      %p144 = scmp.eq.s32.totalorder %s34, 0
      %p145 = por %p143, %p144
      %s147 = sadd.s32 %s146, 1
      %p150 = scmp.eq.s32.totalorder %s28, 1
      %p151 = scmp.ne.s32.totalorder %s146, %s148
      %p152 = scmp.eq.s32.totalorder %s28, 0
      %p153 = por %p151, %p152
      %p154 = scmp.ne.s32.totalorder %s146, %s148
      %p155 = scmp.eq.s32.totalorder %s33, 1
      %p156 = por %p154, %p155
      %p157 = scmp.ne.s32.totalorder %s148, %s149
      %p158 = scmp.eq.s32.totalorder %s33, 0
      %p159 = por %p157, %p158
      %p160 = scmp.ne.s32.totalorder %s148, %s149
      %p161 = scmp.eq.s32.totalorder %s34, 1
      %p162 = por %p160, %p161
      %p164 = scmp.ne.s32.totalorder %s149, %s163
      %p165 = scmp.eq.s32.totalorder %s34, 0
      %p166 = por %p164, %p165
      %s168 = sadd.s32 %s167, 1
      %p171 = scmp.eq.s32.totalorder %s28, 1
      %p172 = scmp.ne.s32.totalorder %s167, %s169
      %p173 = scmp.eq.s32.totalorder %s28, 0
      %p174 = por %p172, %p173
      %p175 = scmp.ne.s32.totalorder %s167, %s169
      %p176 = scmp.eq.s32.totalorder %s33, 1
      %p177 = por %p175, %p176
      %p178 = scmp.ne.s32.totalorder %s169, %s170
      %p179 = scmp.eq.s32.totalorder %s33, 0
      %p180 = por %p178, %p179
      %p181 = scmp.ne.s32.totalorder %s169, %s170
      %p182 = scmp.eq.s32.totalorder %s34, 1
      %p183 = por %p181, %p182
      %p185 = scmp.ne.s32.totalorder %s170, %s184
      %p186 = scmp.eq.s32.totalorder %s34, 0
      %p187 = por %p185, %p186
      %s189 = sadd.s32 %s188, 1
      %p192 = scmp.eq.s32.totalorder %s28, 1
      %p193 = scmp.ne.s32.totalorder %s188, %s190
      %p194 = scmp.eq.s32.totalorder %s28, 0
      %p195 = por %p193, %p194
      %p196 = scmp.ne.s32.totalorder %s188, %s190
      %p197 = scmp.eq.s32.totalorder %s33, 1
      %p198 = por %p196, %p197
      %p199 = scmp.ne.s32.totalorder %s190, %s191
      %p200 = scmp.eq.s32.totalorder %s33, 0
      %p201 = por %p199, %p200
      %p202 = scmp.ne.s32.totalorder %s190, %s191
      %p203 = scmp.eq.s32.totalorder %s34, 1
      %p204 = por %p202, %p203
      %p206 = scmp.ne.s32.totalorder %s191, %s205
      %p207 = scmp.eq.s32.totalorder %s34, 0
      %p208 = por %p206, %p207
      %s210 = sadd.s32 %s209, 1
      %p213 = scmp.eq.s32.totalorder %s28, 1
      %p214 = scmp.ne.s32.totalorder %s209, %s211
      %p215 = scmp.eq.s32.totalorder %s28, 0
      %p216 = por %p214, %p215
      %p217 = scmp.ne.s32.totalorder %s209, %s211
      %p218 = scmp.eq.s32.totalorder %s33, 1
      %p219 = por %p217, %p218
      %p220 = scmp.ne.s32.totalorder %s211, %s212
      %p221 = scmp.eq.s32.totalorder %s33, 0
      %p222 = por %p220, %p221
      %p223 = scmp.ne.s32.totalorder %s211, %s212
      %p224 = scmp.eq.s32.totalorder %s34, 1
      %p225 = por %p223, %p224
      %p227 = scmp.ne.s32.totalorder %s212, %s226
      %p228 = scmp.eq.s32.totalorder %s34, 0
      %p229 = por %p227, %p228
      %s231 = sadd.s32 %s230, 1
      %p234 = scmp.eq.s32.totalorder %s28, 1
      %p235 = scmp.ne.s32.totalorder %s230, %s232
      %p236 = scmp.eq.s32.totalorder %s28, 0
      %p237 = por %p235, %p236
      %p238 = scmp.ne.s32.totalorder %s230, %s232
      %p239 = scmp.eq.s32.totalorder %s33, 1
      %p240 = por %p238, %p239
      %p241 = scmp.ne.s32.totalorder %s232, %s233
      %p242 = scmp.eq.s32.totalorder %s33, 0
      %p243 = por %p241, %p242
      %p244 = scmp.ne.s32.totalorder %s232, %s233
      %p245 = scmp.eq.s32.totalorder %s34, 1
      %p246 = por %p244, %p245
      %p248 = scmp.ne.s32.totalorder %s233, %s247
      %p249 = scmp.eq.s32.totalorder %s34, 0
      %p250 = por %p248, %p249
      %s252 = sadd.s32 %s251, 1
      %p255 = scmp.eq.s32.totalorder %s28, 1
      %p256 = scmp.ne.s32.totalorder %s251, %s253
      %p257 = scmp.eq.s32.totalorder %s28, 0
      %p258 = por %p256, %p257
      %p259 = scmp.ne.s32.totalorder %s251, %s253
      %p260 = scmp.eq.s32.totalorder %s33, 1
      %p261 = por %p259, %p260
      %p262 = scmp.ne.s32.totalorder %s253, %s254
      %p263 = scmp.eq.s32.totalorder %s33, 0
      %p264 = por %p262, %p263
      %p265 = scmp.ne.s32.totalorder %s253, %s254
      %p266 = scmp.eq.s32.totalorder %s34, 1
      %p267 = por %p265, %p266
      %p269 = scmp.ne.s32.totalorder %s254, %s268
      %p270 = scmp.eq.s32.totalorder %s34, 0
      %p271 = por %p269, %p270
      %s273 = sadd.s32 %s272, 1
      %p276 = scmp.eq.s32.totalorder %s28, 1
      %p277 = scmp.ne.s32.totalorder %s272, %s274
      %p278 = scmp.eq.s32.totalorder %s28, 0
      %p279 = por %p277, %p278
      %p280 = scmp.ne.s32.totalorder %s272, %s274
      %p281 = scmp.eq.s32.totalorder %s33, 1
      %p282 = por %p280, %p281
      %p283 = scmp.ne.s32.totalorder %s274, %s275
      %p284 = scmp.eq.s32.totalorder %s33, 0
      %p285 = por %p283, %p284
      %p286 = scmp.ne.s32.totalorder %s274, %s275
      %p287 = scmp.eq.s32.totalorder %s34, 1
      %p288 = por %p286, %p287
      %p290 = scmp.ne.s32.totalorder %s275, %s289
      %p291 = scmp.eq.s32.totalorder %s34, 0
      %p292 = por %p290, %p291
      %s294 = sadd.s32 %s293, 1
      %p297 = scmp.eq.s32.totalorder %s28, 1
      %p298 = scmp.ne.s32.totalorder %s293, %s295
      %p299 = scmp.eq.s32.totalorder %s28, 0
      %p300 = por %p298, %p299
      %p301 = scmp.ne.s32.totalorder %s293, %s295
      %p302 = scmp.eq.s32.totalorder %s33, 1
      %p303 = por %p301, %p302
      %p304 = scmp.ne.s32.totalorder %s295, %s296
      %p305 = scmp.eq.s32.totalorder %s33, 0
      %p306 = por %p304, %p305
      %p307 = scmp.ne.s32.totalorder %s295, %s296
      %p308 = scmp.eq.s32.totalorder %s34, 1
      %p309 = por %p307, %p308
      %p311 = scmp.ne.s32.totalorder %s296, %s310
      %p312 = scmp.eq.s32.totalorder %s34, 0
      %p313 = por %p311, %p312
      %s315 = sadd.s32 %s314, 1
      %p318 = scmp.eq.s32.totalorder %s28, 1
      %p319 = scmp.ne.s32.totalorder %s314, %s316
      %p320 = scmp.eq.s32.totalorder %s28, 0
      %p321 = por %p319, %p320
      %p322 = scmp.ne.s32.totalorder %s314, %s316
      %p323 = scmp.eq.s32.totalorder %s33, 1
      %p324 = por %p322, %p323
      %p325 = scmp.ne.s32.totalorder %s316, %s317
      %p326 = scmp.eq.s32.totalorder %s33, 0
      %p327 = por %p325, %p326
      %p328 = scmp.ne.s32.totalorder %s316, %s317
      %p329 = scmp.eq.s32.totalorder %s34, 1
      %p330 = por %p328, %p329
      %p332 = scmp.ne.s32.totalorder %s317, %s331
      %p333 = scmp.eq.s32.totalorder %s34, 0
      %p334 = por %p332, %p333
      %s336 = sadd.s32 %s335, 1
      %p339 = scmp.eq.s32.totalorder %s28, 1
      %p340 = scmp.ne.s32.totalorder %s335, %s337
      %p341 = scmp.eq.s32.totalorder %s28, 0
      %p342 = por %p340, %p341
      %p343 = scmp.ne.s32.totalorder %s335, %s337
      %p344 = scmp.eq.s32.totalorder %s33, 1
      %p345 = por %p343, %p344
      %p346 = scmp.ne.s32.totalorder %s337, %s338
      %p347 = scmp.eq.s32.totalorder %s33, 0
      %p348 = por %p346, %p347
      %p349 = scmp.ne.s32.totalorder %s337, %s338
      %p350 = scmp.eq.s32.totalorder %s34, 1
      %p351 = por %p349, %p350
      %p353 = scmp.ne.s32.totalorder %s338, %s352
      %p354 = scmp.eq.s32.totalorder %s34, 0
      %p355 = por %p353, %p354
      %s357 = sadd.s32 %s356, 1
      %p360 = scmp.eq.s32.totalorder %s28, 1
      %p361 = scmp.ne.s32.totalorder %s356, %s358
      %p362 = scmp.eq.s32.totalorder %s28, 0
      %p363 = por %p361, %p362
      %p364 = scmp.ne.s32.totalorder %s356, %s358
      %p365 = scmp.eq.s32.totalorder %s33, 1
      %p366 = por %p364, %p365
      %p367 = scmp.ne.s32.totalorder %s358, %s359
      %p368 = scmp.eq.s32.totalorder %s33, 0
      %p369 = por %p367, %p368
      %p370 = scmp.ne.s32.totalorder %s358, %s359
      %p371 = scmp.eq.s32.totalorder %s34, 1
      %p372 = por %p370, %p371
      %p374 = scmp.ne.s32.totalorder %s359, %s373
      %p375 = scmp.eq.s32.totalorder %s34, 0
      %p376 = por %p374, %p375
      %s378 = sadd.s32 %s377, 1
      %p381 = scmp.eq.s32.totalorder %s28, 1
      %p382 = scmp.ne.s32.totalorder %s377, %s379
      %p383 = scmp.eq.s32.totalorder %s28, 0
      %p384 = por %p382, %p383
      %p385 = scmp.ne.s32.totalorder %s377, %s379
      %p386 = scmp.eq.s32.totalorder %s33, 1
      %p387 = por %p385, %p386
      %p388 = scmp.ne.s32.totalorder %s379, %s380
      %p389 = scmp.eq.s32.totalorder %s33, 0
      %p390 = por %p388, %p389
      %p391 = scmp.ne.s32.totalorder %s379, %s380
      %p392 = scmp.eq.s32.totalorder %s34, 1
      %p393 = por %p391, %p392
      %p395 = scmp.ne.s32.totalorder %s380, %s394
      %p396 = scmp.eq.s32.totalorder %s34, 0
      %p397 = por %p395, %p396
      %s399 = sadd.s32 %s398, 1
      %p402 = scmp.eq.s32.totalorder %s28, 1
      %p403 = scmp.ne.s32.totalorder %s398, %s400
      %p404 = scmp.eq.s32.totalorder %s28, 0
      %p405 = por %p403, %p404
      %p406 = scmp.ne.s32.totalorder %s398, %s400
      %p407 = scmp.eq.s32.totalorder %s33, 1
      %p408 = por %p406, %p407
      %p409 = scmp.ne.s32.totalorder %s400, %s401
      %p410 = scmp.eq.s32.totalorder %s33, 0
      %p411 = por %p409, %p410
      %p412 = scmp.ne.s32.totalorder %s400, %s401
      %p413 = scmp.eq.s32.totalorder %s34, 1
      %p414 = por %p412, %p413
      %p416 = scmp.ne.s32.totalorder %s401, %s415
      %p417 = scmp.eq.s32.totalorder %s34, 0
      %p418 = por %p416, %p417
      %s420 = sadd.s32 %s419, 1
      %p423 = scmp.eq.s32.totalorder %s28, 1
      %p424 = scmp.ne.s32.totalorder %s419, %s421
      %p425 = scmp.eq.s32.totalorder %s28, 0
      %p426 = por %p424, %p425
      %p427 = scmp.ne.s32.totalorder %s419, %s421
      %p428 = scmp.eq.s32.totalorder %s33, 1
      %p429 = por %p427, %p428
      %p430 = scmp.ne.s32.totalorder %s421, %s422
      %p431 = scmp.eq.s32.totalorder %s33, 0
      %p432 = por %p430, %p431
      %p433 = scmp.ne.s32.totalorder %s421, %s422
      %p434 = scmp.eq.s32.totalorder %s34, 1
      %p435 = por %p433, %p434
      %p437 = scmp.ne.s32.totalorder %s422, %s436
      %p438 = scmp.eq.s32.totalorder %s34, 0
      %p439 = por %p437, %p438
      %s440 = ssub.s32 %s28, %s35
      %p441 = scmp.eq.s32.totalorder %s440, 0
      %s443 = sadd.s32 %s442, 1
      %s444 = scalar_select %p441, %s442, %s443
      %p447 = pneg %p441
      %p448 = scmp.eq.s32.totalorder %s28, 1
      %p449 = por %p447, %p448
      %p450 = scmp.ne.s32.totalorder %s442, %s445
      %p451 = scmp.eq.s32.totalorder %s28, 0
      %p452 = por %p450, %p451
      %p453 = scmp.ne.s32.totalorder %s442, %s445
      %p454 = scmp.eq.s32.totalorder %s33, 1
      %p455 = por %p453, %p454
      %p456 = scmp.ne.s32.totalorder %s445, %s446
      %p457 = scmp.eq.s32.totalorder %s33, 0
      %p458 = por %p456, %p457
      %p459 = scmp.ne.s32.totalorder %s445, %s446
      %p460 = scmp.eq.s32.totalorder %s34, 1
      %p461 = por %p459, %p460
      %p463 = scmp.ne.s32.totalorder %s446, %s462
      %p464 = scmp.eq.s32.totalorder %s34, 0
      %p465 = por %p463, %p464
      %p466 = scmp.le.s32.totalorder 1, %s28
      %p467 = scmp.lt.s32.totalorder %s28, 3
      %p468 = pnand %p466, %p467
      %p469 = pneg %p468
      // Predicated region
      $region9: #{tpu_custom_call.1} parent=5 // pred_check
        _
      $region10: #{tpu_custom_call.1} parent=5 // pred_check_branch
        %471 = sbr.rel (%p468) target = $region12
      $region11: #{tpu_custom_call.1} parent=5 // pred_region
        %s472 = ssub.s32 %s28, 1
        // Predicated region
        $region13: #{tpu_custom_call.1} parent=11 // pred_check
          %p473 = pneg %p75
        $region14: #{tpu_custom_call.1} parent=11 // pred_check_branch
          %475 = sbr.rel (%p473) target = $region16
        $region15: #{tpu_custom_call.1} parent=11 // pred_region
          _
        $region16: #{tpu_custom_call.1} parent=11 // pred_fallthru
          _
        // Predicated region
        $region17: #{tpu_custom_call.1} parent=11 // pred_check
          %p476 = pneg %p96
        $region18: #{tpu_custom_call.1} parent=11 // pred_check_branch
          %478 = sbr.rel (%p476) target = $region20
        $region19: #{tpu_custom_call.1} parent=11 // pred_region
          _
        $region20: #{tpu_custom_call.1} parent=11 // pred_fallthru
          _
        // Predicated region
        $region21: #{tpu_custom_call.1} parent=11 // pred_check
          %p479 = pneg %p117
        $region22: #{tpu_custom_call.1} parent=11 // pred_check_branch
          %481 = sbr.rel (%p479) target = $region24
        $region23: #{tpu_custom_call.1} parent=11 // pred_region
          _
        $region24: #{tpu_custom_call.1} parent=11 // pred_fallthru
          _
        // Predicated region
        $region25: #{tpu_custom_call.1} parent=11 // pred_check
          %p482 = pneg %p138
        $region26: #{tpu_custom_call.1} parent=11 // pred_check_branch
          %484 = sbr.rel (%p482) target = $region28
        $region27: #{tpu_custom_call.1} parent=11 // pred_region
          _
        $region28: #{tpu_custom_call.1} parent=11 // pred_fallthru
          _
        // Predicated region
        $region29: #{tpu_custom_call.1} parent=11 // pred_check
          %p485 = pneg %p159
        $region30: #{tpu_custom_call.1} parent=11 // pred_check_branch
          %487 = sbr.rel (%p485) target = $region32
        $region31: #{tpu_custom_call.1} parent=11 // pred_region
          _
        $region32: #{tpu_custom_call.1} parent=11 // pred_fallthru
          _
        // Predicated region
        $region33: #{tpu_custom_call.1} parent=11 // pred_check
          %p488 = pneg %p180
        $region34: #{tpu_custom_call.1} parent=11 // pred_check_branch
          %490 = sbr.rel (%p488) target = $region36
        $region35: #{tpu_custom_call.1} parent=11 // pred_region
          _
        $region36: #{tpu_custom_call.1} parent=11 // pred_fallthru
          _
        // Predicated region
        $region37: #{tpu_custom_call.1} parent=11 // pred_check
          %p491 = pneg %p201
        $region38: #{tpu_custom_call.1} parent=11 // pred_check_branch
          %493 = sbr.rel (%p491) target = $region40
        $region39: #{tpu_custom_call.1} parent=11 // pred_region
          _
        $region40: #{tpu_custom_call.1} parent=11 // pred_fallthru
          _
        // Predicated region
        $region41: #{tpu_custom_call.1} parent=11 // pred_check
          %p494 = pneg %p222
        $region42: #{tpu_custom_call.1} parent=11 // pred_check_branch
          %496 = sbr.rel (%p494) target = $region44
        $region43: #{tpu_custom_call.1} parent=11 // pred_region
          _
        $region44: #{tpu_custom_call.1} parent=11 // pred_fallthru
          _
        // Predicated region
        $region45: #{tpu_custom_call.1} parent=11 // pred_check
          %p497 = pneg %p243
        $region46: #{tpu_custom_call.1} parent=11 // pred_check_branch
          %499 = sbr.rel (%p497) target = $region48
        $region47: #{tpu_custom_call.1} parent=11 // pred_region
          _
        $region48: #{tpu_custom_call.1} parent=11 // pred_fallthru
          _
        // Predicated region
        $region49: #{tpu_custom_call.1} parent=11 // pred_check
          %p500 = pneg %p264
        $region50: #{tpu_custom_call.1} parent=11 // pred_check_branch
          %502 = sbr.rel (%p500) target = $region52
        $region51: #{tpu_custom_call.1} parent=11 // pred_region
          _
        $region52: #{tpu_custom_call.1} parent=11 // pred_fallthru
          _
        // Predicated region
        $region53: #{tpu_custom_call.1} parent=11 // pred_check
          %p503 = pneg %p285
        $region54: #{tpu_custom_call.1} parent=11 // pred_check_branch
          %505 = sbr.rel (%p503) target = $region56
        $region55: #{tpu_custom_call.1} parent=11 // pred_region
          _
        $region56: #{tpu_custom_call.1} parent=11 // pred_fallthru
          _
        // Predicated region
        $region57: #{tpu_custom_call.1} parent=11 // pred_check
          %p506 = pneg %p306
        $region58: #{tpu_custom_call.1} parent=11 // pred_check_branch
          %508 = sbr.rel (%p506) target = $region60
        $region59: #{tpu_custom_call.1} parent=11 // pred_region
          _
        $region60: #{tpu_custom_call.1} parent=11 // pred_fallthru
          _
        // Predicated region
        $region61: #{tpu_custom_call.1} parent=11 // pred_check
          %p509 = pneg %p327
        $region62: #{tpu_custom_call.1} parent=11 // pred_check_branch
          %511 = sbr.rel (%p509) target = $region64
        $region63: #{tpu_custom_call.1} parent=11 // pred_region
          _
        $region64: #{tpu_custom_call.1} parent=11 // pred_fallthru
          _
        // Predicated region
        $region65: #{tpu_custom_call.1} parent=11 // pred_check
          %p512 = pneg %p348
        $region66: #{tpu_custom_call.1} parent=11 // pred_check_branch
          %514 = sbr.rel (%p512) target = $region68
        $region67: #{tpu_custom_call.1} parent=11 // pred_region
          _
        $region68: #{tpu_custom_call.1} parent=11 // pred_fallthru
          _
        // Predicated region
        $region69: #{tpu_custom_call.1} parent=11 // pred_check
          %p515 = pneg %p369
        $region70: #{tpu_custom_call.1} parent=11 // pred_check_branch
          %517 = sbr.rel (%p515) target = $region72
        $region71: #{tpu_custom_call.1} parent=11 // pred_region
          _
        $region72: #{tpu_custom_call.1} parent=11 // pred_fallthru
          _
        // Predicated region
        $region73: #{tpu_custom_call.1} parent=11 // pred_check
          %p518 = pneg %p390
        $region74: #{tpu_custom_call.1} parent=11 // pred_check_branch
          %520 = sbr.rel (%p518) target = $region76
        $region75: #{tpu_custom_call.1} parent=11 // pred_region
          _
        $region76: #{tpu_custom_call.1} parent=11 // pred_fallthru
          _
        // Predicated region
        $region77: #{tpu_custom_call.1} parent=11 // pred_check
          %p521 = pneg %p411
        $region78: #{tpu_custom_call.1} parent=11 // pred_check_branch
          %523 = sbr.rel (%p521) target = $region80
        $region79: #{tpu_custom_call.1} parent=11 // pred_region
          _
        $region80: #{tpu_custom_call.1} parent=11 // pred_fallthru
          _
        // Predicated region
        $region81: #{tpu_custom_call.1} parent=11 // pred_check
          %p524 = pneg %p432
        $region82: #{tpu_custom_call.1} parent=11 // pred_check_branch
          %526 = sbr.rel (%p524) target = $region84
        $region83: #{tpu_custom_call.1} parent=11 // pred_region
          _
        $region84: #{tpu_custom_call.1} parent=11 // pred_fallthru
          _
      $region12: #{tpu_custom_call.1} parent=5 // pred_fallthru
        _
      %p527 = scmp.lt.s32.totalorder %s28, 2
      // Predicated region
      $region85: #{tpu_custom_call.1} parent=5 // pred_check
        %p528 = pneg %p527
      $region86: #{tpu_custom_call.1} parent=5 // pred_check_branch
        %530 = sbr.rel (%p528) target = $region88
      $region87: #{tpu_custom_call.1} parent=5 // pred_region
        // Predicated region
        $region89: #{tpu_custom_call.1} parent=87 // pred_check
          %p531 = pneg %p48
        $region90: #{tpu_custom_call.1} parent=87 // pred_check_branch
          %533 = sbr.rel (%p531) target = $region92
        $region91: #{tpu_custom_call.1} parent=87 // pred_region
          %p534 = scmp.lt.s32.totalorder %s28, 1
          %s535 = scalar_select %p534, %s28, 1
          %s536 = smul.addr %s535, 54
          %s537 = smul.addr %s536, 8
          %s538 = scalar_lea.vmem %s0, %s537
        $region92: #{tpu_custom_call.1} parent=87 // pred_fallthru
          _
      $region88: #{tpu_custom_call.1} parent=5 // pred_fallthru
        _
      %p539 = scmp.le.s32.totalorder 1, %s28
      %p540 = scmp.lt.s32.totalorder %s28, 3
      %p541 = pnand %p539, %p540
      %p542 = pneg %p541
      // Predicated region
      $region93: #{tpu_custom_call.1} parent=5 // pred_check
        _
      $region94: #{tpu_custom_call.1} parent=5 // pred_check_branch
        %544 = sbr.rel (%p541) target = $region96
      $region95: #{tpu_custom_call.1} parent=5 // pred_region
        %s545 = ssub.s32 %s28, 1
        %p546 = scmp.lt.s32.totalorder %s33, 1
        %s547 = scalar_select %p546, %s33, 1
        %s548 = smul.addr %s547, 54
        %s549 = smul.addr %s548, 8
        %s550 = scalar_lea.vmem %s0, %s549
        %p551 = pneg %p54
        %p552 = pneg %p51
        %p553 = pneg %p75
        %p554 = pneg %p72
        %p555 = pneg %p96
        %p556 = pneg %p93
        %p557 = pneg %p117
        %p558 = pneg %p114
        %p559 = pneg %p138
        %p560 = pneg %p135
        %p561 = pneg %p159
        %p562 = pneg %p156
        %p563 = pneg %p180
        %p564 = pneg %p177
        %p565 = pneg %p201
        %p566 = pneg %p198
        %p567 = pneg %p222
        %p568 = pneg %p219
        %p569 = pneg %p243
        %p570 = pneg %p240
        %p571 = pneg %p264
        %p572 = pneg %p261
        %p573 = pneg %p285
        %p574 = pneg %p282
        %p575 = pneg %p306
        %p576 = pneg %p303
        %p577 = pneg %p327
        %p578 = pneg %p324
        %p579 = pneg %p348
        %p580 = pneg %p345
        %p581 = pneg %p369
        %p582 = pneg %p366
        %p583 = pneg %p390
        %p584 = pneg %p387
        %p585 = pneg %p411
        %p586 = pneg %p408
        %p587 = pneg %p432
        %p588 = pneg %p429
        %p589 = pneg %p458
        %p590 = pneg %p455
        %s591 = sand.u32 %s445, 1
        %s592 = scalar_lea.sflag [#allocation3], %s591
        %s593 = sand.u32 %s445, 1
        %s594 = smul.addr %s593, 256
        %s595 = scalar_lea.vmem [#allocation2], %s594
        %p596 = scmp.lt.s32.totalorder %s33, 1
        %s597 = scalar_select %p596, %s33, 1
        %s598 = smul.addr %s597, 54
        %s599 = smul.addr %s598, 8
        %s600 = scalar_lea.vmem %s0, %s599
        %v602 = vld [vmem:[%s600] sm:$0xff]
        %v603 = vld [vmem:[%s600 + $0x8] sm:$0xff]
        %v604 = vld [vmem:[%s600 + $0x10] sm:$0x3]
        %v605 = vld [vmem:[%s600 + $0x18] sm:$0xff]
        %v606 = vld [vmem:[%s600 + $0x20] sm:$0xff]
        %v607 = vld [vmem:[%s600 + $0x28] sm:$0x3]
        %v608 = vld [vmem:[%s600 + $0x30] sm:$0xff]
        %v609 = vld [vmem:[%s600 + $0x38] sm:$0xff]
        %v610 = vld [vmem:[%s600 + $0x40] sm:$0x3]
        %v611 = vld [vmem:[%s600 + $0x48] sm:$0xff]
        %v612 = vld [vmem:[%s600 + $0x50] sm:$0xff]
        %v613 = vld [vmem:[%s600 + $0x58] sm:$0x3]
        %v614 = vld [vmem:[%s600 + $0x60] sm:$0xff]
        %v615 = vld [vmem:[%s600 + $0x68] sm:$0xff]
        %v616 = vld [vmem:[%s600 + $0x70] sm:$0x3]
        %v617 = vld [vmem:[%s600 + $0x78] sm:$0xff]
        %v618 = vld [vmem:[%s600 + $0x80] sm:$0xff]
        %v619 = vld [vmem:[%s600 + $0x88] sm:$0x3]
        %v620 = vld [vmem:[%s600 + $0x90] sm:$0xff]
        %v621 = vld [vmem:[%s600 + $0x98] sm:$0xff]
        %v622 = vld [vmem:[%s600 + $0xa0] sm:$0x3]
        %v623 = vld [vmem:[%s600 + $0xa8] sm:$0xff]
        %v624 = vld [vmem:[%s600 + $0xb0] sm:$0xff]
        %v625 = vld [vmem:[%s600 + $0xb8] sm:$0x3]
        %v626 = vld [vmem:[%s600 + $0xc0] sm:$0xff]
        %v627 = vld [vmem:[%s600 + $0xc8] sm:$0xff]
        %v628 = vld [vmem:[%s600 + $0xd0] sm:$0x3]
        %v629 = vld [vmem:[%s600 + $0xd8] sm:$0xff]
        %v630 = vld [vmem:[%s600 + $0xe0] sm:$0xff]
        %v631 = vld [vmem:[%s600 + $0xe8] sm:$0x3]
        %v632 = vld [vmem:[%s600 + $0xf0] sm:$0xff]
        %v633 = vld [vmem:[%s600 + $0xf8] sm:$0xff]
        %v634 = vld [vmem:[%s600 + $0x100] sm:$0x3]
        %v635 = vld [vmem:[%s600 + $0x108] sm:$0xff]
        %v636 = vld [vmem:[%s600 + $0x110] sm:$0xff]
        %v637 = vld [vmem:[%s600 + $0x118] sm:$0x3]
        %v638 = vld [vmem:[%s600 + $0x120] sm:$0xff]
        %v639 = vld [vmem:[%s600 + $0x128] sm:$0xff]
        %v640 = vld [vmem:[%s600 + $0x130] sm:$0x3]
        %v641 = vld [vmem:[%s600 + $0x138] sm:$0xff]
        %v642 = vld [vmem:[%s600 + $0x140] sm:$0xff]
        %v643 = vld [vmem:[%s600 + $0x148] sm:$0x3]
        %v644 = vld [vmem:[%s600 + $0x150] sm:$0xff]
        %v645 = vld [vmem:[%s600 + $0x158] sm:$0xff]
        %v646 = vld [vmem:[%s600 + $0x160] sm:$0x3]
        %v647 = vld [vmem:[%s600 + $0x168] sm:$0xff]
        %v648 = vld [vmem:[%s600 + $0x170] sm:$0xff]
        %v649 = vld [vmem:[%s600 + $0x178] sm:$0x3]
        %v650 = vld [vmem:[%s600 + $0x180] sm:$0xff]
        %v651 = vld [vmem:[%s600 + $0x188] sm:$0xff]
        %v652 = vld [vmem:[%s600 + $0x190] sm:$0x3]
        %v653 = vld [vmem:[%s600 + $0x198] sm:$0xff]
        %v654 = vld [vmem:[%s600 + $0x1a0] sm:$0xff]
        %v655 = vld [vmem:[%s600 + $0x1a8] sm:$0x3]
        %v710 = vcombine.high %v602, %v602
        %v712 = vunpack.c.l.s4 1983009808
        %v713 = vunpack.c.0.s8 %v712
        %v714 = vlaneseq
        %v715 = vshrl.u32 %v714, 7
        %v716 = vsub.s32 %v713, %v715
        %v717 = vrot.slane %v602, %v716
        %v719 = vunpack.c.l.s4 1983009808
        %v720 = vunpack.c.0.s8 %v719
        %v721 = vlaneseq
        %v722 = vshrl.u32 %v721, 7
        %v723 = vsub.s32 %v720, %v722
        %v724 = vrot.slane %v710, %v723
        %v725 = vcombine.high %v717, %v717
        %v726 = vcombine.high %v724, %v724
        %v727 = vcombine.high %v603, %v603
        %v729 = vunpack.c.l.s4 1983009808
        %v730 = vunpack.c.0.s8 %v729
        %v731 = vlaneseq
        %v732 = vshrl.u32 %v731, 7
        %v733 = vsub.s32 %v730, %v732
        %v734 = vrot.slane %v603, %v733
        %v736 = vunpack.c.l.s4 1983009808
        %v737 = vunpack.c.0.s8 %v736
        %v738 = vlaneseq
        %v739 = vshrl.u32 %v738, 7
        %v740 = vsub.s32 %v737, %v739
        %v741 = vrot.slane %v727, %v740
        %v742 = vcombine.high %v734, %v734
        %v743 = vcombine.high %v741, %v741
        %v745 = vunpack.c.l.s4 1983009808
        %v746 = vunpack.c.0.s8 %v745
        %v747 = vlaneseq
        %v748 = vshrl.u32 %v747, 7
        %v749 = vsub.s32 %v746, %v748
        %v750 = vrot.slane %v604, %v749
        %v751 = vcombine.high %v605, %v605
        %v753 = vunpack.c.l.s4 1983009808
        %v754 = vunpack.c.0.s8 %v753
        %v755 = vlaneseq
        %v756 = vshrl.u32 %v755, 7
        %v757 = vsub.s32 %v754, %v756
        %v758 = vrot.slane %v605, %v757
        %v760 = vunpack.c.l.s4 1983009808
        %v761 = vunpack.c.0.s8 %v760
        %v762 = vlaneseq
        %v763 = vshrl.u32 %v762, 7
        %v764 = vsub.s32 %v761, %v763
        %v765 = vrot.slane %v751, %v764
        %v766 = vcombine.high %v758, %v758
        %v767 = vcombine.high %v765, %v765
        %v768 = vcombine.high %v606, %v606
        %v770 = vunpack.c.l.s4 1983009808
        %v771 = vunpack.c.0.s8 %v770
        %v772 = vlaneseq
        %v773 = vshrl.u32 %v772, 7
        %v774 = vsub.s32 %v771, %v773
        %v775 = vrot.slane %v606, %v774
        %v777 = vunpack.c.l.s4 1983009808
        %v778 = vunpack.c.0.s8 %v777
        %v779 = vlaneseq
        %v780 = vshrl.u32 %v779, 7
        %v781 = vsub.s32 %v778, %v780
        %v782 = vrot.slane %v768, %v781
        %v783 = vcombine.high %v775, %v775
        %v784 = vcombine.high %v782, %v782
        %v786 = vunpack.c.l.s4 1983009808
        %v787 = vunpack.c.0.s8 %v786
        %v788 = vlaneseq
        %v789 = vshrl.u32 %v788, 7
        %v790 = vsub.s32 %v787, %v789
        %v791 = vrot.slane %v607, %v790
        %v792 = vcombine.high %v608, %v608
        %v794 = vunpack.c.l.s4 1983009808
        %v795 = vunpack.c.0.s8 %v794
        %v796 = vlaneseq
        %v797 = vshrl.u32 %v796, 7
        %v798 = vsub.s32 %v795, %v797
        %v799 = vrot.slane %v608, %v798
        %v801 = vunpack.c.l.s4 1983009808
        %v802 = vunpack.c.0.s8 %v801
        %v803 = vlaneseq
        %v804 = vshrl.u32 %v803, 7
        %v805 = vsub.s32 %v802, %v804
        %v806 = vrot.slane %v792, %v805
        %v807 = vcombine.high %v799, %v799
        %v808 = vcombine.high %v806, %v806
        %v809 = vcombine.high %v609, %v609
        %v811 = vunpack.c.l.s4 1983009808
        %v812 = vunpack.c.0.s8 %v811
        %v813 = vlaneseq
        %v814 = vshrl.u32 %v813, 7
        %v815 = vsub.s32 %v812, %v814
        %v816 = vrot.slane %v609, %v815
        %v818 = vunpack.c.l.s4 1983009808
        %v819 = vunpack.c.0.s8 %v818
        %v820 = vlaneseq
        %v821 = vshrl.u32 %v820, 7
        %v822 = vsub.s32 %v819, %v821
        %v823 = vrot.slane %v809, %v822
        %v824 = vcombine.high %v816, %v816
        %v825 = vcombine.high %v823, %v823
        %v827 = vunpack.c.l.s4 1983009808
        %v828 = vunpack.c.0.s8 %v827
        %v829 = vlaneseq
        %v830 = vshrl.u32 %v829, 7
        %v831 = vsub.s32 %v828, %v830
        %v832 = vrot.slane %v610, %v831
        %v833 = vcombine.high %v611, %v611
        %v835 = vunpack.c.l.s4 1983009808
        %v836 = vunpack.c.0.s8 %v835
        %v837 = vlaneseq
        %v838 = vshrl.u32 %v837, 7
        %v839 = vsub.s32 %v836, %v838
        %v840 = vrot.slane %v611, %v839
        %v842 = vunpack.c.l.s4 1983009808
        %v843 = vunpack.c.0.s8 %v842
        %v844 = vlaneseq
        %v845 = vshrl.u32 %v844, 7
        %v846 = vsub.s32 %v843, %v845
        %v847 = vrot.slane %v833, %v846
        %v848 = vcombine.high %v840, %v840
        %v849 = vcombine.high %v847, %v847
        %v850 = vcombine.high %v612, %v612
        %v852 = vunpack.c.l.s4 1983009808
        %v853 = vunpack.c.0.s8 %v852
        %v854 = vlaneseq
        %v855 = vshrl.u32 %v854, 7
        %v856 = vsub.s32 %v853, %v855
        %v857 = vrot.slane %v612, %v856
        %v859 = vunpack.c.l.s4 1983009808
        %v860 = vunpack.c.0.s8 %v859
        %v861 = vlaneseq
        %v862 = vshrl.u32 %v861, 7
        %v863 = vsub.s32 %v860, %v862
        %v864 = vrot.slane %v850, %v863
        %v865 = vcombine.high %v857, %v857
        %v866 = vcombine.high %v864, %v864
        %v868 = vunpack.c.l.s4 1983009808
        %v869 = vunpack.c.0.s8 %v868
        %v870 = vlaneseq
        %v871 = vshrl.u32 %v870, 7
        %v872 = vsub.s32 %v869, %v871
        %v873 = vrot.slane %v613, %v872
        %v874 = vcombine.high %v614, %v614
        %v876 = vunpack.c.l.s4 1983009808
        %v877 = vunpack.c.0.s8 %v876
        %v878 = vlaneseq
        %v879 = vshrl.u32 %v878, 7
        %v880 = vsub.s32 %v877, %v879
        %v881 = vrot.slane %v614, %v880
        %v883 = vunpack.c.l.s4 1983009808
        %v884 = vunpack.c.0.s8 %v883
        %v885 = vlaneseq
        %v886 = vshrl.u32 %v885, 7
        %v887 = vsub.s32 %v884, %v886
        %v888 = vrot.slane %v874, %v887
        %v889 = vcombine.high %v881, %v881
        %v890 = vcombine.high %v888, %v888
        %v891 = vcombine.high %v615, %v615
        %v893 = vunpack.c.l.s4 1983009808
        %v894 = vunpack.c.0.s8 %v893
        %v895 = vlaneseq
        %v896 = vshrl.u32 %v895, 7
        %v897 = vsub.s32 %v894, %v896
        %v898 = vrot.slane %v615, %v897
        %v900 = vunpack.c.l.s4 1983009808
        %v901 = vunpack.c.0.s8 %v900
        %v902 = vlaneseq
        %v903 = vshrl.u32 %v902, 7
        %v904 = vsub.s32 %v901, %v903
        %v905 = vrot.slane %v891, %v904
        %v906 = vcombine.high %v898, %v898
        %v907 = vcombine.high %v905, %v905
        %v909 = vunpack.c.l.s4 1983009808
        %v910 = vunpack.c.0.s8 %v909
        %v911 = vlaneseq
        %v912 = vshrl.u32 %v911, 7
        %v913 = vsub.s32 %v910, %v912
        %v914 = vrot.slane %v616, %v913
        %v915 = vcombine.high %v617, %v617
        %v917 = vunpack.c.l.s4 1983009808
        %v918 = vunpack.c.0.s8 %v917
        %v919 = vlaneseq
        %v920 = vshrl.u32 %v919, 7
        %v921 = vsub.s32 %v918, %v920
        %v922 = vrot.slane %v617, %v921
        %v924 = vunpack.c.l.s4 1983009808
        %v925 = vunpack.c.0.s8 %v924
        %v926 = vlaneseq
        %v927 = vshrl.u32 %v926, 7
        %v928 = vsub.s32 %v925, %v927
        %v929 = vrot.slane %v915, %v928
        %v930 = vcombine.high %v922, %v922
        %v931 = vcombine.high %v929, %v929
        %v932 = vcombine.high %v618, %v618
        %v934 = vunpack.c.l.s4 1983009808
        %v935 = vunpack.c.0.s8 %v934
        %v936 = vlaneseq
        %v937 = vshrl.u32 %v936, 7
        %v938 = vsub.s32 %v935, %v937
        %v939 = vrot.slane %v618, %v938
        %v941 = vunpack.c.l.s4 1983009808
        %v942 = vunpack.c.0.s8 %v941
        %v943 = vlaneseq
        %v944 = vshrl.u32 %v943, 7
        %v945 = vsub.s32 %v942, %v944
        %v946 = vrot.slane %v932, %v945
        %v947 = vcombine.high %v939, %v939
        %v948 = vcombine.high %v946, %v946
        %v950 = vunpack.c.l.s4 1983009808
        %v951 = vunpack.c.0.s8 %v950
        %v952 = vlaneseq
        %v953 = vshrl.u32 %v952, 7
        %v954 = vsub.s32 %v951, %v953
        %v955 = vrot.slane %v619, %v954
        %v956 = vcombine.high %v620, %v620
        %v958 = vunpack.c.l.s4 1983009808
        %v959 = vunpack.c.0.s8 %v958
        %v960 = vlaneseq
        %v961 = vshrl.u32 %v960, 7
        %v962 = vsub.s32 %v959, %v961
        %v963 = vrot.slane %v620, %v962
        %v965 = vunpack.c.l.s4 1983009808
        %v966 = vunpack.c.0.s8 %v965
        %v967 = vlaneseq
        %v968 = vshrl.u32 %v967, 7
        %v969 = vsub.s32 %v966, %v968
        %v970 = vrot.slane %v956, %v969
        %v971 = vcombine.high %v963, %v963
        %v972 = vcombine.high %v970, %v970
        %v973 = vcombine.high %v621, %v621
        %v975 = vunpack.c.l.s4 1983009808
        %v976 = vunpack.c.0.s8 %v975
        %v977 = vlaneseq
        %v978 = vshrl.u32 %v977, 7
        %v979 = vsub.s32 %v976, %v978
        %v980 = vrot.slane %v621, %v979
        %v982 = vunpack.c.l.s4 1983009808
        %v983 = vunpack.c.0.s8 %v982
        %v984 = vlaneseq
        %v985 = vshrl.u32 %v984, 7
        %v986 = vsub.s32 %v983, %v985
        %v987 = vrot.slane %v973, %v986
        %v988 = vcombine.high %v980, %v980
        %v989 = vcombine.high %v987, %v987
        %v991 = vunpack.c.l.s4 1983009808
        %v992 = vunpack.c.0.s8 %v991
        %v993 = vlaneseq
        %v994 = vshrl.u32 %v993, 7
        %v995 = vsub.s32 %v992, %v994
        %v996 = vrot.slane %v622, %v995
        %v997 = vcombine.high %v623, %v623
        %v999 = vunpack.c.l.s4 1983009808
        %v1000 = vunpack.c.0.s8 %v999
        %v1001 = vlaneseq
        %v1002 = vshrl.u32 %v1001, 7
        %v1003 = vsub.s32 %v1000, %v1002
        %v1004 = vrot.slane %v623, %v1003
        %v1006 = vunpack.c.l.s4 1983009808
        %v1007 = vunpack.c.0.s8 %v1006
        %v1008 = vlaneseq
        %v1009 = vshrl.u32 %v1008, 7
        %v1010 = vsub.s32 %v1007, %v1009
        %v1011 = vrot.slane %v997, %v1010
        %v1012 = vcombine.high %v1004, %v1004
        %v1013 = vcombine.high %v1011, %v1011
        %v1014 = vcombine.high %v624, %v624
        %v1016 = vunpack.c.l.s4 1983009808
        %v1017 = vunpack.c.0.s8 %v1016
        %v1018 = vlaneseq
        %v1019 = vshrl.u32 %v1018, 7
        %v1020 = vsub.s32 %v1017, %v1019
        %v1021 = vrot.slane %v624, %v1020
        %v1023 = vunpack.c.l.s4 1983009808
        %v1024 = vunpack.c.0.s8 %v1023
        %v1025 = vlaneseq
        %v1026 = vshrl.u32 %v1025, 7
        %v1027 = vsub.s32 %v1024, %v1026
        %v1028 = vrot.slane %v1014, %v1027
        %v1029 = vcombine.high %v1021, %v1021
        %v1030 = vcombine.high %v1028, %v1028
        %v1032 = vunpack.c.l.s4 1983009808
        %v1033 = vunpack.c.0.s8 %v1032
        %v1034 = vlaneseq
        %v1035 = vshrl.u32 %v1034, 7
        %v1036 = vsub.s32 %v1033, %v1035
        %v1037 = vrot.slane %v625, %v1036
        %v1038 = vcombine.high %v626, %v626
        %v1040 = vunpack.c.l.s4 1983009808
        %v1041 = vunpack.c.0.s8 %v1040
        %v1042 = vlaneseq
        %v1043 = vshrl.u32 %v1042, 7
        %v1044 = vsub.s32 %v1041, %v1043
        %v1045 = vrot.slane %v626, %v1044
        %v1047 = vunpack.c.l.s4 1983009808
        %v1048 = vunpack.c.0.s8 %v1047
        %v1049 = vlaneseq
        %v1050 = vshrl.u32 %v1049, 7
        %v1051 = vsub.s32 %v1048, %v1050
        %v1052 = vrot.slane %v1038, %v1051
        %v1053 = vcombine.high %v1045, %v1045
        %v1054 = vcombine.high %v1052, %v1052
        %v1055 = vcombine.high %v627, %v627
        %v1057 = vunpack.c.l.s4 1983009808
        %v1058 = vunpack.c.0.s8 %v1057
        %v1059 = vlaneseq
        %v1060 = vshrl.u32 %v1059, 7
        %v1061 = vsub.s32 %v1058, %v1060
        %v1062 = vrot.slane %v627, %v1061
        %v1064 = vunpack.c.l.s4 1983009808
        %v1065 = vunpack.c.0.s8 %v1064
        %v1066 = vlaneseq
        %v1067 = vshrl.u32 %v1066, 7
        %v1068 = vsub.s32 %v1065, %v1067
        %v1069 = vrot.slane %v1055, %v1068
        %v1070 = vcombine.high %v1062, %v1062
        %v1071 = vcombine.high %v1069, %v1069
        %v1073 = vunpack.c.l.s4 1983009808
        %v1074 = vunpack.c.0.s8 %v1073
        %v1075 = vlaneseq
        %v1076 = vshrl.u32 %v1075, 7
        %v1077 = vsub.s32 %v1074, %v1076
        %v1078 = vrot.slane %v628, %v1077
        %v1079 = vcombine.high %v629, %v629
        %v1081 = vunpack.c.l.s4 1983009808
        %v1082 = vunpack.c.0.s8 %v1081
        %v1083 = vlaneseq
        %v1084 = vshrl.u32 %v1083, 7
        %v1085 = vsub.s32 %v1082, %v1084
        %v1086 = vrot.slane %v629, %v1085
        %v1088 = vunpack.c.l.s4 1983009808
        %v1089 = vunpack.c.0.s8 %v1088
        %v1090 = vlaneseq
        %v1091 = vshrl.u32 %v1090, 7
        %v1092 = vsub.s32 %v1089, %v1091
        %v1093 = vrot.slane %v1079, %v1092
        %v1094 = vcombine.high %v1086, %v1086
        %v1095 = vcombine.high %v1093, %v1093
        %v1096 = vcombine.high %v630, %v630
        %v1098 = vunpack.c.l.s4 1983009808
        %v1099 = vunpack.c.0.s8 %v1098
        %v1100 = vlaneseq
        %v1101 = vshrl.u32 %v1100, 7
        %v1102 = vsub.s32 %v1099, %v1101
        %v1103 = vrot.slane %v630, %v1102
        %v1105 = vunpack.c.l.s4 1983009808
        %v1106 = vunpack.c.0.s8 %v1105
        %v1107 = vlaneseq
        %v1108 = vshrl.u32 %v1107, 7
        %v1109 = vsub.s32 %v1106, %v1108
        %v1110 = vrot.slane %v1096, %v1109
        %v1111 = vcombine.high %v1103, %v1103
        %v1112 = vcombine.high %v1110, %v1110
        %v1114 = vunpack.c.l.s4 1983009808
        %v1115 = vunpack.c.0.s8 %v1114
        %v1116 = vlaneseq
        %v1117 = vshrl.u32 %v1116, 7
        %v1118 = vsub.s32 %v1115, %v1117
        %v1119 = vrot.slane %v631, %v1118
        %v1120 = vcombine.high %v632, %v632
        %v1122 = vunpack.c.l.s4 1983009808
        %v1123 = vunpack.c.0.s8 %v1122
        %v1124 = vlaneseq
        %v1125 = vshrl.u32 %v1124, 7
        %v1126 = vsub.s32 %v1123, %v1125
        %v1127 = vrot.slane %v632, %v1126
        %v1129 = vunpack.c.l.s4 1983009808
        %v1130 = vunpack.c.0.s8 %v1129
        %v1131 = vlaneseq
        %v1132 = vshrl.u32 %v1131, 7
        %v1133 = vsub.s32 %v1130, %v1132
        %v1134 = vrot.slane %v1120, %v1133
        %v1135 = vcombine.high %v1127, %v1127
        %v1136 = vcombine.high %v1134, %v1134
        %v1137 = vcombine.high %v633, %v633
        %v1139 = vunpack.c.l.s4 1983009808
        %v1140 = vunpack.c.0.s8 %v1139
        %v1141 = vlaneseq
        %v1142 = vshrl.u32 %v1141, 7
        %v1143 = vsub.s32 %v1140, %v1142
        %v1144 = vrot.slane %v633, %v1143
        %v1146 = vunpack.c.l.s4 1983009808
        %v1147 = vunpack.c.0.s8 %v1146
        %v1148 = vlaneseq
        %v1149 = vshrl.u32 %v1148, 7
        %v1150 = vsub.s32 %v1147, %v1149
        %v1151 = vrot.slane %v1137, %v1150
        %v1152 = vcombine.high %v1144, %v1144
        %v1153 = vcombine.high %v1151, %v1151
        %v1155 = vunpack.c.l.s4 1983009808
        %v1156 = vunpack.c.0.s8 %v1155
        %v1157 = vlaneseq
        %v1158 = vshrl.u32 %v1157, 7
        %v1159 = vsub.s32 %v1156, %v1158
        %v1160 = vrot.slane %v634, %v1159
        %v1161 = vcombine.high %v635, %v635
        %v1163 = vunpack.c.l.s4 1983009808
        %v1164 = vunpack.c.0.s8 %v1163
        %v1165 = vlaneseq
        %v1166 = vshrl.u32 %v1165, 7
        %v1167 = vsub.s32 %v1164, %v1166
        %v1168 = vrot.slane %v635, %v1167
        %v1170 = vunpack.c.l.s4 1983009808
        %v1171 = vunpack.c.0.s8 %v1170
        %v1172 = vlaneseq
        %v1173 = vshrl.u32 %v1172, 7
        %v1174 = vsub.s32 %v1171, %v1173
        %v1175 = vrot.slane %v1161, %v1174
        %v1176 = vcombine.high %v1168, %v1168
        %v1177 = vcombine.high %v1175, %v1175
        %v1178 = vcombine.high %v636, %v636
        %v1180 = vunpack.c.l.s4 1983009808
        %v1181 = vunpack.c.0.s8 %v1180
        %v1182 = vlaneseq
        %v1183 = vshrl.u32 %v1182, 7
        %v1184 = vsub.s32 %v1181, %v1183
        %v1185 = vrot.slane %v636, %v1184
        %v1187 = vunpack.c.l.s4 1983009808
        %v1188 = vunpack.c.0.s8 %v1187
        %v1189 = vlaneseq
        %v1190 = vshrl.u32 %v1189, 7
        %v1191 = vsub.s32 %v1188, %v1190
        %v1192 = vrot.slane %v1178, %v1191
        %v1193 = vcombine.high %v1185, %v1185
        %v1194 = vcombine.high %v1192, %v1192
        %v1196 = vunpack.c.l.s4 1983009808
        %v1197 = vunpack.c.0.s8 %v1196
        %v1198 = vlaneseq
        %v1199 = vshrl.u32 %v1198, 7
        %v1200 = vsub.s32 %v1197, %v1199
        %v1201 = vrot.slane %v637, %v1200
        %v1202 = vcombine.high %v638, %v638
        %v1204 = vunpack.c.l.s4 1983009808
        %v1205 = vunpack.c.0.s8 %v1204
        %v1206 = vlaneseq
        %v1207 = vshrl.u32 %v1206, 7
        %v1208 = vsub.s32 %v1205, %v1207
        %v1209 = vrot.slane %v638, %v1208
        %v1211 = vunpack.c.l.s4 1983009808
        %v1212 = vunpack.c.0.s8 %v1211
        %v1213 = vlaneseq
        %v1214 = vshrl.u32 %v1213, 7
        %v1215 = vsub.s32 %v1212, %v1214
        %v1216 = vrot.slane %v1202, %v1215
        %v1217 = vcombine.high %v1209, %v1209
        %v1218 = vcombine.high %v1216, %v1216
        %v1219 = vcombine.high %v639, %v639
        %v1221 = vunpack.c.l.s4 1983009808
        %v1222 = vunpack.c.0.s8 %v1221
        %v1223 = vlaneseq
        %v1224 = vshrl.u32 %v1223, 7
        %v1225 = vsub.s32 %v1222, %v1224
        %v1226 = vrot.slane %v639, %v1225
        %v1228 = vunpack.c.l.s4 1983009808
        %v1229 = vunpack.c.0.s8 %v1228
        %v1230 = vlaneseq
        %v1231 = vshrl.u32 %v1230, 7
        %v1232 = vsub.s32 %v1229, %v1231
        %v1233 = vrot.slane %v1219, %v1232
        %v1234 = vcombine.high %v1226, %v1226
        %v1235 = vcombine.high %v1233, %v1233
        %v1237 = vunpack.c.l.s4 1983009808
        %v1238 = vunpack.c.0.s8 %v1237
        %v1239 = vlaneseq
        %v1240 = vshrl.u32 %v1239, 7
        %v1241 = vsub.s32 %v1238, %v1240
        %v1242 = vrot.slane %v640, %v1241
        %v1243 = vcombine.high %v641, %v641
        %v1245 = vunpack.c.l.s4 1983009808
        %v1246 = vunpack.c.0.s8 %v1245
        %v1247 = vlaneseq
        %v1248 = vshrl.u32 %v1247, 7
        %v1249 = vsub.s32 %v1246, %v1248
        %v1250 = vrot.slane %v641, %v1249
        %v1252 = vunpack.c.l.s4 1983009808
        %v1253 = vunpack.c.0.s8 %v1252
        %v1254 = vlaneseq
        %v1255 = vshrl.u32 %v1254, 7
        %v1256 = vsub.s32 %v1253, %v1255
        %v1257 = vrot.slane %v1243, %v1256
        %v1258 = vcombine.high %v1250, %v1250
        %v1259 = vcombine.high %v1257, %v1257
        %v1260 = vcombine.high %v642, %v642
        %v1262 = vunpack.c.l.s4 1983009808
        %v1263 = vunpack.c.0.s8 %v1262
        %v1264 = vlaneseq
        %v1265 = vshrl.u32 %v1264, 7
        %v1266 = vsub.s32 %v1263, %v1265
        %v1267 = vrot.slane %v642, %v1266
        %v1269 = vunpack.c.l.s4 1983009808
        %v1270 = vunpack.c.0.s8 %v1269
        %v1271 = vlaneseq
        %v1272 = vshrl.u32 %v1271, 7
        %v1273 = vsub.s32 %v1270, %v1272
        %v1274 = vrot.slane %v1260, %v1273
        %v1275 = vcombine.high %v1267, %v1267
        %v1276 = vcombine.high %v1274, %v1274
        %v1278 = vunpack.c.l.s4 1983009808
        %v1279 = vunpack.c.0.s8 %v1278
        %v1280 = vlaneseq
        %v1281 = vshrl.u32 %v1280, 7
        %v1282 = vsub.s32 %v1279, %v1281
        %v1283 = vrot.slane %v643, %v1282
        %v1284 = vcombine.high %v644, %v644
        %v1286 = vunpack.c.l.s4 1983009808
        %v1287 = vunpack.c.0.s8 %v1286
        %v1288 = vlaneseq
        %v1289 = vshrl.u32 %v1288, 7
        %v1290 = vsub.s32 %v1287, %v1289
        %v1291 = vrot.slane %v644, %v1290
        %v1293 = vunpack.c.l.s4 1983009808
        %v1294 = vunpack.c.0.s8 %v1293
        %v1295 = vlaneseq
        %v1296 = vshrl.u32 %v1295, 7
        %v1297 = vsub.s32 %v1294, %v1296
        %v1298 = vrot.slane %v1284, %v1297
        %v1299 = vcombine.high %v1291, %v1291
        %v1300 = vcombine.high %v1298, %v1298
        %v1301 = vcombine.high %v645, %v645
        %v1303 = vunpack.c.l.s4 1983009808
        %v1304 = vunpack.c.0.s8 %v1303
        %v1305 = vlaneseq
        %v1306 = vshrl.u32 %v1305, 7
        %v1307 = vsub.s32 %v1304, %v1306
        %v1308 = vrot.slane %v645, %v1307
        %v1310 = vunpack.c.l.s4 1983009808
        %v1311 = vunpack.c.0.s8 %v1310
        %v1312 = vlaneseq
        %v1313 = vshrl.u32 %v1312, 7
        %v1314 = vsub.s32 %v1311, %v1313
        %v1315 = vrot.slane %v1301, %v1314
        %v1316 = vcombine.high %v1308, %v1308
        %v1317 = vcombine.high %v1315, %v1315
        %v1319 = vunpack.c.l.s4 1983009808
        %v1320 = vunpack.c.0.s8 %v1319
        %v1321 = vlaneseq
        %v1322 = vshrl.u32 %v1321, 7
        %v1323 = vsub.s32 %v1320, %v1322
        %v1324 = vrot.slane %v646, %v1323
        %v1325 = vcombine.high %v647, %v647
        %v1327 = vunpack.c.l.s4 1983009808
        %v1328 = vunpack.c.0.s8 %v1327
        %v1329 = vlaneseq
        %v1330 = vshrl.u32 %v1329, 7
        %v1331 = vsub.s32 %v1328, %v1330
        %v1332 = vrot.slane %v647, %v1331
        %v1334 = vunpack.c.l.s4 1983009808
        %v1335 = vunpack.c.0.s8 %v1334
        %v1336 = vlaneseq
        %v1337 = vshrl.u32 %v1336, 7
        %v1338 = vsub.s32 %v1335, %v1337
        %v1339 = vrot.slane %v1325, %v1338
        %v1340 = vcombine.high %v1332, %v1332
        %v1341 = vcombine.high %v1339, %v1339
        %v1342 = vcombine.high %v648, %v648
        %v1344 = vunpack.c.l.s4 1983009808
        %v1345 = vunpack.c.0.s8 %v1344
        %v1346 = vlaneseq
        %v1347 = vshrl.u32 %v1346, 7
        %v1348 = vsub.s32 %v1345, %v1347
        %v1349 = vrot.slane %v648, %v1348
        %v1351 = vunpack.c.l.s4 1983009808
        %v1352 = vunpack.c.0.s8 %v1351
        %v1353 = vlaneseq
        %v1354 = vshrl.u32 %v1353, 7
        %v1355 = vsub.s32 %v1352, %v1354
        %v1356 = vrot.slane %v1342, %v1355
        %v1357 = vcombine.high %v1349, %v1349
        %v1358 = vcombine.high %v1356, %v1356
        %v1360 = vunpack.c.l.s4 1983009808
        %v1361 = vunpack.c.0.s8 %v1360
        %v1362 = vlaneseq
        %v1363 = vshrl.u32 %v1362, 7
        %v1364 = vsub.s32 %v1361, %v1363
        %v1365 = vrot.slane %v649, %v1364
        %v1366 = vcombine.high %v650, %v650
        %v1368 = vunpack.c.l.s4 1983009808
        %v1369 = vunpack.c.0.s8 %v1368
        %v1370 = vlaneseq
        %v1371 = vshrl.u32 %v1370, 7
        %v1372 = vsub.s32 %v1369, %v1371
        %v1373 = vrot.slane %v650, %v1372
        %v1375 = vunpack.c.l.s4 1983009808
        %v1376 = vunpack.c.0.s8 %v1375
        %v1377 = vlaneseq
        %v1378 = vshrl.u32 %v1377, 7
        %v1379 = vsub.s32 %v1376, %v1378
        %v1380 = vrot.slane %v1366, %v1379
        %v1381 = vcombine.high %v1373, %v1373
        %v1382 = vcombine.high %v1380, %v1380
        %v1383 = vcombine.high %v651, %v651
        %v1385 = vunpack.c.l.s4 1983009808
        %v1386 = vunpack.c.0.s8 %v1385
        %v1387 = vlaneseq
        %v1388 = vshrl.u32 %v1387, 7
        %v1389 = vsub.s32 %v1386, %v1388
        %v1390 = vrot.slane %v651, %v1389
        %v1392 = vunpack.c.l.s4 1983009808
        %v1393 = vunpack.c.0.s8 %v1392
        %v1394 = vlaneseq
        %v1395 = vshrl.u32 %v1394, 7
        %v1396 = vsub.s32 %v1393, %v1395
        %v1397 = vrot.slane %v1383, %v1396
        %v1398 = vcombine.high %v1390, %v1390
        %v1399 = vcombine.high %v1397, %v1397
        %v1401 = vunpack.c.l.s4 1983009808
        %v1402 = vunpack.c.0.s8 %v1401
        %v1403 = vlaneseq
        %v1404 = vshrl.u32 %v1403, 7
        %v1405 = vsub.s32 %v1402, %v1404
        %v1406 = vrot.slane %v652, %v1405
        %v1407 = vcombine.high %v653, %v653
        %v1409 = vunpack.c.l.s4 1983009808
        %v1410 = vunpack.c.0.s8 %v1409
        %v1411 = vlaneseq
        %v1412 = vshrl.u32 %v1411, 7
        %v1413 = vsub.s32 %v1410, %v1412
        %v1414 = vrot.slane %v653, %v1413
        %v1416 = vunpack.c.l.s4 1983009808
        %v1417 = vunpack.c.0.s8 %v1416
        %v1418 = vlaneseq
        %v1419 = vshrl.u32 %v1418, 7
        %v1420 = vsub.s32 %v1417, %v1419
        %v1421 = vrot.slane %v1407, %v1420
        %v1422 = vcombine.high %v1414, %v1414
        %v1423 = vcombine.high %v1421, %v1421
        %v1424 = vcombine.high %v654, %v654
        %v1426 = vunpack.c.l.s4 1983009808
        %v1427 = vunpack.c.0.s8 %v1426
        %v1428 = vlaneseq
        %v1429 = vshrl.u32 %v1428, 7
        %v1430 = vsub.s32 %v1427, %v1429
        %v1431 = vrot.slane %v654, %v1430
        %v1433 = vunpack.c.l.s4 1983009808
        %v1434 = vunpack.c.0.s8 %v1433
        %v1435 = vlaneseq
        %v1436 = vshrl.u32 %v1435, 7
        %v1437 = vsub.s32 %v1434, %v1436
        %v1438 = vrot.slane %v1424, %v1437
        %v1439 = vcombine.high %v1431, %v1431
        %v1440 = vcombine.high %v1438, %v1438
        %v1442 = vunpack.c.l.s4 1983009808
        %v1443 = vunpack.c.0.s8 %v1442
        %v1444 = vlaneseq
        %v1445 = vshrl.u32 %v1444, 7
        %v1446 = vsub.s32 %v1443, %v1445
        %v1447 = vrot.slane %v655, %v1446
        %v1448 = vcombine.low %v717, %v725
        %v1449 = vcombine.low %v724, %v726
        %v1451 = vunpack.c.l.s4 1983009808
        %v1452 = vunpack.c.0.s8 %v1451
        %v1453 = vlaneseq
        %v1454 = vshrl.u32 %v1453, 7
        %v1455 = vsub.s32 %v1452, %v1454
        %v1456 = vrot.slane %v1448, %v1455
        %v1458 = vunpack.c.l.s4 1983009808
        %v1459 = vunpack.c.0.s8 %v1458
        %v1460 = vlaneseq
        %v1461 = vshrl.u32 %v1460, 7
        %v1462 = vsub.s32 %v1459, %v1461
        %v1463 = vrot.slane %v1449, %v1462
        %v1464 = vcombine.low %v1456, %v1463
        %v1465 = vcombine.low %v734, %v742
        %v1466 = vcombine.low %v741, %v743
        %v1468 = vunpack.c.l.s4 1983009808
        %v1469 = vunpack.c.0.s8 %v1468
        %v1470 = vlaneseq
        %v1471 = vshrl.u32 %v1470, 7
        %v1472 = vsub.s32 %v1469, %v1471
        %v1473 = vrot.slane %v1465, %v1472
        %v1475 = vunpack.c.l.s4 1983009808
        %v1476 = vunpack.c.0.s8 %v1475
        %v1477 = vlaneseq
        %v1478 = vshrl.u32 %v1477, 7
        %v1479 = vsub.s32 %v1476, %v1478
        %v1480 = vrot.slane %v1466, %v1479
        %v1481 = vcombine.low %v1473, %v1480
        %v1482 = vcombine.low %v750, %v758
        %v1483 = vcombine.low %v766, %v765
        %v1485 = vunpack.c.l.s4 1983009808
        %v1486 = vunpack.c.0.s8 %v1485
        %v1487 = vlaneseq
        %v1488 = vshrl.u32 %v1487, 7
        %v1489 = vsub.s32 %v1486, %v1488
        %v1490 = vrot.slane %v1482, %v1489
        %v1492 = vunpack.c.l.s4 1983009808
        %v1493 = vunpack.c.0.s8 %v1492
        %v1494 = vlaneseq
        %v1495 = vshrl.u32 %v1494, 7
        %v1496 = vsub.s32 %v1493, %v1495
        %v1497 = vrot.slane %v1483, %v1496
        %v1498 = vcombine.low %v1490, %v1497
        %v1499 = vcombine.low %v767, %v775
        %v1500 = vcombine.low %v783, %v782
        %v1502 = vunpack.c.l.s4 1983009808
        %v1503 = vunpack.c.0.s8 %v1502
        %v1504 = vlaneseq
        %v1505 = vshrl.u32 %v1504, 7
        %v1506 = vsub.s32 %v1503, %v1505
        %v1507 = vrot.slane %v1499, %v1506
        %v1509 = vunpack.c.l.s4 1983009808
        %v1510 = vunpack.c.0.s8 %v1509
        %v1511 = vlaneseq
        %v1512 = vshrl.u32 %v1511, 7
        %v1513 = vsub.s32 %v1510, %v1512
        %v1514 = vrot.slane %v1500, %v1513
        %v1515 = vcombine.low %v1507, %v1514
        %v1516 = vcombine.low %v784, %v791
        %v1517 = vcombine.low %v799, %v807
        %v1519 = vunpack.c.l.s4 1983009808
        %v1520 = vunpack.c.0.s8 %v1519
        %v1521 = vlaneseq
        %v1522 = vshrl.u32 %v1521, 7
        %v1523 = vsub.s32 %v1520, %v1522
        %v1524 = vrot.slane %v1516, %v1523
        %v1526 = vunpack.c.l.s4 1983009808
        %v1527 = vunpack.c.0.s8 %v1526
        %v1528 = vlaneseq
        %v1529 = vshrl.u32 %v1528, 7
        %v1530 = vsub.s32 %v1527, %v1529
        %v1531 = vrot.slane %v1517, %v1530
        %v1532 = vcombine.low %v1524, %v1531
        %v1533 = vcombine.low %v806, %v808
        %v1534 = vcombine.low %v816, %v824
        %v1536 = vunpack.c.l.s4 1983009808
        %v1537 = vunpack.c.0.s8 %v1536
        %v1538 = vlaneseq
        %v1539 = vshrl.u32 %v1538, 7
        %v1540 = vsub.s32 %v1537, %v1539
        %v1541 = vrot.slane %v1533, %v1540
        %v1543 = vunpack.c.l.s4 1983009808
        %v1544 = vunpack.c.0.s8 %v1543
        %v1545 = vlaneseq
        %v1546 = vshrl.u32 %v1545, 7
        %v1547 = vsub.s32 %v1544, %v1546
        %v1548 = vrot.slane %v1534, %v1547
        %v1549 = vcombine.low %v1541, %v1548
        %v1550 = vcombine.low %v823, %v825
        %v1551 = vcombine.low %v832, %v840
        %v1553 = vunpack.c.l.s4 1983009808
        %v1554 = vunpack.c.0.s8 %v1553
        %v1555 = vlaneseq
        %v1556 = vshrl.u32 %v1555, 7
        %v1557 = vsub.s32 %v1554, %v1556
        %v1558 = vrot.slane %v1550, %v1557
        %v1560 = vunpack.c.l.s4 1983009808
        %v1561 = vunpack.c.0.s8 %v1560
        %v1562 = vlaneseq
        %v1563 = vshrl.u32 %v1562, 7
        %v1564 = vsub.s32 %v1561, %v1563
        %v1565 = vrot.slane %v1551, %v1564
        %v1566 = vcombine.low %v1558, %v1565
        %v1567 = vcombine.low %v848, %v847
        %v1568 = vcombine.low %v849, %v857
        %v1570 = vunpack.c.l.s4 1983009808
        %v1571 = vunpack.c.0.s8 %v1570
        %v1572 = vlaneseq
        %v1573 = vshrl.u32 %v1572, 7
        %v1574 = vsub.s32 %v1571, %v1573
        %v1575 = vrot.slane %v1567, %v1574
        %v1577 = vunpack.c.l.s4 1983009808
        %v1578 = vunpack.c.0.s8 %v1577
        %v1579 = vlaneseq
        %v1580 = vshrl.u32 %v1579, 7
        %v1581 = vsub.s32 %v1578, %v1580
        %v1582 = vrot.slane %v1568, %v1581
        %v1583 = vcombine.low %v1575, %v1582
        %v1584 = vcombine.low %v865, %v864
        %v1585 = vcombine.low %v866, %v873
        %v1587 = vunpack.c.l.s4 1983009808
        %v1588 = vunpack.c.0.s8 %v1587
        %v1589 = vlaneseq
        %v1590 = vshrl.u32 %v1589, 7
        %v1591 = vsub.s32 %v1588, %v1590
        %v1592 = vrot.slane %v1584, %v1591
        %v1594 = vunpack.c.l.s4 1983009808
        %v1595 = vunpack.c.0.s8 %v1594
        %v1596 = vlaneseq
        %v1597 = vshrl.u32 %v1596, 7
        %v1598 = vsub.s32 %v1595, %v1597
        %v1599 = vrot.slane %v1585, %v1598
        %v1600 = vcombine.low %v1592, %v1599
        %v1601 = vcombine.low %v881, %v889
        %v1602 = vcombine.low %v888, %v890
        %v1604 = vunpack.c.l.s4 1983009808
        %v1605 = vunpack.c.0.s8 %v1604
        %v1606 = vlaneseq
        %v1607 = vshrl.u32 %v1606, 7
        %v1608 = vsub.s32 %v1605, %v1607
        %v1609 = vrot.slane %v1601, %v1608
        %v1611 = vunpack.c.l.s4 1983009808
        %v1612 = vunpack.c.0.s8 %v1611
        %v1613 = vlaneseq
        %v1614 = vshrl.u32 %v1613, 7
        %v1615 = vsub.s32 %v1612, %v1614
        %v1616 = vrot.slane %v1602, %v1615
        %v1617 = vcombine.low %v1609, %v1616
        %v1618 = vcombine.low %v898, %v906
        %v1619 = vcombine.low %v905, %v907
        %v1621 = vunpack.c.l.s4 1983009808
        %v1622 = vunpack.c.0.s8 %v1621
        %v1623 = vlaneseq
        %v1624 = vshrl.u32 %v1623, 7
        %v1625 = vsub.s32 %v1622, %v1624
        %v1626 = vrot.slane %v1618, %v1625
        %v1628 = vunpack.c.l.s4 1983009808
        %v1629 = vunpack.c.0.s8 %v1628
        %v1630 = vlaneseq
        %v1631 = vshrl.u32 %v1630, 7
        %v1632 = vsub.s32 %v1629, %v1631
        %v1633 = vrot.slane %v1619, %v1632
        %v1634 = vcombine.low %v1626, %v1633
        %v1635 = vcombine.low %v914, %v922
        %v1636 = vcombine.low %v930, %v929
        %v1638 = vunpack.c.l.s4 1983009808
        %v1639 = vunpack.c.0.s8 %v1638
        %v1640 = vlaneseq
        %v1641 = vshrl.u32 %v1640, 7
        %v1642 = vsub.s32 %v1639, %v1641
        %v1643 = vrot.slane %v1635, %v1642
        %v1645 = vunpack.c.l.s4 1983009808
        %v1646 = vunpack.c.0.s8 %v1645
        %v1647 = vlaneseq
        %v1648 = vshrl.u32 %v1647, 7
        %v1649 = vsub.s32 %v1646, %v1648
        %v1650 = vrot.slane %v1636, %v1649
        %v1651 = vcombine.low %v1643, %v1650
        %v1652 = vcombine.low %v931, %v939
        %v1653 = vcombine.low %v947, %v946
        %v1655 = vunpack.c.l.s4 1983009808
        %v1656 = vunpack.c.0.s8 %v1655
        %v1657 = vlaneseq
        %v1658 = vshrl.u32 %v1657, 7
        %v1659 = vsub.s32 %v1656, %v1658
        %v1660 = vrot.slane %v1652, %v1659
        %v1662 = vunpack.c.l.s4 1983009808
        %v1663 = vunpack.c.0.s8 %v1662
        %v1664 = vlaneseq
        %v1665 = vshrl.u32 %v1664, 7
        %v1666 = vsub.s32 %v1663, %v1665
        %v1667 = vrot.slane %v1653, %v1666
        %v1668 = vcombine.low %v1660, %v1667
        %v1669 = vcombine.low %v948, %v955
        %v1670 = vcombine.low %v963, %v971
        %v1672 = vunpack.c.l.s4 1983009808
        %v1673 = vunpack.c.0.s8 %v1672
        %v1674 = vlaneseq
        %v1675 = vshrl.u32 %v1674, 7
        %v1676 = vsub.s32 %v1673, %v1675
        %v1677 = vrot.slane %v1669, %v1676
        %v1679 = vunpack.c.l.s4 1983009808
        %v1680 = vunpack.c.0.s8 %v1679
        %v1681 = vlaneseq
        %v1682 = vshrl.u32 %v1681, 7
        %v1683 = vsub.s32 %v1680, %v1682
        %v1684 = vrot.slane %v1670, %v1683
        %v1685 = vcombine.low %v1677, %v1684
        %v1686 = vcombine.low %v970, %v972
        %v1687 = vcombine.low %v980, %v988
        %v1689 = vunpack.c.l.s4 1983009808
        %v1690 = vunpack.c.0.s8 %v1689
        %v1691 = vlaneseq
        %v1692 = vshrl.u32 %v1691, 7
        %v1693 = vsub.s32 %v1690, %v1692
        %v1694 = vrot.slane %v1686, %v1693
        %v1696 = vunpack.c.l.s4 1983009808
        %v1697 = vunpack.c.0.s8 %v1696
        %v1698 = vlaneseq
        %v1699 = vshrl.u32 %v1698, 7
        %v1700 = vsub.s32 %v1697, %v1699
        %v1701 = vrot.slane %v1687, %v1700
        %v1702 = vcombine.low %v1694, %v1701
        %v1703 = vcombine.low %v987, %v989
        %v1704 = vcombine.low %v996, %v1004
        %v1706 = vunpack.c.l.s4 1983009808
        %v1707 = vunpack.c.0.s8 %v1706
        %v1708 = vlaneseq
        %v1709 = vshrl.u32 %v1708, 7
        %v1710 = vsub.s32 %v1707, %v1709
        %v1711 = vrot.slane %v1703, %v1710
        %v1713 = vunpack.c.l.s4 1983009808
        %v1714 = vunpack.c.0.s8 %v1713
        %v1715 = vlaneseq
        %v1716 = vshrl.u32 %v1715, 7
        %v1717 = vsub.s32 %v1714, %v1716
        %v1718 = vrot.slane %v1704, %v1717
        %v1719 = vcombine.low %v1711, %v1718
        %v1720 = vcombine.low %v1012, %v1011
        %v1721 = vcombine.low %v1013, %v1021
        %v1723 = vunpack.c.l.s4 1983009808
        %v1724 = vunpack.c.0.s8 %v1723
        %v1725 = vlaneseq
        %v1726 = vshrl.u32 %v1725, 7
        %v1727 = vsub.s32 %v1724, %v1726
        %v1728 = vrot.slane %v1720, %v1727
        %v1730 = vunpack.c.l.s4 1983009808
        %v1731 = vunpack.c.0.s8 %v1730
        %v1732 = vlaneseq
        %v1733 = vshrl.u32 %v1732, 7
        %v1734 = vsub.s32 %v1731, %v1733
        %v1735 = vrot.slane %v1721, %v1734
        %v1736 = vcombine.low %v1728, %v1735
        %v1737 = vcombine.low %v1029, %v1028
        %v1738 = vcombine.low %v1030, %v1037
        %v1740 = vunpack.c.l.s4 1983009808
        %v1741 = vunpack.c.0.s8 %v1740
        %v1742 = vlaneseq
        %v1743 = vshrl.u32 %v1742, 7
        %v1744 = vsub.s32 %v1741, %v1743
        %v1745 = vrot.slane %v1737, %v1744
        %v1747 = vunpack.c.l.s4 1983009808
        %v1748 = vunpack.c.0.s8 %v1747
        %v1749 = vlaneseq
        %v1750 = vshrl.u32 %v1749, 7
        %v1751 = vsub.s32 %v1748, %v1750
        %v1752 = vrot.slane %v1738, %v1751
        %v1753 = vcombine.low %v1745, %v1752
        %v1754 = vcombine.low %v1045, %v1053
        %v1755 = vcombine.low %v1052, %v1054
        %v1757 = vunpack.c.l.s4 1983009808
        %v1758 = vunpack.c.0.s8 %v1757
        %v1759 = vlaneseq
        %v1760 = vshrl.u32 %v1759, 7
        %v1761 = vsub.s32 %v1758, %v1760
        %v1762 = vrot.slane %v1754, %v1761
        %v1764 = vunpack.c.l.s4 1983009808
        %v1765 = vunpack.c.0.s8 %v1764
        %v1766 = vlaneseq
        %v1767 = vshrl.u32 %v1766, 7
        %v1768 = vsub.s32 %v1765, %v1767
        %v1769 = vrot.slane %v1755, %v1768
        %v1770 = vcombine.low %v1762, %v1769
        %v1771 = vcombine.low %v1062, %v1070
        %v1772 = vcombine.low %v1069, %v1071
        %v1774 = vunpack.c.l.s4 1983009808
        %v1775 = vunpack.c.0.s8 %v1774
        %v1776 = vlaneseq
        %v1777 = vshrl.u32 %v1776, 7
        %v1778 = vsub.s32 %v1775, %v1777
        %v1779 = vrot.slane %v1771, %v1778
        %v1781 = vunpack.c.l.s4 1983009808
        %v1782 = vunpack.c.0.s8 %v1781
        %v1783 = vlaneseq
        %v1784 = vshrl.u32 %v1783, 7
        %v1785 = vsub.s32 %v1782, %v1784
        %v1786 = vrot.slane %v1772, %v1785
        %v1787 = vcombine.low %v1779, %v1786
        %v1788 = vcombine.low %v1078, %v1086
        %v1789 = vcombine.low %v1094, %v1093
        %v1791 = vunpack.c.l.s4 1983009808
        %v1792 = vunpack.c.0.s8 %v1791
        %v1793 = vlaneseq
        %v1794 = vshrl.u32 %v1793, 7
        %v1795 = vsub.s32 %v1792, %v1794
        %v1796 = vrot.slane %v1788, %v1795
        %v1798 = vunpack.c.l.s4 1983009808
        %v1799 = vunpack.c.0.s8 %v1798
        %v1800 = vlaneseq
        %v1801 = vshrl.u32 %v1800, 7
        %v1802 = vsub.s32 %v1799, %v1801
        %v1803 = vrot.slane %v1789, %v1802
        %v1804 = vcombine.low %v1796, %v1803
        %v1805 = vcombine.low %v1095, %v1103
        %v1806 = vcombine.low %v1111, %v1110
        %v1808 = vunpack.c.l.s4 1983009808
        %v1809 = vunpack.c.0.s8 %v1808
        %v1810 = vlaneseq
        %v1811 = vshrl.u32 %v1810, 7
        %v1812 = vsub.s32 %v1809, %v1811
        %v1813 = vrot.slane %v1805, %v1812
        %v1815 = vunpack.c.l.s4 1983009808
        %v1816 = vunpack.c.0.s8 %v1815
        %v1817 = vlaneseq
        %v1818 = vshrl.u32 %v1817, 7
        %v1819 = vsub.s32 %v1816, %v1818
        %v1820 = vrot.slane %v1806, %v1819
        %v1821 = vcombine.low %v1813, %v1820
        %v1822 = vcombine.low %v1112, %v1119
        %v1823 = vcombine.low %v1127, %v1135
        %v1825 = vunpack.c.l.s4 1983009808
        %v1826 = vunpack.c.0.s8 %v1825
        %v1827 = vlaneseq
        %v1828 = vshrl.u32 %v1827, 7
        %v1829 = vsub.s32 %v1826, %v1828
        %v1830 = vrot.slane %v1822, %v1829
        %v1832 = vunpack.c.l.s4 1983009808
        %v1833 = vunpack.c.0.s8 %v1832
        %v1834 = vlaneseq
        %v1835 = vshrl.u32 %v1834, 7
        %v1836 = vsub.s32 %v1833, %v1835
        %v1837 = vrot.slane %v1823, %v1836
        %v1838 = vcombine.low %v1830, %v1837
        %v1839 = vcombine.low %v1134, %v1136
        %v1840 = vcombine.low %v1144, %v1152
        %v1842 = vunpack.c.l.s4 1983009808
        %v1843 = vunpack.c.0.s8 %v1842
        %v1844 = vlaneseq
        %v1845 = vshrl.u32 %v1844, 7
        %v1846 = vsub.s32 %v1843, %v1845
        %v1847 = vrot.slane %v1839, %v1846
        %v1849 = vunpack.c.l.s4 1983009808
        %v1850 = vunpack.c.0.s8 %v1849
        %v1851 = vlaneseq
        %v1852 = vshrl.u32 %v1851, 7
        %v1853 = vsub.s32 %v1850, %v1852
        %v1854 = vrot.slane %v1840, %v1853
        %v1855 = vcombine.low %v1847, %v1854
        %v1856 = vcombine.low %v1151, %v1153
        %v1857 = vcombine.low %v1160, %v1168
        %v1859 = vunpack.c.l.s4 1983009808
        %v1860 = vunpack.c.0.s8 %v1859
        %v1861 = vlaneseq
        %v1862 = vshrl.u32 %v1861, 7
        %v1863 = vsub.s32 %v1860, %v1862
        %v1864 = vrot.slane %v1856, %v1863
        %v1866 = vunpack.c.l.s4 1983009808
        %v1867 = vunpack.c.0.s8 %v1866
        %v1868 = vlaneseq
        %v1869 = vshrl.u32 %v1868, 7
        %v1870 = vsub.s32 %v1867, %v1869
        %v1871 = vrot.slane %v1857, %v1870
        %v1872 = vcombine.low %v1864, %v1871
        %v1873 = vcombine.low %v1176, %v1175
        %v1874 = vcombine.low %v1177, %v1185
        %v1876 = vunpack.c.l.s4 1983009808
        %v1877 = vunpack.c.0.s8 %v1876
        %v1878 = vlaneseq
        %v1879 = vshrl.u32 %v1878, 7
        %v1880 = vsub.s32 %v1877, %v1879
        %v1881 = vrot.slane %v1873, %v1880
        %v1883 = vunpack.c.l.s4 1983009808
        %v1884 = vunpack.c.0.s8 %v1883
        %v1885 = vlaneseq
        %v1886 = vshrl.u32 %v1885, 7
        %v1887 = vsub.s32 %v1884, %v1886
        %v1888 = vrot.slane %v1874, %v1887
        %v1889 = vcombine.low %v1881, %v1888
        %v1890 = vcombine.low %v1193, %v1192
        %v1891 = vcombine.low %v1194, %v1201
        %v1893 = vunpack.c.l.s4 1983009808
        %v1894 = vunpack.c.0.s8 %v1893
        %v1895 = vlaneseq
        %v1896 = vshrl.u32 %v1895, 7
        %v1897 = vsub.s32 %v1894, %v1896
        %v1898 = vrot.slane %v1890, %v1897
        %v1900 = vunpack.c.l.s4 1983009808
        %v1901 = vunpack.c.0.s8 %v1900
        %v1902 = vlaneseq
        %v1903 = vshrl.u32 %v1902, 7
        %v1904 = vsub.s32 %v1901, %v1903
        %v1905 = vrot.slane %v1891, %v1904
        %v1906 = vcombine.low %v1898, %v1905
        %v1907 = vcombine.low %v1209, %v1217
        %v1908 = vcombine.low %v1216, %v1218
        %v1910 = vunpack.c.l.s4 1983009808
        %v1911 = vunpack.c.0.s8 %v1910
        %v1912 = vlaneseq
        %v1913 = vshrl.u32 %v1912, 7
        %v1914 = vsub.s32 %v1911, %v1913
        %v1915 = vrot.slane %v1907, %v1914
        %v1917 = vunpack.c.l.s4 1983009808
        %v1918 = vunpack.c.0.s8 %v1917
        %v1919 = vlaneseq
        %v1920 = vshrl.u32 %v1919, 7
        %v1921 = vsub.s32 %v1918, %v1920
        %v1922 = vrot.slane %v1908, %v1921
        %v1923 = vcombine.low %v1915, %v1922
        %v1924 = vcombine.low %v1226, %v1234
        %v1925 = vcombine.low %v1233, %v1235
        %v1927 = vunpack.c.l.s4 1983009808
        %v1928 = vunpack.c.0.s8 %v1927
        %v1929 = vlaneseq
        %v1930 = vshrl.u32 %v1929, 7
        %v1931 = vsub.s32 %v1928, %v1930
        %v1932 = vrot.slane %v1924, %v1931
        %v1934 = vunpack.c.l.s4 1983009808
        %v1935 = vunpack.c.0.s8 %v1934
        %v1936 = vlaneseq
        %v1937 = vshrl.u32 %v1936, 7
        %v1938 = vsub.s32 %v1935, %v1937
        %v1939 = vrot.slane %v1925, %v1938
        %v1940 = vcombine.low %v1932, %v1939
        %v1941 = vcombine.low %v1242, %v1250
        %v1942 = vcombine.low %v1258, %v1257
        %v1944 = vunpack.c.l.s4 1983009808
        %v1945 = vunpack.c.0.s8 %v1944
        %v1946 = vlaneseq
        %v1947 = vshrl.u32 %v1946, 7
        %v1948 = vsub.s32 %v1945, %v1947
        %v1949 = vrot.slane %v1941, %v1948
        %v1951 = vunpack.c.l.s4 1983009808
        %v1952 = vunpack.c.0.s8 %v1951
        %v1953 = vlaneseq
        %v1954 = vshrl.u32 %v1953, 7
        %v1955 = vsub.s32 %v1952, %v1954
        %v1956 = vrot.slane %v1942, %v1955
        %v1957 = vcombine.low %v1949, %v1956
        %v1958 = vcombine.low %v1259, %v1267
        %v1959 = vcombine.low %v1275, %v1274
        %v1961 = vunpack.c.l.s4 1983009808
        %v1962 = vunpack.c.0.s8 %v1961
        %v1963 = vlaneseq
        %v1964 = vshrl.u32 %v1963, 7
        %v1965 = vsub.s32 %v1962, %v1964
        %v1966 = vrot.slane %v1958, %v1965
        %v1968 = vunpack.c.l.s4 1983009808
        %v1969 = vunpack.c.0.s8 %v1968
        %v1970 = vlaneseq
        %v1971 = vshrl.u32 %v1970, 7
        %v1972 = vsub.s32 %v1969, %v1971
        %v1973 = vrot.slane %v1959, %v1972
        %v1974 = vcombine.low %v1966, %v1973
        %v1975 = vcombine.low %v1276, %v1283
        %v1976 = vcombine.low %v1291, %v1299
        %v1978 = vunpack.c.l.s4 1983009808
        %v1979 = vunpack.c.0.s8 %v1978
        %v1980 = vlaneseq
        %v1981 = vshrl.u32 %v1980, 7
        %v1982 = vsub.s32 %v1979, %v1981
        %v1983 = vrot.slane %v1975, %v1982
        %v1985 = vunpack.c.l.s4 1983009808
        %v1986 = vunpack.c.0.s8 %v1985
        %v1987 = vlaneseq
        %v1988 = vshrl.u32 %v1987, 7
        %v1989 = vsub.s32 %v1986, %v1988
        %v1990 = vrot.slane %v1976, %v1989
        %v1991 = vcombine.low %v1983, %v1990
        %v1992 = vcombine.low %v1298, %v1300
        %v1993 = vcombine.low %v1308, %v1316
        %v1995 = vunpack.c.l.s4 1983009808
        %v1996 = vunpack.c.0.s8 %v1995
        %v1997 = vlaneseq
        %v1998 = vshrl.u32 %v1997, 7
        %v1999 = vsub.s32 %v1996, %v1998
        %v2000 = vrot.slane %v1992, %v1999
        %v2002 = vunpack.c.l.s4 1983009808
        %v2003 = vunpack.c.0.s8 %v2002
        %v2004 = vlaneseq
        %v2005 = vshrl.u32 %v2004, 7
        %v2006 = vsub.s32 %v2003, %v2005
        %v2007 = vrot.slane %v1993, %v2006
        %v2008 = vcombine.low %v2000, %v2007
        %v2009 = vcombine.low %v1315, %v1317
        %v2010 = vcombine.low %v1324, %v1332
        %v2012 = vunpack.c.l.s4 1983009808
        %v2013 = vunpack.c.0.s8 %v2012
        %v2014 = vlaneseq
        %v2015 = vshrl.u32 %v2014, 7
        %v2016 = vsub.s32 %v2013, %v2015
        %v2017 = vrot.slane %v2009, %v2016
        %v2019 = vunpack.c.l.s4 1983009808
        %v2020 = vunpack.c.0.s8 %v2019
        %v2021 = vlaneseq
        %v2022 = vshrl.u32 %v2021, 7
        %v2023 = vsub.s32 %v2020, %v2022
        %v2024 = vrot.slane %v2010, %v2023
        %v2025 = vcombine.low %v2017, %v2024
        %v2026 = vcombine.low %v1340, %v1339
        %v2027 = vcombine.low %v1341, %v1349
        %v2029 = vunpack.c.l.s4 1983009808
        %v2030 = vunpack.c.0.s8 %v2029
        %v2031 = vlaneseq
        %v2032 = vshrl.u32 %v2031, 7
        %v2033 = vsub.s32 %v2030, %v2032
        %v2034 = vrot.slane %v2026, %v2033
        %v2036 = vunpack.c.l.s4 1983009808
        %v2037 = vunpack.c.0.s8 %v2036
        %v2038 = vlaneseq
        %v2039 = vshrl.u32 %v2038, 7
        %v2040 = vsub.s32 %v2037, %v2039
        %v2041 = vrot.slane %v2027, %v2040
        %v2042 = vcombine.low %v2034, %v2041
        %v2043 = vcombine.low %v1357, %v1356
        %v2044 = vcombine.low %v1358, %v1365
        %v2046 = vunpack.c.l.s4 1983009808
        %v2047 = vunpack.c.0.s8 %v2046
        %v2048 = vlaneseq
        %v2049 = vshrl.u32 %v2048, 7
        %v2050 = vsub.s32 %v2047, %v2049
        %v2051 = vrot.slane %v2043, %v2050
        %v2053 = vunpack.c.l.s4 1983009808
        %v2054 = vunpack.c.0.s8 %v2053
        %v2055 = vlaneseq
        %v2056 = vshrl.u32 %v2055, 7
        %v2057 = vsub.s32 %v2054, %v2056
        %v2058 = vrot.slane %v2044, %v2057
        %v2059 = vcombine.low %v2051, %v2058
        %v2060 = vcombine.low %v1373, %v1381
        %v2061 = vcombine.low %v1380, %v1382
        %v2063 = vunpack.c.l.s4 1983009808
        %v2064 = vunpack.c.0.s8 %v2063
        %v2065 = vlaneseq
        %v2066 = vshrl.u32 %v2065, 7
        %v2067 = vsub.s32 %v2064, %v2066
        %v2068 = vrot.slane %v2060, %v2067
        %v2070 = vunpack.c.l.s4 1983009808
        %v2071 = vunpack.c.0.s8 %v2070
        %v2072 = vlaneseq
        %v2073 = vshrl.u32 %v2072, 7
        %v2074 = vsub.s32 %v2071, %v2073
        %v2075 = vrot.slane %v2061, %v2074
        %v2076 = vcombine.low %v2068, %v2075
        %v2077 = vcombine.low %v1390, %v1398
        %v2078 = vcombine.low %v1397, %v1399
        %v2080 = vunpack.c.l.s4 1983009808
        %v2081 = vunpack.c.0.s8 %v2080
        %v2082 = vlaneseq
        %v2083 = vshrl.u32 %v2082, 7
        %v2084 = vsub.s32 %v2081, %v2083
        %v2085 = vrot.slane %v2077, %v2084
        %v2087 = vunpack.c.l.s4 1983009808
        %v2088 = vunpack.c.0.s8 %v2087
        %v2089 = vlaneseq
        %v2090 = vshrl.u32 %v2089, 7
        %v2091 = vsub.s32 %v2088, %v2090
        %v2092 = vrot.slane %v2078, %v2091
        %v2093 = vcombine.low %v2085, %v2092
        %v2094 = vcombine.low %v1406, %v1414
        %v2095 = vcombine.low %v1422, %v1421
        %v2097 = vunpack.c.l.s4 1983009808
        %v2098 = vunpack.c.0.s8 %v2097
        %v2099 = vlaneseq
        %v2100 = vshrl.u32 %v2099, 7
        %v2101 = vsub.s32 %v2098, %v2100
        %v2102 = vrot.slane %v2094, %v2101
        %v2104 = vunpack.c.l.s4 1983009808
        %v2105 = vunpack.c.0.s8 %v2104
        %v2106 = vlaneseq
        %v2107 = vshrl.u32 %v2106, 7
        %v2108 = vsub.s32 %v2105, %v2107
        %v2109 = vrot.slane %v2095, %v2108
        %v2110 = vcombine.low %v2102, %v2109
        %v2111 = vcombine.low %v1423, %v1431
        %v2112 = vcombine.low %v1439, %v1438
        %v2114 = vunpack.c.l.s4 1983009808
        %v2115 = vunpack.c.0.s8 %v2114
        %v2116 = vlaneseq
        %v2117 = vshrl.u32 %v2116, 7
        %v2118 = vsub.s32 %v2115, %v2117
        %v2119 = vrot.slane %v2111, %v2118
        %v2121 = vunpack.c.l.s4 1983009808
        %v2122 = vunpack.c.0.s8 %v2121
        %v2123 = vlaneseq
        %v2124 = vshrl.u32 %v2123, 7
        %v2125 = vsub.s32 %v2122, %v2124
        %v2126 = vrot.slane %v2112, %v2125
        %v2127 = vcombine.low %v2119, %v2126
        %v2128 = vcombine.low %v1440, %v1447
        %v2130 = vunpack.c.l.s4 1983009808
        %v2131 = vunpack.c.0.s8 %v2130
        %v2132 = vlaneseq
        %v2133 = vshrl.u32 %v2132, 7
        %v2134 = vsub.s32 %v2131, %v2133
        %v2135 = vrot.slane %v2128, %v2134
        %v2177 = vpack.c.bf16 %v1481, %v1464
        %v2178 = vpack.c.bf16 %v1515, %v1498
        %v2179 = vpack.c.bf16 %v1549, %v1532
        %v2180 = vpack.c.bf16 %v1583, %v1566
        %v2181 = vpack.c.bf16 %v1617, %v1600
        %v2182 = vpack.c.bf16 %v1651, %v1634
        %v2183 = vpack.c.bf16 %v1685, %v1668
        %v2184 = vpack.c.bf16 %v1719, %v1702
        %v2185 = vpack.c.bf16 %v1753, %v1736
        %v2186 = vpack.c.bf16 %v1787, %v1770
        %v2187 = vpack.c.bf16 %v1821, %v1804
        %v2188 = vpack.c.bf16 %v1855, %v1838
        %v2189 = vpack.c.bf16 %v1889, %v1872
        %v2190 = vpack.c.bf16 %v1923, %v1906
        %v2191 = vpack.c.bf16 %v1957, %v1940
        %v2192 = vpack.c.bf16 %v1991, %v1974
        %v2193 = vpack.c.bf16 %v2025, %v2008
        %v2194 = vpack.c.bf16 %v2059, %v2042
        %v2195 = vpack.c.bf16 %v2093, %v2076
        %v2196 = vpack.c.bf16 %v2127, %v2110
        %v2197 = vpack.c.bf16 %v2135, %v2135
        %v2198 = vld [vmem:[%s2] sm:$0xf]
        %v2199 = vld [vmem:[%s2 + $0x4] sm:$0xf]
        %v2202 = vunpack.c.l.b16 %v2198
        %v2203 = vunpack.c.l.b16 %v2199
        %v2204 = vpack.c.b16 %v2203, %v2202
        %vm2206 = vcmask 130048
        %v2208 = vsel %vm2206, %v2177, 0
        %v2211 = vsel %vm2206, %v2178, 0
        %v2214 = vsel %vm2206, %v2179, 0
        %v2217 = vsel %vm2206, %v2180, 0
        %v2220 = vsel %vm2206, %v2181, 0
        %v2223 = vsel %vm2206, %v2182, 0
        %v2226 = vsel %vm2206, %v2183, 0
        %v2229 = vsel %vm2206, %v2184, 0
        %v2232 = vsel %vm2206, %v2185, 0
        %v2235 = vsel %vm2206, %v2186, 0
        %v2238 = vsel %vm2206, %v2187, 0
        %v2241 = vsel %vm2206, %v2188, 0
        %v2244 = vsel %vm2206, %v2189, 0
        %v2247 = vsel %vm2206, %v2190, 0
        %v2250 = vsel %vm2206, %v2191, 0
        %v2253 = vsel %vm2206, %v2192, 0
        %v2256 = vsel %vm2206, %v2193, 0
        %v2259 = vsel %vm2206, %v2194, 0
        %v2262 = vsel %vm2206, %v2195, 0
        %v2265 = vsel %vm2206, %v2196, 0
        %v2268 = vsel %vm2206, %v2197, 0
        %2270 = vmatprep.subr.bf16.mxu0 0
        %2271 = vmatpush1.bf16.msra.mxu0 %v2204
        %2272 = vmatprep.subr.bf16.mxu0 0
        %2273 = vmatpush1.bf16.msra.mxu0 0
        %2274 = vmatprep.subr.bf16.mxu0 0
        %2275 = vmatpush1.bf16.msra.mxu0 0
        %2276 = vmatprep.subr.bf16.mxu0 0
        %2277 = vmatpush1.bf16.msra.mxu0 0
        %2278 = vmatprep.subr.bf16.mxu0 0
        %2279 = vmatpush1.bf16.msra.mxu0 0
        %2280 = vmatprep.subr.bf16.mxu0 0
        %2281 = vmatpush1.bf16.msra.mxu0 0
        %2282 = vmatprep.subr.bf16.mxu0 0
        %2283 = vmatpush1.bf16.msra.mxu0 0
        %2284 = vmatprep.subr.bf16.mxu0 0
        %2285 = vmatpush1.bf16.msra.mxu0 0
        %2286 = vmatprep.subr.bf16.mxu0 0
        %2287 = vmatpush1.bf16.msra.mxu0 0
        %2288 = vmatprep.subr.bf16.mxu0 0
        %2289 = vmatpush1.bf16.msra.mxu0 0
        %2290 = vmatprep.subr.bf16.mxu0 0
        %2291 = vmatpush1.bf16.msra.mxu0 0
        %2292 = vmatprep.subr.bf16.mxu0 0
        %2293 = vmatpush1.bf16.msra.mxu0 0
        %2294 = vmatprep.subr.bf16.mxu0 0
        %2295 = vmatpush1.bf16.msra.mxu0 0
        %2296 = vmatprep.subr.bf16.mxu0 0
        %2297 = vmatpush1.bf16.msra.mxu0 0
        %2298 = vmatprep.subr.bf16.mxu0 0
        %2299 = vmatpush1.bf16.msra.mxu0 0
        %2300 = vmatprep.subr.bf16.mxu0 0
        %2301 = vmatpush1.bf16.msra.mxu0 0
        %2302 = vmatprep.mubr.bf16.mxu0 0
        %2303 = vmatmul.mubr.bf16.gmra.mrb[0].mxu0 %v2208
        %v2304 = vpop.f32.mrb[0].mxu0
        %v2305 = vadd.f32 0.0, %v2304
        %v2306 = vpop.f32.mrb[0].mxu0
        %v2307 = vpop.f32.mrb[0].mxu0
        %v2308 = vadd.f32 0.0, %v2307
        %v2309 = vpop.f32.mrb[0].mxu0
        %2310 = vmatprep.mubr.bf16.mxu0 0
        %2311 = vmatmul.mubr.bf16.gmra.mrb[0].mxu0 %v2211
        %v2312 = vpop.f32.mrb[0].mxu0
        %v2313 = vadd.f32 0.0, %v2312
        %v2314 = vpop.f32.mrb[0].mxu0
        %v2315 = vpop.f32.mrb[0].mxu0
        %v2316 = vadd.f32 0.0, %v2315
        %v2317 = vpop.f32.mrb[0].mxu0
        %2318 = vmatprep.mubr.bf16.mxu0 0
        %2319 = vmatmul.mubr.bf16.gmra.mrb[0].mxu0 %v2214
        %v2320 = vpop.f32.mrb[0].mxu0
        %v2321 = vadd.f32 0.0, %v2320
        %v2322 = vpop.f32.mrb[0].mxu0
        %v2323 = vpop.f32.mrb[0].mxu0
        %v2324 = vadd.f32 0.0, %v2323
        %v2325 = vpop.f32.mrb[0].mxu0
        %2326 = vmatprep.mubr.bf16.mxu0 0
        %2327 = vmatmul.mubr.bf16.gmra.mrb[0].mxu0 %v2217
        %v2328 = vpop.f32.mrb[0].mxu0
        %v2329 = vadd.f32 0.0, %v2328
        %v2330 = vpop.f32.mrb[0].mxu0
        %v2331 = vpop.f32.mrb[0].mxu0
        %v2332 = vadd.f32 0.0, %v2331
        %v2333 = vpop.f32.mrb[0].mxu0
        %2334 = vmatprep.mubr.bf16.mxu0 0
        %2335 = vmatmul.mubr.bf16.gmra.mrb[0].mxu0 %v2220
        %v2336 = vpop.f32.mrb[0].mxu0
        %v2337 = vadd.f32 0.0, %v2336
        %v2338 = vpop.f32.mrb[0].mxu0
        %v2339 = vpop.f32.mrb[0].mxu0
        %v2340 = vadd.f32 0.0, %v2339
        %v2341 = vpop.f32.mrb[0].mxu0
        %2342 = vmatprep.mubr.bf16.mxu0 0
        %2343 = vmatmul.mubr.bf16.gmra.mrb[0].mxu0 %v2223
        %v2344 = vpop.f32.mrb[0].mxu0
        %v2345 = vadd.f32 0.0, %v2344
        %v2346 = vpop.f32.mrb[0].mxu0
        %v2347 = vpop.f32.mrb[0].mxu0
        %v2348 = vadd.f32 0.0, %v2347
        %v2349 = vpop.f32.mrb[0].mxu0
        %2350 = vmatprep.mubr.bf16.mxu0 0
        %2351 = vmatmul.mubr.bf16.gmra.mrb[0].mxu0 %v2226
        %v2352 = vpop.f32.mrb[0].mxu0
        %v2353 = vadd.f32 0.0, %v2352
        %v2354 = vpop.f32.mrb[0].mxu0
        %v2355 = vpop.f32.mrb[0].mxu0
        %v2356 = vadd.f32 0.0, %v2355
        %v2357 = vpop.f32.mrb[0].mxu0
        %2358 = vmatprep.mubr.bf16.mxu0 0
        %2359 = vmatmul.mubr.bf16.gmra.mrb[0].mxu0 %v2229
        %v2360 = vpop.f32.mrb[0].mxu0
        %v2361 = vadd.f32 0.0, %v2360
        %v2362 = vpop.f32.mrb[0].mxu0
        %v2363 = vpop.f32.mrb[0].mxu0
        %v2364 = vadd.f32 0.0, %v2363
        %v2365 = vpop.f32.mrb[0].mxu0
        %2366 = vmatprep.mubr.bf16.mxu0 0
        %2367 = vmatmul.mubr.bf16.gmra.mrb[0].mxu0 %v2232
        %v2368 = vpop.f32.mrb[0].mxu0
        %v2369 = vadd.f32 0.0, %v2368
        %v2370 = vpop.f32.mrb[0].mxu0
        %v2371 = vpop.f32.mrb[0].mxu0
        %v2372 = vadd.f32 0.0, %v2371
        %v2373 = vpop.f32.mrb[0].mxu0
        %2374 = vmatprep.mubr.bf16.mxu0 0
        %2375 = vmatmul.mubr.bf16.gmra.mrb[0].mxu0 %v2235
        %v2376 = vpop.f32.mrb[0].mxu0
        %v2377 = vadd.f32 0.0, %v2376
        %v2378 = vpop.f32.mrb[0].mxu0
        %v2379 = vpop.f32.mrb[0].mxu0
        %v2380 = vadd.f32 0.0, %v2379
        %v2381 = vpop.f32.mrb[0].mxu0
        %2382 = vmatprep.mubr.bf16.mxu0 0
        %2383 = vmatmul.mubr.bf16.gmra.mrb[0].mxu0 %v2238
        %v2384 = vpop.f32.mrb[0].mxu0
        %v2385 = vadd.f32 0.0, %v2384
        %v2386 = vpop.f32.mrb[0].mxu0
        %v2387 = vpop.f32.mrb[0].mxu0
        %v2388 = vadd.f32 0.0, %v2387
        %v2389 = vpop.f32.mrb[0].mxu0
        %2390 = vmatprep.mubr.bf16.mxu0 0
        %2391 = vmatmul.mubr.bf16.gmra.mrb[0].mxu0 %v2241
        %v2392 = vpop.f32.mrb[0].mxu0
        %v2393 = vadd.f32 0.0, %v2392
        %v2394 = vpop.f32.mrb[0].mxu0
        %v2395 = vpop.f32.mrb[0].mxu0
        %v2396 = vadd.f32 0.0, %v2395
        %v2397 = vpop.f32.mrb[0].mxu0
        %2398 = vmatprep.mubr.bf16.mxu0 0
        %2399 = vmatmul.mubr.bf16.gmra.mrb[0].mxu0 %v2244
        %v2400 = vpop.f32.mrb[0].mxu0
        %v2401 = vadd.f32 0.0, %v2400
        %v2402 = vpop.f32.mrb[0].mxu0
        %v2403 = vpop.f32.mrb[0].mxu0
        %v2404 = vadd.f32 0.0, %v2403
        %v2405 = vpop.f32.mrb[0].mxu0
        %2406 = vmatprep.mubr.bf16.mxu0 0
        %2407 = vmatmul.mubr.bf16.gmra.mrb[0].mxu0 %v2247
        %v2408 = vpop.f32.mrb[0].mxu0
        %v2409 = vadd.f32 0.0, %v2408
        %v2410 = vpop.f32.mrb[0].mxu0
        %v2411 = vpop.f32.mrb[0].mxu0
        %v2412 = vadd.f32 0.0, %v2411
        %v2413 = vpop.f32.mrb[0].mxu0
        %2414 = vmatprep.mubr.bf16.mxu0 0
        %2415 = vmatmul.mubr.bf16.gmra.mrb[0].mxu0 %v2250
        %v2416 = vpop.f32.mrb[0].mxu0
        %v2417 = vadd.f32 0.0, %v2416
        %v2418 = vpop.f32.mrb[0].mxu0
        %v2419 = vpop.f32.mrb[0].mxu0
        %v2420 = vadd.f32 0.0, %v2419
        %v2421 = vpop.f32.mrb[0].mxu0
        %2422 = vmatprep.mubr.bf16.mxu0 0
        %2423 = vmatmul.mubr.bf16.gmra.mrb[0].mxu0 %v2253
        %v2424 = vpop.f32.mrb[0].mxu0
        %v2425 = vadd.f32 0.0, %v2424
        %v2426 = vpop.f32.mrb[0].mxu0
        %v2427 = vpop.f32.mrb[0].mxu0
        %v2428 = vadd.f32 0.0, %v2427
        %v2429 = vpop.f32.mrb[0].mxu0
        %2430 = vmatprep.mubr.bf16.mxu0 0
        %2431 = vmatmul.mubr.bf16.gmra.mrb[0].mxu0 %v2256
        %v2432 = vpop.f32.mrb[0].mxu0
        %v2433 = vadd.f32 0.0, %v2432
        %v2434 = vpop.f32.mrb[0].mxu0
        %v2435 = vpop.f32.mrb[0].mxu0
        %v2436 = vadd.f32 0.0, %v2435
        %v2437 = vpop.f32.mrb[0].mxu0
        %2438 = vmatprep.mubr.bf16.mxu0 0
        %2439 = vmatmul.mubr.bf16.gmra.mrb[0].mxu0 %v2259
        %v2440 = vpop.f32.mrb[0].mxu0
        %v2441 = vadd.f32 0.0, %v2440
        %v2442 = vpop.f32.mrb[0].mxu0
        %v2443 = vpop.f32.mrb[0].mxu0
        %v2444 = vadd.f32 0.0, %v2443
        %v2445 = vpop.f32.mrb[0].mxu0
        %2446 = vmatprep.mubr.bf16.mxu0 0
        %2447 = vmatmul.mubr.bf16.gmra.mrb[0].mxu0 %v2262
        %v2448 = vpop.f32.mrb[0].mxu0
        %v2449 = vadd.f32 0.0, %v2448
        %v2450 = vpop.f32.mrb[0].mxu0
        %v2451 = vpop.f32.mrb[0].mxu0
        %v2452 = vadd.f32 0.0, %v2451
        %v2453 = vpop.f32.mrb[0].mxu0
        %2454 = vmatprep.mubr.bf16.mxu0 0
        %2455 = vmatmul.mubr.bf16.gmra.mrb[0].mxu0 %v2265
        %v2456 = vpop.f32.mrb[0].mxu0
        %v2457 = vadd.f32 0.0, %v2456
        %v2458 = vpop.f32.mrb[0].mxu0
        %v2459 = vpop.f32.mrb[0].mxu0
        %v2460 = vadd.f32 0.0, %v2459
        %v2461 = vpop.f32.mrb[0].mxu0
        %2462 = vmatprep.mubr.bf16.mxu0 0
        %2463 = vmatmul.mubr.bf16.gmra.mrb[0].mxu0 %v2268
        %v2464 = vpop.f32.mrb[0].mxu0
        %v2465 = vadd.f32 0.0, %v2464
        %v2466 = vpop.f32.mrb[0].mxu0
        %v2467 = vpop.f32.mrb[0].mxu0
        %v2468 = vpop.f32.mrb[0].mxu0
        %2469 = vdwg.mxu0
        %v2470 = vld [vmem:[%s3] sm:$0x1]
        %v2472 = vlaneseq
        %v2473 = vshrl.u32 %v2472, 7
        %v2474 = vsub.s32 0, %v2473
        %v2475 = vrot.slane %v2470, %v2474
        %v2477 = vmul.f32 %v2305, %v2475
        %v2478 = vmul.f32 %v2308, %v2475
        %v2479 = vmul.f32 %v2313, %v2475
        %v2480 = vmul.f32 %v2316, %v2475
        %v2481 = vmul.f32 %v2321, %v2475
        %v2482 = vmul.f32 %v2324, %v2475
        %v2483 = vmul.f32 %v2329, %v2475
        %v2484 = vmul.f32 %v2332, %v2475
        %v2485 = vmul.f32 %v2337, %v2475
        %v2486 = vmul.f32 %v2340, %v2475
        %v2487 = vmul.f32 %v2345, %v2475
        %v2488 = vmul.f32 %v2348, %v2475
        %v2489 = vmul.f32 %v2353, %v2475
        %v2490 = vmul.f32 %v2356, %v2475
        %v2491 = vmul.f32 %v2361, %v2475
        %v2492 = vmul.f32 %v2364, %v2475
        %v2493 = vmul.f32 %v2369, %v2475
        %v2494 = vmul.f32 %v2372, %v2475
        %v2495 = vmul.f32 %v2377, %v2475
        %v2496 = vmul.f32 %v2380, %v2475
        %v2497 = vmul.f32 %v2385, %v2475
        %v2498 = vmul.f32 %v2388, %v2475
        %v2499 = vmul.f32 %v2393, %v2475
        %v2500 = vmul.f32 %v2396, %v2475
        %v2501 = vmul.f32 %v2401, %v2475
        %v2502 = vmul.f32 %v2404, %v2475
        %v2503 = vmul.f32 %v2409, %v2475
        %v2504 = vmul.f32 %v2412, %v2475
        %v2505 = vmul.f32 %v2417, %v2475
        %v2506 = vmul.f32 %v2420, %v2475
        %v2507 = vmul.f32 %v2425, %v2475
        %v2508 = vmul.f32 %v2428, %v2475
        %v2509 = vmul.f32 %v2433, %v2475
        %v2510 = vmul.f32 %v2436, %v2475
        %v2511 = vmul.f32 %v2441, %v2475
        %v2512 = vmul.f32 %v2444, %v2475
        %v2513 = vmul.f32 %v2449, %v2475
        %v2514 = vmul.f32 %v2452, %v2475
        %v2515 = vmul.f32 %v2457, %v2475
        %v2516 = vmul.f32 %v2460, %v2475
        %v2517 = vmul.f32 %v2465, %v2475
        %v2518 = vld [vmem:[%s4] sm:$0x1]
        %v2520 = vlaneseq
        %v2521 = vshrl.u32 %v2520, 7
        %v2522 = vsub.s32 0, %v2521
        %v2523 = vrot.slane %v2518, %v2522
        %v2525 = vadd.f32 %v2477, %v2523
        %v2526 = vadd.f32 %v2478, %v2523
        %v2527 = vadd.f32 %v2479, %v2523
        %v2528 = vadd.f32 %v2480, %v2523
        %v2529 = vadd.f32 %v2481, %v2523
        %v2530 = vadd.f32 %v2482, %v2523
        %v2531 = vadd.f32 %v2483, %v2523
        %v2532 = vadd.f32 %v2484, %v2523
        %v2533 = vadd.f32 %v2485, %v2523
        %v2534 = vadd.f32 %v2486, %v2523
        %v2535 = vadd.f32 %v2487, %v2523
        %v2536 = vadd.f32 %v2488, %v2523
        %v2537 = vadd.f32 %v2489, %v2523
        %v2538 = vadd.f32 %v2490, %v2523
        %v2539 = vadd.f32 %v2491, %v2523
        %v2540 = vadd.f32 %v2492, %v2523
        %v2541 = vadd.f32 %v2493, %v2523
        %v2542 = vadd.f32 %v2494, %v2523
        %v2543 = vadd.f32 %v2495, %v2523
        %v2544 = vadd.f32 %v2496, %v2523
        %v2545 = vadd.f32 %v2497, %v2523
        %v2546 = vadd.f32 %v2498, %v2523
        %v2547 = vadd.f32 %v2499, %v2523
        %v2548 = vadd.f32 %v2500, %v2523
        %v2549 = vadd.f32 %v2501, %v2523
        %v2550 = vadd.f32 %v2502, %v2523
        %v2551 = vadd.f32 %v2503, %v2523
        %v2552 = vadd.f32 %v2504, %v2523
        %v2553 = vadd.f32 %v2505, %v2523
        %v2554 = vadd.f32 %v2506, %v2523
        %v2555 = vadd.f32 %v2507, %v2523
        %v2556 = vadd.f32 %v2508, %v2523
        %v2557 = vadd.f32 %v2509, %v2523
        %v2558 = vadd.f32 %v2510, %v2523
        %v2559 = vadd.f32 %v2511, %v2523
        %v2560 = vadd.f32 %v2512, %v2523
        %v2561 = vadd.f32 %v2513, %v2523
        %v2562 = vadd.f32 %v2514, %v2523
        %v2563 = vadd.f32 %v2515, %v2523
        %v2564 = vadd.f32 %v2516, %v2523
        %v2565 = vadd.f32 %v2517, %v2523
        %v2566 = vmax.f32 %v2525, 0.0
        %v2567 = vmax.f32 %v2526, 0.0
        %v2568 = vmax.f32 %v2527, 0.0
        %v2569 = vmax.f32 %v2528, 0.0
        %v2570 = vmax.f32 %v2529, 0.0
        %v2571 = vmax.f32 %v2530, 0.0
        %v2572 = vmax.f32 %v2531, 0.0
        %v2573 = vmax.f32 %v2532, 0.0
        %v2574 = vmax.f32 %v2533, 0.0
        %v2575 = vmax.f32 %v2534, 0.0
        %v2576 = vmax.f32 %v2535, 0.0
        %v2577 = vmax.f32 %v2536, 0.0
        %v2578 = vmax.f32 %v2537, 0.0
        %v2579 = vmax.f32 %v2538, 0.0
        %v2580 = vmax.f32 %v2539, 0.0
        %v2581 = vmax.f32 %v2540, 0.0
        %v2582 = vmax.f32 %v2541, 0.0
        %v2583 = vmax.f32 %v2542, 0.0
        %v2584 = vmax.f32 %v2543, 0.0
        %v2585 = vmax.f32 %v2544, 0.0
        %v2586 = vmax.f32 %v2545, 0.0
        %v2587 = vmax.f32 %v2546, 0.0
        %v2588 = vmax.f32 %v2547, 0.0
        %v2589 = vmax.f32 %v2548, 0.0
        %v2590 = vmax.f32 %v2549, 0.0
        %v2591 = vmax.f32 %v2550, 0.0
        %v2592 = vmax.f32 %v2551, 0.0
        %v2593 = vmax.f32 %v2552, 0.0
        %v2594 = vmax.f32 %v2553, 0.0
        %v2595 = vmax.f32 %v2554, 0.0
        %v2596 = vmax.f32 %v2555, 0.0
        %v2597 = vmax.f32 %v2556, 0.0
        %v2598 = vmax.f32 %v2557, 0.0
        %v2599 = vmax.f32 %v2558, 0.0
        %v2600 = vmax.f32 %v2559, 0.0
        %v2601 = vmax.f32 %v2560, 0.0
        %v2602 = vmax.f32 %v2561, 0.0
        %v2603 = vmax.f32 %v2562, 0.0
        %v2604 = vmax.f32 %v2563, 0.0
        %v2605 = vmax.f32 %v2564, 0.0
        %v2606 = vmax.f32 %v2565, 0.0
        %v2607 = vld [vmem:[%s1] sm:$0xff]
        %v2608 = vld [vmem:[%s1 + $0x8] sm:$0xff]
        %v2609 = vld [vmem:[%s1 + $0x10] sm:$0xff]
        %v2610 = vld [vmem:[%s1 + $0x18] sm:$0xff]
        %v2611 = vld [vmem:[%s1 + $0x20] sm:$0xff]
        %v2612 = vld [vmem:[%s1 + $0x28] sm:$0xff]
        %v2613 = vld [vmem:[%s1 + $0x30] sm:$0xff]
        %v2614 = vld [vmem:[%s1 + $0x38] sm:$0xff]
        %v2615 = vld [vmem:[%s1 + $0x40] sm:$0xff]
        %v2616 = vld [vmem:[%s1 + $0x48] sm:$0xff]
        %v2617 = vld [vmem:[%s1 + $0x50] sm:$0xff]
        %v2618 = vld [vmem:[%s1 + $0x58] sm:$0xff]
        %v2619 = vld [vmem:[%s1 + $0x60] sm:$0xff]
        %v2620 = vld [vmem:[%s1 + $0x68] sm:$0xff]
        %v2621 = vld [vmem:[%s1 + $0x70] sm:$0xff]
        %v2622 = vld [vmem:[%s1 + $0x78] sm:$0xff]
        %v2623 = vld [vmem:[%s1 + $0x80] sm:$0xff]
        %v2624 = vld [vmem:[%s1 + $0x88] sm:$0xff]
        %v2625 = vld [vmem:[%s1 + $0x90] sm:$0xff]
        %v2626 = vld [vmem:[%s1 + $0x98] sm:$0xff]
        %v2627 = vld [vmem:[%s1 + $0xa0] sm:$0xff]
        %v2628 = vld [vmem:[%s1 + $0xa8] sm:$0xff]
        %v2629 = vld [vmem:[%s1 + $0xb0] sm:$0xff]
        %v2630 = vld [vmem:[%s1 + $0xb8] sm:$0xff]
        %v2631 = vld [vmem:[%s1 + $0xc0] sm:$0xff]
        %v2632 = vld [vmem:[%s1 + $0xc8] sm:$0xff]
        %v2633 = vld [vmem:[%s1 + $0xd0] sm:$0xff]
        %v2634 = vld [vmem:[%s1 + $0xd8] sm:$0xff]
        %v2635 = vld [vmem:[%s1 + $0xe0] sm:$0xff]
        %v2636 = vld [vmem:[%s1 + $0xe8] sm:$0xff]
        %v2637 = vld [vmem:[%s1 + $0xf0] sm:$0xff]
        %v2638 = vld [vmem:[%s1 + $0xf8] sm:$0xff]
        %v2639 = vld [vmem:[%s1 + $0x100] sm:$0xff]
        %v2640 = vld [vmem:[%s1 + $0x108] sm:$0xff]
        %v2641 = vld [vmem:[%s1 + $0x110] sm:$0xff]
        %v2642 = vld [vmem:[%s1 + $0x118] sm:$0xff]
        %v2643 = vld [vmem:[%s1 + $0x120] sm:$0xff]
        %v2644 = vld [vmem:[%s1 + $0x128] sm:$0xff]
        %v2645 = vld [vmem:[%s1 + $0x130] sm:$0xff]
        %v2646 = vld [vmem:[%s1 + $0x138] sm:$0xff]
        %v2647 = vld [vmem:[%s1 + $0x140] sm:$0xf]
        %2649 = vset.pattern.permute.xlu0 0
        %2650 = vperm.xlu0 %2649, %v2607
        %v2651 = vpop.permute.xlu0 %2650
        %2654 = vset.pattern.permute.xlu0 0
        %2655 = vperm.xlu0 %2654, %v2608
        %v2656 = vpop.permute.xlu0 %2655
        %2659 = vset.pattern.permute.xlu0 0
        %2660 = vperm.xlu0 %2659, %v2609
        %v2661 = vpop.permute.xlu0 %2660
        %2664 = vset.pattern.permute.xlu0 0
        %2665 = vperm.xlu0 %2664, %v2610
        %v2666 = vpop.permute.xlu0 %2665
        %2669 = vset.pattern.permute.xlu0 0
        %2670 = vperm.xlu0 %2669, %v2611
        %v2671 = vpop.permute.xlu0 %2670
        %2674 = vset.pattern.permute.xlu0 0
        %2675 = vperm.xlu0 %2674, %v2612
        %v2676 = vpop.permute.xlu0 %2675
        %2679 = vset.pattern.permute.xlu0 0
        %2680 = vperm.xlu0 %2679, %v2613
        %v2681 = vpop.permute.xlu0 %2680
        %2684 = vset.pattern.permute.xlu0 0
        %2685 = vperm.xlu0 %2684, %v2614
        %v2686 = vpop.permute.xlu0 %2685
        %2689 = vset.pattern.permute.xlu0 0
        %2690 = vperm.xlu0 %2689, %v2615
        %v2691 = vpop.permute.xlu0 %2690
        %2694 = vset.pattern.permute.xlu0 0
        %2695 = vperm.xlu0 %2694, %v2616
        %v2696 = vpop.permute.xlu0 %2695
        %2699 = vset.pattern.permute.xlu0 0
        %2700 = vperm.xlu0 %2699, %v2617
        %v2701 = vpop.permute.xlu0 %2700
        %2704 = vset.pattern.permute.xlu0 0
        %2705 = vperm.xlu0 %2704, %v2618
        %v2706 = vpop.permute.xlu0 %2705
        %2709 = vset.pattern.permute.xlu0 0
        %2710 = vperm.xlu0 %2709, %v2619
        %v2711 = vpop.permute.xlu0 %2710
        %2714 = vset.pattern.permute.xlu0 0
        %2715 = vperm.xlu0 %2714, %v2620
        %v2716 = vpop.permute.xlu0 %2715
        %2719 = vset.pattern.permute.xlu0 0
        %2720 = vperm.xlu0 %2719, %v2621
        %v2721 = vpop.permute.xlu0 %2720
        %2724 = vset.pattern.permute.xlu0 0
        %2725 = vperm.xlu0 %2724, %v2622
        %v2726 = vpop.permute.xlu0 %2725
        %2729 = vset.pattern.permute.xlu0 0
        %2730 = vperm.xlu0 %2729, %v2623
        %v2731 = vpop.permute.xlu0 %2730
        %2734 = vset.pattern.permute.xlu0 0
        %2735 = vperm.xlu0 %2734, %v2624
        %v2736 = vpop.permute.xlu0 %2735
        %2739 = vset.pattern.permute.xlu0 0
        %2740 = vperm.xlu0 %2739, %v2625
        %v2741 = vpop.permute.xlu0 %2740
        %2744 = vset.pattern.permute.xlu0 0
        %2745 = vperm.xlu0 %2744, %v2626
        %v2746 = vpop.permute.xlu0 %2745
        %2749 = vset.pattern.permute.xlu0 0
        %2750 = vperm.xlu0 %2749, %v2627
        %v2751 = vpop.permute.xlu0 %2750
        %2754 = vset.pattern.permute.xlu0 0
        %2755 = vperm.xlu0 %2754, %v2628
        %v2756 = vpop.permute.xlu0 %2755
        %2759 = vset.pattern.permute.xlu0 0
        %2760 = vperm.xlu0 %2759, %v2629
        %v2761 = vpop.permute.xlu0 %2760
        %2764 = vset.pattern.permute.xlu0 0
        %2765 = vperm.xlu0 %2764, %v2630
        %v2766 = vpop.permute.xlu0 %2765
        %2769 = vset.pattern.permute.xlu0 0
        %2770 = vperm.xlu0 %2769, %v2631
        %v2771 = vpop.permute.xlu0 %2770
        %2774 = vset.pattern.permute.xlu0 0
        %2775 = vperm.xlu0 %2774, %v2632
        %v2776 = vpop.permute.xlu0 %2775
        %2779 = vset.pattern.permute.xlu0 0
        %2780 = vperm.xlu0 %2779, %v2633
        %v2781 = vpop.permute.xlu0 %2780
        %2784 = vset.pattern.permute.xlu0 0
        %2785 = vperm.xlu0 %2784, %v2634
        %v2786 = vpop.permute.xlu0 %2785
        %2789 = vset.pattern.permute.xlu0 0
        %2790 = vperm.xlu0 %2789, %v2635
        %v2791 = vpop.permute.xlu0 %2790
        %2794 = vset.pattern.permute.xlu0 0
        %2795 = vperm.xlu0 %2794, %v2636
        %v2796 = vpop.permute.xlu0 %2795
        %2799 = vset.pattern.permute.xlu0 0
        %2800 = vperm.xlu0 %2799, %v2637
        %v2801 = vpop.permute.xlu0 %2800
        %2804 = vset.pattern.permute.xlu0 0
        %2805 = vperm.xlu0 %2804, %v2638
        %v2806 = vpop.permute.xlu0 %2805
        %2809 = vset.pattern.permute.xlu0 0
        %2810 = vperm.xlu0 %2809, %v2639
        %v2811 = vpop.permute.xlu0 %2810
        %2814 = vset.pattern.permute.xlu0 0
        %2815 = vperm.xlu0 %2814, %v2640
        %v2816 = vpop.permute.xlu0 %2815
        %2819 = vset.pattern.permute.xlu0 0
        %2820 = vperm.xlu0 %2819, %v2641
        %v2821 = vpop.permute.xlu0 %2820
        %2824 = vset.pattern.permute.xlu0 0
        %2825 = vperm.xlu0 %2824, %v2642
        %v2826 = vpop.permute.xlu0 %2825
        %2829 = vset.pattern.permute.xlu0 0
        %2830 = vperm.xlu0 %2829, %v2643
        %v2831 = vpop.permute.xlu0 %2830
        %2834 = vset.pattern.permute.xlu0 0
        %2835 = vperm.xlu0 %2834, %v2644
        %v2836 = vpop.permute.xlu0 %2835
        %2839 = vset.pattern.permute.xlu0 0
        %2840 = vperm.xlu0 %2839, %v2645
        %v2841 = vpop.permute.xlu0 %2840
        %2844 = vset.pattern.permute.xlu0 0
        %2845 = vperm.xlu0 %2844, %v2646
        %v2846 = vpop.permute.xlu0 %2845
        %2849 = vset.pattern.permute.xlu0 0
        %2850 = vperm.xlu0 %2849, %v2647
        %v2851 = vpop.permute.xlu0 %2850
        %v2853 = vmul.f32 %v2566, %v2651
        %v2854 = vmul.f32 %v2567, %v2656
        %v2855 = vmul.f32 %v2568, %v2661
        %v2856 = vmul.f32 %v2569, %v2666
        %v2857 = vmul.f32 %v2570, %v2671
        %v2858 = vmul.f32 %v2571, %v2676
        %v2859 = vmul.f32 %v2572, %v2681
        %v2860 = vmul.f32 %v2573, %v2686
        %v2861 = vmul.f32 %v2574, %v2691
        %v2862 = vmul.f32 %v2575, %v2696
        %v2863 = vmul.f32 %v2576, %v2701
        %v2864 = vmul.f32 %v2577, %v2706
        %v2865 = vmul.f32 %v2578, %v2711
        %v2866 = vmul.f32 %v2579, %v2716
        %v2867 = vmul.f32 %v2580, %v2721
        %v2868 = vmul.f32 %v2581, %v2726
        %v2869 = vmul.f32 %v2582, %v2731
        %v2870 = vmul.f32 %v2583, %v2736
        %v2871 = vmul.f32 %v2584, %v2741
        %v2872 = vmul.f32 %v2585, %v2746
        %v2873 = vmul.f32 %v2586, %v2751
        %v2874 = vmul.f32 %v2587, %v2756
        %v2875 = vmul.f32 %v2588, %v2761
        %v2876 = vmul.f32 %v2589, %v2766
        %v2877 = vmul.f32 %v2590, %v2771
        %v2878 = vmul.f32 %v2591, %v2776
        %v2879 = vmul.f32 %v2592, %v2781
        %v2880 = vmul.f32 %v2593, %v2786
        %v2881 = vmul.f32 %v2594, %v2791
        %v2882 = vmul.f32 %v2595, %v2796
        %v2883 = vmul.f32 %v2596, %v2801
        %v2884 = vmul.f32 %v2597, %v2806
        %v2885 = vmul.f32 %v2598, %v2811
        %v2886 = vmul.f32 %v2599, %v2816
        %v2887 = vmul.f32 %v2600, %v2821
        %v2888 = vmul.f32 %v2601, %v2826
        %v2889 = vmul.f32 %v2602, %v2831
        %v2890 = vmul.f32 %v2603, %v2836
        %v2891 = vmul.f32 %v2604, %v2841
        %v2892 = vmul.f32 %v2605, %v2846
        %v2893 = vmul.f32 %v2606, %v2851
        %v2935 = vcombine.high %v2853, %v2853
        %v2937 = vunpack.c.l.s4 1983009808
        %v2938 = vunpack.c.0.s8 %v2937
        %v2939 = vlaneseq
        %v2940 = vshrl.u32 %v2939, 7
        %v2941 = vsub.s32 %v2938, %v2940
        %v2942 = vrot.slane %v2853, %v2941
        %v2944 = vunpack.c.l.s4 1983009808
        %v2945 = vunpack.c.0.s8 %v2944
        %v2946 = vlaneseq
        %v2947 = vshrl.u32 %v2946, 7
        %v2948 = vsub.s32 %v2945, %v2947
        %v2949 = vrot.slane %v2935, %v2948
        %v2950 = vcombine.high %v2942, %v2942
        %v2951 = vcombine.high %v2949, %v2949
        %v2952 = vcombine.high %v2854, %v2854
        %v2954 = vunpack.c.l.s4 1983009808
        %v2955 = vunpack.c.0.s8 %v2954
        %v2956 = vlaneseq
        %v2957 = vshrl.u32 %v2956, 7
        %v2958 = vsub.s32 %v2955, %v2957
        %v2959 = vrot.slane %v2854, %v2958
        %v2961 = vunpack.c.l.s4 1983009808
        %v2962 = vunpack.c.0.s8 %v2961
        %v2963 = vlaneseq
        %v2964 = vshrl.u32 %v2963, 7
        %v2965 = vsub.s32 %v2962, %v2964
        %v2966 = vrot.slane %v2952, %v2965
        %v2967 = vcombine.high %v2959, %v2959
        %v2968 = vcombine.high %v2966, %v2966
        %v2969 = vcombine.high %v2855, %v2855
        %v2971 = vunpack.c.l.s4 1983009808
        %v2972 = vunpack.c.0.s8 %v2971
        %v2973 = vlaneseq
        %v2974 = vshrl.u32 %v2973, 7
        %v2975 = vsub.s32 %v2972, %v2974
        %v2976 = vrot.slane %v2855, %v2975
        %v2978 = vunpack.c.l.s4 1983009808
        %v2979 = vunpack.c.0.s8 %v2978
        %v2980 = vlaneseq
        %v2981 = vshrl.u32 %v2980, 7
        %v2982 = vsub.s32 %v2979, %v2981
        %v2983 = vrot.slane %v2969, %v2982
        %v2984 = vcombine.high %v2976, %v2976
        %v2985 = vcombine.high %v2983, %v2983
        %v2986 = vcombine.high %v2856, %v2856
        %v2988 = vunpack.c.l.s4 1983009808
        %v2989 = vunpack.c.0.s8 %v2988
        %v2990 = vlaneseq
        %v2991 = vshrl.u32 %v2990, 7
        %v2992 = vsub.s32 %v2989, %v2991
        %v2993 = vrot.slane %v2856, %v2992
        %v2995 = vunpack.c.l.s4 1983009808
        %v2996 = vunpack.c.0.s8 %v2995
        %v2997 = vlaneseq
        %v2998 = vshrl.u32 %v2997, 7
        %v2999 = vsub.s32 %v2996, %v2998
        %v3000 = vrot.slane %v2986, %v2999
        %v3001 = vcombine.high %v2993, %v2993
        %v3002 = vcombine.high %v3000, %v3000
        %v3003 = vcombine.high %v2857, %v2857
        %v3005 = vunpack.c.l.s4 1983009808
        %v3006 = vunpack.c.0.s8 %v3005
        %v3007 = vlaneseq
        %v3008 = vshrl.u32 %v3007, 7
        %v3009 = vsub.s32 %v3006, %v3008
        %v3010 = vrot.slane %v2857, %v3009
        %v3012 = vunpack.c.l.s4 1983009808
        %v3013 = vunpack.c.0.s8 %v3012
        %v3014 = vlaneseq
        %v3015 = vshrl.u32 %v3014, 7
        %v3016 = vsub.s32 %v3013, %v3015
        %v3017 = vrot.slane %v3003, %v3016
        %v3018 = vcombine.high %v3010, %v3010
        %v3019 = vcombine.high %v3017, %v3017
        %v3020 = vcombine.high %v2858, %v2858
        %v3022 = vunpack.c.l.s4 1983009808
        %v3023 = vunpack.c.0.s8 %v3022
        %v3024 = vlaneseq
        %v3025 = vshrl.u32 %v3024, 7
        %v3026 = vsub.s32 %v3023, %v3025
        %v3027 = vrot.slane %v2858, %v3026
        %v3029 = vunpack.c.l.s4 1983009808
        %v3030 = vunpack.c.0.s8 %v3029
        %v3031 = vlaneseq
        %v3032 = vshrl.u32 %v3031, 7
        %v3033 = vsub.s32 %v3030, %v3032
        %v3034 = vrot.slane %v3020, %v3033
        %v3035 = vcombine.high %v3027, %v3027
        %v3036 = vcombine.high %v3034, %v3034
        %v3037 = vcombine.high %v2859, %v2859
        %v3039 = vunpack.c.l.s4 1983009808
        %v3040 = vunpack.c.0.s8 %v3039
        %v3041 = vlaneseq
        %v3042 = vshrl.u32 %v3041, 7
        %v3043 = vsub.s32 %v3040, %v3042
        %v3044 = vrot.slane %v2859, %v3043
        %v3046 = vunpack.c.l.s4 1983009808
        %v3047 = vunpack.c.0.s8 %v3046
        %v3048 = vlaneseq
        %v3049 = vshrl.u32 %v3048, 7
        %v3050 = vsub.s32 %v3047, %v3049
        %v3051 = vrot.slane %v3037, %v3050
        %v3052 = vcombine.high %v3044, %v3044
        %v3053 = vcombine.high %v3051, %v3051
        %v3054 = vcombine.high %v2860, %v2860
        %v3056 = vunpack.c.l.s4 1983009808
        %v3057 = vunpack.c.0.s8 %v3056
        %v3058 = vlaneseq
        %v3059 = vshrl.u32 %v3058, 7
        %v3060 = vsub.s32 %v3057, %v3059
        %v3061 = vrot.slane %v2860, %v3060
        %v3063 = vunpack.c.l.s4 1983009808
        %v3064 = vunpack.c.0.s8 %v3063
        %v3065 = vlaneseq
        %v3066 = vshrl.u32 %v3065, 7
        %v3067 = vsub.s32 %v3064, %v3066
        %v3068 = vrot.slane %v3054, %v3067
        %v3069 = vcombine.high %v3061, %v3061
        %v3070 = vcombine.high %v3068, %v3068
        %v3071 = vcombine.high %v2861, %v2861
        %v3073 = vunpack.c.l.s4 1983009808
        %v3074 = vunpack.c.0.s8 %v3073
        %v3075 = vlaneseq
        %v3076 = vshrl.u32 %v3075, 7
        %v3077 = vsub.s32 %v3074, %v3076
        %v3078 = vrot.slane %v2861, %v3077
        %v3080 = vunpack.c.l.s4 1983009808
        %v3081 = vunpack.c.0.s8 %v3080
        %v3082 = vlaneseq
        %v3083 = vshrl.u32 %v3082, 7
        %v3084 = vsub.s32 %v3081, %v3083
        %v3085 = vrot.slane %v3071, %v3084
        %v3086 = vcombine.high %v3078, %v3078
        %v3087 = vcombine.high %v3085, %v3085
        %v3088 = vcombine.high %v2862, %v2862
        %v3090 = vunpack.c.l.s4 1983009808
        %v3091 = vunpack.c.0.s8 %v3090
        %v3092 = vlaneseq
        %v3093 = vshrl.u32 %v3092, 7
        %v3094 = vsub.s32 %v3091, %v3093
        %v3095 = vrot.slane %v2862, %v3094
        %v3097 = vunpack.c.l.s4 1983009808
        %v3098 = vunpack.c.0.s8 %v3097
        %v3099 = vlaneseq
        %v3100 = vshrl.u32 %v3099, 7
        %v3101 = vsub.s32 %v3098, %v3100
        %v3102 = vrot.slane %v3088, %v3101
        %v3103 = vcombine.high %v3095, %v3095
        %v3104 = vcombine.high %v3102, %v3102
        %v3105 = vcombine.high %v2863, %v2863
        %v3107 = vunpack.c.l.s4 1983009808
        %v3108 = vunpack.c.0.s8 %v3107
        %v3109 = vlaneseq
        %v3110 = vshrl.u32 %v3109, 7
        %v3111 = vsub.s32 %v3108, %v3110
        %v3112 = vrot.slane %v2863, %v3111
        %v3114 = vunpack.c.l.s4 1983009808
        %v3115 = vunpack.c.0.s8 %v3114
        %v3116 = vlaneseq
        %v3117 = vshrl.u32 %v3116, 7
        %v3118 = vsub.s32 %v3115, %v3117
        %v3119 = vrot.slane %v3105, %v3118
        %v3120 = vcombine.high %v3112, %v3112
        %v3121 = vcombine.high %v3119, %v3119
        %v3122 = vcombine.high %v2864, %v2864
        %v3124 = vunpack.c.l.s4 1983009808
        %v3125 = vunpack.c.0.s8 %v3124
        %v3126 = vlaneseq
        %v3127 = vshrl.u32 %v3126, 7
        %v3128 = vsub.s32 %v3125, %v3127
        %v3129 = vrot.slane %v2864, %v3128
        %v3131 = vunpack.c.l.s4 1983009808
        %v3132 = vunpack.c.0.s8 %v3131
        %v3133 = vlaneseq
        %v3134 = vshrl.u32 %v3133, 7
        %v3135 = vsub.s32 %v3132, %v3134
        %v3136 = vrot.slane %v3122, %v3135
        %v3137 = vcombine.high %v3129, %v3129
        %v3138 = vcombine.high %v3136, %v3136
        %v3139 = vcombine.high %v2865, %v2865
        %v3141 = vunpack.c.l.s4 1983009808
        %v3142 = vunpack.c.0.s8 %v3141
        %v3143 = vlaneseq
        %v3144 = vshrl.u32 %v3143, 7
        %v3145 = vsub.s32 %v3142, %v3144
        %v3146 = vrot.slane %v2865, %v3145
        %v3148 = vunpack.c.l.s4 1983009808
        %v3149 = vunpack.c.0.s8 %v3148
        %v3150 = vlaneseq
        %v3151 = vshrl.u32 %v3150, 7
        %v3152 = vsub.s32 %v3149, %v3151
        %v3153 = vrot.slane %v3139, %v3152
        %v3154 = vcombine.high %v3146, %v3146
        %v3155 = vcombine.high %v3153, %v3153
        %v3156 = vcombine.high %v2866, %v2866
        %v3158 = vunpack.c.l.s4 1983009808
        %v3159 = vunpack.c.0.s8 %v3158
        %v3160 = vlaneseq
        %v3161 = vshrl.u32 %v3160, 7
        %v3162 = vsub.s32 %v3159, %v3161
        %v3163 = vrot.slane %v2866, %v3162
        %v3165 = vunpack.c.l.s4 1983009808
        %v3166 = vunpack.c.0.s8 %v3165
        %v3167 = vlaneseq
        %v3168 = vshrl.u32 %v3167, 7
        %v3169 = vsub.s32 %v3166, %v3168
        %v3170 = vrot.slane %v3156, %v3169
        %v3171 = vcombine.high %v3163, %v3163
        %v3172 = vcombine.high %v3170, %v3170
        %v3173 = vcombine.high %v2867, %v2867
        %v3175 = vunpack.c.l.s4 1983009808
        %v3176 = vunpack.c.0.s8 %v3175
        %v3177 = vlaneseq
        %v3178 = vshrl.u32 %v3177, 7
        %v3179 = vsub.s32 %v3176, %v3178
        %v3180 = vrot.slane %v2867, %v3179
        %v3182 = vunpack.c.l.s4 1983009808
        %v3183 = vunpack.c.0.s8 %v3182
        %v3184 = vlaneseq
        %v3185 = vshrl.u32 %v3184, 7
        %v3186 = vsub.s32 %v3183, %v3185
        %v3187 = vrot.slane %v3173, %v3186
        %v3188 = vcombine.high %v3180, %v3180
        %v3189 = vcombine.high %v3187, %v3187
        %v3190 = vcombine.high %v2868, %v2868
        %v3192 = vunpack.c.l.s4 1983009808
        %v3193 = vunpack.c.0.s8 %v3192
        %v3194 = vlaneseq
        %v3195 = vshrl.u32 %v3194, 7
        %v3196 = vsub.s32 %v3193, %v3195
        %v3197 = vrot.slane %v2868, %v3196
        %v3199 = vunpack.c.l.s4 1983009808
        %v3200 = vunpack.c.0.s8 %v3199
        %v3201 = vlaneseq
        %v3202 = vshrl.u32 %v3201, 7
        %v3203 = vsub.s32 %v3200, %v3202
        %v3204 = vrot.slane %v3190, %v3203
        %v3205 = vcombine.high %v3197, %v3197
        %v3206 = vcombine.high %v3204, %v3204
        %v3207 = vcombine.high %v2869, %v2869
        %v3209 = vunpack.c.l.s4 1983009808
        %v3210 = vunpack.c.0.s8 %v3209
        %v3211 = vlaneseq
        %v3212 = vshrl.u32 %v3211, 7
        %v3213 = vsub.s32 %v3210, %v3212
        %v3214 = vrot.slane %v2869, %v3213
        %v3216 = vunpack.c.l.s4 1983009808
        %v3217 = vunpack.c.0.s8 %v3216
        %v3218 = vlaneseq
        %v3219 = vshrl.u32 %v3218, 7
        %v3220 = vsub.s32 %v3217, %v3219
        %v3221 = vrot.slane %v3207, %v3220
        %v3222 = vcombine.high %v3214, %v3214
        %v3223 = vcombine.high %v3221, %v3221
        %v3224 = vcombine.high %v2870, %v2870
        %v3226 = vunpack.c.l.s4 1983009808
        %v3227 = vunpack.c.0.s8 %v3226
        %v3228 = vlaneseq
        %v3229 = vshrl.u32 %v3228, 7
        %v3230 = vsub.s32 %v3227, %v3229
        %v3231 = vrot.slane %v2870, %v3230
        %v3233 = vunpack.c.l.s4 1983009808
        %v3234 = vunpack.c.0.s8 %v3233
        %v3235 = vlaneseq
        %v3236 = vshrl.u32 %v3235, 7
        %v3237 = vsub.s32 %v3234, %v3236
        %v3238 = vrot.slane %v3224, %v3237
        %v3239 = vcombine.high %v3231, %v3231
        %v3240 = vcombine.high %v3238, %v3238
        %v3241 = vcombine.high %v2871, %v2871
        %v3243 = vunpack.c.l.s4 1983009808
        %v3244 = vunpack.c.0.s8 %v3243
        %v3245 = vlaneseq
        %v3246 = vshrl.u32 %v3245, 7
        %v3247 = vsub.s32 %v3244, %v3246
        %v3248 = vrot.slane %v2871, %v3247
        %v3250 = vunpack.c.l.s4 1983009808
        %v3251 = vunpack.c.0.s8 %v3250
        %v3252 = vlaneseq
        %v3253 = vshrl.u32 %v3252, 7
        %v3254 = vsub.s32 %v3251, %v3253
        %v3255 = vrot.slane %v3241, %v3254
        %v3256 = vcombine.high %v3248, %v3248
        %v3257 = vcombine.high %v3255, %v3255
        %v3258 = vcombine.high %v2872, %v2872
        %v3260 = vunpack.c.l.s4 1983009808
        %v3261 = vunpack.c.0.s8 %v3260
        %v3262 = vlaneseq
        %v3263 = vshrl.u32 %v3262, 7
        %v3264 = vsub.s32 %v3261, %v3263
        %v3265 = vrot.slane %v2872, %v3264
        %v3267 = vunpack.c.l.s4 1983009808
        %v3268 = vunpack.c.0.s8 %v3267
        %v3269 = vlaneseq
        %v3270 = vshrl.u32 %v3269, 7
        %v3271 = vsub.s32 %v3268, %v3270
        %v3272 = vrot.slane %v3258, %v3271
        %v3273 = vcombine.high %v3265, %v3265
        %v3274 = vcombine.high %v3272, %v3272
        %v3275 = vcombine.high %v2873, %v2873
        %v3277 = vunpack.c.l.s4 1983009808
        %v3278 = vunpack.c.0.s8 %v3277
        %v3279 = vlaneseq
        %v3280 = vshrl.u32 %v3279, 7
        %v3281 = vsub.s32 %v3278, %v3280
        %v3282 = vrot.slane %v2873, %v3281
        %v3284 = vunpack.c.l.s4 1983009808
        %v3285 = vunpack.c.0.s8 %v3284
        %v3286 = vlaneseq
        %v3287 = vshrl.u32 %v3286, 7
        %v3288 = vsub.s32 %v3285, %v3287
        %v3289 = vrot.slane %v3275, %v3288
        %v3290 = vcombine.high %v3282, %v3282
        %v3291 = vcombine.high %v3289, %v3289
        %v3292 = vcombine.high %v2874, %v2874
        %v3294 = vunpack.c.l.s4 1983009808
        %v3295 = vunpack.c.0.s8 %v3294
        %v3296 = vlaneseq
        %v3297 = vshrl.u32 %v3296, 7
        %v3298 = vsub.s32 %v3295, %v3297
        %v3299 = vrot.slane %v2874, %v3298
        %v3301 = vunpack.c.l.s4 1983009808
        %v3302 = vunpack.c.0.s8 %v3301
        %v3303 = vlaneseq
        %v3304 = vshrl.u32 %v3303, 7
        %v3305 = vsub.s32 %v3302, %v3304
        %v3306 = vrot.slane %v3292, %v3305
        %v3307 = vcombine.high %v3299, %v3299
        %v3308 = vcombine.high %v3306, %v3306
        %v3309 = vcombine.high %v2875, %v2875
        %v3311 = vunpack.c.l.s4 1983009808
        %v3312 = vunpack.c.0.s8 %v3311
        %v3313 = vlaneseq
        %v3314 = vshrl.u32 %v3313, 7
        %v3315 = vsub.s32 %v3312, %v3314
        %v3316 = vrot.slane %v2875, %v3315
        %v3318 = vunpack.c.l.s4 1983009808
        %v3319 = vunpack.c.0.s8 %v3318
        %v3320 = vlaneseq
        %v3321 = vshrl.u32 %v3320, 7
        %v3322 = vsub.s32 %v3319, %v3321
        %v3323 = vrot.slane %v3309, %v3322
        %v3324 = vcombine.high %v3316, %v3316
        %v3325 = vcombine.high %v3323, %v3323
        %v3326 = vcombine.high %v2876, %v2876
        %v3328 = vunpack.c.l.s4 1983009808
        %v3329 = vunpack.c.0.s8 %v3328
        %v3330 = vlaneseq
        %v3331 = vshrl.u32 %v3330, 7
        %v3332 = vsub.s32 %v3329, %v3331
        %v3333 = vrot.slane %v2876, %v3332
        %v3335 = vunpack.c.l.s4 1983009808
        %v3336 = vunpack.c.0.s8 %v3335
        %v3337 = vlaneseq
        %v3338 = vshrl.u32 %v3337, 7
        %v3339 = vsub.s32 %v3336, %v3338
        %v3340 = vrot.slane %v3326, %v3339
        %v3341 = vcombine.high %v3333, %v3333
        %v3342 = vcombine.high %v3340, %v3340
        %v3343 = vcombine.high %v2877, %v2877
        %v3345 = vunpack.c.l.s4 1983009808
        %v3346 = vunpack.c.0.s8 %v3345
        %v3347 = vlaneseq
        %v3348 = vshrl.u32 %v3347, 7
        %v3349 = vsub.s32 %v3346, %v3348
        %v3350 = vrot.slane %v2877, %v3349
        %v3352 = vunpack.c.l.s4 1983009808
        %v3353 = vunpack.c.0.s8 %v3352
        %v3354 = vlaneseq
        %v3355 = vshrl.u32 %v3354, 7
        %v3356 = vsub.s32 %v3353, %v3355
        %v3357 = vrot.slane %v3343, %v3356
        %v3358 = vcombine.high %v3350, %v3350
        %v3359 = vcombine.high %v3357, %v3357
        %v3360 = vcombine.high %v2878, %v2878
        %v3362 = vunpack.c.l.s4 1983009808
        %v3363 = vunpack.c.0.s8 %v3362
        %v3364 = vlaneseq
        %v3365 = vshrl.u32 %v3364, 7
        %v3366 = vsub.s32 %v3363, %v3365
        %v3367 = vrot.slane %v2878, %v3366
        %v3369 = vunpack.c.l.s4 1983009808
        %v3370 = vunpack.c.0.s8 %v3369
        %v3371 = vlaneseq
        %v3372 = vshrl.u32 %v3371, 7
        %v3373 = vsub.s32 %v3370, %v3372
        %v3374 = vrot.slane %v3360, %v3373
        %v3375 = vcombine.high %v3367, %v3367
        %v3376 = vcombine.high %v3374, %v3374
        %v3377 = vcombine.high %v2879, %v2879
        %v3379 = vunpack.c.l.s4 1983009808
        %v3380 = vunpack.c.0.s8 %v3379
        %v3381 = vlaneseq
        %v3382 = vshrl.u32 %v3381, 7
        %v3383 = vsub.s32 %v3380, %v3382
        %v3384 = vrot.slane %v2879, %v3383
        %v3386 = vunpack.c.l.s4 1983009808
        %v3387 = vunpack.c.0.s8 %v3386
        %v3388 = vlaneseq
        %v3389 = vshrl.u32 %v3388, 7
        %v3390 = vsub.s32 %v3387, %v3389
        %v3391 = vrot.slane %v3377, %v3390
        %v3392 = vcombine.high %v3384, %v3384
        %v3393 = vcombine.high %v3391, %v3391
        %v3394 = vcombine.high %v2880, %v2880
        %v3396 = vunpack.c.l.s4 1983009808
        %v3397 = vunpack.c.0.s8 %v3396
        %v3398 = vlaneseq
        %v3399 = vshrl.u32 %v3398, 7
        %v3400 = vsub.s32 %v3397, %v3399
        %v3401 = vrot.slane %v2880, %v3400
        %v3403 = vunpack.c.l.s4 1983009808
        %v3404 = vunpack.c.0.s8 %v3403
        %v3405 = vlaneseq
        %v3406 = vshrl.u32 %v3405, 7
        %v3407 = vsub.s32 %v3404, %v3406
        %v3408 = vrot.slane %v3394, %v3407
        %v3409 = vcombine.high %v3401, %v3401
        %v3410 = vcombine.high %v3408, %v3408
        %v3411 = vcombine.high %v2881, %v2881
        %v3413 = vunpack.c.l.s4 1983009808
        %v3414 = vunpack.c.0.s8 %v3413
        %v3415 = vlaneseq
        %v3416 = vshrl.u32 %v3415, 7
        %v3417 = vsub.s32 %v3414, %v3416
        %v3418 = vrot.slane %v2881, %v3417
        %v3420 = vunpack.c.l.s4 1983009808
        %v3421 = vunpack.c.0.s8 %v3420
        %v3422 = vlaneseq
        %v3423 = vshrl.u32 %v3422, 7
        %v3424 = vsub.s32 %v3421, %v3423
        %v3425 = vrot.slane %v3411, %v3424
        %v3426 = vcombine.high %v3418, %v3418
        %v3427 = vcombine.high %v3425, %v3425
        %v3428 = vcombine.high %v2882, %v2882
        %v3430 = vunpack.c.l.s4 1983009808
        %v3431 = vunpack.c.0.s8 %v3430
        %v3432 = vlaneseq
        %v3433 = vshrl.u32 %v3432, 7
        %v3434 = vsub.s32 %v3431, %v3433
        %v3435 = vrot.slane %v2882, %v3434
        %v3437 = vunpack.c.l.s4 1983009808
        %v3438 = vunpack.c.0.s8 %v3437
        %v3439 = vlaneseq
        %v3440 = vshrl.u32 %v3439, 7
        %v3441 = vsub.s32 %v3438, %v3440
        %v3442 = vrot.slane %v3428, %v3441
        %v3443 = vcombine.high %v3435, %v3435
        %v3444 = vcombine.high %v3442, %v3442
        %v3445 = vcombine.high %v2883, %v2883
        %v3447 = vunpack.c.l.s4 1983009808
        %v3448 = vunpack.c.0.s8 %v3447
        %v3449 = vlaneseq
        %v3450 = vshrl.u32 %v3449, 7
        %v3451 = vsub.s32 %v3448, %v3450
        %v3452 = vrot.slane %v2883, %v3451
        %v3454 = vunpack.c.l.s4 1983009808
        %v3455 = vunpack.c.0.s8 %v3454
        %v3456 = vlaneseq
        %v3457 = vshrl.u32 %v3456, 7
        %v3458 = vsub.s32 %v3455, %v3457
        %v3459 = vrot.slane %v3445, %v3458
        %v3460 = vcombine.high %v3452, %v3452
        %v3461 = vcombine.high %v3459, %v3459
        %v3462 = vcombine.high %v2884, %v2884
        %v3464 = vunpack.c.l.s4 1983009808
        %v3465 = vunpack.c.0.s8 %v3464
        %v3466 = vlaneseq
        %v3467 = vshrl.u32 %v3466, 7
        %v3468 = vsub.s32 %v3465, %v3467
        %v3469 = vrot.slane %v2884, %v3468
        %v3471 = vunpack.c.l.s4 1983009808
        %v3472 = vunpack.c.0.s8 %v3471
        %v3473 = vlaneseq
        %v3474 = vshrl.u32 %v3473, 7
        %v3475 = vsub.s32 %v3472, %v3474
        %v3476 = vrot.slane %v3462, %v3475
        %v3477 = vcombine.high %v3469, %v3469
        %v3478 = vcombine.high %v3476, %v3476
        %v3479 = vcombine.high %v2885, %v2885
        %v3481 = vunpack.c.l.s4 1983009808
        %v3482 = vunpack.c.0.s8 %v3481
        %v3483 = vlaneseq
        %v3484 = vshrl.u32 %v3483, 7
        %v3485 = vsub.s32 %v3482, %v3484
        %v3486 = vrot.slane %v2885, %v3485
        %v3488 = vunpack.c.l.s4 1983009808
        %v3489 = vunpack.c.0.s8 %v3488
        %v3490 = vlaneseq
        %v3491 = vshrl.u32 %v3490, 7
        %v3492 = vsub.s32 %v3489, %v3491
        %v3493 = vrot.slane %v3479, %v3492
        %v3494 = vcombine.high %v3486, %v3486
        %v3495 = vcombine.high %v3493, %v3493
        %v3496 = vcombine.high %v2886, %v2886
        %v3498 = vunpack.c.l.s4 1983009808
        %v3499 = vunpack.c.0.s8 %v3498
        %v3500 = vlaneseq
        %v3501 = vshrl.u32 %v3500, 7
        %v3502 = vsub.s32 %v3499, %v3501
        %v3503 = vrot.slane %v2886, %v3502
        %v3505 = vunpack.c.l.s4 1983009808
        %v3506 = vunpack.c.0.s8 %v3505
        %v3507 = vlaneseq
        %v3508 = vshrl.u32 %v3507, 7
        %v3509 = vsub.s32 %v3506, %v3508
        %v3510 = vrot.slane %v3496, %v3509
        %v3511 = vcombine.high %v3503, %v3503
        %v3512 = vcombine.high %v3510, %v3510
        %v3513 = vcombine.high %v2887, %v2887
        %v3515 = vunpack.c.l.s4 1983009808
        %v3516 = vunpack.c.0.s8 %v3515
        %v3517 = vlaneseq
        %v3518 = vshrl.u32 %v3517, 7
        %v3519 = vsub.s32 %v3516, %v3518
        %v3520 = vrot.slane %v2887, %v3519
        %v3522 = vunpack.c.l.s4 1983009808
        %v3523 = vunpack.c.0.s8 %v3522
        %v3524 = vlaneseq
        %v3525 = vshrl.u32 %v3524, 7
        %v3526 = vsub.s32 %v3523, %v3525
        %v3527 = vrot.slane %v3513, %v3526
        %v3528 = vcombine.high %v3520, %v3520
        %v3529 = vcombine.high %v3527, %v3527
        %v3530 = vcombine.high %v2888, %v2888
        %v3532 = vunpack.c.l.s4 1983009808
        %v3533 = vunpack.c.0.s8 %v3532
        %v3534 = vlaneseq
        %v3535 = vshrl.u32 %v3534, 7
        %v3536 = vsub.s32 %v3533, %v3535
        %v3537 = vrot.slane %v2888, %v3536
        %v3539 = vunpack.c.l.s4 1983009808
        %v3540 = vunpack.c.0.s8 %v3539
        %v3541 = vlaneseq
        %v3542 = vshrl.u32 %v3541, 7
        %v3543 = vsub.s32 %v3540, %v3542
        %v3544 = vrot.slane %v3530, %v3543
        %v3545 = vcombine.high %v3537, %v3537
        %v3546 = vcombine.high %v3544, %v3544
        %v3547 = vcombine.high %v2889, %v2889
        %v3549 = vunpack.c.l.s4 1983009808
        %v3550 = vunpack.c.0.s8 %v3549
        %v3551 = vlaneseq
        %v3552 = vshrl.u32 %v3551, 7
        %v3553 = vsub.s32 %v3550, %v3552
        %v3554 = vrot.slane %v2889, %v3553
        %v3556 = vunpack.c.l.s4 1983009808
        %v3557 = vunpack.c.0.s8 %v3556
        %v3558 = vlaneseq
        %v3559 = vshrl.u32 %v3558, 7
        %v3560 = vsub.s32 %v3557, %v3559
        %v3561 = vrot.slane %v3547, %v3560
        %v3562 = vcombine.high %v3554, %v3554
        %v3563 = vcombine.high %v3561, %v3561
        %v3564 = vcombine.high %v2890, %v2890
        %v3566 = vunpack.c.l.s4 1983009808
        %v3567 = vunpack.c.0.s8 %v3566
        %v3568 = vlaneseq
        %v3569 = vshrl.u32 %v3568, 7
        %v3570 = vsub.s32 %v3567, %v3569
        %v3571 = vrot.slane %v2890, %v3570
        %v3573 = vunpack.c.l.s4 1983009808
        %v3574 = vunpack.c.0.s8 %v3573
        %v3575 = vlaneseq
        %v3576 = vshrl.u32 %v3575, 7
        %v3577 = vsub.s32 %v3574, %v3576
        %v3578 = vrot.slane %v3564, %v3577
        %v3579 = vcombine.high %v3571, %v3571
        %v3580 = vcombine.high %v3578, %v3578
        %v3581 = vcombine.high %v2891, %v2891
        %v3583 = vunpack.c.l.s4 1983009808
        %v3584 = vunpack.c.0.s8 %v3583
        %v3585 = vlaneseq
        %v3586 = vshrl.u32 %v3585, 7
        %v3587 = vsub.s32 %v3584, %v3586
        %v3588 = vrot.slane %v2891, %v3587
        %v3590 = vunpack.c.l.s4 1983009808
        %v3591 = vunpack.c.0.s8 %v3590
        %v3592 = vlaneseq
        %v3593 = vshrl.u32 %v3592, 7
        %v3594 = vsub.s32 %v3591, %v3593
        %v3595 = vrot.slane %v3581, %v3594
        %v3596 = vcombine.high %v3588, %v3588
        %v3597 = vcombine.high %v3595, %v3595
        %v3598 = vcombine.high %v2892, %v2892
        %v3600 = vunpack.c.l.s4 1983009808
        %v3601 = vunpack.c.0.s8 %v3600
        %v3602 = vlaneseq
        %v3603 = vshrl.u32 %v3602, 7
        %v3604 = vsub.s32 %v3601, %v3603
        %v3605 = vrot.slane %v2892, %v3604
        %v3607 = vunpack.c.l.s4 1983009808
        %v3608 = vunpack.c.0.s8 %v3607
        %v3609 = vlaneseq
        %v3610 = vshrl.u32 %v3609, 7
        %v3611 = vsub.s32 %v3608, %v3610
        %v3612 = vrot.slane %v3598, %v3611
        %v3613 = vcombine.high %v3605, %v3605
        %v3614 = vcombine.high %v3612, %v3612
        %v3616 = vunpack.c.l.s4 1983009808
        %v3617 = vunpack.c.0.s8 %v3616
        %v3618 = vlaneseq
        %v3619 = vshrl.u32 %v3618, 7
        %v3620 = vsub.s32 %v3617, %v3619
        %v3621 = vrot.slane %v2893, %v3620
        %v3622 = vcombine.high %v3621, %v3621
        %v3623 = vcombine.low %v2942, %v2950
        %v3624 = vcombine.low %v2949, %v2951
        %v3626 = vunpack.c.l.s4 1983009808
        %v3627 = vunpack.c.0.s8 %v3626
        %v3628 = vlaneseq
        %v3629 = vshrl.u32 %v3628, 7
        %v3630 = vsub.s32 %v3627, %v3629
        %v3631 = vrot.slane %v3623, %v3630
        %v3633 = vunpack.c.l.s4 1983009808
        %v3634 = vunpack.c.0.s8 %v3633
        %v3635 = vlaneseq
        %v3636 = vshrl.u32 %v3635, 7
        %v3637 = vsub.s32 %v3634, %v3636
        %v3638 = vrot.slane %v3624, %v3637
        %v3639 = vcombine.low %v3631, %v3638
        %v3640 = vcombine.low %v2959, %v2967
        %v3641 = vcombine.low %v2966, %v2968
        %v3643 = vunpack.c.l.s4 1983009808
        %v3644 = vunpack.c.0.s8 %v3643
        %v3645 = vlaneseq
        %v3646 = vshrl.u32 %v3645, 7
        %v3647 = vsub.s32 %v3644, %v3646
        %v3648 = vrot.slane %v3640, %v3647
        %v3650 = vunpack.c.l.s4 1983009808
        %v3651 = vunpack.c.0.s8 %v3650
        %v3652 = vlaneseq
        %v3653 = vshrl.u32 %v3652, 7
        %v3654 = vsub.s32 %v3651, %v3653
        %v3655 = vrot.slane %v3641, %v3654
        %v3656 = vcombine.low %v3648, %v3655
        %v3657 = vcombine.low %v2984, %v2983
        %v3658 = vcombine.low %v2985, %v2993
        %v3660 = vunpack.c.l.s4 1983009808
        %v3661 = vunpack.c.0.s8 %v3660
        %v3662 = vlaneseq
        %v3663 = vshrl.u32 %v3662, 7
        %v3664 = vsub.s32 %v3661, %v3663
        %v3665 = vrot.slane %v3657, %v3664
        %v3667 = vunpack.c.l.s4 1983009808
        %v3668 = vunpack.c.0.s8 %v3667
        %v3669 = vlaneseq
        %v3670 = vshrl.u32 %v3669, 7
        %v3671 = vsub.s32 %v3668, %v3670
        %v3672 = vrot.slane %v3658, %v3671
        %v3673 = vcombine.low %v3665, %v3672
        %v3674 = vcombine.low %v3001, %v3000
        %v3675 = vcombine.low %v3002, %v3010
        %v3677 = vunpack.c.l.s4 1983009808
        %v3678 = vunpack.c.0.s8 %v3677
        %v3679 = vlaneseq
        %v3680 = vshrl.u32 %v3679, 7
        %v3681 = vsub.s32 %v3678, %v3680
        %v3682 = vrot.slane %v3674, %v3681
        %v3684 = vunpack.c.l.s4 1983009808
        %v3685 = vunpack.c.0.s8 %v3684
        %v3686 = vlaneseq
        %v3687 = vshrl.u32 %v3686, 7
        %v3688 = vsub.s32 %v3685, %v3687
        %v3689 = vrot.slane %v3675, %v3688
        %v3690 = vcombine.low %v3682, %v3689
        %v3691 = vcombine.low %v3017, %v3019
        %v3692 = vcombine.low %v3027, %v3035
        %v3694 = vunpack.c.l.s4 1983009808
        %v3695 = vunpack.c.0.s8 %v3694
        %v3696 = vlaneseq
        %v3697 = vshrl.u32 %v3696, 7
        %v3698 = vsub.s32 %v3695, %v3697
        %v3699 = vrot.slane %v3691, %v3698
        %v3701 = vunpack.c.l.s4 1983009808
        %v3702 = vunpack.c.0.s8 %v3701
        %v3703 = vlaneseq
        %v3704 = vshrl.u32 %v3703, 7
        %v3705 = vsub.s32 %v3702, %v3704
        %v3706 = vrot.slane %v3692, %v3705
        %v3707 = vcombine.low %v3699, %v3706
        %v3708 = vcombine.low %v3034, %v3036
        %v3709 = vcombine.low %v3044, %v3052
        %v3711 = vunpack.c.l.s4 1983009808
        %v3712 = vunpack.c.0.s8 %v3711
        %v3713 = vlaneseq
        %v3714 = vshrl.u32 %v3713, 7
        %v3715 = vsub.s32 %v3712, %v3714
        %v3716 = vrot.slane %v3708, %v3715
        %v3718 = vunpack.c.l.s4 1983009808
        %v3719 = vunpack.c.0.s8 %v3718
        %v3720 = vlaneseq
        %v3721 = vshrl.u32 %v3720, 7
        %v3722 = vsub.s32 %v3719, %v3721
        %v3723 = vrot.slane %v3709, %v3722
        %v3724 = vcombine.low %v3716, %v3723
        %v3725 = vcombine.low %v3053, %v3061
        %v3726 = vcombine.low %v3069, %v3068
        %v3728 = vunpack.c.l.s4 1983009808
        %v3729 = vunpack.c.0.s8 %v3728
        %v3730 = vlaneseq
        %v3731 = vshrl.u32 %v3730, 7
        %v3732 = vsub.s32 %v3729, %v3731
        %v3733 = vrot.slane %v3725, %v3732
        %v3735 = vunpack.c.l.s4 1983009808
        %v3736 = vunpack.c.0.s8 %v3735
        %v3737 = vlaneseq
        %v3738 = vshrl.u32 %v3737, 7
        %v3739 = vsub.s32 %v3736, %v3738
        %v3740 = vrot.slane %v3726, %v3739
        %v3741 = vcombine.low %v3733, %v3740
        %v3742 = vcombine.low %v3070, %v3078
        %v3743 = vcombine.low %v3086, %v3085
        %v3745 = vunpack.c.l.s4 1983009808
        %v3746 = vunpack.c.0.s8 %v3745
        %v3747 = vlaneseq
        %v3748 = vshrl.u32 %v3747, 7
        %v3749 = vsub.s32 %v3746, %v3748
        %v3750 = vrot.slane %v3742, %v3749
        %v3752 = vunpack.c.l.s4 1983009808
        %v3753 = vunpack.c.0.s8 %v3752
        %v3754 = vlaneseq
        %v3755 = vshrl.u32 %v3754, 7
        %v3756 = vsub.s32 %v3753, %v3755
        %v3757 = vrot.slane %v3743, %v3756
        %v3758 = vcombine.low %v3750, %v3757
        %v3759 = vcombine.low %v3095, %v3103
        %v3760 = vcombine.low %v3102, %v3104
        %v3762 = vunpack.c.l.s4 1983009808
        %v3763 = vunpack.c.0.s8 %v3762
        %v3764 = vlaneseq
        %v3765 = vshrl.u32 %v3764, 7
        %v3766 = vsub.s32 %v3763, %v3765
        %v3767 = vrot.slane %v3759, %v3766
        %v3769 = vunpack.c.l.s4 1983009808
        %v3770 = vunpack.c.0.s8 %v3769
        %v3771 = vlaneseq
        %v3772 = vshrl.u32 %v3771, 7
        %v3773 = vsub.s32 %v3770, %v3772
        %v3774 = vrot.slane %v3760, %v3773
        %v3775 = vcombine.low %v3767, %v3774
        %v3776 = vcombine.low %v3112, %v3120
        %v3777 = vcombine.low %v3119, %v3121
        %v3779 = vunpack.c.l.s4 1983009808
        %v3780 = vunpack.c.0.s8 %v3779
        %v3781 = vlaneseq
        %v3782 = vshrl.u32 %v3781, 7
        %v3783 = vsub.s32 %v3780, %v3782
        %v3784 = vrot.slane %v3776, %v3783
        %v3786 = vunpack.c.l.s4 1983009808
        %v3787 = vunpack.c.0.s8 %v3786
        %v3788 = vlaneseq
        %v3789 = vshrl.u32 %v3788, 7
        %v3790 = vsub.s32 %v3787, %v3789
        %v3791 = vrot.slane %v3777, %v3790
        %v3792 = vcombine.low %v3784, %v3791
        %v3793 = vcombine.low %v3137, %v3136
        %v3794 = vcombine.low %v3138, %v3146
        %v3796 = vunpack.c.l.s4 1983009808
        %v3797 = vunpack.c.0.s8 %v3796
        %v3798 = vlaneseq
        %v3799 = vshrl.u32 %v3798, 7
        %v3800 = vsub.s32 %v3797, %v3799
        %v3801 = vrot.slane %v3793, %v3800
        %v3803 = vunpack.c.l.s4 1983009808
        %v3804 = vunpack.c.0.s8 %v3803
        %v3805 = vlaneseq
        %v3806 = vshrl.u32 %v3805, 7
        %v3807 = vsub.s32 %v3804, %v3806
        %v3808 = vrot.slane %v3794, %v3807
        %v3809 = vcombine.low %v3801, %v3808
        %v3810 = vcombine.low %v3154, %v3153
        %v3811 = vcombine.low %v3155, %v3163
        %v3813 = vunpack.c.l.s4 1983009808
        %v3814 = vunpack.c.0.s8 %v3813
        %v3815 = vlaneseq
        %v3816 = vshrl.u32 %v3815, 7
        %v3817 = vsub.s32 %v3814, %v3816
        %v3818 = vrot.slane %v3810, %v3817
        %v3820 = vunpack.c.l.s4 1983009808
        %v3821 = vunpack.c.0.s8 %v3820
        %v3822 = vlaneseq
        %v3823 = vshrl.u32 %v3822, 7
        %v3824 = vsub.s32 %v3821, %v3823
        %v3825 = vrot.slane %v3811, %v3824
        %v3826 = vcombine.low %v3818, %v3825
        %v3827 = vcombine.low %v3170, %v3172
        %v3828 = vcombine.low %v3180, %v3188
        %v3830 = vunpack.c.l.s4 1983009808
        %v3831 = vunpack.c.0.s8 %v3830
        %v3832 = vlaneseq
        %v3833 = vshrl.u32 %v3832, 7
        %v3834 = vsub.s32 %v3831, %v3833
        %v3835 = vrot.slane %v3827, %v3834
        %v3837 = vunpack.c.l.s4 1983009808
        %v3838 = vunpack.c.0.s8 %v3837
        %v3839 = vlaneseq
        %v3840 = vshrl.u32 %v3839, 7
        %v3841 = vsub.s32 %v3838, %v3840
        %v3842 = vrot.slane %v3828, %v3841
        %v3843 = vcombine.low %v3835, %v3842
        %v3844 = vcombine.low %v3187, %v3189
        %v3845 = vcombine.low %v3197, %v3205
        %v3847 = vunpack.c.l.s4 1983009808
        %v3848 = vunpack.c.0.s8 %v3847
        %v3849 = vlaneseq
        %v3850 = vshrl.u32 %v3849, 7
        %v3851 = vsub.s32 %v3848, %v3850
        %v3852 = vrot.slane %v3844, %v3851
        %v3854 = vunpack.c.l.s4 1983009808
        %v3855 = vunpack.c.0.s8 %v3854
        %v3856 = vlaneseq
        %v3857 = vshrl.u32 %v3856, 7
        %v3858 = vsub.s32 %v3855, %v3857
        %v3859 = vrot.slane %v3845, %v3858
        %v3860 = vcombine.low %v3852, %v3859
        %v3861 = vcombine.low %v3206, %v3214
        %v3862 = vcombine.low %v3222, %v3221
        %v3864 = vunpack.c.l.s4 1983009808
        %v3865 = vunpack.c.0.s8 %v3864
        %v3866 = vlaneseq
        %v3867 = vshrl.u32 %v3866, 7
        %v3868 = vsub.s32 %v3865, %v3867
        %v3869 = vrot.slane %v3861, %v3868
        %v3871 = vunpack.c.l.s4 1983009808
        %v3872 = vunpack.c.0.s8 %v3871
        %v3873 = vlaneseq
        %v3874 = vshrl.u32 %v3873, 7
        %v3875 = vsub.s32 %v3872, %v3874
        %v3876 = vrot.slane %v3862, %v3875
        %v3877 = vcombine.low %v3869, %v3876
        %v3878 = vcombine.low %v3223, %v3231
        %v3879 = vcombine.low %v3239, %v3238
        %v3881 = vunpack.c.l.s4 1983009808
        %v3882 = vunpack.c.0.s8 %v3881
        %v3883 = vlaneseq
        %v3884 = vshrl.u32 %v3883, 7
        %v3885 = vsub.s32 %v3882, %v3884
        %v3886 = vrot.slane %v3878, %v3885
        %v3888 = vunpack.c.l.s4 1983009808
        %v3889 = vunpack.c.0.s8 %v3888
        %v3890 = vlaneseq
        %v3891 = vshrl.u32 %v3890, 7
        %v3892 = vsub.s32 %v3889, %v3891
        %v3893 = vrot.slane %v3879, %v3892
        %v3894 = vcombine.low %v3886, %v3893
        %v3895 = vcombine.low %v3248, %v3256
        %v3896 = vcombine.low %v3255, %v3257
        %v3898 = vunpack.c.l.s4 1983009808
        %v3899 = vunpack.c.0.s8 %v3898
        %v3900 = vlaneseq
        %v3901 = vshrl.u32 %v3900, 7
        %v3902 = vsub.s32 %v3899, %v3901
        %v3903 = vrot.slane %v3895, %v3902
        %v3905 = vunpack.c.l.s4 1983009808
        %v3906 = vunpack.c.0.s8 %v3905
        %v3907 = vlaneseq
        %v3908 = vshrl.u32 %v3907, 7
        %v3909 = vsub.s32 %v3906, %v3908
        %v3910 = vrot.slane %v3896, %v3909
        %v3911 = vcombine.low %v3903, %v3910
        %v3912 = vcombine.low %v3265, %v3273
        %v3913 = vcombine.low %v3272, %v3274
        %v3915 = vunpack.c.l.s4 1983009808
        %v3916 = vunpack.c.0.s8 %v3915
        %v3917 = vlaneseq
        %v3918 = vshrl.u32 %v3917, 7
        %v3919 = vsub.s32 %v3916, %v3918
        %v3920 = vrot.slane %v3912, %v3919
        %v3922 = vunpack.c.l.s4 1983009808
        %v3923 = vunpack.c.0.s8 %v3922
        %v3924 = vlaneseq
        %v3925 = vshrl.u32 %v3924, 7
        %v3926 = vsub.s32 %v3923, %v3925
        %v3927 = vrot.slane %v3913, %v3926
        %v3928 = vcombine.low %v3920, %v3927
        %v3929 = vcombine.low %v3290, %v3289
        %v3930 = vcombine.low %v3291, %v3299
        %v3932 = vunpack.c.l.s4 1983009808
        %v3933 = vunpack.c.0.s8 %v3932
        %v3934 = vlaneseq
        %v3935 = vshrl.u32 %v3934, 7
        %v3936 = vsub.s32 %v3933, %v3935
        %v3937 = vrot.slane %v3929, %v3936
        %v3939 = vunpack.c.l.s4 1983009808
        %v3940 = vunpack.c.0.s8 %v3939
        %v3941 = vlaneseq
        %v3942 = vshrl.u32 %v3941, 7
        %v3943 = vsub.s32 %v3940, %v3942
        %v3944 = vrot.slane %v3930, %v3943
        %v3945 = vcombine.low %v3937, %v3944
        %v3946 = vcombine.low %v3307, %v3306
        %v3947 = vcombine.low %v3308, %v3316
        %v3949 = vunpack.c.l.s4 1983009808
        %v3950 = vunpack.c.0.s8 %v3949
        %v3951 = vlaneseq
        %v3952 = vshrl.u32 %v3951, 7
        %v3953 = vsub.s32 %v3950, %v3952
        %v3954 = vrot.slane %v3946, %v3953
        %v3956 = vunpack.c.l.s4 1983009808
        %v3957 = vunpack.c.0.s8 %v3956
        %v3958 = vlaneseq
        %v3959 = vshrl.u32 %v3958, 7
        %v3960 = vsub.s32 %v3957, %v3959
        %v3961 = vrot.slane %v3947, %v3960
        %v3962 = vcombine.low %v3954, %v3961
        %v3963 = vcombine.low %v3323, %v3325
        %v3964 = vcombine.low %v3333, %v3341
        %v3966 = vunpack.c.l.s4 1983009808
        %v3967 = vunpack.c.0.s8 %v3966
        %v3968 = vlaneseq
        %v3969 = vshrl.u32 %v3968, 7
        %v3970 = vsub.s32 %v3967, %v3969
        %v3971 = vrot.slane %v3963, %v3970
        %v3973 = vunpack.c.l.s4 1983009808
        %v3974 = vunpack.c.0.s8 %v3973
        %v3975 = vlaneseq
        %v3976 = vshrl.u32 %v3975, 7
        %v3977 = vsub.s32 %v3974, %v3976
        %v3978 = vrot.slane %v3964, %v3977
        %v3979 = vcombine.low %v3971, %v3978
        %v3980 = vcombine.low %v3340, %v3342
        %v3981 = vcombine.low %v3350, %v3358
        %v3983 = vunpack.c.l.s4 1983009808
        %v3984 = vunpack.c.0.s8 %v3983
        %v3985 = vlaneseq
        %v3986 = vshrl.u32 %v3985, 7
        %v3987 = vsub.s32 %v3984, %v3986
        %v3988 = vrot.slane %v3980, %v3987
        %v3990 = vunpack.c.l.s4 1983009808
        %v3991 = vunpack.c.0.s8 %v3990
        %v3992 = vlaneseq
        %v3993 = vshrl.u32 %v3992, 7
        %v3994 = vsub.s32 %v3991, %v3993
        %v3995 = vrot.slane %v3981, %v3994
        %v3996 = vcombine.low %v3988, %v3995
        %v3997 = vcombine.low %v3359, %v3367
        %v3998 = vcombine.low %v3375, %v3374
        %v4000 = vunpack.c.l.s4 1983009808
        %v4001 = vunpack.c.0.s8 %v4000
        %v4002 = vlaneseq
        %v4003 = vshrl.u32 %v4002, 7
        %v4004 = vsub.s32 %v4001, %v4003
        %v4005 = vrot.slane %v3997, %v4004
        %v4007 = vunpack.c.l.s4 1983009808
        %v4008 = vunpack.c.0.s8 %v4007
        %v4009 = vlaneseq
        %v4010 = vshrl.u32 %v4009, 7
        %v4011 = vsub.s32 %v4008, %v4010
        %v4012 = vrot.slane %v3998, %v4011
        %v4013 = vcombine.low %v4005, %v4012
        %v4014 = vcombine.low %v3376, %v3384
        %v4015 = vcombine.low %v3392, %v3391
        %v4017 = vunpack.c.l.s4 1983009808
        %v4018 = vunpack.c.0.s8 %v4017
        %v4019 = vlaneseq
        %v4020 = vshrl.u32 %v4019, 7
        %v4021 = vsub.s32 %v4018, %v4020
        %v4022 = vrot.slane %v4014, %v4021
        %v4024 = vunpack.c.l.s4 1983009808
        %v4025 = vunpack.c.0.s8 %v4024
        %v4026 = vlaneseq
        %v4027 = vshrl.u32 %v4026, 7
        %v4028 = vsub.s32 %v4025, %v4027
        %v4029 = vrot.slane %v4015, %v4028
        %v4030 = vcombine.low %v4022, %v4029
        %v4031 = vcombine.low %v3401, %v3409
        %v4032 = vcombine.low %v3408, %v3410
        %v4034 = vunpack.c.l.s4 1983009808
        %v4035 = vunpack.c.0.s8 %v4034
        %v4036 = vlaneseq
        %v4037 = vshrl.u32 %v4036, 7
        %v4038 = vsub.s32 %v4035, %v4037
        %v4039 = vrot.slane %v4031, %v4038
        %v4041 = vunpack.c.l.s4 1983009808
        %v4042 = vunpack.c.0.s8 %v4041
        %v4043 = vlaneseq
        %v4044 = vshrl.u32 %v4043, 7
        %v4045 = vsub.s32 %v4042, %v4044
        %v4046 = vrot.slane %v4032, %v4045
        %v4047 = vcombine.low %v4039, %v4046
        %v4048 = vcombine.low %v3418, %v3426
        %v4049 = vcombine.low %v3425, %v3427
        %v4051 = vunpack.c.l.s4 1983009808
        %v4052 = vunpack.c.0.s8 %v4051
        %v4053 = vlaneseq
        %v4054 = vshrl.u32 %v4053, 7
        %v4055 = vsub.s32 %v4052, %v4054
        %v4056 = vrot.slane %v4048, %v4055
        %v4058 = vunpack.c.l.s4 1983009808
        %v4059 = vunpack.c.0.s8 %v4058
        %v4060 = vlaneseq
        %v4061 = vshrl.u32 %v4060, 7
        %v4062 = vsub.s32 %v4059, %v4061
        %v4063 = vrot.slane %v4049, %v4062
        %v4064 = vcombine.low %v4056, %v4063
        %v4065 = vcombine.low %v3443, %v3442
        %v4066 = vcombine.low %v3444, %v3452
        %v4068 = vunpack.c.l.s4 1983009808
        %v4069 = vunpack.c.0.s8 %v4068
        %v4070 = vlaneseq
        %v4071 = vshrl.u32 %v4070, 7
        %v4072 = vsub.s32 %v4069, %v4071
        %v4073 = vrot.slane %v4065, %v4072
        %v4075 = vunpack.c.l.s4 1983009808
        %v4076 = vunpack.c.0.s8 %v4075
        %v4077 = vlaneseq
        %v4078 = vshrl.u32 %v4077, 7
        %v4079 = vsub.s32 %v4076, %v4078
        %v4080 = vrot.slane %v4066, %v4079
        %v4081 = vcombine.low %v4073, %v4080
        %v4082 = vcombine.low %v3460, %v3459
        %v4083 = vcombine.low %v3461, %v3469
        %v4085 = vunpack.c.l.s4 1983009808
        %v4086 = vunpack.c.0.s8 %v4085
        %v4087 = vlaneseq
        %v4088 = vshrl.u32 %v4087, 7
        %v4089 = vsub.s32 %v4086, %v4088
        %v4090 = vrot.slane %v4082, %v4089
        %v4092 = vunpack.c.l.s4 1983009808
        %v4093 = vunpack.c.0.s8 %v4092
        %v4094 = vlaneseq
        %v4095 = vshrl.u32 %v4094, 7
        %v4096 = vsub.s32 %v4093, %v4095
        %v4097 = vrot.slane %v4083, %v4096
        %v4098 = vcombine.low %v4090, %v4097
        %v4099 = vcombine.low %v3476, %v3478
        %v4100 = vcombine.low %v3486, %v3494
        %v4102 = vunpack.c.l.s4 1983009808
        %v4103 = vunpack.c.0.s8 %v4102
        %v4104 = vlaneseq
        %v4105 = vshrl.u32 %v4104, 7
        %v4106 = vsub.s32 %v4103, %v4105
        %v4107 = vrot.slane %v4099, %v4106
        %v4109 = vunpack.c.l.s4 1983009808
        %v4110 = vunpack.c.0.s8 %v4109
        %v4111 = vlaneseq
        %v4112 = vshrl.u32 %v4111, 7
        %v4113 = vsub.s32 %v4110, %v4112
        %v4114 = vrot.slane %v4100, %v4113
        %v4115 = vcombine.low %v4107, %v4114
        %v4116 = vcombine.low %v3493, %v3495
        %v4117 = vcombine.low %v3503, %v3511
        %v4119 = vunpack.c.l.s4 1983009808
        %v4120 = vunpack.c.0.s8 %v4119
        %v4121 = vlaneseq
        %v4122 = vshrl.u32 %v4121, 7
        %v4123 = vsub.s32 %v4120, %v4122
        %v4124 = vrot.slane %v4116, %v4123
        %v4126 = vunpack.c.l.s4 1983009808
        %v4127 = vunpack.c.0.s8 %v4126
        %v4128 = vlaneseq
        %v4129 = vshrl.u32 %v4128, 7
        %v4130 = vsub.s32 %v4127, %v4129
        %v4131 = vrot.slane %v4117, %v4130
        %v4132 = vcombine.low %v4124, %v4131
        %v4133 = vcombine.low %v3512, %v3520
        %v4134 = vcombine.low %v3528, %v3527
        %v4136 = vunpack.c.l.s4 1983009808
        %v4137 = vunpack.c.0.s8 %v4136
        %v4138 = vlaneseq
        %v4139 = vshrl.u32 %v4138, 7
        %v4140 = vsub.s32 %v4137, %v4139
        %v4141 = vrot.slane %v4133, %v4140
        %v4143 = vunpack.c.l.s4 1983009808
        %v4144 = vunpack.c.0.s8 %v4143
        %v4145 = vlaneseq
        %v4146 = vshrl.u32 %v4145, 7
        %v4147 = vsub.s32 %v4144, %v4146
        %v4148 = vrot.slane %v4134, %v4147
        %v4149 = vcombine.low %v4141, %v4148
        %v4150 = vcombine.low %v3529, %v3537
        %v4151 = vcombine.low %v3545, %v3544
        %v4153 = vunpack.c.l.s4 1983009808
        %v4154 = vunpack.c.0.s8 %v4153
        %v4155 = vlaneseq
        %v4156 = vshrl.u32 %v4155, 7
        %v4157 = vsub.s32 %v4154, %v4156
        %v4158 = vrot.slane %v4150, %v4157
        %v4160 = vunpack.c.l.s4 1983009808
        %v4161 = vunpack.c.0.s8 %v4160
        %v4162 = vlaneseq
        %v4163 = vshrl.u32 %v4162, 7
        %v4164 = vsub.s32 %v4161, %v4163
        %v4165 = vrot.slane %v4151, %v4164
        %v4166 = vcombine.low %v4158, %v4165
        %v4199 = vpack.c.bf16 %v3656, %v3639
        %v4200 = vpack.c.bf16 %v3690, %v3673
        %v4201 = vpack.c.bf16 %v3724, %v3707
        %v4202 = vpack.c.bf16 %v3758, %v3741
        %v4203 = vpack.c.bf16 %v3792, %v3775
        %v4204 = vpack.c.bf16 %v3826, %v3809
        %v4205 = vpack.c.bf16 %v3860, %v3843
        %v4206 = vpack.c.bf16 %v3894, %v3877
        %v4207 = vpack.c.bf16 %v3928, %v3911
        %v4208 = vpack.c.bf16 %v3962, %v3945
        %v4209 = vpack.c.bf16 %v3996, %v3979
        %v4210 = vpack.c.bf16 %v4030, %v4013
        %v4211 = vpack.c.bf16 %v4064, %v4047
        %v4212 = vpack.c.bf16 %v4098, %v4081
        %v4213 = vpack.c.bf16 %v4132, %v4115
        %v4214 = vpack.c.bf16 %v4166, %v4149
        %v4215 = vld [vmem:[%s5] sm:$0x3]
        %vm4216 = vcmask 1040384
        %vm4217 = vcmask 1042434
        %vm4218 = vmor %vm4216, %vm4217
        %vm4219 = vcmask 1044484
        %vm4220 = vmor %vm4218, %vm4219
        %vm4221 = vcmask 1046534
        %vm4222 = vmor %vm4220, %vm4221
        %v4223 = vrot.slane %v2942, 7
        %v4224 = vrot.slane %v4223, 2
        %v4225 = vrot.slane %v2950, 7
        %v4226 = vsel %vm4222, %v4224, %v4225
        %v4227 = vrot.slane %v4225, 2
        %v4228 = vrot.slane %v2949, 7
        %v4229 = vsel %vm4222, %v4227, %v4228
        %v4230 = vrot.slane %v4228, 2
        %v4231 = vrot.slane %v2951, 7
        %v4232 = vsel %vm4222, %v4230, %v4231
        %v4233 = vrot.slane %v4231, 2
        %v4234 = vrot.slane %v2959, 7
        %v4235 = vsel %vm4222, %v4233, %v4234
        %v4236 = vrot.slane %v4234, 2
        %v4237 = vrot.slane %v2967, 7
        %v4238 = vsel %vm4222, %v4236, %v4237
        %v4239 = vrot.slane %v4237, 2
        %v4240 = vrot.slane %v2966, 7
        %v4241 = vsel %vm4222, %v4239, %v4240
        %v4242 = vrot.slane %v4240, 2
        %v4243 = vrot.slane %v2968, 7
        %v4244 = vsel %vm4222, %v4242, %v4243
        %v4245 = vrot.slane %v4243, 2
        %v4246 = vrot.slane %v2976, 7
        %v4247 = vsel %vm4222, %v4245, %v4246
        %v4248 = vrot.slane %v2984, 7
        %v4249 = vrot.slane %v4248, 2
        %v4250 = vrot.slane %v2983, 7
        %v4251 = vsel %vm4222, %v4249, %v4250
        %v4252 = vrot.slane %v4250, 2
        %v4253 = vrot.slane %v2985, 7
        %v4254 = vsel %vm4222, %v4252, %v4253
        %v4255 = vrot.slane %v4253, 2
        %v4256 = vrot.slane %v2993, 7
        %v4257 = vsel %vm4222, %v4255, %v4256
        %v4258 = vrot.slane %v4256, 2
        %v4259 = vrot.slane %v3001, 7
        %v4260 = vsel %vm4222, %v4258, %v4259
        %v4261 = vrot.slane %v4259, 2
        %v4262 = vrot.slane %v3000, 7
        %v4263 = vsel %vm4222, %v4261, %v4262
        %v4264 = vrot.slane %v4262, 2
        %v4265 = vrot.slane %v3002, 7
        %v4266 = vsel %vm4222, %v4264, %v4265
        %v4267 = vrot.slane %v4265, 2
        %v4268 = vrot.slane %v3010, 7
        %v4269 = vsel %vm4222, %v4267, %v4268
        %v4270 = vrot.slane %v4268, 2
        %v4271 = vrot.slane %v3018, 7
        %v4272 = vsel %vm4222, %v4270, %v4271
        %v4273 = vrot.slane %v3017, 7
        %v4274 = vrot.slane %v4273, 2
        %v4275 = vrot.slane %v3019, 7
        %v4276 = vsel %vm4222, %v4274, %v4275
        %v4277 = vrot.slane %v4275, 2
        %v4278 = vrot.slane %v3027, 7
        %v4279 = vsel %vm4222, %v4277, %v4278
        %v4280 = vrot.slane %v4278, 2
        %v4281 = vrot.slane %v3035, 7
        %v4282 = vsel %vm4222, %v4280, %v4281
        %v4283 = vrot.slane %v4281, 2
        %v4284 = vrot.slane %v3034, 7
        %v4285 = vsel %vm4222, %v4283, %v4284
        %v4286 = vrot.slane %v4284, 2
        %v4287 = vrot.slane %v3036, 7
        %v4288 = vsel %vm4222, %v4286, %v4287
        %v4289 = vrot.slane %v4287, 2
        %v4290 = vrot.slane %v3044, 7
        %v4291 = vsel %vm4222, %v4289, %v4290
        %v4292 = vrot.slane %v4290, 2
        %v4293 = vrot.slane %v3052, 7
        %v4294 = vsel %vm4222, %v4292, %v4293
        %v4295 = vrot.slane %v4293, 2
        %v4296 = vrot.slane %v3051, 7
        %v4297 = vsel %vm4222, %v4295, %v4296
        %v4298 = vrot.slane %v3053, 7
        %v4299 = vrot.slane %v4298, 2
        %v4300 = vrot.slane %v3061, 7
        %v4301 = vsel %vm4222, %v4299, %v4300
        %v4302 = vrot.slane %v4300, 2
        %v4303 = vrot.slane %v3069, 7
        %v4304 = vsel %vm4222, %v4302, %v4303
        %v4305 = vrot.slane %v4303, 2
        %v4306 = vrot.slane %v3068, 7
        %v4307 = vsel %vm4222, %v4305, %v4306
        %v4308 = vrot.slane %v4306, 2
        %v4309 = vrot.slane %v3070, 7
        %v4310 = vsel %vm4222, %v4308, %v4309
        %v4311 = vrot.slane %v4309, 2
        %v4312 = vrot.slane %v3078, 7
        %v4313 = vsel %vm4222, %v4311, %v4312
        %v4314 = vrot.slane %v4312, 2
        %v4315 = vrot.slane %v3086, 7
        %v4316 = vsel %vm4222, %v4314, %v4315
        %v4317 = vrot.slane %v4315, 2
        %v4318 = vrot.slane %v3085, 7
        %v4319 = vsel %vm4222, %v4317, %v4318
        %v4320 = vrot.slane %v4318, 2
        %v4321 = vrot.slane %v3087, 7
        %v4322 = vsel %vm4222, %v4320, %v4321
        %v4323 = vrot.slane %v3095, 7
        %v4324 = vrot.slane %v4323, 2
        %v4325 = vrot.slane %v3103, 7
        %v4326 = vsel %vm4222, %v4324, %v4325
        %v4327 = vrot.slane %v4325, 2
        %v4328 = vrot.slane %v3102, 7
        %v4329 = vsel %vm4222, %v4327, %v4328
        %v4330 = vrot.slane %v4328, 2
        %v4331 = vrot.slane %v3104, 7
        %v4332 = vsel %vm4222, %v4330, %v4331
        %v4333 = vrot.slane %v4331, 2
        %v4334 = vrot.slane %v3112, 7
        %v4335 = vsel %vm4222, %v4333, %v4334
        %v4336 = vrot.slane %v4334, 2
        %v4337 = vrot.slane %v3120, 7
        %v4338 = vsel %vm4222, %v4336, %v4337
        %v4339 = vrot.slane %v4337, 2
        %v4340 = vrot.slane %v3119, 7
        %v4341 = vsel %vm4222, %v4339, %v4340
        %v4342 = vrot.slane %v4340, 2
        %v4343 = vrot.slane %v3121, 7
        %v4344 = vsel %vm4222, %v4342, %v4343
        %v4345 = vrot.slane %v4343, 2
        %v4346 = vrot.slane %v3129, 7
        %v4347 = vsel %vm4222, %v4345, %v4346
        %v4348 = vrot.slane %v3137, 7
        %v4349 = vrot.slane %v4348, 2
        %v4350 = vrot.slane %v3136, 7
        %v4351 = vsel %vm4222, %v4349, %v4350
        %v4352 = vrot.slane %v4350, 2
        %v4353 = vrot.slane %v3138, 7
        %v4354 = vsel %vm4222, %v4352, %v4353
        %v4355 = vrot.slane %v4353, 2
        %v4356 = vrot.slane %v3146, 7
        %v4357 = vsel %vm4222, %v4355, %v4356
        %v4358 = vrot.slane %v4356, 2
        %v4359 = vrot.slane %v3154, 7
        %v4360 = vsel %vm4222, %v4358, %v4359
        %v4361 = vrot.slane %v4359, 2
        %v4362 = vrot.slane %v3153, 7
        %v4363 = vsel %vm4222, %v4361, %v4362
        %v4364 = vrot.slane %v4362, 2
        %v4365 = vrot.slane %v3155, 7
        %v4366 = vsel %vm4222, %v4364, %v4365
        %v4367 = vrot.slane %v4365, 2
        %v4368 = vrot.slane %v3163, 7
        %v4369 = vsel %vm4222, %v4367, %v4368
        %v4370 = vrot.slane %v4368, 2
        %v4371 = vrot.slane %v3171, 7
        %v4372 = vsel %vm4222, %v4370, %v4371
        %v4373 = vrot.slane %v3170, 7
        %v4374 = vrot.slane %v4373, 2
        %v4375 = vrot.slane %v3172, 7
        %v4376 = vsel %vm4222, %v4374, %v4375
        %v4377 = vrot.slane %v4375, 2
        %v4378 = vrot.slane %v3180, 7
        %v4379 = vsel %vm4222, %v4377, %v4378
        %v4380 = vrot.slane %v4378, 2
        %v4381 = vrot.slane %v3188, 7
        %v4382 = vsel %vm4222, %v4380, %v4381
        %v4383 = vrot.slane %v4381, 2
        %v4384 = vrot.slane %v3187, 7
        %v4385 = vsel %vm4222, %v4383, %v4384
        %v4386 = vrot.slane %v4384, 2
        %v4387 = vrot.slane %v3189, 7
        %v4388 = vsel %vm4222, %v4386, %v4387
        %v4389 = vrot.slane %v4387, 2
        %v4390 = vrot.slane %v3197, 7
        %v4391 = vsel %vm4222, %v4389, %v4390
        %v4392 = vrot.slane %v4390, 2
        %v4393 = vrot.slane %v3205, 7
        %v4394 = vsel %vm4222, %v4392, %v4393
        %v4395 = vrot.slane %v4393, 2
        %v4396 = vrot.slane %v3204, 7
        %v4397 = vsel %vm4222, %v4395, %v4396
        %v4398 = vrot.slane %v3206, 7
        %v4399 = vrot.slane %v4398, 2
        %v4400 = vrot.slane %v3214, 7
        %v4401 = vsel %vm4222, %v4399, %v4400
        %v4402 = vrot.slane %v4400, 2
        %v4403 = vrot.slane %v3222, 7
        %v4404 = vsel %vm4222, %v4402, %v4403
        %v4405 = vrot.slane %v4403, 2
        %v4406 = vrot.slane %v3221, 7
        %v4407 = vsel %vm4222, %v4405, %v4406
        %v4408 = vrot.slane %v4406, 2
        %v4409 = vrot.slane %v3223, 7
        %v4410 = vsel %vm4222, %v4408, %v4409
        %v4411 = vrot.slane %v4409, 2
        %v4412 = vrot.slane %v3231, 7
        %v4413 = vsel %vm4222, %v4411, %v4412
        %v4414 = vrot.slane %v4412, 2
        %v4415 = vrot.slane %v3239, 7
        %v4416 = vsel %vm4222, %v4414, %v4415
        %v4417 = vrot.slane %v4415, 2
        %v4418 = vrot.slane %v3238, 7
        %v4419 = vsel %vm4222, %v4417, %v4418
        %v4420 = vrot.slane %v4418, 2
        %v4421 = vrot.slane %v3240, 7
        %v4422 = vsel %vm4222, %v4420, %v4421
        %v4423 = vrot.slane %v3248, 7
        %v4424 = vrot.slane %v4423, 2
        %v4425 = vrot.slane %v3256, 7
        %v4426 = vsel %vm4222, %v4424, %v4425
        %v4427 = vrot.slane %v4425, 2
        %v4428 = vrot.slane %v3255, 7
        %v4429 = vsel %vm4222, %v4427, %v4428
        %v4430 = vrot.slane %v4428, 2
        %v4431 = vrot.slane %v3257, 7
        %v4432 = vsel %vm4222, %v4430, %v4431
        %v4433 = vrot.slane %v4431, 2
        %v4434 = vrot.slane %v3265, 7
        %v4435 = vsel %vm4222, %v4433, %v4434
        %v4436 = vrot.slane %v4434, 2
        %v4437 = vrot.slane %v3273, 7
        %v4438 = vsel %vm4222, %v4436, %v4437
        %v4439 = vrot.slane %v4437, 2
        %v4440 = vrot.slane %v3272, 7
        %v4441 = vsel %vm4222, %v4439, %v4440
        %v4442 = vrot.slane %v4440, 2
        %v4443 = vrot.slane %v3274, 7
        %v4444 = vsel %vm4222, %v4442, %v4443
        %v4445 = vrot.slane %v4443, 2
        %v4446 = vrot.slane %v3282, 7
        %v4447 = vsel %vm4222, %v4445, %v4446
        %v4448 = vrot.slane %v3290, 7
        %v4449 = vrot.slane %v4448, 2
        %v4450 = vrot.slane %v3289, 7
        %v4451 = vsel %vm4222, %v4449, %v4450
        %v4452 = vrot.slane %v4450, 2
        %v4453 = vrot.slane %v3291, 7
        %v4454 = vsel %vm4222, %v4452, %v4453
        %v4455 = vrot.slane %v4453, 2
        %v4456 = vrot.slane %v3299, 7
        %v4457 = vsel %vm4222, %v4455, %v4456
        %v4458 = vrot.slane %v4456, 2
        %v4459 = vrot.slane %v3307, 7
        %v4460 = vsel %vm4222, %v4458, %v4459
        %v4461 = vrot.slane %v4459, 2
        %v4462 = vrot.slane %v3306, 7
        %v4463 = vsel %vm4222, %v4461, %v4462
        %v4464 = vrot.slane %v4462, 2
        %v4465 = vrot.slane %v3308, 7
        %v4466 = vsel %vm4222, %v4464, %v4465
        %v4467 = vrot.slane %v4465, 2
        %v4468 = vrot.slane %v3316, 7
        %v4469 = vsel %vm4222, %v4467, %v4468
        %v4470 = vrot.slane %v4468, 2
        %v4471 = vrot.slane %v3324, 7
        %v4472 = vsel %vm4222, %v4470, %v4471
        %v4473 = vrot.slane %v3323, 7
        %v4474 = vrot.slane %v4473, 2
        %v4475 = vrot.slane %v3325, 7
        %v4476 = vsel %vm4222, %v4474, %v4475
        %v4477 = vrot.slane %v4475, 2
        %v4478 = vrot.slane %v3333, 7
        %v4479 = vsel %vm4222, %v4477, %v4478
        %v4480 = vrot.slane %v4478, 2
        %v4481 = vrot.slane %v3341, 7
        %v4482 = vsel %vm4222, %v4480, %v4481
        %v4483 = vrot.slane %v4481, 2
        %v4484 = vrot.slane %v3340, 7
        %v4485 = vsel %vm4222, %v4483, %v4484
        %v4486 = vrot.slane %v4484, 2
        %v4487 = vrot.slane %v3342, 7
        %v4488 = vsel %vm4222, %v4486, %v4487
        %v4489 = vrot.slane %v4487, 2
        %v4490 = vrot.slane %v3350, 7
        %v4491 = vsel %vm4222, %v4489, %v4490
        %v4492 = vrot.slane %v4490, 2
        %v4493 = vrot.slane %v3358, 7
        %v4494 = vsel %vm4222, %v4492, %v4493
        %v4495 = vrot.slane %v4493, 2
        %v4496 = vrot.slane %v3357, 7
        %v4497 = vsel %vm4222, %v4495, %v4496
        %v4498 = vrot.slane %v3359, 7
        %v4499 = vrot.slane %v4498, 2
        %v4500 = vrot.slane %v3367, 7
        %v4501 = vsel %vm4222, %v4499, %v4500
        %v4502 = vrot.slane %v4500, 2
        %v4503 = vrot.slane %v3375, 7
        %v4504 = vsel %vm4222, %v4502, %v4503
        %v4505 = vrot.slane %v4503, 2
        %v4506 = vrot.slane %v3374, 7
        %v4507 = vsel %vm4222, %v4505, %v4506
        %v4508 = vrot.slane %v4506, 2
        %v4509 = vrot.slane %v3376, 7
        %v4510 = vsel %vm4222, %v4508, %v4509
        %v4511 = vrot.slane %v4509, 2
        %v4512 = vrot.slane %v3384, 7
        %v4513 = vsel %vm4222, %v4511, %v4512
        %v4514 = vrot.slane %v4512, 2
        %v4515 = vrot.slane %v3392, 7
        %v4516 = vsel %vm4222, %v4514, %v4515
        %v4517 = vrot.slane %v4515, 2
        %v4518 = vrot.slane %v3391, 7
        %v4519 = vsel %vm4222, %v4517, %v4518
        %v4520 = vrot.slane %v4518, 2
        %v4521 = vrot.slane %v3393, 7
        %v4522 = vsel %vm4222, %v4520, %v4521
        %v4523 = vrot.slane %v3401, 7
        %v4524 = vrot.slane %v4523, 2
        %v4525 = vrot.slane %v3409, 7
        %v4526 = vsel %vm4222, %v4524, %v4525
        %v4527 = vrot.slane %v4525, 2
        %v4528 = vrot.slane %v3408, 7
        %v4529 = vsel %vm4222, %v4527, %v4528
        %v4530 = vrot.slane %v4528, 2
        %v4531 = vrot.slane %v3410, 7
        %v4532 = vsel %vm4222, %v4530, %v4531
        %v4533 = vrot.slane %v4531, 2
        %v4534 = vrot.slane %v3418, 7
        %v4535 = vsel %vm4222, %v4533, %v4534
        %v4536 = vrot.slane %v4534, 2
        %v4537 = vrot.slane %v3426, 7
        %v4538 = vsel %vm4222, %v4536, %v4537
        %v4539 = vrot.slane %v4537, 2
        %v4540 = vrot.slane %v3425, 7
        %v4541 = vsel %vm4222, %v4539, %v4540
        %v4542 = vrot.slane %v4540, 2
        %v4543 = vrot.slane %v3427, 7
        %v4544 = vsel %vm4222, %v4542, %v4543
        %v4545 = vrot.slane %v4543, 2
        %v4546 = vrot.slane %v3435, 7
        %v4547 = vsel %vm4222, %v4545, %v4546
        %v4548 = vrot.slane %v3443, 7
        %v4549 = vrot.slane %v4548, 2
        %v4550 = vrot.slane %v3442, 7
        %v4551 = vsel %vm4222, %v4549, %v4550
        %v4552 = vrot.slane %v4550, 2
        %v4553 = vrot.slane %v3444, 7
        %v4554 = vsel %vm4222, %v4552, %v4553
        %v4555 = vrot.slane %v4553, 2
        %v4556 = vrot.slane %v3452, 7
        %v4557 = vsel %vm4222, %v4555, %v4556
        %v4558 = vrot.slane %v4556, 2
        %v4559 = vrot.slane %v3460, 7
        %v4560 = vsel %vm4222, %v4558, %v4559
        %v4561 = vrot.slane %v4559, 2
        %v4562 = vrot.slane %v3459, 7
        %v4563 = vsel %vm4222, %v4561, %v4562
        %v4564 = vrot.slane %v4562, 2
        %v4565 = vrot.slane %v3461, 7
        %v4566 = vsel %vm4222, %v4564, %v4565
        %v4567 = vrot.slane %v4565, 2
        %v4568 = vrot.slane %v3469, 7
        %v4569 = vsel %vm4222, %v4567, %v4568
        %v4570 = vrot.slane %v4568, 2
        %v4571 = vrot.slane %v3477, 7
        %v4572 = vsel %vm4222, %v4570, %v4571
        %v4573 = vrot.slane %v3476, 7
        %v4574 = vrot.slane %v4573, 2
        %v4575 = vrot.slane %v3478, 7
        %v4576 = vsel %vm4222, %v4574, %v4575
        %v4577 = vrot.slane %v4575, 2
        %v4578 = vrot.slane %v3486, 7
        %v4579 = vsel %vm4222, %v4577, %v4578
        %v4580 = vrot.slane %v4578, 2
        %v4581 = vrot.slane %v3494, 7
        %v4582 = vsel %vm4222, %v4580, %v4581
        %v4583 = vrot.slane %v4581, 2
        %v4584 = vrot.slane %v3493, 7
        %v4585 = vsel %vm4222, %v4583, %v4584
        %v4586 = vrot.slane %v4584, 2
        %v4587 = vrot.slane %v3495, 7
        %v4588 = vsel %vm4222, %v4586, %v4587
        %v4589 = vrot.slane %v4587, 2
        %v4590 = vrot.slane %v3503, 7
        %v4591 = vsel %vm4222, %v4589, %v4590
        %v4592 = vrot.slane %v4590, 2
        %v4593 = vrot.slane %v3511, 7
        %v4594 = vsel %vm4222, %v4592, %v4593
        %v4595 = vrot.slane %v4593, 2
        %v4596 = vrot.slane %v3510, 7
        %v4597 = vsel %vm4222, %v4595, %v4596
        %v4598 = vrot.slane %v3512, 7
        %v4599 = vrot.slane %v4598, 2
        %v4600 = vrot.slane %v3520, 7
        %v4601 = vsel %vm4222, %v4599, %v4600
        %v4602 = vrot.slane %v4600, 2
        %v4603 = vrot.slane %v3528, 7
        %v4604 = vsel %vm4222, %v4602, %v4603
        %v4605 = vrot.slane %v4603, 2
        %v4606 = vrot.slane %v3527, 7
        %v4607 = vsel %vm4222, %v4605, %v4606
        %v4608 = vrot.slane %v4606, 2
        %v4609 = vrot.slane %v3529, 7
        %v4610 = vsel %vm4222, %v4608, %v4609
        %v4611 = vrot.slane %v4609, 2
        %v4612 = vrot.slane %v3537, 7
        %v4613 = vsel %vm4222, %v4611, %v4612
        %v4614 = vrot.slane %v4612, 2
        %v4615 = vrot.slane %v3545, 7
        %v4616 = vsel %vm4222, %v4614, %v4615
        %v4617 = vrot.slane %v4615, 2
        %v4618 = vrot.slane %v3544, 7
        %v4619 = vsel %vm4222, %v4617, %v4618
        %v4620 = vrot.slane %v4618, 2
        %v4621 = vrot.slane %v3546, 7
        %v4622 = vsel %vm4222, %v4620, %v4621
        %v4623 = vcombine.low %v4226, %v4229
        %v4624 = vcombine.low %v4232, %v4235
        %v4626 = vunpack.c.l.s4 1983009808
        %v4627 = vunpack.c.0.s8 %v4626
        %v4628 = vlaneseq
        %v4629 = vshrl.u32 %v4628, 7
        %v4630 = vsub.s32 %v4627, %v4629
        %v4631 = vrot.slane %v4623, %v4630
        %v4633 = vunpack.c.l.s4 1983009808
        %v4634 = vunpack.c.0.s8 %v4633
        %v4635 = vlaneseq
        %v4636 = vshrl.u32 %v4635, 7
        %v4637 = vsub.s32 %v4634, %v4636
        %v4638 = vrot.slane %v4624, %v4637
        %v4639 = vcombine.low %v4631, %v4638
        %v4640 = vcombine.low %v4238, %v4241
        %v4641 = vcombine.low %v4244, %v4247
        %v4643 = vunpack.c.l.s4 1983009808
        %v4644 = vunpack.c.0.s8 %v4643
        %v4645 = vlaneseq
        %v4646 = vshrl.u32 %v4645, 7
        %v4647 = vsub.s32 %v4644, %v4646
        %v4648 = vrot.slane %v4640, %v4647
        %v4650 = vunpack.c.l.s4 1983009808
        %v4651 = vunpack.c.0.s8 %v4650
        %v4652 = vlaneseq
        %v4653 = vshrl.u32 %v4652, 7
        %v4654 = vsub.s32 %v4651, %v4653
        %v4655 = vrot.slane %v4641, %v4654
        %v4656 = vcombine.low %v4648, %v4655
        %v4657 = vcombine.low %v4251, %v4254
        %v4658 = vcombine.low %v4257, %v4260
        %v4660 = vunpack.c.l.s4 1983009808
        %v4661 = vunpack.c.0.s8 %v4660
        %v4662 = vlaneseq
        %v4663 = vshrl.u32 %v4662, 7
        %v4664 = vsub.s32 %v4661, %v4663
        %v4665 = vrot.slane %v4657, %v4664
        %v4667 = vunpack.c.l.s4 1983009808
        %v4668 = vunpack.c.0.s8 %v4667
        %v4669 = vlaneseq
        %v4670 = vshrl.u32 %v4669, 7
        %v4671 = vsub.s32 %v4668, %v4670
        %v4672 = vrot.slane %v4658, %v4671
        %v4673 = vcombine.low %v4665, %v4672
        %v4674 = vcombine.low %v4263, %v4266
        %v4675 = vcombine.low %v4269, %v4272
        %v4677 = vunpack.c.l.s4 1983009808
        %v4678 = vunpack.c.0.s8 %v4677
        %v4679 = vlaneseq
        %v4680 = vshrl.u32 %v4679, 7
        %v4681 = vsub.s32 %v4678, %v4680
        %v4682 = vrot.slane %v4674, %v4681
        %v4684 = vunpack.c.l.s4 1983009808
        %v4685 = vunpack.c.0.s8 %v4684
        %v4686 = vlaneseq
        %v4687 = vshrl.u32 %v4686, 7
        %v4688 = vsub.s32 %v4685, %v4687
        %v4689 = vrot.slane %v4675, %v4688
        %v4690 = vcombine.low %v4682, %v4689
        %v4691 = vcombine.low %v4276, %v4279
        %v4692 = vcombine.low %v4282, %v4285
        %v4694 = vunpack.c.l.s4 1983009808
        %v4695 = vunpack.c.0.s8 %v4694
        %v4696 = vlaneseq
        %v4697 = vshrl.u32 %v4696, 7
        %v4698 = vsub.s32 %v4695, %v4697
        %v4699 = vrot.slane %v4691, %v4698
        %v4701 = vunpack.c.l.s4 1983009808
        %v4702 = vunpack.c.0.s8 %v4701
        %v4703 = vlaneseq
        %v4704 = vshrl.u32 %v4703, 7
        %v4705 = vsub.s32 %v4702, %v4704
        %v4706 = vrot.slane %v4692, %v4705
        %v4707 = vcombine.low %v4699, %v4706
        %v4708 = vcombine.low %v4288, %v4291
        %v4709 = vcombine.low %v4294, %v4297
        %v4711 = vunpack.c.l.s4 1983009808
        %v4712 = vunpack.c.0.s8 %v4711
        %v4713 = vlaneseq
        %v4714 = vshrl.u32 %v4713, 7
        %v4715 = vsub.s32 %v4712, %v4714
        %v4716 = vrot.slane %v4708, %v4715
        %v4718 = vunpack.c.l.s4 1983009808
        %v4719 = vunpack.c.0.s8 %v4718
        %v4720 = vlaneseq
        %v4721 = vshrl.u32 %v4720, 7
        %v4722 = vsub.s32 %v4719, %v4721
        %v4723 = vrot.slane %v4709, %v4722
        %v4724 = vcombine.low %v4716, %v4723
        %v4725 = vcombine.low %v4301, %v4304
        %v4726 = vcombine.low %v4307, %v4310
        %v4728 = vunpack.c.l.s4 1983009808
        %v4729 = vunpack.c.0.s8 %v4728
        %v4730 = vlaneseq
        %v4731 = vshrl.u32 %v4730, 7
        %v4732 = vsub.s32 %v4729, %v4731
        %v4733 = vrot.slane %v4725, %v4732
        %v4735 = vunpack.c.l.s4 1983009808
        %v4736 = vunpack.c.0.s8 %v4735
        %v4737 = vlaneseq
        %v4738 = vshrl.u32 %v4737, 7
        %v4739 = vsub.s32 %v4736, %v4738
        %v4740 = vrot.slane %v4726, %v4739
        %v4741 = vcombine.low %v4733, %v4740
        %v4742 = vcombine.low %v4313, %v4316
        %v4743 = vcombine.low %v4319, %v4322
        %v4745 = vunpack.c.l.s4 1983009808
        %v4746 = vunpack.c.0.s8 %v4745
        %v4747 = vlaneseq
        %v4748 = vshrl.u32 %v4747, 7
        %v4749 = vsub.s32 %v4746, %v4748
        %v4750 = vrot.slane %v4742, %v4749
        %v4752 = vunpack.c.l.s4 1983009808
        %v4753 = vunpack.c.0.s8 %v4752
        %v4754 = vlaneseq
        %v4755 = vshrl.u32 %v4754, 7
        %v4756 = vsub.s32 %v4753, %v4755
        %v4757 = vrot.slane %v4743, %v4756
        %v4758 = vcombine.low %v4750, %v4757
        %v4759 = vcombine.low %v4326, %v4329
        %v4760 = vcombine.low %v4332, %v4335
        %v4762 = vunpack.c.l.s4 1983009808
        %v4763 = vunpack.c.0.s8 %v4762
        %v4764 = vlaneseq
        %v4765 = vshrl.u32 %v4764, 7
        %v4766 = vsub.s32 %v4763, %v4765
        %v4767 = vrot.slane %v4759, %v4766
        %v4769 = vunpack.c.l.s4 1983009808
        %v4770 = vunpack.c.0.s8 %v4769
        %v4771 = vlaneseq
        %v4772 = vshrl.u32 %v4771, 7
        %v4773 = vsub.s32 %v4770, %v4772
        %v4774 = vrot.slane %v4760, %v4773
        %v4775 = vcombine.low %v4767, %v4774
        %v4776 = vcombine.low %v4338, %v4341
        %v4777 = vcombine.low %v4344, %v4347
        %v4779 = vunpack.c.l.s4 1983009808
        %v4780 = vunpack.c.0.s8 %v4779
        %v4781 = vlaneseq
        %v4782 = vshrl.u32 %v4781, 7
        %v4783 = vsub.s32 %v4780, %v4782
        %v4784 = vrot.slane %v4776, %v4783
        %v4786 = vunpack.c.l.s4 1983009808
        %v4787 = vunpack.c.0.s8 %v4786
        %v4788 = vlaneseq
        %v4789 = vshrl.u32 %v4788, 7
        %v4790 = vsub.s32 %v4787, %v4789
        %v4791 = vrot.slane %v4777, %v4790
        %v4792 = vcombine.low %v4784, %v4791
        %v4793 = vcombine.low %v4351, %v4354
        %v4794 = vcombine.low %v4357, %v4360
        %v4796 = vunpack.c.l.s4 1983009808
        %v4797 = vunpack.c.0.s8 %v4796
        %v4798 = vlaneseq
        %v4799 = vshrl.u32 %v4798, 7
        %v4800 = vsub.s32 %v4797, %v4799
        %v4801 = vrot.slane %v4793, %v4800
        %v4803 = vunpack.c.l.s4 1983009808
        %v4804 = vunpack.c.0.s8 %v4803
        %v4805 = vlaneseq
        %v4806 = vshrl.u32 %v4805, 7
        %v4807 = vsub.s32 %v4804, %v4806
        %v4808 = vrot.slane %v4794, %v4807
        %v4809 = vcombine.low %v4801, %v4808
        %v4810 = vcombine.low %v4363, %v4366
        %v4811 = vcombine.low %v4369, %v4372
        %v4813 = vunpack.c.l.s4 1983009808
        %v4814 = vunpack.c.0.s8 %v4813
        %v4815 = vlaneseq
        %v4816 = vshrl.u32 %v4815, 7
        %v4817 = vsub.s32 %v4814, %v4816
        %v4818 = vrot.slane %v4810, %v4817
        %v4820 = vunpack.c.l.s4 1983009808
        %v4821 = vunpack.c.0.s8 %v4820
        %v4822 = vlaneseq
        %v4823 = vshrl.u32 %v4822, 7
        %v4824 = vsub.s32 %v4821, %v4823
        %v4825 = vrot.slane %v4811, %v4824
        %v4826 = vcombine.low %v4818, %v4825
        %v4827 = vcombine.low %v4376, %v4379
        %v4828 = vcombine.low %v4382, %v4385
        %v4830 = vunpack.c.l.s4 1983009808
        %v4831 = vunpack.c.0.s8 %v4830
        %v4832 = vlaneseq
        %v4833 = vshrl.u32 %v4832, 7
        %v4834 = vsub.s32 %v4831, %v4833
        %v4835 = vrot.slane %v4827, %v4834
        %v4837 = vunpack.c.l.s4 1983009808
        %v4838 = vunpack.c.0.s8 %v4837
        %v4839 = vlaneseq
        %v4840 = vshrl.u32 %v4839, 7
        %v4841 = vsub.s32 %v4838, %v4840
        %v4842 = vrot.slane %v4828, %v4841
        %v4843 = vcombine.low %v4835, %v4842
        %v4844 = vcombine.low %v4388, %v4391
        %v4845 = vcombine.low %v4394, %v4397
        %v4847 = vunpack.c.l.s4 1983009808
        %v4848 = vunpack.c.0.s8 %v4847
        %v4849 = vlaneseq
        %v4850 = vshrl.u32 %v4849, 7
        %v4851 = vsub.s32 %v4848, %v4850
        %v4852 = vrot.slane %v4844, %v4851
        %v4854 = vunpack.c.l.s4 1983009808
        %v4855 = vunpack.c.0.s8 %v4854
        %v4856 = vlaneseq
        %v4857 = vshrl.u32 %v4856, 7
        %v4858 = vsub.s32 %v4855, %v4857
        %v4859 = vrot.slane %v4845, %v4858
        %v4860 = vcombine.low %v4852, %v4859
        %v4861 = vcombine.low %v4401, %v4404
        %v4862 = vcombine.low %v4407, %v4410
        %v4864 = vunpack.c.l.s4 1983009808
        %v4865 = vunpack.c.0.s8 %v4864
        %v4866 = vlaneseq
        %v4867 = vshrl.u32 %v4866, 7
        %v4868 = vsub.s32 %v4865, %v4867
        %v4869 = vrot.slane %v4861, %v4868
        %v4871 = vunpack.c.l.s4 1983009808
        %v4872 = vunpack.c.0.s8 %v4871
        %v4873 = vlaneseq
        %v4874 = vshrl.u32 %v4873, 7
        %v4875 = vsub.s32 %v4872, %v4874
        %v4876 = vrot.slane %v4862, %v4875
        %v4877 = vcombine.low %v4869, %v4876
        %v4878 = vcombine.low %v4413, %v4416
        %v4879 = vcombine.low %v4419, %v4422
        %v4881 = vunpack.c.l.s4 1983009808
        %v4882 = vunpack.c.0.s8 %v4881
        %v4883 = vlaneseq
        %v4884 = vshrl.u32 %v4883, 7
        %v4885 = vsub.s32 %v4882, %v4884
        %v4886 = vrot.slane %v4878, %v4885
        %v4888 = vunpack.c.l.s4 1983009808
        %v4889 = vunpack.c.0.s8 %v4888
        %v4890 = vlaneseq
        %v4891 = vshrl.u32 %v4890, 7
        %v4892 = vsub.s32 %v4889, %v4891
        %v4893 = vrot.slane %v4879, %v4892
        %v4894 = vcombine.low %v4886, %v4893
        %v4895 = vcombine.low %v4426, %v4429
        %v4896 = vcombine.low %v4432, %v4435
        %v4898 = vunpack.c.l.s4 1983009808
        %v4899 = vunpack.c.0.s8 %v4898
        %v4900 = vlaneseq
        %v4901 = vshrl.u32 %v4900, 7
        %v4902 = vsub.s32 %v4899, %v4901
        %v4903 = vrot.slane %v4895, %v4902
        %v4905 = vunpack.c.l.s4 1983009808
        %v4906 = vunpack.c.0.s8 %v4905
        %v4907 = vlaneseq
        %v4908 = vshrl.u32 %v4907, 7
        %v4909 = vsub.s32 %v4906, %v4908
        %v4910 = vrot.slane %v4896, %v4909
        %v4911 = vcombine.low %v4903, %v4910
        %v4912 = vcombine.low %v4438, %v4441
        %v4913 = vcombine.low %v4444, %v4447
        %v4915 = vunpack.c.l.s4 1983009808
        %v4916 = vunpack.c.0.s8 %v4915
        %v4917 = vlaneseq
        %v4918 = vshrl.u32 %v4917, 7
        %v4919 = vsub.s32 %v4916, %v4918
        %v4920 = vrot.slane %v4912, %v4919
        %v4922 = vunpack.c.l.s4 1983009808
        %v4923 = vunpack.c.0.s8 %v4922
        %v4924 = vlaneseq
        %v4925 = vshrl.u32 %v4924, 7
        %v4926 = vsub.s32 %v4923, %v4925
        %v4927 = vrot.slane %v4913, %v4926
        %v4928 = vcombine.low %v4920, %v4927
        %v4929 = vcombine.low %v4451, %v4454
        %v4930 = vcombine.low %v4457, %v4460
        %v4932 = vunpack.c.l.s4 1983009808
        %v4933 = vunpack.c.0.s8 %v4932
        %v4934 = vlaneseq
        %v4935 = vshrl.u32 %v4934, 7
        %v4936 = vsub.s32 %v4933, %v4935
        %v4937 = vrot.slane %v4929, %v4936
        %v4939 = vunpack.c.l.s4 1983009808
        %v4940 = vunpack.c.0.s8 %v4939
        %v4941 = vlaneseq
        %v4942 = vshrl.u32 %v4941, 7
        %v4943 = vsub.s32 %v4940, %v4942
        %v4944 = vrot.slane %v4930, %v4943
        %v4945 = vcombine.low %v4937, %v4944
        %v4946 = vcombine.low %v4463, %v4466
        %v4947 = vcombine.low %v4469, %v4472
        %v4949 = vunpack.c.l.s4 1983009808
        %v4950 = vunpack.c.0.s8 %v4949
        %v4951 = vlaneseq
        %v4952 = vshrl.u32 %v4951, 7
        %v4953 = vsub.s32 %v4950, %v4952
        %v4954 = vrot.slane %v4946, %v4953
        %v4956 = vunpack.c.l.s4 1983009808
        %v4957 = vunpack.c.0.s8 %v4956
        %v4958 = vlaneseq
        %v4959 = vshrl.u32 %v4958, 7
        %v4960 = vsub.s32 %v4957, %v4959
        %v4961 = vrot.slane %v4947, %v4960
        %v4962 = vcombine.low %v4954, %v4961
        %v4963 = vcombine.low %v4476, %v4479
        %v4964 = vcombine.low %v4482, %v4485
        %v4966 = vunpack.c.l.s4 1983009808
        %v4967 = vunpack.c.0.s8 %v4966
        %v4968 = vlaneseq
        %v4969 = vshrl.u32 %v4968, 7
        %v4970 = vsub.s32 %v4967, %v4969
        %v4971 = vrot.slane %v4963, %v4970
        %v4973 = vunpack.c.l.s4 1983009808
        %v4974 = vunpack.c.0.s8 %v4973
        %v4975 = vlaneseq
        %v4976 = vshrl.u32 %v4975, 7
        %v4977 = vsub.s32 %v4974, %v4976
        %v4978 = vrot.slane %v4964, %v4977
        %v4979 = vcombine.low %v4971, %v4978
        %v4980 = vcombine.low %v4488, %v4491
        %v4981 = vcombine.low %v4494, %v4497
        %v4983 = vunpack.c.l.s4 1983009808
        %v4984 = vunpack.c.0.s8 %v4983
        %v4985 = vlaneseq
        %v4986 = vshrl.u32 %v4985, 7
        %v4987 = vsub.s32 %v4984, %v4986
        %v4988 = vrot.slane %v4980, %v4987
        %v4990 = vunpack.c.l.s4 1983009808
        %v4991 = vunpack.c.0.s8 %v4990
        %v4992 = vlaneseq
        %v4993 = vshrl.u32 %v4992, 7
        %v4994 = vsub.s32 %v4991, %v4993
        %v4995 = vrot.slane %v4981, %v4994
        %v4996 = vcombine.low %v4988, %v4995
        %v4997 = vcombine.low %v4501, %v4504
        %v4998 = vcombine.low %v4507, %v4510
        %v5000 = vunpack.c.l.s4 1983009808
        %v5001 = vunpack.c.0.s8 %v5000
        %v5002 = vlaneseq
        %v5003 = vshrl.u32 %v5002, 7
        %v5004 = vsub.s32 %v5001, %v5003
        %v5005 = vrot.slane %v4997, %v5004
        %v5007 = vunpack.c.l.s4 1983009808
        %v5008 = vunpack.c.0.s8 %v5007
        %v5009 = vlaneseq
        %v5010 = vshrl.u32 %v5009, 7
        %v5011 = vsub.s32 %v5008, %v5010
        %v5012 = vrot.slane %v4998, %v5011
        %v5013 = vcombine.low %v5005, %v5012
        %v5014 = vcombine.low %v4513, %v4516
        %v5015 = vcombine.low %v4519, %v4522
        %v5017 = vunpack.c.l.s4 1983009808
        %v5018 = vunpack.c.0.s8 %v5017
        %v5019 = vlaneseq
        %v5020 = vshrl.u32 %v5019, 7
        %v5021 = vsub.s32 %v5018, %v5020
        %v5022 = vrot.slane %v5014, %v5021
        %v5024 = vunpack.c.l.s4 1983009808
        %v5025 = vunpack.c.0.s8 %v5024
        %v5026 = vlaneseq
        %v5027 = vshrl.u32 %v5026, 7
        %v5028 = vsub.s32 %v5025, %v5027
        %v5029 = vrot.slane %v5015, %v5028
        %v5030 = vcombine.low %v5022, %v5029
        %v5031 = vcombine.low %v4526, %v4529
        %v5032 = vcombine.low %v4532, %v4535
        %v5034 = vunpack.c.l.s4 1983009808
        %v5035 = vunpack.c.0.s8 %v5034
        %v5036 = vlaneseq
        %v5037 = vshrl.u32 %v5036, 7
        %v5038 = vsub.s32 %v5035, %v5037
        %v5039 = vrot.slane %v5031, %v5038
        %v5041 = vunpack.c.l.s4 1983009808
        %v5042 = vunpack.c.0.s8 %v5041
        %v5043 = vlaneseq
        %v5044 = vshrl.u32 %v5043, 7
        %v5045 = vsub.s32 %v5042, %v5044
        %v5046 = vrot.slane %v5032, %v5045
        %v5047 = vcombine.low %v5039, %v5046
        %v5048 = vcombine.low %v4538, %v4541
        %v5049 = vcombine.low %v4544, %v4547
        %v5051 = vunpack.c.l.s4 1983009808
        %v5052 = vunpack.c.0.s8 %v5051
        %v5053 = vlaneseq
        %v5054 = vshrl.u32 %v5053, 7
        %v5055 = vsub.s32 %v5052, %v5054
        %v5056 = vrot.slane %v5048, %v5055
        %v5058 = vunpack.c.l.s4 1983009808
        %v5059 = vunpack.c.0.s8 %v5058
        %v5060 = vlaneseq
        %v5061 = vshrl.u32 %v5060, 7
        %v5062 = vsub.s32 %v5059, %v5061
        %v5063 = vrot.slane %v5049, %v5062
        %v5064 = vcombine.low %v5056, %v5063
        %v5065 = vcombine.low %v4551, %v4554
        %v5066 = vcombine.low %v4557, %v4560
        %v5068 = vunpack.c.l.s4 1983009808
        %v5069 = vunpack.c.0.s8 %v5068
        %v5070 = vlaneseq
        %v5071 = vshrl.u32 %v5070, 7
        %v5072 = vsub.s32 %v5069, %v5071
        %v5073 = vrot.slane %v5065, %v5072
        %v5075 = vunpack.c.l.s4 1983009808
        %v5076 = vunpack.c.0.s8 %v5075
        %v5077 = vlaneseq
        %v5078 = vshrl.u32 %v5077, 7
        %v5079 = vsub.s32 %v5076, %v5078
        %v5080 = vrot.slane %v5066, %v5079
        %v5081 = vcombine.low %v5073, %v5080
        %v5082 = vcombine.low %v4563, %v4566
        %v5083 = vcombine.low %v4569, %v4572
        %v5085 = vunpack.c.l.s4 1983009808
        %v5086 = vunpack.c.0.s8 %v5085
        %v5087 = vlaneseq
        %v5088 = vshrl.u32 %v5087, 7
        %v5089 = vsub.s32 %v5086, %v5088
        %v5090 = vrot.slane %v5082, %v5089
        %v5092 = vunpack.c.l.s4 1983009808
        %v5093 = vunpack.c.0.s8 %v5092
        %v5094 = vlaneseq
        %v5095 = vshrl.u32 %v5094, 7
        %v5096 = vsub.s32 %v5093, %v5095
        %v5097 = vrot.slane %v5083, %v5096
        %v5098 = vcombine.low %v5090, %v5097
        %v5099 = vcombine.low %v4576, %v4579
        %v5100 = vcombine.low %v4582, %v4585
        %v5102 = vunpack.c.l.s4 1983009808
        %v5103 = vunpack.c.0.s8 %v5102
        %v5104 = vlaneseq
        %v5105 = vshrl.u32 %v5104, 7
        %v5106 = vsub.s32 %v5103, %v5105
        %v5107 = vrot.slane %v5099, %v5106
        %v5109 = vunpack.c.l.s4 1983009808
        %v5110 = vunpack.c.0.s8 %v5109
        %v5111 = vlaneseq
        %v5112 = vshrl.u32 %v5111, 7
        %v5113 = vsub.s32 %v5110, %v5112
        %v5114 = vrot.slane %v5100, %v5113
        %v5115 = vcombine.low %v5107, %v5114
        %v5116 = vcombine.low %v4588, %v4591
        %v5117 = vcombine.low %v4594, %v4597
        %v5119 = vunpack.c.l.s4 1983009808
        %v5120 = vunpack.c.0.s8 %v5119
        %v5121 = vlaneseq
        %v5122 = vshrl.u32 %v5121, 7
        %v5123 = vsub.s32 %v5120, %v5122
        %v5124 = vrot.slane %v5116, %v5123
        %v5126 = vunpack.c.l.s4 1983009808
        %v5127 = vunpack.c.0.s8 %v5126
        %v5128 = vlaneseq
        %v5129 = vshrl.u32 %v5128, 7
        %v5130 = vsub.s32 %v5127, %v5129
        %v5131 = vrot.slane %v5117, %v5130
        %v5132 = vcombine.low %v5124, %v5131
        %v5133 = vcombine.low %v4601, %v4604
        %v5134 = vcombine.low %v4607, %v4610
        %v5136 = vunpack.c.l.s4 1983009808
        %v5137 = vunpack.c.0.s8 %v5136
        %v5138 = vlaneseq
        %v5139 = vshrl.u32 %v5138, 7
        %v5140 = vsub.s32 %v5137, %v5139
        %v5141 = vrot.slane %v5133, %v5140
        %v5143 = vunpack.c.l.s4 1983009808
        %v5144 = vunpack.c.0.s8 %v5143
        %v5145 = vlaneseq
        %v5146 = vshrl.u32 %v5145, 7
        %v5147 = vsub.s32 %v5144, %v5146
        %v5148 = vrot.slane %v5134, %v5147
        %v5149 = vcombine.low %v5141, %v5148
        %v5150 = vcombine.low %v4613, %v4616
        %v5151 = vcombine.low %v4619, %v4622
        %v5153 = vunpack.c.l.s4 1983009808
        %v5154 = vunpack.c.0.s8 %v5153
        %v5155 = vlaneseq
        %v5156 = vshrl.u32 %v5155, 7
        %v5157 = vsub.s32 %v5154, %v5156
        %v5158 = vrot.slane %v5150, %v5157
        %v5160 = vunpack.c.l.s4 1983009808
        %v5161 = vunpack.c.0.s8 %v5160
        %v5162 = vlaneseq
        %v5163 = vshrl.u32 %v5162, 7
        %v5164 = vsub.s32 %v5161, %v5163
        %v5165 = vrot.slane %v5151, %v5164
        %v5166 = vcombine.low %v5158, %v5165
        %v5199 = vpack.c.bf16 %v4656, %v4639
        %v5200 = vpack.c.bf16 %v4690, %v4673
        %v5201 = vpack.c.bf16 %v4724, %v4707
        %v5202 = vpack.c.bf16 %v4758, %v4741
        %v5203 = vpack.c.bf16 %v4792, %v4775
        %v5204 = vpack.c.bf16 %v4826, %v4809
        %v5205 = vpack.c.bf16 %v4860, %v4843
        %v5206 = vpack.c.bf16 %v4894, %v4877
        %v5207 = vpack.c.bf16 %v4928, %v4911
        %v5208 = vpack.c.bf16 %v4962, %v4945
        %v5209 = vpack.c.bf16 %v4996, %v4979
        %v5210 = vpack.c.bf16 %v5030, %v5013
        %v5211 = vpack.c.bf16 %v5064, %v5047
        %v5212 = vpack.c.bf16 %v5098, %v5081
        %v5213 = vpack.c.bf16 %v5132, %v5115
        %v5214 = vpack.c.bf16 %v5166, %v5149
        %s5215 = scalar_lea.vmem %s5, 2
        %v5216 = vld [vmem:[%s5215] sm:$0x3]
        %vm5217 = vcmask 31744
        %v5219 = vsel %vm5217, %v5199, 0
        %v5222 = vsel %vm5217, %v5200, 0
        %v5225 = vsel %vm5217, %v5201, 0
        %v5228 = vsel %vm5217, %v5202, 0
        %v5231 = vsel %vm5217, %v5203, 0
        %v5234 = vsel %vm5217, %v5204, 0
        %v5237 = vsel %vm5217, %v5205, 0
        %v5240 = vsel %vm5217, %v5206, 0
        %v5243 = vsel %vm5217, %v5207, 0
        %v5246 = vsel %vm5217, %v5208, 0
        %v5249 = vsel %vm5217, %v5209, 0
        %v5252 = vsel %vm5217, %v5210, 0
        %v5255 = vsel %vm5217, %v5211, 0
        %v5258 = vsel %vm5217, %v5212, 0
        %v5261 = vsel %vm5217, %v5213, 0
        %v5264 = vsel %vm5217, %v5214, 0
        %vm5266 = vcmask 1041408
        %v5268 = vsel %vm5266, %v5216, 0
        %5270 = vmatprep.subr.bf16.mxu0 0
        %5271 = vmatpush1.bf16.msra.mxu0 %v5268
        %5272 = vmatprep.subr.bf16.mxu0 0
        %5273 = vmatpush1.bf16.msra.mxu0 0
        %5274 = vmatprep.subr.bf16.mxu0 0
        %5275 = vmatpush1.bf16.msra.mxu0 0
        %5276 = vmatprep.subr.bf16.mxu0 0
        %5277 = vmatpush1.bf16.msra.mxu0 0
        %5278 = vmatprep.subr.bf16.mxu0 0
        %5279 = vmatpush1.bf16.msra.mxu0 0
        %5280 = vmatprep.subr.bf16.mxu0 0
        %5281 = vmatpush1.bf16.msra.mxu0 0
        %5282 = vmatprep.subr.bf16.mxu0 0
        %5283 = vmatpush1.bf16.msra.mxu0 0
        %5284 = vmatprep.subr.bf16.mxu0 0
        %5285 = vmatpush1.bf16.msra.mxu0 0
        %5286 = vmatprep.subr.bf16.mxu0 0
        %5287 = vmatpush1.bf16.msra.mxu0 0
        %5288 = vmatprep.subr.bf16.mxu0 0
        %5289 = vmatpush1.bf16.msra.mxu0 0
        %5290 = vmatprep.subr.bf16.mxu0 0
        %5291 = vmatpush1.bf16.msra.mxu0 0
        %5292 = vmatprep.subr.bf16.mxu0 0
        %5293 = vmatpush1.bf16.msra.mxu0 0
        %5294 = vmatprep.subr.bf16.mxu0 0
        %5295 = vmatpush1.bf16.msra.mxu0 0
        %5296 = vmatprep.subr.bf16.mxu0 0
        %5297 = vmatpush1.bf16.msra.mxu0 0
        %5298 = vmatprep.subr.bf16.mxu0 0
        %5299 = vmatpush1.bf16.msra.mxu0 0
        %5300 = vmatprep.subr.bf16.mxu0 0
        %5301 = vmatpush1.bf16.msra.mxu0 0
        %5302 = vmatprep.mubr.bf16.mxu0 0
        %5303 = vmatmul.mubr.bf16.gmra.mrb[0].mxu0 %v5219
        %v5304 = vpop.f32.mrb[0].mxu0
        %v5305 = vadd.f32 0.0, %v5304
        %v5306 = vpop.f32.mrb[0].mxu0
        %v5307 = vpop.f32.mrb[0].mxu0
        %v5308 = vadd.f32 0.0, %v5307
        %v5309 = vpop.f32.mrb[0].mxu0
        %5310 = vmatprep.mubr.bf16.mxu0 0
        %5311 = vmatmul.mubr.bf16.gmra.mrb[0].mxu0 %v5222
        %v5312 = vpop.f32.mrb[0].mxu0
        %v5313 = vadd.f32 0.0, %v5312
        %v5314 = vpop.f32.mrb[0].mxu0
        %v5315 = vpop.f32.mrb[0].mxu0
        %v5316 = vadd.f32 0.0, %v5315
        %v5317 = vpop.f32.mrb[0].mxu0
        %5318 = vmatprep.mubr.bf16.mxu0 0
        %5319 = vmatmul.mubr.bf16.gmra.mrb[0].mxu0 %v5225
        %v5320 = vpop.f32.mrb[0].mxu0
        %v5321 = vadd.f32 0.0, %v5320
        %v5322 = vpop.f32.mrb[0].mxu0
        %v5323 = vpop.f32.mrb[0].mxu0
        %v5324 = vadd.f32 0.0, %v5323
        %v5325 = vpop.f32.mrb[0].mxu0
        %5326 = vmatprep.mubr.bf16.mxu0 0
        %5327 = vmatmul.mubr.bf16.gmra.mrb[0].mxu0 %v5228
        %v5328 = vpop.f32.mrb[0].mxu0
        %v5329 = vadd.f32 0.0, %v5328
        %v5330 = vpop.f32.mrb[0].mxu0
        %v5331 = vpop.f32.mrb[0].mxu0
        %v5332 = vadd.f32 0.0, %v5331
        %v5333 = vpop.f32.mrb[0].mxu0
        %5334 = vmatprep.mubr.bf16.mxu0 0
        %5335 = vmatmul.mubr.bf16.gmra.mrb[0].mxu0 %v5231
        %v5336 = vpop.f32.mrb[0].mxu0
        %v5337 = vadd.f32 0.0, %v5336
        %v5338 = vpop.f32.mrb[0].mxu0
        %v5339 = vpop.f32.mrb[0].mxu0
        %v5340 = vadd.f32 0.0, %v5339
        %v5341 = vpop.f32.mrb[0].mxu0
        %5342 = vmatprep.mubr.bf16.mxu0 0
        %5343 = vmatmul.mubr.bf16.gmra.mrb[0].mxu0 %v5234
        %v5344 = vpop.f32.mrb[0].mxu0
        %v5345 = vadd.f32 0.0, %v5344
        %v5346 = vpop.f32.mrb[0].mxu0
        %v5347 = vpop.f32.mrb[0].mxu0
        %v5348 = vadd.f32 0.0, %v5347
        %v5349 = vpop.f32.mrb[0].mxu0
        %5350 = vmatprep.mubr.bf16.mxu0 0
        %5351 = vmatmul.mubr.bf16.gmra.mrb[0].mxu0 %v5237
        %v5352 = vpop.f32.mrb[0].mxu0
        %v5353 = vadd.f32 0.0, %v5352
        %v5354 = vpop.f32.mrb[0].mxu0
        %v5355 = vpop.f32.mrb[0].mxu0
        %v5356 = vadd.f32 0.0, %v5355
        %v5357 = vpop.f32.mrb[0].mxu0
        %5358 = vmatprep.mubr.bf16.mxu0 0
        %5359 = vmatmul.mubr.bf16.gmra.mrb[0].mxu0 %v5240
        %v5360 = vpop.f32.mrb[0].mxu0
        %v5361 = vadd.f32 0.0, %v5360
        %v5362 = vpop.f32.mrb[0].mxu0
        %v5363 = vpop.f32.mrb[0].mxu0
        %v5364 = vadd.f32 0.0, %v5363
        %v5365 = vpop.f32.mrb[0].mxu0
        %5366 = vmatprep.mubr.bf16.mxu0 0
        %5367 = vmatmul.mubr.bf16.gmra.mrb[0].mxu0 %v5243
        %v5368 = vpop.f32.mrb[0].mxu0
        %v5369 = vadd.f32 0.0, %v5368
        %v5370 = vpop.f32.mrb[0].mxu0
        %v5371 = vpop.f32.mrb[0].mxu0
        %v5372 = vadd.f32 0.0, %v5371
        %v5373 = vpop.f32.mrb[0].mxu0
        %5374 = vmatprep.mubr.bf16.mxu0 0
        %5375 = vmatmul.mubr.bf16.gmra.mrb[0].mxu0 %v5246
        %v5376 = vpop.f32.mrb[0].mxu0
        %v5377 = vadd.f32 0.0, %v5376
        %v5378 = vpop.f32.mrb[0].mxu0
        %v5379 = vpop.f32.mrb[0].mxu0
        %v5380 = vadd.f32 0.0, %v5379
        %v5381 = vpop.f32.mrb[0].mxu0
        %5382 = vmatprep.mubr.bf16.mxu0 0
        %5383 = vmatmul.mubr.bf16.gmra.mrb[0].mxu0 %v5249
        %v5384 = vpop.f32.mrb[0].mxu0
        %v5385 = vadd.f32 0.0, %v5384
        %v5386 = vpop.f32.mrb[0].mxu0
        %v5387 = vpop.f32.mrb[0].mxu0
        %v5388 = vadd.f32 0.0, %v5387
        %v5389 = vpop.f32.mrb[0].mxu0
        %5390 = vmatprep.mubr.bf16.mxu0 0
        %5391 = vmatmul.mubr.bf16.gmra.mrb[0].mxu0 %v5252
        %v5392 = vpop.f32.mrb[0].mxu0
        %v5393 = vadd.f32 0.0, %v5392
        %v5394 = vpop.f32.mrb[0].mxu0
        %v5395 = vpop.f32.mrb[0].mxu0
        %v5396 = vadd.f32 0.0, %v5395
        %v5397 = vpop.f32.mrb[0].mxu0
        %5398 = vmatprep.mubr.bf16.mxu0 0
        %5399 = vmatmul.mubr.bf16.gmra.mrb[0].mxu0 %v5255
        %v5400 = vpop.f32.mrb[0].mxu0
        %v5401 = vadd.f32 0.0, %v5400
        %v5402 = vpop.f32.mrb[0].mxu0
        %v5403 = vpop.f32.mrb[0].mxu0
        %v5404 = vadd.f32 0.0, %v5403
        %v5405 = vpop.f32.mrb[0].mxu0
        %5406 = vmatprep.mubr.bf16.mxu0 0
        %5407 = vmatmul.mubr.bf16.gmra.mrb[0].mxu0 %v5258
        %v5408 = vpop.f32.mrb[0].mxu0
        %v5409 = vadd.f32 0.0, %v5408
        %v5410 = vpop.f32.mrb[0].mxu0
        %v5411 = vpop.f32.mrb[0].mxu0
        %v5412 = vadd.f32 0.0, %v5411
        %v5413 = vpop.f32.mrb[0].mxu0
        %5414 = vmatprep.mubr.bf16.mxu0 0
        %5415 = vmatmul.mubr.bf16.gmra.mrb[0].mxu0 %v5261
        %v5416 = vpop.f32.mrb[0].mxu0
        %v5417 = vadd.f32 0.0, %v5416
        %v5418 = vpop.f32.mrb[0].mxu0
        %v5419 = vpop.f32.mrb[0].mxu0
        %v5420 = vadd.f32 0.0, %v5419
        %v5421 = vpop.f32.mrb[0].mxu0
        %5422 = vmatprep.mubr.bf16.mxu0 0
        %5423 = vmatmul.mubr.bf16.gmra.mrb[0].mxu0 %v5264
        %v5424 = vpop.f32.mrb[0].mxu0
        %v5425 = vadd.f32 0.0, %v5424
        %v5426 = vpop.f32.mrb[0].mxu0
        %v5427 = vpop.f32.mrb[0].mxu0
        %v5428 = vadd.f32 0.0, %v5427
        %v5429 = vpop.f32.mrb[0].mxu0
        %5430 = vdwg.mxu0
        %v5432 = vsel %vm5217, %v4199, 0
        %v5435 = vsel %vm5217, %v4200, 0
        %v5438 = vsel %vm5217, %v4201, 0
        %v5441 = vsel %vm5217, %v4202, 0
        %v5444 = vsel %vm5217, %v4203, 0
        %v5447 = vsel %vm5217, %v4204, 0
        %v5450 = vsel %vm5217, %v4205, 0
        %v5453 = vsel %vm5217, %v4206, 0
        %v5456 = vsel %vm5217, %v4207, 0
        %v5459 = vsel %vm5217, %v4208, 0
        %v5462 = vsel %vm5217, %v4209, 0
        %v5465 = vsel %vm5217, %v4210, 0
        %v5468 = vsel %vm5217, %v4211, 0
        %v5471 = vsel %vm5217, %v4212, 0
        %v5474 = vsel %vm5217, %v4213, 0
        %v5477 = vsel %vm5217, %v4214, 0
        %v5480 = vsel %vm5266, %v4215, 0
        %5482 = vmatprep.subr.bf16.mxu0 0
        %5483 = vmatpush1.bf16.msra.mxu0 %v5480
        %5484 = vmatprep.subr.bf16.mxu0 0
        %5485 = vmatpush1.bf16.msra.mxu0 0
        %5486 = vmatprep.subr.bf16.mxu0 0
        %5487 = vmatpush1.bf16.msra.mxu0 0
        %5488 = vmatprep.subr.bf16.mxu0 0
        %5489 = vmatpush1.bf16.msra.mxu0 0
        %5490 = vmatprep.subr.bf16.mxu0 0
        %5491 = vmatpush1.bf16.msra.mxu0 0
        %5492 = vmatprep.subr.bf16.mxu0 0
        %5493 = vmatpush1.bf16.msra.mxu0 0
        %5494 = vmatprep.subr.bf16.mxu0 0
        %5495 = vmatpush1.bf16.msra.mxu0 0
        %5496 = vmatprep.subr.bf16.mxu0 0
        %5497 = vmatpush1.bf16.msra.mxu0 0
        %5498 = vmatprep.subr.bf16.mxu0 0
        %5499 = vmatpush1.bf16.msra.mxu0 0
        %5500 = vmatprep.subr.bf16.mxu0 0
        %5501 = vmatpush1.bf16.msra.mxu0 0
        %5502 = vmatprep.subr.bf16.mxu0 0
        %5503 = vmatpush1.bf16.msra.mxu0 0
        %5504 = vmatprep.subr.bf16.mxu0 0
        %5505 = vmatpush1.bf16.msra.mxu0 0
        %5506 = vmatprep.subr.bf16.mxu0 0
        %5507 = vmatpush1.bf16.msra.mxu0 0
        %5508 = vmatprep.subr.bf16.mxu0 0
        %5509 = vmatpush1.bf16.msra.mxu0 0
        %5510 = vmatprep.subr.bf16.mxu0 0
        %5511 = vmatpush1.bf16.msra.mxu0 0
        %5512 = vmatprep.subr.bf16.mxu0 0
        %5513 = vmatpush1.bf16.msra.mxu0 0
        %5514 = vmatprep.mubr.bf16.mxu0 0
        %5515 = vmatmul.mubr.bf16.gmra.mrb[0].mxu0 %v5432
        %v5516 = vpop.f32.mrb[0].mxu0
        %v5517 = vadd.f32 %v5305, %v5516
        %v5518 = vpop.f32.mrb[0].mxu0
        %v5519 = vpop.f32.mrb[0].mxu0
        %v5520 = vadd.f32 %v5308, %v5519
        %v5521 = vpop.f32.mrb[0].mxu0
        %5522 = vmatprep.mubr.bf16.mxu0 0
        %5523 = vmatmul.mubr.bf16.gmra.mrb[0].mxu0 %v5435
        %v5524 = vpop.f32.mrb[0].mxu0
        %v5525 = vadd.f32 %v5313, %v5524
        %v5526 = vpop.f32.mrb[0].mxu0
        %v5527 = vpop.f32.mrb[0].mxu0
        %v5528 = vadd.f32 %v5316, %v5527
        %v5529 = vpop.f32.mrb[0].mxu0
        %5530 = vmatprep.mubr.bf16.mxu0 0
        %5531 = vmatmul.mubr.bf16.gmra.mrb[0].mxu0 %v5438
        %v5532 = vpop.f32.mrb[0].mxu0
        %v5533 = vadd.f32 %v5321, %v5532
        %v5534 = vpop.f32.mrb[0].mxu0
        %v5535 = vpop.f32.mrb[0].mxu0
        %v5536 = vadd.f32 %v5324, %v5535
        %v5537 = vpop.f32.mrb[0].mxu0
        %5538 = vmatprep.mubr.bf16.mxu0 0
        %5539 = vmatmul.mubr.bf16.gmra.mrb[0].mxu0 %v5441
        %v5540 = vpop.f32.mrb[0].mxu0
        %v5541 = vadd.f32 %v5329, %v5540
        %v5542 = vpop.f32.mrb[0].mxu0
        %v5543 = vpop.f32.mrb[0].mxu0
        %v5544 = vadd.f32 %v5332, %v5543
        %v5545 = vpop.f32.mrb[0].mxu0
        %5546 = vmatprep.mubr.bf16.mxu0 0
        %5547 = vmatmul.mubr.bf16.gmra.mrb[0].mxu0 %v5444
        %v5548 = vpop.f32.mrb[0].mxu0
        %v5549 = vadd.f32 %v5337, %v5548
        %v5550 = vpop.f32.mrb[0].mxu0
        %v5551 = vpop.f32.mrb[0].mxu0
        %v5552 = vadd.f32 %v5340, %v5551
        %v5553 = vpop.f32.mrb[0].mxu0
        %5554 = vmatprep.mubr.bf16.mxu0 0
        %5555 = vmatmul.mubr.bf16.gmra.mrb[0].mxu0 %v5447
        %v5556 = vpop.f32.mrb[0].mxu0
        %v5557 = vadd.f32 %v5345, %v5556
        %v5558 = vpop.f32.mrb[0].mxu0
        %v5559 = vpop.f32.mrb[0].mxu0
        %v5560 = vadd.f32 %v5348, %v5559
        %v5561 = vpop.f32.mrb[0].mxu0
        %5562 = vmatprep.mubr.bf16.mxu0 0
        %5563 = vmatmul.mubr.bf16.gmra.mrb[0].mxu0 %v5450
        %v5564 = vpop.f32.mrb[0].mxu0
        %v5565 = vadd.f32 %v5353, %v5564
        %v5566 = vpop.f32.mrb[0].mxu0
        %v5567 = vpop.f32.mrb[0].mxu0
        %v5568 = vadd.f32 %v5356, %v5567
        %v5569 = vpop.f32.mrb[0].mxu0
        %5570 = vmatprep.mubr.bf16.mxu0 0
        %5571 = vmatmul.mubr.bf16.gmra.mrb[0].mxu0 %v5453
        %v5572 = vpop.f32.mrb[0].mxu0
        %v5573 = vadd.f32 %v5361, %v5572
        %v5574 = vpop.f32.mrb[0].mxu0
        %v5575 = vpop.f32.mrb[0].mxu0
        %v5576 = vadd.f32 %v5364, %v5575
        %v5577 = vpop.f32.mrb[0].mxu0
        %5578 = vmatprep.mubr.bf16.mxu0 0
        %5579 = vmatmul.mubr.bf16.gmra.mrb[0].mxu0 %v5456
        %v5580 = vpop.f32.mrb[0].mxu0
        %v5581 = vadd.f32 %v5369, %v5580
        %v5582 = vpop.f32.mrb[0].mxu0
        %v5583 = vpop.f32.mrb[0].mxu0
        %v5584 = vadd.f32 %v5372, %v5583
        %v5585 = vpop.f32.mrb[0].mxu0
        %5586 = vmatprep.mubr.bf16.mxu0 0
        %5587 = vmatmul.mubr.bf16.gmra.mrb[0].mxu0 %v5459
        %v5588 = vpop.f32.mrb[0].mxu0
        %v5589 = vadd.f32 %v5377, %v5588
        %v5590 = vpop.f32.mrb[0].mxu0
        %v5591 = vpop.f32.mrb[0].mxu0
        %v5592 = vadd.f32 %v5380, %v5591
        %v5593 = vpop.f32.mrb[0].mxu0
        %5594 = vmatprep.mubr.bf16.mxu0 0
        %5595 = vmatmul.mubr.bf16.gmra.mrb[0].mxu0 %v5462
        %v5596 = vpop.f32.mrb[0].mxu0
        %v5597 = vadd.f32 %v5385, %v5596
        %v5598 = vpop.f32.mrb[0].mxu0
        %v5599 = vpop.f32.mrb[0].mxu0
        %v5600 = vadd.f32 %v5388, %v5599
        %v5601 = vpop.f32.mrb[0].mxu0
        %5602 = vmatprep.mubr.bf16.mxu0 0
        %5603 = vmatmul.mubr.bf16.gmra.mrb[0].mxu0 %v5465
        %v5604 = vpop.f32.mrb[0].mxu0
        %v5605 = vadd.f32 %v5393, %v5604
        %v5606 = vpop.f32.mrb[0].mxu0
        %v5607 = vpop.f32.mrb[0].mxu0
        %v5608 = vadd.f32 %v5396, %v5607
        %v5609 = vpop.f32.mrb[0].mxu0
        %5610 = vmatprep.mubr.bf16.mxu0 0
        %5611 = vmatmul.mubr.bf16.gmra.mrb[0].mxu0 %v5468
        %v5612 = vpop.f32.mrb[0].mxu0
        %v5613 = vadd.f32 %v5401, %v5612
        %v5614 = vpop.f32.mrb[0].mxu0
        %v5615 = vpop.f32.mrb[0].mxu0
        %v5616 = vadd.f32 %v5404, %v5615
        %v5617 = vpop.f32.mrb[0].mxu0
        %5618 = vmatprep.mubr.bf16.mxu0 0
        %5619 = vmatmul.mubr.bf16.gmra.mrb[0].mxu0 %v5471
        %v5620 = vpop.f32.mrb[0].mxu0
        %v5621 = vadd.f32 %v5409, %v5620
        %v5622 = vpop.f32.mrb[0].mxu0
        %v5623 = vpop.f32.mrb[0].mxu0
        %v5624 = vadd.f32 %v5412, %v5623
        %v5625 = vpop.f32.mrb[0].mxu0
        %5626 = vmatprep.mubr.bf16.mxu0 0
        %5627 = vmatmul.mubr.bf16.gmra.mrb[0].mxu0 %v5474
        %v5628 = vpop.f32.mrb[0].mxu0
        %v5629 = vadd.f32 %v5417, %v5628
        %v5630 = vpop.f32.mrb[0].mxu0
        %v5631 = vpop.f32.mrb[0].mxu0
        %v5632 = vadd.f32 %v5420, %v5631
        %v5633 = vpop.f32.mrb[0].mxu0
        %5634 = vmatprep.mubr.bf16.mxu0 0
        %5635 = vmatmul.mubr.bf16.gmra.mrb[0].mxu0 %v5477
        %v5636 = vpop.f32.mrb[0].mxu0
        %v5637 = vadd.f32 %v5425, %v5636
        %v5638 = vpop.f32.mrb[0].mxu0
        %v5639 = vpop.f32.mrb[0].mxu0
        %v5640 = vadd.f32 %v5428, %v5639
        %v5641 = vpop.f32.mrb[0].mxu0
        %5642 = vdwg.mxu0
        %v5643 = vcombine.low %v2950, %v2949
        %v5644 = vcombine.low %v2951, %v2959
        %v5646 = vunpack.c.l.s4 1983009808
        %v5647 = vunpack.c.0.s8 %v5646
        %v5648 = vlaneseq
        %v5649 = vshrl.u32 %v5648, 7
        %v5650 = vsub.s32 %v5647, %v5649
        %v5651 = vrot.slane %v5643, %v5650
        %v5653 = vunpack.c.l.s4 1983009808
        %v5654 = vunpack.c.0.s8 %v5653
        %v5655 = vlaneseq
        %v5656 = vshrl.u32 %v5655, 7
        %v5657 = vsub.s32 %v5654, %v5656
        %v5658 = vrot.slane %v5644, %v5657
        %v5659 = vcombine.low %v5651, %v5658
        %v5660 = vcombine.low %v2967, %v2966
        %v5661 = vcombine.low %v2968, %v2976
        %v5663 = vunpack.c.l.s4 1983009808
        %v5664 = vunpack.c.0.s8 %v5663
        %v5665 = vlaneseq
        %v5666 = vshrl.u32 %v5665, 7
        %v5667 = vsub.s32 %v5664, %v5666
        %v5668 = vrot.slane %v5660, %v5667
        %v5670 = vunpack.c.l.s4 1983009808
        %v5671 = vunpack.c.0.s8 %v5670
        %v5672 = vlaneseq
        %v5673 = vshrl.u32 %v5672, 7
        %v5674 = vsub.s32 %v5671, %v5673
        %v5675 = vrot.slane %v5661, %v5674
        %v5676 = vcombine.low %v5668, %v5675
        %v5677 = vcombine.low %v2983, %v2985
        %v5678 = vcombine.low %v2993, %v3001
        %v5680 = vunpack.c.l.s4 1983009808
        %v5681 = vunpack.c.0.s8 %v5680
        %v5682 = vlaneseq
        %v5683 = vshrl.u32 %v5682, 7
        %v5684 = vsub.s32 %v5681, %v5683
        %v5685 = vrot.slane %v5677, %v5684
        %v5687 = vunpack.c.l.s4 1983009808
        %v5688 = vunpack.c.0.s8 %v5687
        %v5689 = vlaneseq
        %v5690 = vshrl.u32 %v5689, 7
        %v5691 = vsub.s32 %v5688, %v5690
        %v5692 = vrot.slane %v5678, %v5691
        %v5693 = vcombine.low %v5685, %v5692
        %v5694 = vcombine.low %v3000, %v3002
        %v5695 = vcombine.low %v3010, %v3018
        %v5697 = vunpack.c.l.s4 1983009808
        %v5698 = vunpack.c.0.s8 %v5697
        %v5699 = vlaneseq
        %v5700 = vshrl.u32 %v5699, 7
        %v5701 = vsub.s32 %v5698, %v5700
        %v5702 = vrot.slane %v5694, %v5701
        %v5704 = vunpack.c.l.s4 1983009808
        %v5705 = vunpack.c.0.s8 %v5704
        %v5706 = vlaneseq
        %v5707 = vshrl.u32 %v5706, 7
        %v5708 = vsub.s32 %v5705, %v5707
        %v5709 = vrot.slane %v5695, %v5708
        %v5710 = vcombine.low %v5702, %v5709
        %v5711 = vcombine.low %v3019, %v3027
        %v5712 = vcombine.low %v3035, %v3034
        %v5714 = vunpack.c.l.s4 1983009808
        %v5715 = vunpack.c.0.s8 %v5714
        %v5716 = vlaneseq
        %v5717 = vshrl.u32 %v5716, 7
        %v5718 = vsub.s32 %v5715, %v5717
        %v5719 = vrot.slane %v5711, %v5718
        %v5721 = vunpack.c.l.s4 1983009808
        %v5722 = vunpack.c.0.s8 %v5721
        %v5723 = vlaneseq
        %v5724 = vshrl.u32 %v5723, 7
        %v5725 = vsub.s32 %v5722, %v5724
        %v5726 = vrot.slane %v5712, %v5725
        %v5727 = vcombine.low %v5719, %v5726
        %v5728 = vcombine.low %v3036, %v3044
        %v5729 = vcombine.low %v3052, %v3051
        %v5731 = vunpack.c.l.s4 1983009808
        %v5732 = vunpack.c.0.s8 %v5731
        %v5733 = vlaneseq
        %v5734 = vshrl.u32 %v5733, 7
        %v5735 = vsub.s32 %v5732, %v5734
        %v5736 = vrot.slane %v5728, %v5735
        %v5738 = vunpack.c.l.s4 1983009808
        %v5739 = vunpack.c.0.s8 %v5738
        %v5740 = vlaneseq
        %v5741 = vshrl.u32 %v5740, 7
        %v5742 = vsub.s32 %v5739, %v5741
        %v5743 = vrot.slane %v5729, %v5742
        %v5744 = vcombine.low %v5736, %v5743
        %v5745 = vcombine.low %v3061, %v3069
        %v5746 = vcombine.low %v3068, %v3070
        %v5748 = vunpack.c.l.s4 1983009808
        %v5749 = vunpack.c.0.s8 %v5748
        %v5750 = vlaneseq
        %v5751 = vshrl.u32 %v5750, 7
        %v5752 = vsub.s32 %v5749, %v5751
        %v5753 = vrot.slane %v5745, %v5752
        %v5755 = vunpack.c.l.s4 1983009808
        %v5756 = vunpack.c.0.s8 %v5755
        %v5757 = vlaneseq
        %v5758 = vshrl.u32 %v5757, 7
        %v5759 = vsub.s32 %v5756, %v5758
        %v5760 = vrot.slane %v5746, %v5759
        %v5761 = vcombine.low %v5753, %v5760
        %v5762 = vcombine.low %v3078, %v3086
        %v5763 = vcombine.low %v3085, %v3087
        %v5765 = vunpack.c.l.s4 1983009808
        %v5766 = vunpack.c.0.s8 %v5765
        %v5767 = vlaneseq
        %v5768 = vshrl.u32 %v5767, 7
        %v5769 = vsub.s32 %v5766, %v5768
        %v5770 = vrot.slane %v5762, %v5769
        %v5772 = vunpack.c.l.s4 1983009808
        %v5773 = vunpack.c.0.s8 %v5772
        %v5774 = vlaneseq
        %v5775 = vshrl.u32 %v5774, 7
        %v5776 = vsub.s32 %v5773, %v5775
        %v5777 = vrot.slane %v5763, %v5776
        %v5778 = vcombine.low %v5770, %v5777
        %v5779 = vcombine.low %v3103, %v3102
        %v5780 = vcombine.low %v3104, %v3112
        %v5782 = vunpack.c.l.s4 1983009808
        %v5783 = vunpack.c.0.s8 %v5782
        %v5784 = vlaneseq
        %v5785 = vshrl.u32 %v5784, 7
        %v5786 = vsub.s32 %v5783, %v5785
        %v5787 = vrot.slane %v5779, %v5786
        %v5789 = vunpack.c.l.s4 1983009808
        %v5790 = vunpack.c.0.s8 %v5789
        %v5791 = vlaneseq
        %v5792 = vshrl.u32 %v5791, 7
        %v5793 = vsub.s32 %v5790, %v5792
        %v5794 = vrot.slane %v5780, %v5793
        %v5795 = vcombine.low %v5787, %v5794
        %v5796 = vcombine.low %v3120, %v3119
        %v5797 = vcombine.low %v3121, %v3129
        %v5799 = vunpack.c.l.s4 1983009808
        %v5800 = vunpack.c.0.s8 %v5799
        %v5801 = vlaneseq
        %v5802 = vshrl.u32 %v5801, 7
        %v5803 = vsub.s32 %v5800, %v5802
        %v5804 = vrot.slane %v5796, %v5803
        %v5806 = vunpack.c.l.s4 1983009808
        %v5807 = vunpack.c.0.s8 %v5806
        %v5808 = vlaneseq
        %v5809 = vshrl.u32 %v5808, 7
        %v5810 = vsub.s32 %v5807, %v5809
        %v5811 = vrot.slane %v5797, %v5810
        %v5812 = vcombine.low %v5804, %v5811
        %v5813 = vcombine.low %v3136, %v3138
        %v5814 = vcombine.low %v3146, %v3154
        %v5816 = vunpack.c.l.s4 1983009808
        %v5817 = vunpack.c.0.s8 %v5816
        %v5818 = vlaneseq
        %v5819 = vshrl.u32 %v5818, 7
        %v5820 = vsub.s32 %v5817, %v5819
        %v5821 = vrot.slane %v5813, %v5820
        %v5823 = vunpack.c.l.s4 1983009808
        %v5824 = vunpack.c.0.s8 %v5823
        %v5825 = vlaneseq
        %v5826 = vshrl.u32 %v5825, 7
        %v5827 = vsub.s32 %v5824, %v5826
        %v5828 = vrot.slane %v5814, %v5827
        %v5829 = vcombine.low %v5821, %v5828
        %v5830 = vcombine.low %v3153, %v3155
        %v5831 = vcombine.low %v3163, %v3171
        %v5833 = vunpack.c.l.s4 1983009808
        %v5834 = vunpack.c.0.s8 %v5833
        %v5835 = vlaneseq
        %v5836 = vshrl.u32 %v5835, 7
        %v5837 = vsub.s32 %v5834, %v5836
        %v5838 = vrot.slane %v5830, %v5837
        %v5840 = vunpack.c.l.s4 1983009808
        %v5841 = vunpack.c.0.s8 %v5840
        %v5842 = vlaneseq
        %v5843 = vshrl.u32 %v5842, 7
        %v5844 = vsub.s32 %v5841, %v5843
        %v5845 = vrot.slane %v5831, %v5844
        %v5846 = vcombine.low %v5838, %v5845
        %v5847 = vcombine.low %v3172, %v3180
        %v5848 = vcombine.low %v3188, %v3187
        %v5850 = vunpack.c.l.s4 1983009808
        %v5851 = vunpack.c.0.s8 %v5850
        %v5852 = vlaneseq
        %v5853 = vshrl.u32 %v5852, 7
        %v5854 = vsub.s32 %v5851, %v5853
        %v5855 = vrot.slane %v5847, %v5854
        %v5857 = vunpack.c.l.s4 1983009808
        %v5858 = vunpack.c.0.s8 %v5857
        %v5859 = vlaneseq
        %v5860 = vshrl.u32 %v5859, 7
        %v5861 = vsub.s32 %v5858, %v5860
        %v5862 = vrot.slane %v5848, %v5861
        %v5863 = vcombine.low %v5855, %v5862
        %v5864 = vcombine.low %v3189, %v3197
        %v5865 = vcombine.low %v3205, %v3204
        %v5867 = vunpack.c.l.s4 1983009808
        %v5868 = vunpack.c.0.s8 %v5867
        %v5869 = vlaneseq
        %v5870 = vshrl.u32 %v5869, 7
        %v5871 = vsub.s32 %v5868, %v5870
        %v5872 = vrot.slane %v5864, %v5871
        %v5874 = vunpack.c.l.s4 1983009808
        %v5875 = vunpack.c.0.s8 %v5874
        %v5876 = vlaneseq
        %v5877 = vshrl.u32 %v5876, 7
        %v5878 = vsub.s32 %v5875, %v5877
        %v5879 = vrot.slane %v5865, %v5878
        %v5880 = vcombine.low %v5872, %v5879
        %v5881 = vcombine.low %v3214, %v3222
        %v5882 = vcombine.low %v3221, %v3223
        %v5884 = vunpack.c.l.s4 1983009808
        %v5885 = vunpack.c.0.s8 %v5884
        %v5886 = vlaneseq
        %v5887 = vshrl.u32 %v5886, 7
        %v5888 = vsub.s32 %v5885, %v5887
        %v5889 = vrot.slane %v5881, %v5888
        %v5891 = vunpack.c.l.s4 1983009808
        %v5892 = vunpack.c.0.s8 %v5891
        %v5893 = vlaneseq
        %v5894 = vshrl.u32 %v5893, 7
        %v5895 = vsub.s32 %v5892, %v5894
        %v5896 = vrot.slane %v5882, %v5895
        %v5897 = vcombine.low %v5889, %v5896
        %v5898 = vcombine.low %v3231, %v3239
        %v5899 = vcombine.low %v3238, %v3240
        %v5901 = vunpack.c.l.s4 1983009808
        %v5902 = vunpack.c.0.s8 %v5901
        %v5903 = vlaneseq
        %v5904 = vshrl.u32 %v5903, 7
        %v5905 = vsub.s32 %v5902, %v5904
        %v5906 = vrot.slane %v5898, %v5905
        %v5908 = vunpack.c.l.s4 1983009808
        %v5909 = vunpack.c.0.s8 %v5908
        %v5910 = vlaneseq
        %v5911 = vshrl.u32 %v5910, 7
        %v5912 = vsub.s32 %v5909, %v5911
        %v5913 = vrot.slane %v5899, %v5912
        %v5914 = vcombine.low %v5906, %v5913
        %v5915 = vcombine.low %v3256, %v3255
        %v5916 = vcombine.low %v3257, %v3265
        %v5918 = vunpack.c.l.s4 1983009808
        %v5919 = vunpack.c.0.s8 %v5918
        %v5920 = vlaneseq
        %v5921 = vshrl.u32 %v5920, 7
        %v5922 = vsub.s32 %v5919, %v5921
        %v5923 = vrot.slane %v5915, %v5922
        %v5925 = vunpack.c.l.s4 1983009808
        %v5926 = vunpack.c.0.s8 %v5925
        %v5927 = vlaneseq
        %v5928 = vshrl.u32 %v5927, 7
        %v5929 = vsub.s32 %v5926, %v5928
        %v5930 = vrot.slane %v5916, %v5929
        %v5931 = vcombine.low %v5923, %v5930
        %v5932 = vcombine.low %v3273, %v3272
        %v5933 = vcombine.low %v3274, %v3282
        %v5935 = vunpack.c.l.s4 1983009808
        %v5936 = vunpack.c.0.s8 %v5935
        %v5937 = vlaneseq
        %v5938 = vshrl.u32 %v5937, 7
        %v5939 = vsub.s32 %v5936, %v5938
        %v5940 = vrot.slane %v5932, %v5939
        %v5942 = vunpack.c.l.s4 1983009808
        %v5943 = vunpack.c.0.s8 %v5942
        %v5944 = vlaneseq
        %v5945 = vshrl.u32 %v5944, 7
        %v5946 = vsub.s32 %v5943, %v5945
        %v5947 = vrot.slane %v5933, %v5946
        %v5948 = vcombine.low %v5940, %v5947
        %v5949 = vcombine.low %v3289, %v3291
        %v5950 = vcombine.low %v3299, %v3307
        %v5952 = vunpack.c.l.s4 1983009808
        %v5953 = vunpack.c.0.s8 %v5952
        %v5954 = vlaneseq
        %v5955 = vshrl.u32 %v5954, 7
        %v5956 = vsub.s32 %v5953, %v5955
        %v5957 = vrot.slane %v5949, %v5956
        %v5959 = vunpack.c.l.s4 1983009808
        %v5960 = vunpack.c.0.s8 %v5959
        %v5961 = vlaneseq
        %v5962 = vshrl.u32 %v5961, 7
        %v5963 = vsub.s32 %v5960, %v5962
        %v5964 = vrot.slane %v5950, %v5963
        %v5965 = vcombine.low %v5957, %v5964
        %v5966 = vcombine.low %v3306, %v3308
        %v5967 = vcombine.low %v3316, %v3324
        %v5969 = vunpack.c.l.s4 1983009808
        %v5970 = vunpack.c.0.s8 %v5969
        %v5971 = vlaneseq
        %v5972 = vshrl.u32 %v5971, 7
        %v5973 = vsub.s32 %v5970, %v5972
        %v5974 = vrot.slane %v5966, %v5973
        %v5976 = vunpack.c.l.s4 1983009808
        %v5977 = vunpack.c.0.s8 %v5976
        %v5978 = vlaneseq
        %v5979 = vshrl.u32 %v5978, 7
        %v5980 = vsub.s32 %v5977, %v5979
        %v5981 = vrot.slane %v5967, %v5980
        %v5982 = vcombine.low %v5974, %v5981
        %v5983 = vcombine.low %v3325, %v3333
        %v5984 = vcombine.low %v3341, %v3340
        %v5986 = vunpack.c.l.s4 1983009808
        %v5987 = vunpack.c.0.s8 %v5986
        %v5988 = vlaneseq
        %v5989 = vshrl.u32 %v5988, 7
        %v5990 = vsub.s32 %v5987, %v5989
        %v5991 = vrot.slane %v5983, %v5990
        %v5993 = vunpack.c.l.s4 1983009808
        %v5994 = vunpack.c.0.s8 %v5993
        %v5995 = vlaneseq
        %v5996 = vshrl.u32 %v5995, 7
        %v5997 = vsub.s32 %v5994, %v5996
        %v5998 = vrot.slane %v5984, %v5997
        %v5999 = vcombine.low %v5991, %v5998
        %v6000 = vcombine.low %v3342, %v3350
        %v6001 = vcombine.low %v3358, %v3357
        %v6003 = vunpack.c.l.s4 1983009808
        %v6004 = vunpack.c.0.s8 %v6003
        %v6005 = vlaneseq
        %v6006 = vshrl.u32 %v6005, 7
        %v6007 = vsub.s32 %v6004, %v6006
        %v6008 = vrot.slane %v6000, %v6007
        %v6010 = vunpack.c.l.s4 1983009808
        %v6011 = vunpack.c.0.s8 %v6010
        %v6012 = vlaneseq
        %v6013 = vshrl.u32 %v6012, 7
        %v6014 = vsub.s32 %v6011, %v6013
        %v6015 = vrot.slane %v6001, %v6014
        %v6016 = vcombine.low %v6008, %v6015
        %v6017 = vcombine.low %v3367, %v3375
        %v6018 = vcombine.low %v3374, %v3376
        %v6020 = vunpack.c.l.s4 1983009808
        %v6021 = vunpack.c.0.s8 %v6020
        %v6022 = vlaneseq
        %v6023 = vshrl.u32 %v6022, 7
        %v6024 = vsub.s32 %v6021, %v6023
        %v6025 = vrot.slane %v6017, %v6024
        %v6027 = vunpack.c.l.s4 1983009808
        %v6028 = vunpack.c.0.s8 %v6027
        %v6029 = vlaneseq
        %v6030 = vshrl.u32 %v6029, 7
        %v6031 = vsub.s32 %v6028, %v6030
        %v6032 = vrot.slane %v6018, %v6031
        %v6033 = vcombine.low %v6025, %v6032
        %v6034 = vcombine.low %v3384, %v3392
        %v6035 = vcombine.low %v3391, %v3393
        %v6037 = vunpack.c.l.s4 1983009808
        %v6038 = vunpack.c.0.s8 %v6037
        %v6039 = vlaneseq
        %v6040 = vshrl.u32 %v6039, 7
        %v6041 = vsub.s32 %v6038, %v6040
        %v6042 = vrot.slane %v6034, %v6041
        %v6044 = vunpack.c.l.s4 1983009808
        %v6045 = vunpack.c.0.s8 %v6044
        %v6046 = vlaneseq
        %v6047 = vshrl.u32 %v6046, 7
        %v6048 = vsub.s32 %v6045, %v6047
        %v6049 = vrot.slane %v6035, %v6048
        %v6050 = vcombine.low %v6042, %v6049
        %v6051 = vcombine.low %v3409, %v3408
        %v6052 = vcombine.low %v3410, %v3418
        %v6054 = vunpack.c.l.s4 1983009808
        %v6055 = vunpack.c.0.s8 %v6054
        %v6056 = vlaneseq
        %v6057 = vshrl.u32 %v6056, 7
        %v6058 = vsub.s32 %v6055, %v6057
        %v6059 = vrot.slane %v6051, %v6058
        %v6061 = vunpack.c.l.s4 1983009808
        %v6062 = vunpack.c.0.s8 %v6061
        %v6063 = vlaneseq
        %v6064 = vshrl.u32 %v6063, 7
        %v6065 = vsub.s32 %v6062, %v6064
        %v6066 = vrot.slane %v6052, %v6065
        %v6067 = vcombine.low %v6059, %v6066
        %v6068 = vcombine.low %v3426, %v3425
        %v6069 = vcombine.low %v3427, %v3435
        %v6071 = vunpack.c.l.s4 1983009808
        %v6072 = vunpack.c.0.s8 %v6071
        %v6073 = vlaneseq
        %v6074 = vshrl.u32 %v6073, 7
        %v6075 = vsub.s32 %v6072, %v6074
        %v6076 = vrot.slane %v6068, %v6075
        %v6078 = vunpack.c.l.s4 1983009808
        %v6079 = vunpack.c.0.s8 %v6078
        %v6080 = vlaneseq
        %v6081 = vshrl.u32 %v6080, 7
        %v6082 = vsub.s32 %v6079, %v6081
        %v6083 = vrot.slane %v6069, %v6082
        %v6084 = vcombine.low %v6076, %v6083
        %v6085 = vcombine.low %v3442, %v3444
        %v6086 = vcombine.low %v3452, %v3460
        %v6088 = vunpack.c.l.s4 1983009808
        %v6089 = vunpack.c.0.s8 %v6088
        %v6090 = vlaneseq
        %v6091 = vshrl.u32 %v6090, 7
        %v6092 = vsub.s32 %v6089, %v6091
        %v6093 = vrot.slane %v6085, %v6092
        %v6095 = vunpack.c.l.s4 1983009808
        %v6096 = vunpack.c.0.s8 %v6095
        %v6097 = vlaneseq
        %v6098 = vshrl.u32 %v6097, 7
        %v6099 = vsub.s32 %v6096, %v6098
        %v6100 = vrot.slane %v6086, %v6099
        %v6101 = vcombine.low %v6093, %v6100
        %v6102 = vcombine.low %v3459, %v3461
        %v6103 = vcombine.low %v3469, %v3477
        %v6105 = vunpack.c.l.s4 1983009808
        %v6106 = vunpack.c.0.s8 %v6105
        %v6107 = vlaneseq
        %v6108 = vshrl.u32 %v6107, 7
        %v6109 = vsub.s32 %v6106, %v6108
        %v6110 = vrot.slane %v6102, %v6109
        %v6112 = vunpack.c.l.s4 1983009808
        %v6113 = vunpack.c.0.s8 %v6112
        %v6114 = vlaneseq
        %v6115 = vshrl.u32 %v6114, 7
        %v6116 = vsub.s32 %v6113, %v6115
        %v6117 = vrot.slane %v6103, %v6116
        %v6118 = vcombine.low %v6110, %v6117
        %v6119 = vcombine.low %v3478, %v3486
        %v6120 = vcombine.low %v3494, %v3493
        %v6122 = vunpack.c.l.s4 1983009808
        %v6123 = vunpack.c.0.s8 %v6122
        %v6124 = vlaneseq
        %v6125 = vshrl.u32 %v6124, 7
        %v6126 = vsub.s32 %v6123, %v6125
        %v6127 = vrot.slane %v6119, %v6126
        %v6129 = vunpack.c.l.s4 1983009808
        %v6130 = vunpack.c.0.s8 %v6129
        %v6131 = vlaneseq
        %v6132 = vshrl.u32 %v6131, 7
        %v6133 = vsub.s32 %v6130, %v6132
        %v6134 = vrot.slane %v6120, %v6133
        %v6135 = vcombine.low %v6127, %v6134
        %v6136 = vcombine.low %v3495, %v3503
        %v6137 = vcombine.low %v3511, %v3510
        %v6139 = vunpack.c.l.s4 1983009808
        %v6140 = vunpack.c.0.s8 %v6139
        %v6141 = vlaneseq
        %v6142 = vshrl.u32 %v6141, 7
        %v6143 = vsub.s32 %v6140, %v6142
        %v6144 = vrot.slane %v6136, %v6143
        %v6146 = vunpack.c.l.s4 1983009808
        %v6147 = vunpack.c.0.s8 %v6146
        %v6148 = vlaneseq
        %v6149 = vshrl.u32 %v6148, 7
        %v6150 = vsub.s32 %v6147, %v6149
        %v6151 = vrot.slane %v6137, %v6150
        %v6152 = vcombine.low %v6144, %v6151
        %v6153 = vcombine.low %v3520, %v3528
        %v6154 = vcombine.low %v3527, %v3529
        %v6156 = vunpack.c.l.s4 1983009808
        %v6157 = vunpack.c.0.s8 %v6156
        %v6158 = vlaneseq
        %v6159 = vshrl.u32 %v6158, 7
        %v6160 = vsub.s32 %v6157, %v6159
        %v6161 = vrot.slane %v6153, %v6160
        %v6163 = vunpack.c.l.s4 1983009808
        %v6164 = vunpack.c.0.s8 %v6163
        %v6165 = vlaneseq
        %v6166 = vshrl.u32 %v6165, 7
        %v6167 = vsub.s32 %v6164, %v6166
        %v6168 = vrot.slane %v6154, %v6167
        %v6169 = vcombine.low %v6161, %v6168
        %v6170 = vcombine.low %v3537, %v3545
        %v6171 = vcombine.low %v3544, %v3546
        %v6173 = vunpack.c.l.s4 1983009808
        %v6174 = vunpack.c.0.s8 %v6173
        %v6175 = vlaneseq
        %v6176 = vshrl.u32 %v6175, 7
        %v6177 = vsub.s32 %v6174, %v6176
        %v6178 = vrot.slane %v6170, %v6177
        %v6180 = vunpack.c.l.s4 1983009808
        %v6181 = vunpack.c.0.s8 %v6180
        %v6182 = vlaneseq
        %v6183 = vshrl.u32 %v6182, 7
        %v6184 = vsub.s32 %v6181, %v6183
        %v6185 = vrot.slane %v6171, %v6184
        %v6186 = vcombine.low %v6178, %v6185
        %v6219 = vpack.c.bf16 %v5676, %v5659
        %v6220 = vpack.c.bf16 %v5710, %v5693
        %v6221 = vpack.c.bf16 %v5744, %v5727
        %v6222 = vpack.c.bf16 %v5778, %v5761
        %v6223 = vpack.c.bf16 %v5812, %v5795
        %v6224 = vpack.c.bf16 %v5846, %v5829
        %v6225 = vpack.c.bf16 %v5880, %v5863
        %v6226 = vpack.c.bf16 %v5914, %v5897
        %v6227 = vpack.c.bf16 %v5948, %v5931
        %v6228 = vpack.c.bf16 %v5982, %v5965
        %v6229 = vpack.c.bf16 %v6016, %v5999
        %v6230 = vpack.c.bf16 %v6050, %v6033
        %v6231 = vpack.c.bf16 %v6084, %v6067
        %v6232 = vpack.c.bf16 %v6118, %v6101
        %v6233 = vpack.c.bf16 %v6152, %v6135
        %v6234 = vpack.c.bf16 %v6186, %v6169
        %s6235 = scalar_lea.vmem %s5, 4
        %v6236 = vld [vmem:[%s6235] sm:$0x3]
        %v6238 = vsel %vm5217, %v6219, 0
        %v6241 = vsel %vm5217, %v6220, 0
        %v6244 = vsel %vm5217, %v6221, 0
        %v6247 = vsel %vm5217, %v6222, 0
        %v6250 = vsel %vm5217, %v6223, 0
        %v6253 = vsel %vm5217, %v6224, 0
        %v6256 = vsel %vm5217, %v6225, 0
        %v6259 = vsel %vm5217, %v6226, 0
        %v6262 = vsel %vm5217, %v6227, 0
        %v6265 = vsel %vm5217, %v6228, 0
        %v6268 = vsel %vm5217, %v6229, 0
        %v6271 = vsel %vm5217, %v6230, 0
        %v6274 = vsel %vm5217, %v6231, 0
        %v6277 = vsel %vm5217, %v6232, 0
        %v6280 = vsel %vm5217, %v6233, 0
        %v6283 = vsel %vm5217, %v6234, 0
        %v6286 = vsel %vm5266, %v6236, 0
        %6288 = vmatprep.subr.bf16.mxu0 0
        %6289 = vmatpush1.bf16.msra.mxu0 %v6286
        %6290 = vmatprep.subr.bf16.mxu0 0
        %6291 = vmatpush1.bf16.msra.mxu0 0
        %6292 = vmatprep.subr.bf16.mxu0 0
        %6293 = vmatpush1.bf16.msra.mxu0 0
        %6294 = vmatprep.subr.bf16.mxu0 0
        %6295 = vmatpush1.bf16.msra.mxu0 0
        %6296 = vmatprep.subr.bf16.mxu0 0
        %6297 = vmatpush1.bf16.msra.mxu0 0
        %6298 = vmatprep.subr.bf16.mxu0 0
        %6299 = vmatpush1.bf16.msra.mxu0 0
        %6300 = vmatprep.subr.bf16.mxu0 0
        %6301 = vmatpush1.bf16.msra.mxu0 0
        %6302 = vmatprep.subr.bf16.mxu0 0
        %6303 = vmatpush1.bf16.msra.mxu0 0
        %6304 = vmatprep.subr.bf16.mxu0 0
        %6305 = vmatpush1.bf16.msra.mxu0 0
        %6306 = vmatprep.subr.bf16.mxu0 0
        %6307 = vmatpush1.bf16.msra.mxu0 0
        %6308 = vmatprep.subr.bf16.mxu0 0
        %6309 = vmatpush1.bf16.msra.mxu0 0
        %6310 = vmatprep.subr.bf16.mxu0 0
        %6311 = vmatpush1.bf16.msra.mxu0 0
        %6312 = vmatprep.subr.bf16.mxu0 0
        %6313 = vmatpush1.bf16.msra.mxu0 0
        %6314 = vmatprep.subr.bf16.mxu0 0
        %6315 = vmatpush1.bf16.msra.mxu0 0
        %6316 = vmatprep.subr.bf16.mxu0 0
        %6317 = vmatpush1.bf16.msra.mxu0 0
        %6318 = vmatprep.subr.bf16.mxu0 0
        %6319 = vmatpush1.bf16.msra.mxu0 0
        %6320 = vmatprep.mubr.bf16.mxu0 0
        %6321 = vmatmul.mubr.bf16.gmra.mrb[0].mxu0 %v6238
        %v6322 = vpop.f32.mrb[0].mxu0
        %v6323 = vadd.f32 0.0, %v6322
        %v6324 = vpop.f32.mrb[0].mxu0
        %v6325 = vpop.f32.mrb[0].mxu0
        %v6326 = vadd.f32 0.0, %v6325
        %v6327 = vpop.f32.mrb[0].mxu0
        %6328 = vmatprep.mubr.bf16.mxu0 0
        %6329 = vmatmul.mubr.bf16.gmra.mrb[0].mxu0 %v6241
        %v6330 = vpop.f32.mrb[0].mxu0
        %v6331 = vadd.f32 0.0, %v6330
        %v6332 = vpop.f32.mrb[0].mxu0
        %v6333 = vpop.f32.mrb[0].mxu0
        %v6334 = vadd.f32 0.0, %v6333
        %v6335 = vpop.f32.mrb[0].mxu0
        %6336 = vmatprep.mubr.bf16.mxu0 0
        %6337 = vmatmul.mubr.bf16.gmra.mrb[0].mxu0 %v6244
        %v6338 = vpop.f32.mrb[0].mxu0
        %v6339 = vadd.f32 0.0, %v6338
        %v6340 = vpop.f32.mrb[0].mxu0
        %v6341 = vpop.f32.mrb[0].mxu0
        %v6342 = vadd.f32 0.0, %v6341
        %v6343 = vpop.f32.mrb[0].mxu0
        %6344 = vmatprep.mubr.bf16.mxu0 0
        %6345 = vmatmul.mubr.bf16.gmra.mrb[0].mxu0 %v6247
        %v6346 = vpop.f32.mrb[0].mxu0
        %v6347 = vadd.f32 0.0, %v6346
        %v6348 = vpop.f32.mrb[0].mxu0
        %v6349 = vpop.f32.mrb[0].mxu0
        %v6350 = vadd.f32 0.0, %v6349
        %v6351 = vpop.f32.mrb[0].mxu0
        %6352 = vmatprep.mubr.bf16.mxu0 0
        %6353 = vmatmul.mubr.bf16.gmra.mrb[0].mxu0 %v6250
        %v6354 = vpop.f32.mrb[0].mxu0
        %v6355 = vadd.f32 0.0, %v6354
        %v6356 = vpop.f32.mrb[0].mxu0
        %v6357 = vpop.f32.mrb[0].mxu0
        %v6358 = vadd.f32 0.0, %v6357
        %v6359 = vpop.f32.mrb[0].mxu0
        %6360 = vmatprep.mubr.bf16.mxu0 0
        %6361 = vmatmul.mubr.bf16.gmra.mrb[0].mxu0 %v6253
        %v6362 = vpop.f32.mrb[0].mxu0
        %v6363 = vadd.f32 0.0, %v6362
        %v6364 = vpop.f32.mrb[0].mxu0
        %v6365 = vpop.f32.mrb[0].mxu0
        %v6366 = vadd.f32 0.0, %v6365
        %v6367 = vpop.f32.mrb[0].mxu0
        %6368 = vmatprep.mubr.bf16.mxu0 0
        %6369 = vmatmul.mubr.bf16.gmra.mrb[0].mxu0 %v6256
        %v6370 = vpop.f32.mrb[0].mxu0
        %v6371 = vadd.f32 0.0, %v6370
        %v6372 = vpop.f32.mrb[0].mxu0
        %v6373 = vpop.f32.mrb[0].mxu0
        %v6374 = vadd.f32 0.0, %v6373
        %v6375 = vpop.f32.mrb[0].mxu0
        %6376 = vmatprep.mubr.bf16.mxu0 0
        %6377 = vmatmul.mubr.bf16.gmra.mrb[0].mxu0 %v6259
        %v6378 = vpop.f32.mrb[0].mxu0
        %v6379 = vadd.f32 0.0, %v6378
        %v6380 = vpop.f32.mrb[0].mxu0
        %v6381 = vpop.f32.mrb[0].mxu0
        %v6382 = vadd.f32 0.0, %v6381
        %v6383 = vpop.f32.mrb[0].mxu0
        %6384 = vmatprep.mubr.bf16.mxu0 0
        %6385 = vmatmul.mubr.bf16.gmra.mrb[0].mxu0 %v6262
        %v6386 = vpop.f32.mrb[0].mxu0
        %v6387 = vadd.f32 0.0, %v6386
        %v6388 = vpop.f32.mrb[0].mxu0
        %v6389 = vpop.f32.mrb[0].mxu0
        %v6390 = vadd.f32 0.0, %v6389
        %v6391 = vpop.f32.mrb[0].mxu0
        %6392 = vmatprep.mubr.bf16.mxu0 0
        %6393 = vmatmul.mubr.bf16.gmra.mrb[0].mxu0 %v6265
        %v6394 = vpop.f32.mrb[0].mxu0
        %v6395 = vadd.f32 0.0, %v6394
        %v6396 = vpop.f32.mrb[0].mxu0
        %v6397 = vpop.f32.mrb[0].mxu0
        %v6398 = vadd.f32 0.0, %v6397
        %v6399 = vpop.f32.mrb[0].mxu0
        %6400 = vmatprep.mubr.bf16.mxu0 0
        %6401 = vmatmul.mubr.bf16.gmra.mrb[0].mxu0 %v6268
        %v6402 = vpop.f32.mrb[0].mxu0
        %v6403 = vadd.f32 0.0, %v6402
        %v6404 = vpop.f32.mrb[0].mxu0
        %v6405 = vpop.f32.mrb[0].mxu0
        %v6406 = vadd.f32 0.0, %v6405
        %v6407 = vpop.f32.mrb[0].mxu0
        %6408 = vmatprep.mubr.bf16.mxu0 0
        %6409 = vmatmul.mubr.bf16.gmra.mrb[0].mxu0 %v6271
        %v6410 = vpop.f32.mrb[0].mxu0
        %v6411 = vadd.f32 0.0, %v6410
        %v6412 = vpop.f32.mrb[0].mxu0
        %v6413 = vpop.f32.mrb[0].mxu0
        %v6414 = vadd.f32 0.0, %v6413
        %v6415 = vpop.f32.mrb[0].mxu0
        %6416 = vmatprep.mubr.bf16.mxu0 0
        %6417 = vmatmul.mubr.bf16.gmra.mrb[0].mxu0 %v6274
        %v6418 = vpop.f32.mrb[0].mxu0
        %v6419 = vadd.f32 0.0, %v6418
        %v6420 = vpop.f32.mrb[0].mxu0
        %v6421 = vpop.f32.mrb[0].mxu0
        %v6422 = vadd.f32 0.0, %v6421
        %v6423 = vpop.f32.mrb[0].mxu0
        %6424 = vmatprep.mubr.bf16.mxu0 0
        %6425 = vmatmul.mubr.bf16.gmra.mrb[0].mxu0 %v6277
        %v6426 = vpop.f32.mrb[0].mxu0
        %v6427 = vadd.f32 0.0, %v6426
        %v6428 = vpop.f32.mrb[0].mxu0
        %v6429 = vpop.f32.mrb[0].mxu0
        %v6430 = vadd.f32 0.0, %v6429
        %v6431 = vpop.f32.mrb[0].mxu0
        %6432 = vmatprep.mubr.bf16.mxu0 0
        %6433 = vmatmul.mubr.bf16.gmra.mrb[0].mxu0 %v6280
        %v6434 = vpop.f32.mrb[0].mxu0
        %v6435 = vadd.f32 0.0, %v6434
        %v6436 = vpop.f32.mrb[0].mxu0
        %v6437 = vpop.f32.mrb[0].mxu0
        %v6438 = vadd.f32 0.0, %v6437
        %v6439 = vpop.f32.mrb[0].mxu0
        %6440 = vmatprep.mubr.bf16.mxu0 0
        %6441 = vmatmul.mubr.bf16.gmra.mrb[0].mxu0 %v6283
        %v6442 = vpop.f32.mrb[0].mxu0
        %v6443 = vadd.f32 0.0, %v6442
        %v6444 = vpop.f32.mrb[0].mxu0
        %v6445 = vpop.f32.mrb[0].mxu0
        %v6446 = vadd.f32 0.0, %v6445
        %v6447 = vpop.f32.mrb[0].mxu0
        %6448 = vdwg.mxu0
        %v6449 = vadd.f32 %v5517, %v6323
        %v6450 = vadd.f32 %v5520, %v6326
        %v6451 = vadd.f32 %v5525, %v6331
        %v6452 = vadd.f32 %v5528, %v6334
        %v6453 = vadd.f32 %v5533, %v6339
        %v6454 = vadd.f32 %v5536, %v6342
        %v6455 = vadd.f32 %v5541, %v6347
        %v6456 = vadd.f32 %v5544, %v6350
        %v6457 = vadd.f32 %v5549, %v6355
        %v6458 = vadd.f32 %v5552, %v6358
        %v6459 = vadd.f32 %v5557, %v6363
        %v6460 = vadd.f32 %v5560, %v6366
        %v6461 = vadd.f32 %v5565, %v6371
        %v6462 = vadd.f32 %v5568, %v6374
        %v6463 = vadd.f32 %v5573, %v6379
        %v6464 = vadd.f32 %v5576, %v6382
        %v6465 = vadd.f32 %v5581, %v6387
        %v6466 = vadd.f32 %v5584, %v6390
        %v6467 = vadd.f32 %v5589, %v6395
        %v6468 = vadd.f32 %v5592, %v6398
        %v6469 = vadd.f32 %v5597, %v6403
        %v6470 = vadd.f32 %v5600, %v6406
        %v6471 = vadd.f32 %v5605, %v6411
        %v6472 = vadd.f32 %v5608, %v6414
        %v6473 = vadd.f32 %v5613, %v6419
        %v6474 = vadd.f32 %v5616, %v6422
        %v6475 = vadd.f32 %v5621, %v6427
        %v6476 = vadd.f32 %v5624, %v6430
        %v6477 = vadd.f32 %v5629, %v6435
        %v6478 = vadd.f32 %v5632, %v6438
        %v6479 = vadd.f32 %v5637, %v6443
        %v6480 = vadd.f32 %v5640, %v6446
        %v6481 = vcombine.low %v3554, %v3562
        %v6482 = vcombine.low %v3561, %v3563
        %v6484 = vunpack.c.l.s4 1983009808
        %v6485 = vunpack.c.0.s8 %v6484
        %v6486 = vlaneseq
        %v6487 = vshrl.u32 %v6486, 7
        %v6488 = vsub.s32 %v6485, %v6487
        %v6489 = vrot.slane %v6481, %v6488
        %v6491 = vunpack.c.l.s4 1983009808
        %v6492 = vunpack.c.0.s8 %v6491
        %v6493 = vlaneseq
        %v6494 = vshrl.u32 %v6493, 7
        %v6495 = vsub.s32 %v6492, %v6494
        %v6496 = vrot.slane %v6482, %v6495
        %v6497 = vcombine.low %v6489, %v6496
        %v6498 = vcombine.low %v3571, %v3579
        %v6499 = vcombine.low %v3578, %v3580
        %v6501 = vunpack.c.l.s4 1983009808
        %v6502 = vunpack.c.0.s8 %v6501
        %v6503 = vlaneseq
        %v6504 = vshrl.u32 %v6503, 7
        %v6505 = vsub.s32 %v6502, %v6504
        %v6506 = vrot.slane %v6498, %v6505
        %v6508 = vunpack.c.l.s4 1983009808
        %v6509 = vunpack.c.0.s8 %v6508
        %v6510 = vlaneseq
        %v6511 = vshrl.u32 %v6510, 7
        %v6512 = vsub.s32 %v6509, %v6511
        %v6513 = vrot.slane %v6499, %v6512
        %v6514 = vcombine.low %v6506, %v6513
        %v6517 = vpack.c.bf16 %v6514, %v6497
        %s6518 = scalar_lea.vmem %s5, 6
        %v6519 = vld [vmem:[%s6518] sm:$0x3]
        %v6521 = vsel %vm5217, %v6517, 0
        %v6524 = vsel %vm5266, %v6519, 0
        %6526 = vmatprep.subr.bf16.mxu0 0
        %6527 = vmatpush1.bf16.msra.mxu0 %v6524
        %6528 = vmatprep.subr.bf16.mxu0 0
        %6529 = vmatpush1.bf16.msra.mxu0 0
        %6530 = vmatprep.subr.bf16.mxu0 0
        %6531 = vmatpush1.bf16.msra.mxu0 0
        %6532 = vmatprep.subr.bf16.mxu0 0
        %6533 = vmatpush1.bf16.msra.mxu0 0
        %6534 = vmatprep.subr.bf16.mxu0 0
        %6535 = vmatpush1.bf16.msra.mxu0 0
        %6536 = vmatprep.subr.bf16.mxu0 0
        %6537 = vmatpush1.bf16.msra.mxu0 0
        %6538 = vmatprep.subr.bf16.mxu0 0
        %6539 = vmatpush1.bf16.msra.mxu0 0
        %6540 = vmatprep.subr.bf16.mxu0 0
        %6541 = vmatpush1.bf16.msra.mxu0 0
        %6542 = vmatprep.subr.bf16.mxu0 0
        %6543 = vmatpush1.bf16.msra.mxu0 0
        %6544 = vmatprep.subr.bf16.mxu0 0
        %6545 = vmatpush1.bf16.msra.mxu0 0
        %6546 = vmatprep.subr.bf16.mxu0 0
        %6547 = vmatpush1.bf16.msra.mxu0 0
        %6548 = vmatprep.subr.bf16.mxu0 0
        %6549 = vmatpush1.bf16.msra.mxu0 0
        %6550 = vmatprep.subr.bf16.mxu0 0
        %6551 = vmatpush1.bf16.msra.mxu0 0
        %6552 = vmatprep.subr.bf16.mxu0 0
        %6553 = vmatpush1.bf16.msra.mxu0 0
        %6554 = vmatprep.subr.bf16.mxu0 0
        %6555 = vmatpush1.bf16.msra.mxu0 0
        %6556 = vmatprep.subr.bf16.mxu0 0
        %6557 = vmatpush1.bf16.msra.mxu0 0
        %6558 = vmatprep.mubr.bf16.mxu0 0
        %6559 = vmatmul.mubr.bf16.gmra.mrb[0].mxu0 %v5435
        %v6560 = vpop.f32.mrb[0].mxu0
        %v6561 = vadd.f32 0.0, %v6560
        %v6562 = vpop.f32.mrb[0].mxu0
        %v6563 = vpop.f32.mrb[0].mxu0
        %v6564 = vadd.f32 0.0, %v6563
        %v6565 = vpop.f32.mrb[0].mxu0
        %6566 = vmatprep.mubr.bf16.mxu0 0
        %6567 = vmatmul.mubr.bf16.gmra.mrb[0].mxu0 %v5438
        %v6568 = vpop.f32.mrb[0].mxu0
        %v6569 = vadd.f32 0.0, %v6568
        %v6570 = vpop.f32.mrb[0].mxu0
        %v6571 = vpop.f32.mrb[0].mxu0
        %v6572 = vadd.f32 0.0, %v6571
        %v6573 = vpop.f32.mrb[0].mxu0
        %6574 = vmatprep.mubr.bf16.mxu0 0
        %6575 = vmatmul.mubr.bf16.gmra.mrb[0].mxu0 %v5441
        %v6576 = vpop.f32.mrb[0].mxu0
        %v6577 = vadd.f32 0.0, %v6576
        %v6578 = vpop.f32.mrb[0].mxu0
        %v6579 = vpop.f32.mrb[0].mxu0
        %v6580 = vadd.f32 0.0, %v6579
        %v6581 = vpop.f32.mrb[0].mxu0
        %6582 = vmatprep.mubr.bf16.mxu0 0
        %6583 = vmatmul.mubr.bf16.gmra.mrb[0].mxu0 %v5444
        %v6584 = vpop.f32.mrb[0].mxu0
        %v6585 = vadd.f32 0.0, %v6584
        %v6586 = vpop.f32.mrb[0].mxu0
        %v6587 = vpop.f32.mrb[0].mxu0
        %v6588 = vadd.f32 0.0, %v6587
        %v6589 = vpop.f32.mrb[0].mxu0
        %6590 = vmatprep.mubr.bf16.mxu0 0
        %6591 = vmatmul.mubr.bf16.gmra.mrb[0].mxu0 %v5447
        %v6592 = vpop.f32.mrb[0].mxu0
        %v6593 = vadd.f32 0.0, %v6592
        %v6594 = vpop.f32.mrb[0].mxu0
        %v6595 = vpop.f32.mrb[0].mxu0
        %v6596 = vadd.f32 0.0, %v6595
        %v6597 = vpop.f32.mrb[0].mxu0
        %6598 = vmatprep.mubr.bf16.mxu0 0
        %6599 = vmatmul.mubr.bf16.gmra.mrb[0].mxu0 %v5450
        %v6600 = vpop.f32.mrb[0].mxu0
        %v6601 = vadd.f32 0.0, %v6600
        %v6602 = vpop.f32.mrb[0].mxu0
        %v6603 = vpop.f32.mrb[0].mxu0
        %v6604 = vadd.f32 0.0, %v6603
        %v6605 = vpop.f32.mrb[0].mxu0
        %6606 = vmatprep.mubr.bf16.mxu0 0
        %6607 = vmatmul.mubr.bf16.gmra.mrb[0].mxu0 %v5453
        %v6608 = vpop.f32.mrb[0].mxu0
        %v6609 = vadd.f32 0.0, %v6608
        %v6610 = vpop.f32.mrb[0].mxu0
        %v6611 = vpop.f32.mrb[0].mxu0
        %v6612 = vadd.f32 0.0, %v6611
        %v6613 = vpop.f32.mrb[0].mxu0
        %6614 = vmatprep.mubr.bf16.mxu0 0
        %6615 = vmatmul.mubr.bf16.gmra.mrb[0].mxu0 %v5456
        %v6616 = vpop.f32.mrb[0].mxu0
        %v6617 = vadd.f32 0.0, %v6616
        %v6618 = vpop.f32.mrb[0].mxu0
        %v6619 = vpop.f32.mrb[0].mxu0
        %v6620 = vadd.f32 0.0, %v6619
        %v6621 = vpop.f32.mrb[0].mxu0
        %6622 = vmatprep.mubr.bf16.mxu0 0
        %6623 = vmatmul.mubr.bf16.gmra.mrb[0].mxu0 %v5459
        %v6624 = vpop.f32.mrb[0].mxu0
        %v6625 = vadd.f32 0.0, %v6624
        %v6626 = vpop.f32.mrb[0].mxu0
        %v6627 = vpop.f32.mrb[0].mxu0
        %v6628 = vadd.f32 0.0, %v6627
        %v6629 = vpop.f32.mrb[0].mxu0
        %6630 = vmatprep.mubr.bf16.mxu0 0
        %6631 = vmatmul.mubr.bf16.gmra.mrb[0].mxu0 %v5462
        %v6632 = vpop.f32.mrb[0].mxu0
        %v6633 = vadd.f32 0.0, %v6632
        %v6634 = vpop.f32.mrb[0].mxu0
        %v6635 = vpop.f32.mrb[0].mxu0
        %v6636 = vadd.f32 0.0, %v6635
        %v6637 = vpop.f32.mrb[0].mxu0
        %6638 = vmatprep.mubr.bf16.mxu0 0
        %6639 = vmatmul.mubr.bf16.gmra.mrb[0].mxu0 %v5465
        %v6640 = vpop.f32.mrb[0].mxu0
        %v6641 = vadd.f32 0.0, %v6640
        %v6642 = vpop.f32.mrb[0].mxu0
        %v6643 = vpop.f32.mrb[0].mxu0
        %v6644 = vadd.f32 0.0, %v6643
        %v6645 = vpop.f32.mrb[0].mxu0
        %6646 = vmatprep.mubr.bf16.mxu0 0
        %6647 = vmatmul.mubr.bf16.gmra.mrb[0].mxu0 %v5468
        %v6648 = vpop.f32.mrb[0].mxu0
        %v6649 = vadd.f32 0.0, %v6648
        %v6650 = vpop.f32.mrb[0].mxu0
        %v6651 = vpop.f32.mrb[0].mxu0
        %v6652 = vadd.f32 0.0, %v6651
        %v6653 = vpop.f32.mrb[0].mxu0
        %6654 = vmatprep.mubr.bf16.mxu0 0
        %6655 = vmatmul.mubr.bf16.gmra.mrb[0].mxu0 %v5471
        %v6656 = vpop.f32.mrb[0].mxu0
        %v6657 = vadd.f32 0.0, %v6656
        %v6658 = vpop.f32.mrb[0].mxu0
        %v6659 = vpop.f32.mrb[0].mxu0
        %v6660 = vadd.f32 0.0, %v6659
        %v6661 = vpop.f32.mrb[0].mxu0
        %6662 = vmatprep.mubr.bf16.mxu0 0
        %6663 = vmatmul.mubr.bf16.gmra.mrb[0].mxu0 %v5474
        %v6664 = vpop.f32.mrb[0].mxu0
        %v6665 = vadd.f32 0.0, %v6664
        %v6666 = vpop.f32.mrb[0].mxu0
        %v6667 = vpop.f32.mrb[0].mxu0
        %v6668 = vadd.f32 0.0, %v6667
        %v6669 = vpop.f32.mrb[0].mxu0
        %6670 = vmatprep.mubr.bf16.mxu0 0
        %6671 = vmatmul.mubr.bf16.gmra.mrb[0].mxu0 %v5477
        %v6672 = vpop.f32.mrb[0].mxu0
        %v6673 = vadd.f32 0.0, %v6672
        %v6674 = vpop.f32.mrb[0].mxu0
        %v6675 = vpop.f32.mrb[0].mxu0
        %v6676 = vadd.f32 0.0, %v6675
        %v6677 = vpop.f32.mrb[0].mxu0
        %6678 = vmatprep.mubr.bf16.mxu0 0
        %6679 = vmatmul.mubr.bf16.gmra.mrb[0].mxu0 %v6521
        %v6680 = vpop.f32.mrb[0].mxu0
        %v6681 = vadd.f32 0.0, %v6680
        %v6682 = vpop.f32.mrb[0].mxu0
        %v6683 = vpop.f32.mrb[0].mxu0
        %v6684 = vadd.f32 0.0, %v6683
        %v6685 = vpop.f32.mrb[0].mxu0
        %6686 = vdwg.mxu0
        %v6687 = vadd.f32 %v6449, %v6561
        %v6688 = vadd.f32 %v6450, %v6564
        %v6689 = vadd.f32 %v6451, %v6569
        %v6690 = vadd.f32 %v6452, %v6572
        %v6691 = vadd.f32 %v6453, %v6577
        %v6692 = vadd.f32 %v6454, %v6580
        %v6693 = vadd.f32 %v6455, %v6585
        %v6694 = vadd.f32 %v6456, %v6588
        %v6695 = vadd.f32 %v6457, %v6593
        %v6696 = vadd.f32 %v6458, %v6596
        %v6697 = vadd.f32 %v6459, %v6601
        %v6698 = vadd.f32 %v6460, %v6604
        %v6699 = vadd.f32 %v6461, %v6609
        %v6700 = vadd.f32 %v6462, %v6612
        %v6701 = vadd.f32 %v6463, %v6617
        %v6702 = vadd.f32 %v6464, %v6620
        %v6703 = vadd.f32 %v6465, %v6625
        %v6704 = vadd.f32 %v6466, %v6628
        %v6705 = vadd.f32 %v6467, %v6633
        %v6706 = vadd.f32 %v6468, %v6636
        %v6707 = vadd.f32 %v6469, %v6641
        %v6708 = vadd.f32 %v6470, %v6644
        %v6709 = vadd.f32 %v6471, %v6649
        %v6710 = vadd.f32 %v6472, %v6652
        %v6711 = vadd.f32 %v6473, %v6657
        %v6712 = vadd.f32 %v6474, %v6660
        %v6713 = vadd.f32 %v6475, %v6665
        %v6714 = vadd.f32 %v6476, %v6668
        %v6715 = vadd.f32 %v6477, %v6673
        %v6716 = vadd.f32 %v6478, %v6676
        %v6717 = vadd.f32 %v6479, %v6681
        %v6718 = vadd.f32 %v6480, %v6684
        %v6719 = vrot.slane %v3554, 7
        %v6720 = vrot.slane %v6719, 2
        %v6721 = vrot.slane %v3562, 7
        %v6722 = vsel %vm4222, %v6720, %v6721
        %v6723 = vrot.slane %v6721, 2
        %v6724 = vrot.slane %v3561, 7
        %v6725 = vsel %vm4222, %v6723, %v6724
        %v6726 = vrot.slane %v6724, 2
        %v6727 = vrot.slane %v3563, 7
        %v6728 = vsel %vm4222, %v6726, %v6727
        %v6729 = vrot.slane %v6727, 2
        %v6730 = vrot.slane %v3571, 7
        %v6731 = vsel %vm4222, %v6729, %v6730
        %v6732 = vrot.slane %v6730, 2
        %v6733 = vrot.slane %v3579, 7
        %v6734 = vsel %vm4222, %v6732, %v6733
        %v6735 = vrot.slane %v6733, 2
        %v6736 = vrot.slane %v3578, 7
        %v6737 = vsel %vm4222, %v6735, %v6736
        %v6738 = vrot.slane %v6736, 2
        %v6739 = vrot.slane %v3580, 7
        %v6740 = vsel %vm4222, %v6738, %v6739
        %v6741 = vrot.slane %v6739, 2
        %v6742 = vrot.slane %v3588, 7
        %v6743 = vsel %vm4222, %v6741, %v6742
        %v6744 = vcombine.low %v6722, %v6725
        %v6745 = vcombine.low %v6728, %v6731
        %v6747 = vunpack.c.l.s4 1983009808
        %v6748 = vunpack.c.0.s8 %v6747
        %v6749 = vlaneseq
        %v6750 = vshrl.u32 %v6749, 7
        %v6751 = vsub.s32 %v6748, %v6750
        %v6752 = vrot.slane %v6744, %v6751
        %v6754 = vunpack.c.l.s4 1983009808
        %v6755 = vunpack.c.0.s8 %v6754
        %v6756 = vlaneseq
        %v6757 = vshrl.u32 %v6756, 7
        %v6758 = vsub.s32 %v6755, %v6757
        %v6759 = vrot.slane %v6745, %v6758
        %v6760 = vcombine.low %v6752, %v6759
        %v6761 = vcombine.low %v6734, %v6737
        %v6762 = vcombine.low %v6740, %v6743
        %v6764 = vunpack.c.l.s4 1983009808
        %v6765 = vunpack.c.0.s8 %v6764
        %v6766 = vlaneseq
        %v6767 = vshrl.u32 %v6766, 7
        %v6768 = vsub.s32 %v6765, %v6767
        %v6769 = vrot.slane %v6761, %v6768
        %v6771 = vunpack.c.l.s4 1983009808
        %v6772 = vunpack.c.0.s8 %v6771
        %v6773 = vlaneseq
        %v6774 = vshrl.u32 %v6773, 7
        %v6775 = vsub.s32 %v6772, %v6774
        %v6776 = vrot.slane %v6762, %v6775
        %v6777 = vcombine.low %v6769, %v6776
        %v6780 = vpack.c.bf16 %v6777, %v6760
        %s6781 = scalar_lea.vmem %s5, 8
        %v6782 = vld [vmem:[%s6781] sm:$0x3]
        %v6784 = vsel %vm5217, %v6780, 0
        %v6787 = vsel %vm5266, %v6782, 0
        %6789 = vmatprep.subr.bf16.mxu0 0
        %6790 = vmatpush1.bf16.msra.mxu0 %v6787
        %6791 = vmatprep.subr.bf16.mxu0 0
        %6792 = vmatpush1.bf16.msra.mxu0 0
        %6793 = vmatprep.subr.bf16.mxu0 0
        %6794 = vmatpush1.bf16.msra.mxu0 0
        %6795 = vmatprep.subr.bf16.mxu0 0
        %6796 = vmatpush1.bf16.msra.mxu0 0
        %6797 = vmatprep.subr.bf16.mxu0 0
        %6798 = vmatpush1.bf16.msra.mxu0 0
        %6799 = vmatprep.subr.bf16.mxu0 0
        %6800 = vmatpush1.bf16.msra.mxu0 0
        %6801 = vmatprep.subr.bf16.mxu0 0
        %6802 = vmatpush1.bf16.msra.mxu0 0
        %6803 = vmatprep.subr.bf16.mxu0 0
        %6804 = vmatpush1.bf16.msra.mxu0 0
        %6805 = vmatprep.subr.bf16.mxu0 0
        %6806 = vmatpush1.bf16.msra.mxu0 0
        %6807 = vmatprep.subr.bf16.mxu0 0
        %6808 = vmatpush1.bf16.msra.mxu0 0
        %6809 = vmatprep.subr.bf16.mxu0 0
        %6810 = vmatpush1.bf16.msra.mxu0 0
        %6811 = vmatprep.subr.bf16.mxu0 0
        %6812 = vmatpush1.bf16.msra.mxu0 0
        %6813 = vmatprep.subr.bf16.mxu0 0
        %6814 = vmatpush1.bf16.msra.mxu0 0
        %6815 = vmatprep.subr.bf16.mxu0 0
        %6816 = vmatpush1.bf16.msra.mxu0 0
        %6817 = vmatprep.subr.bf16.mxu0 0
        %6818 = vmatpush1.bf16.msra.mxu0 0
        %6819 = vmatprep.subr.bf16.mxu0 0
        %6820 = vmatpush1.bf16.msra.mxu0 0
        %6821 = vmatprep.mubr.bf16.mxu0 0
        %6822 = vmatmul.mubr.bf16.gmra.mrb[0].mxu0 %v5222
        %v6823 = vpop.f32.mrb[0].mxu0
        %v6824 = vadd.f32 0.0, %v6823
        %v6825 = vpop.f32.mrb[0].mxu0
        %v6826 = vpop.f32.mrb[0].mxu0
        %v6827 = vadd.f32 0.0, %v6826
        %v6828 = vpop.f32.mrb[0].mxu0
        %6829 = vmatprep.mubr.bf16.mxu0 0
        %6830 = vmatmul.mubr.bf16.gmra.mrb[0].mxu0 %v5225
        %v6831 = vpop.f32.mrb[0].mxu0
        %v6832 = vadd.f32 0.0, %v6831
        %v6833 = vpop.f32.mrb[0].mxu0
        %v6834 = vpop.f32.mrb[0].mxu0
        %v6835 = vadd.f32 0.0, %v6834
        %v6836 = vpop.f32.mrb[0].mxu0
        %6837 = vmatprep.mubr.bf16.mxu0 0
        %6838 = vmatmul.mubr.bf16.gmra.mrb[0].mxu0 %v5228
        %v6839 = vpop.f32.mrb[0].mxu0
        %v6840 = vadd.f32 0.0, %v6839
        %v6841 = vpop.f32.mrb[0].mxu0
        %v6842 = vpop.f32.mrb[0].mxu0
        %v6843 = vadd.f32 0.0, %v6842
        %v6844 = vpop.f32.mrb[0].mxu0
        %6845 = vmatprep.mubr.bf16.mxu0 0
        %6846 = vmatmul.mubr.bf16.gmra.mrb[0].mxu0 %v5231
        %v6847 = vpop.f32.mrb[0].mxu0
        %v6848 = vadd.f32 0.0, %v6847
        %v6849 = vpop.f32.mrb[0].mxu0
        %v6850 = vpop.f32.mrb[0].mxu0
        %v6851 = vadd.f32 0.0, %v6850
        %v6852 = vpop.f32.mrb[0].mxu0
        %6853 = vmatprep.mubr.bf16.mxu0 0
        %6854 = vmatmul.mubr.bf16.gmra.mrb[0].mxu0 %v5234
        %v6855 = vpop.f32.mrb[0].mxu0
        %v6856 = vadd.f32 0.0, %v6855
        %v6857 = vpop.f32.mrb[0].mxu0
        %v6858 = vpop.f32.mrb[0].mxu0
        %v6859 = vadd.f32 0.0, %v6858
        %v6860 = vpop.f32.mrb[0].mxu0
        %6861 = vmatprep.mubr.bf16.mxu0 0
        %6862 = vmatmul.mubr.bf16.gmra.mrb[0].mxu0 %v5237
        %v6863 = vpop.f32.mrb[0].mxu0
        %v6864 = vadd.f32 0.0, %v6863
        %v6865 = vpop.f32.mrb[0].mxu0
        %v6866 = vpop.f32.mrb[0].mxu0
        %v6867 = vadd.f32 0.0, %v6866
        %v6868 = vpop.f32.mrb[0].mxu0
        %6869 = vmatprep.mubr.bf16.mxu0 0
        %6870 = vmatmul.mubr.bf16.gmra.mrb[0].mxu0 %v5240
        %v6871 = vpop.f32.mrb[0].mxu0
        %v6872 = vadd.f32 0.0, %v6871
        %v6873 = vpop.f32.mrb[0].mxu0
        %v6874 = vpop.f32.mrb[0].mxu0
        %v6875 = vadd.f32 0.0, %v6874
        %v6876 = vpop.f32.mrb[0].mxu0
        %6877 = vmatprep.mubr.bf16.mxu0 0
        %6878 = vmatmul.mubr.bf16.gmra.mrb[0].mxu0 %v5243
        %v6879 = vpop.f32.mrb[0].mxu0
        %v6880 = vadd.f32 0.0, %v6879
        %v6881 = vpop.f32.mrb[0].mxu0
        %v6882 = vpop.f32.mrb[0].mxu0
        %v6883 = vadd.f32 0.0, %v6882
        %v6884 = vpop.f32.mrb[0].mxu0
        %6885 = vmatprep.mubr.bf16.mxu0 0
        %6886 = vmatmul.mubr.bf16.gmra.mrb[0].mxu0 %v5246
        %v6887 = vpop.f32.mrb[0].mxu0
        %v6888 = vadd.f32 0.0, %v6887
        %v6889 = vpop.f32.mrb[0].mxu0
        %v6890 = vpop.f32.mrb[0].mxu0
        %v6891 = vadd.f32 0.0, %v6890
        %v6892 = vpop.f32.mrb[0].mxu0
        %6893 = vmatprep.mubr.bf16.mxu0 0
        %6894 = vmatmul.mubr.bf16.gmra.mrb[0].mxu0 %v5249
        %v6895 = vpop.f32.mrb[0].mxu0
        %v6896 = vadd.f32 0.0, %v6895
        %v6897 = vpop.f32.mrb[0].mxu0
        %v6898 = vpop.f32.mrb[0].mxu0
        %v6899 = vadd.f32 0.0, %v6898
        %v6900 = vpop.f32.mrb[0].mxu0
        %6901 = vmatprep.mubr.bf16.mxu0 0
        %6902 = vmatmul.mubr.bf16.gmra.mrb[0].mxu0 %v5252
        %v6903 = vpop.f32.mrb[0].mxu0
        %v6904 = vadd.f32 0.0, %v6903
        %v6905 = vpop.f32.mrb[0].mxu0
        %v6906 = vpop.f32.mrb[0].mxu0
        %v6907 = vadd.f32 0.0, %v6906
        %v6908 = vpop.f32.mrb[0].mxu0
        %6909 = vmatprep.mubr.bf16.mxu0 0
        %6910 = vmatmul.mubr.bf16.gmra.mrb[0].mxu0 %v5255
        %v6911 = vpop.f32.mrb[0].mxu0
        %v6912 = vadd.f32 0.0, %v6911
        %v6913 = vpop.f32.mrb[0].mxu0
        %v6914 = vpop.f32.mrb[0].mxu0
        %v6915 = vadd.f32 0.0, %v6914
        %v6916 = vpop.f32.mrb[0].mxu0
        %6917 = vmatprep.mubr.bf16.mxu0 0
        %6918 = vmatmul.mubr.bf16.gmra.mrb[0].mxu0 %v5258
        %v6919 = vpop.f32.mrb[0].mxu0
        %v6920 = vadd.f32 0.0, %v6919
        %v6921 = vpop.f32.mrb[0].mxu0
        %v6922 = vpop.f32.mrb[0].mxu0
        %v6923 = vadd.f32 0.0, %v6922
        %v6924 = vpop.f32.mrb[0].mxu0
        %6925 = vmatprep.mubr.bf16.mxu0 0
        %6926 = vmatmul.mubr.bf16.gmra.mrb[0].mxu0 %v5261
        %v6927 = vpop.f32.mrb[0].mxu0
        %v6928 = vadd.f32 0.0, %v6927
        %v6929 = vpop.f32.mrb[0].mxu0
        %v6930 = vpop.f32.mrb[0].mxu0
        %v6931 = vadd.f32 0.0, %v6930
        %v6932 = vpop.f32.mrb[0].mxu0
        %6933 = vmatprep.mubr.bf16.mxu0 0
        %6934 = vmatmul.mubr.bf16.gmra.mrb[0].mxu0 %v5264
        %v6935 = vpop.f32.mrb[0].mxu0
        %v6936 = vadd.f32 0.0, %v6935
        %v6937 = vpop.f32.mrb[0].mxu0
        %v6938 = vpop.f32.mrb[0].mxu0
        %v6939 = vadd.f32 0.0, %v6938
        %v6940 = vpop.f32.mrb[0].mxu0
        %6941 = vmatprep.mubr.bf16.mxu0 0
        %6942 = vmatmul.mubr.bf16.gmra.mrb[0].mxu0 %v6784
        %v6943 = vpop.f32.mrb[0].mxu0
        %v6944 = vadd.f32 0.0, %v6943
        %v6945 = vpop.f32.mrb[0].mxu0
        %v6946 = vpop.f32.mrb[0].mxu0
        %v6947 = vadd.f32 0.0, %v6946
        %v6948 = vpop.f32.mrb[0].mxu0
        %6949 = vdwg.mxu0
        %v6950 = vadd.f32 %v6687, %v6824
        %v6951 = vadd.f32 %v6688, %v6827
        %v6952 = vadd.f32 %v6689, %v6832
        %v6953 = vadd.f32 %v6690, %v6835
        %v6954 = vadd.f32 %v6691, %v6840
        %v6955 = vadd.f32 %v6692, %v6843
        %v6956 = vadd.f32 %v6693, %v6848
        %v6957 = vadd.f32 %v6694, %v6851
        %v6958 = vadd.f32 %v6695, %v6856
        %v6959 = vadd.f32 %v6696, %v6859
        %v6960 = vadd.f32 %v6697, %v6864
        %v6961 = vadd.f32 %v6698, %v6867
        %v6962 = vadd.f32 %v6699, %v6872
        %v6963 = vadd.f32 %v6700, %v6875
        %v6964 = vadd.f32 %v6701, %v6880
        %v6965 = vadd.f32 %v6702, %v6883
        %v6966 = vadd.f32 %v6703, %v6888
        %v6967 = vadd.f32 %v6704, %v6891
        %v6968 = vadd.f32 %v6705, %v6896
        %v6969 = vadd.f32 %v6706, %v6899
        %v6970 = vadd.f32 %v6707, %v6904
        %v6971 = vadd.f32 %v6708, %v6907
        %v6972 = vadd.f32 %v6709, %v6912
        %v6973 = vadd.f32 %v6710, %v6915
        %v6974 = vadd.f32 %v6711, %v6920
        %v6975 = vadd.f32 %v6712, %v6923
        %v6976 = vadd.f32 %v6713, %v6928
        %v6977 = vadd.f32 %v6714, %v6931
        %v6978 = vadd.f32 %v6715, %v6936
        %v6979 = vadd.f32 %v6716, %v6939
        %v6980 = vadd.f32 %v6717, %v6944
        %v6981 = vadd.f32 %v6718, %v6947
        %v6982 = vcombine.low %v3562, %v3561
        %v6983 = vcombine.low %v3563, %v3571
        %v6985 = vunpack.c.l.s4 1983009808
        %v6986 = vunpack.c.0.s8 %v6985
        %v6987 = vlaneseq
        %v6988 = vshrl.u32 %v6987, 7
        %v6989 = vsub.s32 %v6986, %v6988
        %v6990 = vrot.slane %v6982, %v6989
        %v6992 = vunpack.c.l.s4 1983009808
        %v6993 = vunpack.c.0.s8 %v6992
        %v6994 = vlaneseq
        %v6995 = vshrl.u32 %v6994, 7
        %v6996 = vsub.s32 %v6993, %v6995
        %v6997 = vrot.slane %v6983, %v6996
        %v6998 = vcombine.low %v6990, %v6997
        %v6999 = vcombine.low %v3579, %v3578
        %v7000 = vcombine.low %v3580, %v3588
        %v7002 = vunpack.c.l.s4 1983009808
        %v7003 = vunpack.c.0.s8 %v7002
        %v7004 = vlaneseq
        %v7005 = vshrl.u32 %v7004, 7
        %v7006 = vsub.s32 %v7003, %v7005
        %v7007 = vrot.slane %v6999, %v7006
        %v7009 = vunpack.c.l.s4 1983009808
        %v7010 = vunpack.c.0.s8 %v7009
        %v7011 = vlaneseq
        %v7012 = vshrl.u32 %v7011, 7
        %v7013 = vsub.s32 %v7010, %v7012
        %v7014 = vrot.slane %v7000, %v7013
        %v7015 = vcombine.low %v7007, %v7014
        %v7018 = vpack.c.bf16 %v7015, %v6998
        %s7019 = scalar_lea.vmem %s5, 10
        %v7020 = vld [vmem:[%s7019] sm:$0x3]
        %v7022 = vsel %vm5217, %v7018, 0
        %v7025 = vsel %vm5266, %v7020, 0
        %7027 = vmatprep.subr.bf16.mxu0 0
        %7028 = vmatpush1.bf16.msra.mxu0 %v7025
        %7029 = vmatprep.subr.bf16.mxu0 0
        %7030 = vmatpush1.bf16.msra.mxu0 0
        %7031 = vmatprep.subr.bf16.mxu0 0
        %7032 = vmatpush1.bf16.msra.mxu0 0
        %7033 = vmatprep.subr.bf16.mxu0 0
        %7034 = vmatpush1.bf16.msra.mxu0 0
        %7035 = vmatprep.subr.bf16.mxu0 0
        %7036 = vmatpush1.bf16.msra.mxu0 0
        %7037 = vmatprep.subr.bf16.mxu0 0
        %7038 = vmatpush1.bf16.msra.mxu0 0
        %7039 = vmatprep.subr.bf16.mxu0 0
        %7040 = vmatpush1.bf16.msra.mxu0 0
        %7041 = vmatprep.subr.bf16.mxu0 0
        %7042 = vmatpush1.bf16.msra.mxu0 0
        %7043 = vmatprep.subr.bf16.mxu0 0
        %7044 = vmatpush1.bf16.msra.mxu0 0
        %7045 = vmatprep.subr.bf16.mxu0 0
        %7046 = vmatpush1.bf16.msra.mxu0 0
        %7047 = vmatprep.subr.bf16.mxu0 0
        %7048 = vmatpush1.bf16.msra.mxu0 0
        %7049 = vmatprep.subr.bf16.mxu0 0
        %7050 = vmatpush1.bf16.msra.mxu0 0
        %7051 = vmatprep.subr.bf16.mxu0 0
        %7052 = vmatpush1.bf16.msra.mxu0 0
        %7053 = vmatprep.subr.bf16.mxu0 0
        %7054 = vmatpush1.bf16.msra.mxu0 0
        %7055 = vmatprep.subr.bf16.mxu0 0
        %7056 = vmatpush1.bf16.msra.mxu0 0
        %7057 = vmatprep.subr.bf16.mxu0 0
        %7058 = vmatpush1.bf16.msra.mxu0 0
        %7059 = vmatprep.mubr.bf16.mxu0 0
        %7060 = vmatmul.mubr.bf16.gmra.mrb[0].mxu0 %v6241
        %v7061 = vpop.f32.mrb[0].mxu0
        %v7062 = vadd.f32 0.0, %v7061
        %v7063 = vpop.f32.mrb[0].mxu0
        %v7064 = vpop.f32.mrb[0].mxu0
        %v7065 = vadd.f32 0.0, %v7064
        %v7066 = vpop.f32.mrb[0].mxu0
        %7067 = vmatprep.mubr.bf16.mxu0 0
        %7068 = vmatmul.mubr.bf16.gmra.mrb[0].mxu0 %v6244
        %v7069 = vpop.f32.mrb[0].mxu0
        %v7070 = vadd.f32 0.0, %v7069
        %v7071 = vpop.f32.mrb[0].mxu0
        %v7072 = vpop.f32.mrb[0].mxu0
        %v7073 = vadd.f32 0.0, %v7072
        %v7074 = vpop.f32.mrb[0].mxu0
        %7075 = vmatprep.mubr.bf16.mxu0 0
        %7076 = vmatmul.mubr.bf16.gmra.mrb[0].mxu0 %v6247
        %v7077 = vpop.f32.mrb[0].mxu0
        %v7078 = vadd.f32 0.0, %v7077
        %v7079 = vpop.f32.mrb[0].mxu0
        %v7080 = vpop.f32.mrb[0].mxu0
        %v7081 = vadd.f32 0.0, %v7080
        %v7082 = vpop.f32.mrb[0].mxu0
        %7083 = vmatprep.mubr.bf16.mxu0 0
        %7084 = vmatmul.mubr.bf16.gmra.mrb[0].mxu0 %v6250
        %v7085 = vpop.f32.mrb[0].mxu0
        %v7086 = vadd.f32 0.0, %v7085
        %v7087 = vpop.f32.mrb[0].mxu0
        %v7088 = vpop.f32.mrb[0].mxu0
        %v7089 = vadd.f32 0.0, %v7088
        %v7090 = vpop.f32.mrb[0].mxu0
        %7091 = vmatprep.mubr.bf16.mxu0 0
        %7092 = vmatmul.mubr.bf16.gmra.mrb[0].mxu0 %v6253
        %v7093 = vpop.f32.mrb[0].mxu0
        %v7094 = vadd.f32 0.0, %v7093
        %v7095 = vpop.f32.mrb[0].mxu0
        %v7096 = vpop.f32.mrb[0].mxu0
        %v7097 = vadd.f32 0.0, %v7096
        %v7098 = vpop.f32.mrb[0].mxu0
        %7099 = vmatprep.mubr.bf16.mxu0 0
        %7100 = vmatmul.mubr.bf16.gmra.mrb[0].mxu0 %v6256
        %v7101 = vpop.f32.mrb[0].mxu0
        %v7102 = vadd.f32 0.0, %v7101
        %v7103 = vpop.f32.mrb[0].mxu0
        %v7104 = vpop.f32.mrb[0].mxu0
        %v7105 = vadd.f32 0.0, %v7104
        %v7106 = vpop.f32.mrb[0].mxu0
        %7107 = vmatprep.mubr.bf16.mxu0 0
        %7108 = vmatmul.mubr.bf16.gmra.mrb[0].mxu0 %v6259
        %v7109 = vpop.f32.mrb[0].mxu0
        %v7110 = vadd.f32 0.0, %v7109
        %v7111 = vpop.f32.mrb[0].mxu0
        %v7112 = vpop.f32.mrb[0].mxu0
        %v7113 = vadd.f32 0.0, %v7112
        %v7114 = vpop.f32.mrb[0].mxu0
        %7115 = vmatprep.mubr.bf16.mxu0 0
        %7116 = vmatmul.mubr.bf16.gmra.mrb[0].mxu0 %v6262
        %v7117 = vpop.f32.mrb[0].mxu0
        %v7118 = vadd.f32 0.0, %v7117
        %v7119 = vpop.f32.mrb[0].mxu0
        %v7120 = vpop.f32.mrb[0].mxu0
        %v7121 = vadd.f32 0.0, %v7120
        %v7122 = vpop.f32.mrb[0].mxu0
        %7123 = vmatprep.mubr.bf16.mxu0 0
        %7124 = vmatmul.mubr.bf16.gmra.mrb[0].mxu0 %v6265
        %v7125 = vpop.f32.mrb[0].mxu0
        %v7126 = vadd.f32 0.0, %v7125
        %v7127 = vpop.f32.mrb[0].mxu0
        %v7128 = vpop.f32.mrb[0].mxu0
        %v7129 = vadd.f32 0.0, %v7128
        %v7130 = vpop.f32.mrb[0].mxu0
        %7131 = vmatprep.mubr.bf16.mxu0 0
        %7132 = vmatmul.mubr.bf16.gmra.mrb[0].mxu0 %v6268
        %v7133 = vpop.f32.mrb[0].mxu0
        %v7134 = vadd.f32 0.0, %v7133
        %v7135 = vpop.f32.mrb[0].mxu0
        %v7136 = vpop.f32.mrb[0].mxu0
        %v7137 = vadd.f32 0.0, %v7136
        %v7138 = vpop.f32.mrb[0].mxu0
        %7139 = vmatprep.mubr.bf16.mxu0 0
        %7140 = vmatmul.mubr.bf16.gmra.mrb[0].mxu0 %v6271
        %v7141 = vpop.f32.mrb[0].mxu0
        %v7142 = vadd.f32 0.0, %v7141
        %v7143 = vpop.f32.mrb[0].mxu0
        %v7144 = vpop.f32.mrb[0].mxu0
        %v7145 = vadd.f32 0.0, %v7144
        %v7146 = vpop.f32.mrb[0].mxu0
        %7147 = vmatprep.mubr.bf16.mxu0 0
        %7148 = vmatmul.mubr.bf16.gmra.mrb[0].mxu0 %v6274
        %v7149 = vpop.f32.mrb[0].mxu0
        %v7150 = vadd.f32 0.0, %v7149
        %v7151 = vpop.f32.mrb[0].mxu0
        %v7152 = vpop.f32.mrb[0].mxu0
        %v7153 = vadd.f32 0.0, %v7152
        %v7154 = vpop.f32.mrb[0].mxu0
        %7155 = vmatprep.mubr.bf16.mxu0 0
        %7156 = vmatmul.mubr.bf16.gmra.mrb[0].mxu0 %v6277
        %v7157 = vpop.f32.mrb[0].mxu0
        %v7158 = vadd.f32 0.0, %v7157
        %v7159 = vpop.f32.mrb[0].mxu0
        %v7160 = vpop.f32.mrb[0].mxu0
        %v7161 = vadd.f32 0.0, %v7160
        %v7162 = vpop.f32.mrb[0].mxu0
        %7163 = vmatprep.mubr.bf16.mxu0 0
        %7164 = vmatmul.mubr.bf16.gmra.mrb[0].mxu0 %v6280
        %v7165 = vpop.f32.mrb[0].mxu0
        %v7166 = vadd.f32 0.0, %v7165
        %v7167 = vpop.f32.mrb[0].mxu0
        %v7168 = vpop.f32.mrb[0].mxu0
        %v7169 = vadd.f32 0.0, %v7168
        %v7170 = vpop.f32.mrb[0].mxu0
        %7171 = vmatprep.mubr.bf16.mxu0 0
        %7172 = vmatmul.mubr.bf16.gmra.mrb[0].mxu0 %v6283
        %v7173 = vpop.f32.mrb[0].mxu0
        %v7174 = vadd.f32 0.0, %v7173
        %v7175 = vpop.f32.mrb[0].mxu0
        %v7176 = vpop.f32.mrb[0].mxu0
        %v7177 = vadd.f32 0.0, %v7176
        %v7178 = vpop.f32.mrb[0].mxu0
        %7179 = vmatprep.mubr.bf16.mxu0 0
        %7180 = vmatmul.mubr.bf16.gmra.mrb[0].mxu0 %v7022
        %v7181 = vpop.f32.mrb[0].mxu0
        %v7182 = vadd.f32 0.0, %v7181
        %v7183 = vpop.f32.mrb[0].mxu0
        %v7184 = vpop.f32.mrb[0].mxu0
        %v7185 = vadd.f32 0.0, %v7184
        %v7186 = vpop.f32.mrb[0].mxu0
        %7187 = vdwg.mxu0
        %v7188 = vadd.f32 %v6950, %v7062
        %v7189 = vadd.f32 %v6951, %v7065
        %v7190 = vadd.f32 %v6952, %v7070
        %v7191 = vadd.f32 %v6953, %v7073
        %v7192 = vadd.f32 %v6954, %v7078
        %v7193 = vadd.f32 %v6955, %v7081
        %v7194 = vadd.f32 %v6956, %v7086
        %v7195 = vadd.f32 %v6957, %v7089
        %v7196 = vadd.f32 %v6958, %v7094
        %v7197 = vadd.f32 %v6959, %v7097
        %v7198 = vadd.f32 %v6960, %v7102
        %v7199 = vadd.f32 %v6961, %v7105
        %v7200 = vadd.f32 %v6962, %v7110
        %v7201 = vadd.f32 %v6963, %v7113
        %v7202 = vadd.f32 %v6964, %v7118
        %v7203 = vadd.f32 %v6965, %v7121
        %v7204 = vadd.f32 %v6966, %v7126
        %v7205 = vadd.f32 %v6967, %v7129
        %v7206 = vadd.f32 %v6968, %v7134
        %v7207 = vadd.f32 %v6969, %v7137
        %v7208 = vadd.f32 %v6970, %v7142
        %v7209 = vadd.f32 %v6971, %v7145
        %v7210 = vadd.f32 %v6972, %v7150
        %v7211 = vadd.f32 %v6973, %v7153
        %v7212 = vadd.f32 %v6974, %v7158
        %v7213 = vadd.f32 %v6975, %v7161
        %v7214 = vadd.f32 %v6976, %v7166
        %v7215 = vadd.f32 %v6977, %v7169
        %v7216 = vadd.f32 %v6978, %v7174
        %v7217 = vadd.f32 %v6979, %v7177
        %v7218 = vadd.f32 %v6980, %v7182
        %v7219 = vadd.f32 %v6981, %v7185
        %v7220 = vcombine.low %v3596, %v3595
        %v7221 = vcombine.low %v3597, %v3605
        %v7223 = vunpack.c.l.s4 1983009808
        %v7224 = vunpack.c.0.s8 %v7223
        %v7225 = vlaneseq
        %v7226 = vshrl.u32 %v7225, 7
        %v7227 = vsub.s32 %v7224, %v7226
        %v7228 = vrot.slane %v7220, %v7227
        %v7230 = vunpack.c.l.s4 1983009808
        %v7231 = vunpack.c.0.s8 %v7230
        %v7232 = vlaneseq
        %v7233 = vshrl.u32 %v7232, 7
        %v7234 = vsub.s32 %v7231, %v7233
        %v7235 = vrot.slane %v7221, %v7234
        %v7236 = vcombine.low %v7228, %v7235
        %v7237 = vcombine.low %v3613, %v3612
        %v7238 = vcombine.low %v3614, %v3621
        %v7240 = vunpack.c.l.s4 1983009808
        %v7241 = vunpack.c.0.s8 %v7240
        %v7242 = vlaneseq
        %v7243 = vshrl.u32 %v7242, 7
        %v7244 = vsub.s32 %v7241, %v7243
        %v7245 = vrot.slane %v7237, %v7244
        %v7247 = vunpack.c.l.s4 1983009808
        %v7248 = vunpack.c.0.s8 %v7247
        %v7249 = vlaneseq
        %v7250 = vshrl.u32 %v7249, 7
        %v7251 = vsub.s32 %v7248, %v7250
        %v7252 = vrot.slane %v7238, %v7251
        %v7253 = vcombine.low %v7245, %v7252
        %v7256 = vpack.c.bf16 %v7253, %v7236
        %s7257 = scalar_lea.vmem %s5, 12
        %v7258 = vld [vmem:[%s7257] sm:$0x3]
        %v7260 = vsel %vm5217, %v7256, 0
        %v7263 = vsel %vm5266, %v7258, 0
        %7265 = vmatprep.subr.bf16.mxu0 0
        %7266 = vmatpush1.bf16.msra.mxu0 %v7263
        %7267 = vmatprep.subr.bf16.mxu0 0
        %7268 = vmatpush1.bf16.msra.mxu0 0
        %7269 = vmatprep.subr.bf16.mxu0 0
        %7270 = vmatpush1.bf16.msra.mxu0 0
        %7271 = vmatprep.subr.bf16.mxu0 0
        %7272 = vmatpush1.bf16.msra.mxu0 0
        %7273 = vmatprep.subr.bf16.mxu0 0
        %7274 = vmatpush1.bf16.msra.mxu0 0
        %7275 = vmatprep.subr.bf16.mxu0 0
        %7276 = vmatpush1.bf16.msra.mxu0 0
        %7277 = vmatprep.subr.bf16.mxu0 0
        %7278 = vmatpush1.bf16.msra.mxu0 0
        %7279 = vmatprep.subr.bf16.mxu0 0
        %7280 = vmatpush1.bf16.msra.mxu0 0
        %7281 = vmatprep.subr.bf16.mxu0 0
        %7282 = vmatpush1.bf16.msra.mxu0 0
        %7283 = vmatprep.subr.bf16.mxu0 0
        %7284 = vmatpush1.bf16.msra.mxu0 0
        %7285 = vmatprep.subr.bf16.mxu0 0
        %7286 = vmatpush1.bf16.msra.mxu0 0
        %7287 = vmatprep.subr.bf16.mxu0 0
        %7288 = vmatpush1.bf16.msra.mxu0 0
        %7289 = vmatprep.subr.bf16.mxu0 0
        %7290 = vmatpush1.bf16.msra.mxu0 0
        %7291 = vmatprep.subr.bf16.mxu0 0
        %7292 = vmatpush1.bf16.msra.mxu0 0
        %7293 = vmatprep.subr.bf16.mxu0 0
        %7294 = vmatpush1.bf16.msra.mxu0 0
        %7295 = vmatprep.subr.bf16.mxu0 0
        %7296 = vmatpush1.bf16.msra.mxu0 0
        %7297 = vmatprep.mubr.bf16.mxu0 0
        %7298 = vmatmul.mubr.bf16.gmra.mrb[0].mxu0 %v5438
        %v7299 = vpop.f32.mrb[0].mxu0
        %v7300 = vadd.f32 0.0, %v7299
        %v7301 = vpop.f32.mrb[0].mxu0
        %v7302 = vpop.f32.mrb[0].mxu0
        %v7303 = vadd.f32 0.0, %v7302
        %v7304 = vpop.f32.mrb[0].mxu0
        %7305 = vmatprep.mubr.bf16.mxu0 0
        %7306 = vmatmul.mubr.bf16.gmra.mrb[0].mxu0 %v5441
        %v7307 = vpop.f32.mrb[0].mxu0
        %v7308 = vadd.f32 0.0, %v7307
        %v7309 = vpop.f32.mrb[0].mxu0
        %v7310 = vpop.f32.mrb[0].mxu0
        %v7311 = vadd.f32 0.0, %v7310
        %v7312 = vpop.f32.mrb[0].mxu0
        %7313 = vmatprep.mubr.bf16.mxu0 0
        %7314 = vmatmul.mubr.bf16.gmra.mrb[0].mxu0 %v5444
        %v7315 = vpop.f32.mrb[0].mxu0
        %v7316 = vadd.f32 0.0, %v7315
        %v7317 = vpop.f32.mrb[0].mxu0
        %v7318 = vpop.f32.mrb[0].mxu0
        %v7319 = vadd.f32 0.0, %v7318
        %v7320 = vpop.f32.mrb[0].mxu0
        %7321 = vmatprep.mubr.bf16.mxu0 0
        %7322 = vmatmul.mubr.bf16.gmra.mrb[0].mxu0 %v5447
        %v7323 = vpop.f32.mrb[0].mxu0
        %v7324 = vadd.f32 0.0, %v7323
        %v7325 = vpop.f32.mrb[0].mxu0
        %v7326 = vpop.f32.mrb[0].mxu0
        %v7327 = vadd.f32 0.0, %v7326
        %v7328 = vpop.f32.mrb[0].mxu0
        %7329 = vmatprep.mubr.bf16.mxu0 0
        %7330 = vmatmul.mubr.bf16.gmra.mrb[0].mxu0 %v5450
        %v7331 = vpop.f32.mrb[0].mxu0
        %v7332 = vadd.f32 0.0, %v7331
        %v7333 = vpop.f32.mrb[0].mxu0
        %v7334 = vpop.f32.mrb[0].mxu0
        %v7335 = vadd.f32 0.0, %v7334
        %v7336 = vpop.f32.mrb[0].mxu0
        %7337 = vmatprep.mubr.bf16.mxu0 0
        %7338 = vmatmul.mubr.bf16.gmra.mrb[0].mxu0 %v5453
        %v7339 = vpop.f32.mrb[0].mxu0
        %v7340 = vadd.f32 0.0, %v7339
        %v7341 = vpop.f32.mrb[0].mxu0
        %v7342 = vpop.f32.mrb[0].mxu0
        %v7343 = vadd.f32 0.0, %v7342
        %v7344 = vpop.f32.mrb[0].mxu0
        %7345 = vmatprep.mubr.bf16.mxu0 0
        %7346 = vmatmul.mubr.bf16.gmra.mrb[0].mxu0 %v5456
        %v7347 = vpop.f32.mrb[0].mxu0
        %v7348 = vadd.f32 0.0, %v7347
        %v7349 = vpop.f32.mrb[0].mxu0
        %v7350 = vpop.f32.mrb[0].mxu0
        %v7351 = vadd.f32 0.0, %v7350
        %v7352 = vpop.f32.mrb[0].mxu0
        %7353 = vmatprep.mubr.bf16.mxu0 0
        %7354 = vmatmul.mubr.bf16.gmra.mrb[0].mxu0 %v5459
        %v7355 = vpop.f32.mrb[0].mxu0
        %v7356 = vadd.f32 0.0, %v7355
        %v7357 = vpop.f32.mrb[0].mxu0
        %v7358 = vpop.f32.mrb[0].mxu0
        %v7359 = vadd.f32 0.0, %v7358
        %v7360 = vpop.f32.mrb[0].mxu0
        %7361 = vmatprep.mubr.bf16.mxu0 0
        %7362 = vmatmul.mubr.bf16.gmra.mrb[0].mxu0 %v5462
        %v7363 = vpop.f32.mrb[0].mxu0
        %v7364 = vadd.f32 0.0, %v7363
        %v7365 = vpop.f32.mrb[0].mxu0
        %v7366 = vpop.f32.mrb[0].mxu0
        %v7367 = vadd.f32 0.0, %v7366
        %v7368 = vpop.f32.mrb[0].mxu0
        %7369 = vmatprep.mubr.bf16.mxu0 0
        %7370 = vmatmul.mubr.bf16.gmra.mrb[0].mxu0 %v5465
        %v7371 = vpop.f32.mrb[0].mxu0
        %v7372 = vadd.f32 0.0, %v7371
        %v7373 = vpop.f32.mrb[0].mxu0
        %v7374 = vpop.f32.mrb[0].mxu0
        %v7375 = vadd.f32 0.0, %v7374
        %v7376 = vpop.f32.mrb[0].mxu0
        %7377 = vmatprep.mubr.bf16.mxu0 0
        %7378 = vmatmul.mubr.bf16.gmra.mrb[0].mxu0 %v5468
        %v7379 = vpop.f32.mrb[0].mxu0
        %v7380 = vadd.f32 0.0, %v7379
        %v7381 = vpop.f32.mrb[0].mxu0
        %v7382 = vpop.f32.mrb[0].mxu0
        %v7383 = vadd.f32 0.0, %v7382
        %v7384 = vpop.f32.mrb[0].mxu0
        %7385 = vmatprep.mubr.bf16.mxu0 0
        %7386 = vmatmul.mubr.bf16.gmra.mrb[0].mxu0 %v5471
        %v7387 = vpop.f32.mrb[0].mxu0
        %v7388 = vadd.f32 0.0, %v7387
        %v7389 = vpop.f32.mrb[0].mxu0
        %v7390 = vpop.f32.mrb[0].mxu0
        %v7391 = vadd.f32 0.0, %v7390
        %v7392 = vpop.f32.mrb[0].mxu0
        %7393 = vmatprep.mubr.bf16.mxu0 0
        %7394 = vmatmul.mubr.bf16.gmra.mrb[0].mxu0 %v5474
        %v7395 = vpop.f32.mrb[0].mxu0
        %v7396 = vadd.f32 0.0, %v7395
        %v7397 = vpop.f32.mrb[0].mxu0
        %v7398 = vpop.f32.mrb[0].mxu0
        %v7399 = vadd.f32 0.0, %v7398
        %v7400 = vpop.f32.mrb[0].mxu0
        %7401 = vmatprep.mubr.bf16.mxu0 0
        %7402 = vmatmul.mubr.bf16.gmra.mrb[0].mxu0 %v5477
        %v7403 = vpop.f32.mrb[0].mxu0
        %v7404 = vadd.f32 0.0, %v7403
        %v7405 = vpop.f32.mrb[0].mxu0
        %v7406 = vpop.f32.mrb[0].mxu0
        %v7407 = vadd.f32 0.0, %v7406
        %v7408 = vpop.f32.mrb[0].mxu0
        %7409 = vmatprep.mubr.bf16.mxu0 0
        %7410 = vmatmul.mubr.bf16.gmra.mrb[0].mxu0 %v6521
        %v7411 = vpop.f32.mrb[0].mxu0
        %v7412 = vadd.f32 0.0, %v7411
        %v7413 = vpop.f32.mrb[0].mxu0
        %v7414 = vpop.f32.mrb[0].mxu0
        %v7415 = vadd.f32 0.0, %v7414
        %v7416 = vpop.f32.mrb[0].mxu0
        %7417 = vmatprep.mubr.bf16.mxu0 0
        %7418 = vmatmul.mubr.bf16.gmra.mrb[0].mxu0 %v7260
        %v7419 = vpop.f32.mrb[0].mxu0
        %v7420 = vadd.f32 0.0, %v7419
        %v7421 = vpop.f32.mrb[0].mxu0
        %v7422 = vpop.f32.mrb[0].mxu0
        %v7423 = vadd.f32 0.0, %v7422
        %v7424 = vpop.f32.mrb[0].mxu0
        %7425 = vdwg.mxu0
        %v7426 = vadd.f32 %v7188, %v7300
        %v7427 = vadd.f32 %v7189, %v7303
        %v7428 = vadd.f32 %v7190, %v7308
        %v7429 = vadd.f32 %v7191, %v7311
        %v7430 = vadd.f32 %v7192, %v7316
        %v7431 = vadd.f32 %v7193, %v7319
        %v7432 = vadd.f32 %v7194, %v7324
        %v7433 = vadd.f32 %v7195, %v7327
        %v7434 = vadd.f32 %v7196, %v7332
        %v7435 = vadd.f32 %v7197, %v7335
        %v7436 = vadd.f32 %v7198, %v7340
        %v7437 = vadd.f32 %v7199, %v7343
        %v7438 = vadd.f32 %v7200, %v7348
        %v7439 = vadd.f32 %v7201, %v7351
        %v7440 = vadd.f32 %v7202, %v7356
        %v7441 = vadd.f32 %v7203, %v7359
        %v7442 = vadd.f32 %v7204, %v7364
        %v7443 = vadd.f32 %v7205, %v7367
        %v7444 = vadd.f32 %v7206, %v7372
        %v7445 = vadd.f32 %v7207, %v7375
        %v7446 = vadd.f32 %v7208, %v7380
        %v7447 = vadd.f32 %v7209, %v7383
        %v7448 = vadd.f32 %v7210, %v7388
        %v7449 = vadd.f32 %v7211, %v7391
        %v7450 = vadd.f32 %v7212, %v7396
        %v7451 = vadd.f32 %v7213, %v7399
        %v7452 = vadd.f32 %v7214, %v7404
        %v7453 = vadd.f32 %v7215, %v7407
        %v7454 = vadd.f32 %v7216, %v7412
        %v7455 = vadd.f32 %v7217, %v7415
        %v7456 = vadd.f32 %v7218, %v7420
        %v7457 = vadd.f32 %v7219, %v7423
        %v7458 = vrot.slane %v3596, 7
        %v7459 = vrot.slane %v7458, 2
        %v7460 = vrot.slane %v3595, 7
        %v7461 = vsel %vm4222, %v7459, %v7460
        %v7462 = vrot.slane %v7460, 2
        %v7463 = vrot.slane %v3597, 7
        %v7464 = vsel %vm4222, %v7462, %v7463
        %v7465 = vrot.slane %v7463, 2
        %v7466 = vrot.slane %v3605, 7
        %v7467 = vsel %vm4222, %v7465, %v7466
        %v7468 = vrot.slane %v7466, 2
        %v7469 = vrot.slane %v3613, 7
        %v7470 = vsel %vm4222, %v7468, %v7469
        %v7471 = vrot.slane %v7469, 2
        %v7472 = vrot.slane %v3612, 7
        %v7473 = vsel %vm4222, %v7471, %v7472
        %v7474 = vrot.slane %v7472, 2
        %v7475 = vrot.slane %v3614, 7
        %v7476 = vsel %vm4222, %v7474, %v7475
        %v7477 = vrot.slane %v7475, 2
        %v7478 = vrot.slane %v3621, 7
        %v7479 = vsel %vm4222, %v7477, %v7478
        %v7480 = vrot.slane %v7478, 2
        %v7481 = vrot.slane %v3622, 7
        %v7482 = vsel %vm4222, %v7480, %v7481
        %v7483 = vcombine.low %v7461, %v7464
        %v7484 = vcombine.low %v7467, %v7470
        %v7486 = vunpack.c.l.s4 1983009808
        %v7487 = vunpack.c.0.s8 %v7486
        %v7488 = vlaneseq
        %v7489 = vshrl.u32 %v7488, 7
        %v7490 = vsub.s32 %v7487, %v7489
        %v7491 = vrot.slane %v7483, %v7490
        %v7493 = vunpack.c.l.s4 1983009808
        %v7494 = vunpack.c.0.s8 %v7493
        %v7495 = vlaneseq
        %v7496 = vshrl.u32 %v7495, 7
        %v7497 = vsub.s32 %v7494, %v7496
        %v7498 = vrot.slane %v7484, %v7497
        %v7499 = vcombine.low %v7491, %v7498
        %v7500 = vcombine.low %v7473, %v7476
        %v7501 = vcombine.low %v7479, %v7482
        %v7503 = vunpack.c.l.s4 1983009808
        %v7504 = vunpack.c.0.s8 %v7503
        %v7505 = vlaneseq
        %v7506 = vshrl.u32 %v7505, 7
        %v7507 = vsub.s32 %v7504, %v7506
        %v7508 = vrot.slane %v7500, %v7507
        %v7510 = vunpack.c.l.s4 1983009808
        %v7511 = vunpack.c.0.s8 %v7510
        %v7512 = vlaneseq
        %v7513 = vshrl.u32 %v7512, 7
        %v7514 = vsub.s32 %v7511, %v7513
        %v7515 = vrot.slane %v7501, %v7514
        %v7516 = vcombine.low %v7508, %v7515
        %v7519 = vpack.c.bf16 %v7516, %v7499
        %s7520 = scalar_lea.vmem %s5, 14
        %v7521 = vld [vmem:[%s7520] sm:$0x3]
        %v7523 = vsel %vm5217, %v7519, 0
        %v7526 = vsel %vm5266, %v7521, 0
        %7528 = vmatprep.subr.bf16.mxu0 0
        %7529 = vmatpush1.bf16.msra.mxu0 %v7526
        %7530 = vmatprep.subr.bf16.mxu0 0
        %7531 = vmatpush1.bf16.msra.mxu0 0
        %7532 = vmatprep.subr.bf16.mxu0 0
        %7533 = vmatpush1.bf16.msra.mxu0 0
        %7534 = vmatprep.subr.bf16.mxu0 0
        %7535 = vmatpush1.bf16.msra.mxu0 0
        %7536 = vmatprep.subr.bf16.mxu0 0
        %7537 = vmatpush1.bf16.msra.mxu0 0
        %7538 = vmatprep.subr.bf16.mxu0 0
        %7539 = vmatpush1.bf16.msra.mxu0 0
        %7540 = vmatprep.subr.bf16.mxu0 0
        %7541 = vmatpush1.bf16.msra.mxu0 0
        %7542 = vmatprep.subr.bf16.mxu0 0
        %7543 = vmatpush1.bf16.msra.mxu0 0
        %7544 = vmatprep.subr.bf16.mxu0 0
        %7545 = vmatpush1.bf16.msra.mxu0 0
        %7546 = vmatprep.subr.bf16.mxu0 0
        %7547 = vmatpush1.bf16.msra.mxu0 0
        %7548 = vmatprep.subr.bf16.mxu0 0
        %7549 = vmatpush1.bf16.msra.mxu0 0
        %7550 = vmatprep.subr.bf16.mxu0 0
        %7551 = vmatpush1.bf16.msra.mxu0 0
        %7552 = vmatprep.subr.bf16.mxu0 0
        %7553 = vmatpush1.bf16.msra.mxu0 0
        %7554 = vmatprep.subr.bf16.mxu0 0
        %7555 = vmatpush1.bf16.msra.mxu0 0
        %7556 = vmatprep.subr.bf16.mxu0 0
        %7557 = vmatpush1.bf16.msra.mxu0 0
        %7558 = vmatprep.subr.bf16.mxu0 0
        %7559 = vmatpush1.bf16.msra.mxu0 0
        %7560 = vmatprep.mubr.bf16.mxu0 0
        %7561 = vmatmul.mubr.bf16.gmra.mrb[0].mxu0 %v5225
        %v7562 = vpop.f32.mrb[0].mxu0
        %v7563 = vadd.f32 0.0, %v7562
        %v7564 = vpop.f32.mrb[0].mxu0
        %v7565 = vpop.f32.mrb[0].mxu0
        %v7566 = vadd.f32 0.0, %v7565
        %v7567 = vpop.f32.mrb[0].mxu0
        %7568 = vmatprep.mubr.bf16.mxu0 0
        %7569 = vmatmul.mubr.bf16.gmra.mrb[0].mxu0 %v5228
        %v7570 = vpop.f32.mrb[0].mxu0
        %v7571 = vadd.f32 0.0, %v7570
        %v7572 = vpop.f32.mrb[0].mxu0
        %v7573 = vpop.f32.mrb[0].mxu0
        %v7574 = vadd.f32 0.0, %v7573
        %v7575 = vpop.f32.mrb[0].mxu0
        %7576 = vmatprep.mubr.bf16.mxu0 0
        %7577 = vmatmul.mubr.bf16.gmra.mrb[0].mxu0 %v5231
        %v7578 = vpop.f32.mrb[0].mxu0
        %v7579 = vadd.f32 0.0, %v7578
        %v7580 = vpop.f32.mrb[0].mxu0
        %v7581 = vpop.f32.mrb[0].mxu0
        %v7582 = vadd.f32 0.0, %v7581
        %v7583 = vpop.f32.mrb[0].mxu0
        %7584 = vmatprep.mubr.bf16.mxu0 0
        %7585 = vmatmul.mubr.bf16.gmra.mrb[0].mxu0 %v5234
        %v7586 = vpop.f32.mrb[0].mxu0
        %v7587 = vadd.f32 0.0, %v7586
        %v7588 = vpop.f32.mrb[0].mxu0
        %v7589 = vpop.f32.mrb[0].mxu0
        %v7590 = vadd.f32 0.0, %v7589
        %v7591 = vpop.f32.mrb[0].mxu0
        %7592 = vmatprep.mubr.bf16.mxu0 0
        %7593 = vmatmul.mubr.bf16.gmra.mrb[0].mxu0 %v5237
        %v7594 = vpop.f32.mrb[0].mxu0
        %v7595 = vadd.f32 0.0, %v7594
        %v7596 = vpop.f32.mrb[0].mxu0
        %v7597 = vpop.f32.mrb[0].mxu0
        %v7598 = vadd.f32 0.0, %v7597
        %v7599 = vpop.f32.mrb[0].mxu0
        %7600 = vmatprep.mubr.bf16.mxu0 0
        %7601 = vmatmul.mubr.bf16.gmra.mrb[0].mxu0 %v5240
        %v7602 = vpop.f32.mrb[0].mxu0
        %v7603 = vadd.f32 0.0, %v7602
        %v7604 = vpop.f32.mrb[0].mxu0
        %v7605 = vpop.f32.mrb[0].mxu0
        %v7606 = vadd.f32 0.0, %v7605
        %v7607 = vpop.f32.mrb[0].mxu0
        %7608 = vmatprep.mubr.bf16.mxu0 0
        %7609 = vmatmul.mubr.bf16.gmra.mrb[0].mxu0 %v5243
        %v7610 = vpop.f32.mrb[0].mxu0
        %v7611 = vadd.f32 0.0, %v7610
        %v7612 = vpop.f32.mrb[0].mxu0
        %v7613 = vpop.f32.mrb[0].mxu0
        %v7614 = vadd.f32 0.0, %v7613
        %v7615 = vpop.f32.mrb[0].mxu0
        %7616 = vmatprep.mubr.bf16.mxu0 0
        %7617 = vmatmul.mubr.bf16.gmra.mrb[0].mxu0 %v5246
        %v7618 = vpop.f32.mrb[0].mxu0
        %v7619 = vadd.f32 0.0, %v7618
        %v7620 = vpop.f32.mrb[0].mxu0
        %v7621 = vpop.f32.mrb[0].mxu0
        %v7622 = vadd.f32 0.0, %v7621
        %v7623 = vpop.f32.mrb[0].mxu0
        %7624 = vmatprep.mubr.bf16.mxu0 0
        %7625 = vmatmul.mubr.bf16.gmra.mrb[0].mxu0 %v5249
        %v7626 = vpop.f32.mrb[0].mxu0
        %v7627 = vadd.f32 0.0, %v7626
        %v7628 = vpop.f32.mrb[0].mxu0
        %v7629 = vpop.f32.mrb[0].mxu0
        %v7630 = vadd.f32 0.0, %v7629
        %v7631 = vpop.f32.mrb[0].mxu0
        %7632 = vmatprep.mubr.bf16.mxu0 0
        %7633 = vmatmul.mubr.bf16.gmra.mrb[0].mxu0 %v5252
        %v7634 = vpop.f32.mrb[0].mxu0
        %v7635 = vadd.f32 0.0, %v7634
        %v7636 = vpop.f32.mrb[0].mxu0
        %v7637 = vpop.f32.mrb[0].mxu0
        %v7638 = vadd.f32 0.0, %v7637
        %v7639 = vpop.f32.mrb[0].mxu0
        %7640 = vmatprep.mubr.bf16.mxu0 0
        %7641 = vmatmul.mubr.bf16.gmra.mrb[0].mxu0 %v5255
        %v7642 = vpop.f32.mrb[0].mxu0
        %v7643 = vadd.f32 0.0, %v7642
        %v7644 = vpop.f32.mrb[0].mxu0
        %v7645 = vpop.f32.mrb[0].mxu0
        %v7646 = vadd.f32 0.0, %v7645
        %v7647 = vpop.f32.mrb[0].mxu0
        %7648 = vmatprep.mubr.bf16.mxu0 0
        %7649 = vmatmul.mubr.bf16.gmra.mrb[0].mxu0 %v5258
        %v7650 = vpop.f32.mrb[0].mxu0
        %v7651 = vadd.f32 0.0, %v7650
        %v7652 = vpop.f32.mrb[0].mxu0
        %v7653 = vpop.f32.mrb[0].mxu0
        %v7654 = vadd.f32 0.0, %v7653
        %v7655 = vpop.f32.mrb[0].mxu0
        %7656 = vmatprep.mubr.bf16.mxu0 0
        %7657 = vmatmul.mubr.bf16.gmra.mrb[0].mxu0 %v5261
        %v7658 = vpop.f32.mrb[0].mxu0
        %v7659 = vadd.f32 0.0, %v7658
        %v7660 = vpop.f32.mrb[0].mxu0
        %v7661 = vpop.f32.mrb[0].mxu0
        %v7662 = vadd.f32 0.0, %v7661
        %v7663 = vpop.f32.mrb[0].mxu0
        %7664 = vmatprep.mubr.bf16.mxu0 0
        %7665 = vmatmul.mubr.bf16.gmra.mrb[0].mxu0 %v5264
        %v7666 = vpop.f32.mrb[0].mxu0
        %v7667 = vadd.f32 0.0, %v7666
        %v7668 = vpop.f32.mrb[0].mxu0
        %v7669 = vpop.f32.mrb[0].mxu0
        %v7670 = vadd.f32 0.0, %v7669
        %v7671 = vpop.f32.mrb[0].mxu0
        %7672 = vmatprep.mubr.bf16.mxu0 0
        %7673 = vmatmul.mubr.bf16.gmra.mrb[0].mxu0 %v6784
        %v7674 = vpop.f32.mrb[0].mxu0
        %v7675 = vadd.f32 0.0, %v7674
        %v7676 = vpop.f32.mrb[0].mxu0
        %v7677 = vpop.f32.mrb[0].mxu0
        %v7678 = vadd.f32 0.0, %v7677
        %v7679 = vpop.f32.mrb[0].mxu0
        %7680 = vmatprep.mubr.bf16.mxu0 0
        %7681 = vmatmul.mubr.bf16.gmra.mrb[0].mxu0 %v7523
        %v7682 = vpop.f32.mrb[0].mxu0
        %v7683 = vadd.f32 0.0, %v7682
        %v7684 = vpop.f32.mrb[0].mxu0
        %v7685 = vpop.f32.mrb[0].mxu0
        %v7686 = vadd.f32 0.0, %v7685
        %v7687 = vpop.f32.mrb[0].mxu0
        %7688 = vdwg.mxu0
        %v7689 = vadd.f32 %v7426, %v7563
        %v7690 = vadd.f32 %v7427, %v7566
        %v7691 = vadd.f32 %v7428, %v7571
        %v7692 = vadd.f32 %v7429, %v7574
        %v7693 = vadd.f32 %v7430, %v7579
        %v7694 = vadd.f32 %v7431, %v7582
        %v7695 = vadd.f32 %v7432, %v7587
        %v7696 = vadd.f32 %v7433, %v7590
        %v7697 = vadd.f32 %v7434, %v7595
        %v7698 = vadd.f32 %v7435, %v7598
        %v7699 = vadd.f32 %v7436, %v7603
        %v7700 = vadd.f32 %v7437, %v7606
        %v7701 = vadd.f32 %v7438, %v7611
        %v7702 = vadd.f32 %v7439, %v7614
        %v7703 = vadd.f32 %v7440, %v7619
        %v7704 = vadd.f32 %v7441, %v7622
        %v7705 = vadd.f32 %v7442, %v7627
        %v7706 = vadd.f32 %v7443, %v7630
        %v7707 = vadd.f32 %v7444, %v7635
        %v7708 = vadd.f32 %v7445, %v7638
        %v7709 = vadd.f32 %v7446, %v7643
        %v7710 = vadd.f32 %v7447, %v7646
        %v7711 = vadd.f32 %v7448, %v7651
        %v7712 = vadd.f32 %v7449, %v7654
        %v7713 = vadd.f32 %v7450, %v7659
        %v7714 = vadd.f32 %v7451, %v7662
        %v7715 = vadd.f32 %v7452, %v7667
        %v7716 = vadd.f32 %v7453, %v7670
        %v7717 = vadd.f32 %v7454, %v7675
        %v7718 = vadd.f32 %v7455, %v7678
        %v7719 = vadd.f32 %v7456, %v7683
        %v7720 = vadd.f32 %v7457, %v7686
        %v7721 = vcombine.low %v3595, %v3597
        %v7722 = vcombine.low %v3605, %v3613
        %v7724 = vunpack.c.l.s4 1983009808
        %v7725 = vunpack.c.0.s8 %v7724
        %v7726 = vlaneseq
        %v7727 = vshrl.u32 %v7726, 7
        %v7728 = vsub.s32 %v7725, %v7727
        %v7729 = vrot.slane %v7721, %v7728
        %v7731 = vunpack.c.l.s4 1983009808
        %v7732 = vunpack.c.0.s8 %v7731
        %v7733 = vlaneseq
        %v7734 = vshrl.u32 %v7733, 7
        %v7735 = vsub.s32 %v7732, %v7734
        %v7736 = vrot.slane %v7722, %v7735
        %v7737 = vcombine.low %v7729, %v7736
        %v7738 = vcombine.low %v3612, %v3614
        %v7739 = vcombine.low %v3621, %v3622
        %v7741 = vunpack.c.l.s4 1983009808
        %v7742 = vunpack.c.0.s8 %v7741
        %v7743 = vlaneseq
        %v7744 = vshrl.u32 %v7743, 7
        %v7745 = vsub.s32 %v7742, %v7744
        %v7746 = vrot.slane %v7738, %v7745
        %v7748 = vunpack.c.l.s4 1983009808
        %v7749 = vunpack.c.0.s8 %v7748
        %v7750 = vlaneseq
        %v7751 = vshrl.u32 %v7750, 7
        %v7752 = vsub.s32 %v7749, %v7751
        %v7753 = vrot.slane %v7739, %v7752
        %v7754 = vcombine.low %v7746, %v7753
        %v7757 = vpack.c.bf16 %v7754, %v7737
        %s7758 = scalar_lea.vmem %s5, 16
        %v7759 = vld [vmem:[%s7758] sm:$0x3]
        %v7761 = vsel %vm5217, %v7757, 0
        %v7764 = vsel %vm5266, %v7759, 0
        %7766 = vmatprep.subr.bf16.mxu0 0
        %7767 = vmatpush1.bf16.msra.mxu0 %v7764
        %7768 = vmatprep.subr.bf16.mxu0 0
        %7769 = vmatpush1.bf16.msra.mxu0 0
        %7770 = vmatprep.subr.bf16.mxu0 0
        %7771 = vmatpush1.bf16.msra.mxu0 0
        %7772 = vmatprep.subr.bf16.mxu0 0
        %7773 = vmatpush1.bf16.msra.mxu0 0
        %7774 = vmatprep.subr.bf16.mxu0 0
        %7775 = vmatpush1.bf16.msra.mxu0 0
        %7776 = vmatprep.subr.bf16.mxu0 0
        %7777 = vmatpush1.bf16.msra.mxu0 0
        %7778 = vmatprep.subr.bf16.mxu0 0
        %7779 = vmatpush1.bf16.msra.mxu0 0
        %7780 = vmatprep.subr.bf16.mxu0 0
        %7781 = vmatpush1.bf16.msra.mxu0 0
        %7782 = vmatprep.subr.bf16.mxu0 0
        %7783 = vmatpush1.bf16.msra.mxu0 0
        %7784 = vmatprep.subr.bf16.mxu0 0
        %7785 = vmatpush1.bf16.msra.mxu0 0
        %7786 = vmatprep.subr.bf16.mxu0 0
        %7787 = vmatpush1.bf16.msra.mxu0 0
        %7788 = vmatprep.subr.bf16.mxu0 0
        %7789 = vmatpush1.bf16.msra.mxu0 0
        %7790 = vmatprep.subr.bf16.mxu0 0
        %7791 = vmatpush1.bf16.msra.mxu0 0
        %7792 = vmatprep.subr.bf16.mxu0 0
        %7793 = vmatpush1.bf16.msra.mxu0 0
        %7794 = vmatprep.subr.bf16.mxu0 0
        %7795 = vmatpush1.bf16.msra.mxu0 0
        %7796 = vmatprep.subr.bf16.mxu0 0
        %7797 = vmatpush1.bf16.msra.mxu0 0
        %7798 = vmatprep.mubr.bf16.mxu0 0
        %7799 = vmatmul.mubr.bf16.gmra.mrb[0].mxu0 %v6244
        %v7800 = vpop.f32.mrb[0].mxu0
        %v7801 = vadd.f32 0.0, %v7800
        %v7802 = vpop.f32.mrb[0].mxu0
        %v7803 = vpop.f32.mrb[0].mxu0
        %v7804 = vadd.f32 0.0, %v7803
        %v7805 = vpop.f32.mrb[0].mxu0
        %7806 = vmatprep.mubr.bf16.mxu0 0
        %7807 = vmatmul.mubr.bf16.gmra.mrb[0].mxu0 %v6247
        %v7808 = vpop.f32.mrb[0].mxu0
        %v7809 = vadd.f32 0.0, %v7808
        %v7810 = vpop.f32.mrb[0].mxu0
        %v7811 = vpop.f32.mrb[0].mxu0
        %v7812 = vadd.f32 0.0, %v7811
        %v7813 = vpop.f32.mrb[0].mxu0
        %7814 = vmatprep.mubr.bf16.mxu0 0
        %7815 = vmatmul.mubr.bf16.gmra.mrb[0].mxu0 %v6250
        %v7816 = vpop.f32.mrb[0].mxu0
        %v7817 = vadd.f32 0.0, %v7816
        %v7818 = vpop.f32.mrb[0].mxu0
        %v7819 = vpop.f32.mrb[0].mxu0
        %v7820 = vadd.f32 0.0, %v7819
        %v7821 = vpop.f32.mrb[0].mxu0
        %7822 = vmatprep.mubr.bf16.mxu0 0
        %7823 = vmatmul.mubr.bf16.gmra.mrb[0].mxu0 %v6253
        %v7824 = vpop.f32.mrb[0].mxu0
        %v7825 = vadd.f32 0.0, %v7824
        %v7826 = vpop.f32.mrb[0].mxu0
        %v7827 = vpop.f32.mrb[0].mxu0
        %v7828 = vadd.f32 0.0, %v7827
        %v7829 = vpop.f32.mrb[0].mxu0
        %7830 = vmatprep.mubr.bf16.mxu0 0
        %7831 = vmatmul.mubr.bf16.gmra.mrb[0].mxu0 %v6256
        %v7832 = vpop.f32.mrb[0].mxu0
        %v7833 = vadd.f32 0.0, %v7832
        %v7834 = vpop.f32.mrb[0].mxu0
        %v7835 = vpop.f32.mrb[0].mxu0
        %v7836 = vadd.f32 0.0, %v7835
        %v7837 = vpop.f32.mrb[0].mxu0
        %7838 = vmatprep.mubr.bf16.mxu0 0
        %7839 = vmatmul.mubr.bf16.gmra.mrb[0].mxu0 %v6259
        %v7840 = vpop.f32.mrb[0].mxu0
        %v7841 = vadd.f32 0.0, %v7840
        %v7842 = vpop.f32.mrb[0].mxu0
        %v7843 = vpop.f32.mrb[0].mxu0
        %v7844 = vadd.f32 0.0, %v7843
        %v7845 = vpop.f32.mrb[0].mxu0
        %7846 = vmatprep.mubr.bf16.mxu0 0
        %7847 = vmatmul.mubr.bf16.gmra.mrb[0].mxu0 %v6262
        %v7848 = vpop.f32.mrb[0].mxu0
        %v7849 = vadd.f32 0.0, %v7848
        %v7850 = vpop.f32.mrb[0].mxu0
        %v7851 = vpop.f32.mrb[0].mxu0
        %v7852 = vadd.f32 0.0, %v7851
        %v7853 = vpop.f32.mrb[0].mxu0
        %7854 = vmatprep.mubr.bf16.mxu0 0
        %7855 = vmatmul.mubr.bf16.gmra.mrb[0].mxu0 %v6265
        %v7856 = vpop.f32.mrb[0].mxu0
        %v7857 = vadd.f32 0.0, %v7856
        %v7858 = vpop.f32.mrb[0].mxu0
        %v7859 = vpop.f32.mrb[0].mxu0
        %v7860 = vadd.f32 0.0, %v7859
        %v7861 = vpop.f32.mrb[0].mxu0
        %7862 = vmatprep.mubr.bf16.mxu0 0
        %7863 = vmatmul.mubr.bf16.gmra.mrb[0].mxu0 %v6268
        %v7864 = vpop.f32.mrb[0].mxu0
        %v7865 = vadd.f32 0.0, %v7864
        %v7866 = vpop.f32.mrb[0].mxu0
        %v7867 = vpop.f32.mrb[0].mxu0
        %v7868 = vadd.f32 0.0, %v7867
        %v7869 = vpop.f32.mrb[0].mxu0
        %7870 = vmatprep.mubr.bf16.mxu0 0
        %7871 = vmatmul.mubr.bf16.gmra.mrb[0].mxu0 %v6271
        %v7872 = vpop.f32.mrb[0].mxu0
        %v7873 = vadd.f32 0.0, %v7872
        %v7874 = vpop.f32.mrb[0].mxu0
        %v7875 = vpop.f32.mrb[0].mxu0
        %v7876 = vadd.f32 0.0, %v7875
        %v7877 = vpop.f32.mrb[0].mxu0
        %7878 = vmatprep.mubr.bf16.mxu0 0
        %7879 = vmatmul.mubr.bf16.gmra.mrb[0].mxu0 %v6274
        %v7880 = vpop.f32.mrb[0].mxu0
        %v7881 = vadd.f32 0.0, %v7880
        %v7882 = vpop.f32.mrb[0].mxu0
        %v7883 = vpop.f32.mrb[0].mxu0
        %v7884 = vadd.f32 0.0, %v7883
        %v7885 = vpop.f32.mrb[0].mxu0
        %7886 = vmatprep.mubr.bf16.mxu0 0
        %7887 = vmatmul.mubr.bf16.gmra.mrb[0].mxu0 %v6277
        %v7888 = vpop.f32.mrb[0].mxu0
        %v7889 = vadd.f32 0.0, %v7888
        %v7890 = vpop.f32.mrb[0].mxu0
        %v7891 = vpop.f32.mrb[0].mxu0
        %v7892 = vadd.f32 0.0, %v7891
        %v7893 = vpop.f32.mrb[0].mxu0
        %7894 = vmatprep.mubr.bf16.mxu0 0
        %7895 = vmatmul.mubr.bf16.gmra.mrb[0].mxu0 %v6280
        %v7896 = vpop.f32.mrb[0].mxu0
        %v7897 = vadd.f32 0.0, %v7896
        %v7898 = vpop.f32.mrb[0].mxu0
        %v7899 = vpop.f32.mrb[0].mxu0
        %v7900 = vadd.f32 0.0, %v7899
        %v7901 = vpop.f32.mrb[0].mxu0
        %7902 = vmatprep.mubr.bf16.mxu0 0
        %7903 = vmatmul.mubr.bf16.gmra.mrb[0].mxu0 %v6283
        %v7904 = vpop.f32.mrb[0].mxu0
        %v7905 = vadd.f32 0.0, %v7904
        %v7906 = vpop.f32.mrb[0].mxu0
        %v7907 = vpop.f32.mrb[0].mxu0
        %v7908 = vadd.f32 0.0, %v7907
        %v7909 = vpop.f32.mrb[0].mxu0
        %7910 = vmatprep.mubr.bf16.mxu0 0
        %7911 = vmatmul.mubr.bf16.gmra.mrb[0].mxu0 %v7022
        %v7912 = vpop.f32.mrb[0].mxu0
        %v7913 = vadd.f32 0.0, %v7912
        %v7914 = vpop.f32.mrb[0].mxu0
        %v7915 = vpop.f32.mrb[0].mxu0
        %v7916 = vadd.f32 0.0, %v7915
        %v7917 = vpop.f32.mrb[0].mxu0
        %7918 = vmatprep.mubr.bf16.mxu0 0
        %7919 = vmatmul.mubr.bf16.gmra.mrb[0].mxu0 %v7761
        %v7920 = vpop.f32.mrb[0].mxu0
        %v7921 = vadd.f32 0.0, %v7920
        %v7922 = vpop.f32.mrb[0].mxu0
        %v7923 = vpop.f32.mrb[0].mxu0
        %v7924 = vadd.f32 0.0, %v7923
        %v7925 = vpop.f32.mrb[0].mxu0
        %7926 = vdwg.mxu0
        %v7927 = vadd.f32 %v7689, %v7801
        %v7928 = vadd.f32 %v7690, %v7804
        %v7929 = vadd.f32 %v7691, %v7809
        %v7930 = vadd.f32 %v7692, %v7812
        %v7931 = vadd.f32 %v7693, %v7817
        %v7932 = vadd.f32 %v7694, %v7820
        %v7933 = vadd.f32 %v7695, %v7825
        %v7934 = vadd.f32 %v7696, %v7828
        %v7935 = vadd.f32 %v7697, %v7833
        %v7936 = vadd.f32 %v7698, %v7836
        %v7937 = vadd.f32 %v7699, %v7841
        %v7938 = vadd.f32 %v7700, %v7844
        %v7939 = vadd.f32 %v7701, %v7849
        %v7940 = vadd.f32 %v7702, %v7852
        %v7941 = vadd.f32 %v7703, %v7857
        %v7942 = vadd.f32 %v7704, %v7860
        %v7943 = vadd.f32 %v7705, %v7865
        %v7944 = vadd.f32 %v7706, %v7868
        %v7945 = vadd.f32 %v7707, %v7873
        %v7946 = vadd.f32 %v7708, %v7876
        %v7947 = vadd.f32 %v7709, %v7881
        %v7948 = vadd.f32 %v7710, %v7884
        %v7949 = vadd.f32 %v7711, %v7889
        %v7950 = vadd.f32 %v7712, %v7892
        %v7951 = vadd.f32 %v7713, %v7897
        %v7952 = vadd.f32 %v7714, %v7900
        %v7953 = vadd.f32 %v7715, %v7905
        %v7954 = vadd.f32 %v7716, %v7908
        %v7955 = vadd.f32 %v7717, %v7913
        %v7956 = vadd.f32 %v7718, %v7916
        %v7957 = vadd.f32 %v7719, %v7921
        %v7958 = vadd.f32 %v7720, %v7924
        %v7959 = vld [vmem:[%s6] sm:$0x1]
        %v7961 = vlaneseq
        %v7962 = vshrl.u32 %v7961, 7
        %v7963 = vsub.s32 0, %v7962
        %v7964 = vrot.slane %v7959, %v7963
        %v7966 = vmul.f32 %v7927, %v7964
        %v7967 = vmul.f32 %v7928, %v7964
        %v7968 = vmul.f32 %v7929, %v7964
        %v7969 = vmul.f32 %v7930, %v7964
        %v7970 = vmul.f32 %v7931, %v7964
        %v7971 = vmul.f32 %v7932, %v7964
        %v7972 = vmul.f32 %v7933, %v7964
        %v7973 = vmul.f32 %v7934, %v7964
        %v7974 = vmul.f32 %v7935, %v7964
        %v7975 = vmul.f32 %v7936, %v7964
        %v7976 = vmul.f32 %v7937, %v7964
        %v7977 = vmul.f32 %v7938, %v7964
        %v7978 = vmul.f32 %v7939, %v7964
        %v7979 = vmul.f32 %v7940, %v7964
        %v7980 = vmul.f32 %v7941, %v7964
        %v7981 = vmul.f32 %v7942, %v7964
        %v7982 = vmul.f32 %v7943, %v7964
        %v7983 = vmul.f32 %v7944, %v7964
        %v7984 = vmul.f32 %v7945, %v7964
        %v7985 = vmul.f32 %v7946, %v7964
        %v7986 = vmul.f32 %v7947, %v7964
        %v7987 = vmul.f32 %v7948, %v7964
        %v7988 = vmul.f32 %v7949, %v7964
        %v7989 = vmul.f32 %v7950, %v7964
        %v7990 = vmul.f32 %v7951, %v7964
        %v7991 = vmul.f32 %v7952, %v7964
        %v7992 = vmul.f32 %v7953, %v7964
        %v7993 = vmul.f32 %v7954, %v7964
        %v7994 = vmul.f32 %v7955, %v7964
        %v7995 = vmul.f32 %v7956, %v7964
        %v7996 = vmul.f32 %v7957, %v7964
        %v7997 = vmul.f32 %v7958, %v7964
        %v7998 = vld [vmem:[%s7] sm:$0x1]
        %v8000 = vlaneseq
        %v8001 = vshrl.u32 %v8000, 7
        %v8002 = vsub.s32 0, %v8001
        %v8003 = vrot.slane %v7998, %v8002
        %v8005 = vadd.f32 %v7966, %v8003
        %v8006 = vadd.f32 %v7967, %v8003
        %v8007 = vadd.f32 %v7968, %v8003
        %v8008 = vadd.f32 %v7969, %v8003
        %v8009 = vadd.f32 %v7970, %v8003
        %v8010 = vadd.f32 %v7971, %v8003
        %v8011 = vadd.f32 %v7972, %v8003
        %v8012 = vadd.f32 %v7973, %v8003
        %v8013 = vadd.f32 %v7974, %v8003
        %v8014 = vadd.f32 %v7975, %v8003
        %v8015 = vadd.f32 %v7976, %v8003
        %v8016 = vadd.f32 %v7977, %v8003
        %v8017 = vadd.f32 %v7978, %v8003
        %v8018 = vadd.f32 %v7979, %v8003
        %v8019 = vadd.f32 %v7980, %v8003
        %v8020 = vadd.f32 %v7981, %v8003
        %v8021 = vadd.f32 %v7982, %v8003
        %v8022 = vadd.f32 %v7983, %v8003
        %v8023 = vadd.f32 %v7984, %v8003
        %v8024 = vadd.f32 %v7985, %v8003
        %v8025 = vadd.f32 %v7986, %v8003
        %v8026 = vadd.f32 %v7987, %v8003
        %v8027 = vadd.f32 %v7988, %v8003
        %v8028 = vadd.f32 %v7989, %v8003
        %v8029 = vadd.f32 %v7990, %v8003
        %v8030 = vadd.f32 %v7991, %v8003
        %v8031 = vadd.f32 %v7992, %v8003
        %v8032 = vadd.f32 %v7993, %v8003
        %v8033 = vadd.f32 %v7994, %v8003
        %v8034 = vadd.f32 %v7995, %v8003
        %v8035 = vadd.f32 %v7996, %v8003
        %v8036 = vadd.f32 %v7997, %v8003
        %v8037 = vmax.f32 %v8005, 0.0
        %v8038 = vmax.f32 %v8006, 0.0
        %v8039 = vmax.f32 %v8007, 0.0
        %v8040 = vmax.f32 %v8008, 0.0
        %v8041 = vmax.f32 %v8009, 0.0
        %v8042 = vmax.f32 %v8010, 0.0
        %v8043 = vmax.f32 %v8011, 0.0
        %v8044 = vmax.f32 %v8012, 0.0
        %v8045 = vmax.f32 %v8013, 0.0
        %v8046 = vmax.f32 %v8014, 0.0
        %v8047 = vmax.f32 %v8015, 0.0
        %v8048 = vmax.f32 %v8016, 0.0
        %v8049 = vmax.f32 %v8017, 0.0
        %v8050 = vmax.f32 %v8018, 0.0
        %v8051 = vmax.f32 %v8019, 0.0
        %v8052 = vmax.f32 %v8020, 0.0
        %v8053 = vmax.f32 %v8021, 0.0
        %v8054 = vmax.f32 %v8022, 0.0
        %v8055 = vmax.f32 %v8023, 0.0
        %v8056 = vmax.f32 %v8024, 0.0
        %v8057 = vmax.f32 %v8025, 0.0
        %v8058 = vmax.f32 %v8026, 0.0
        %v8059 = vmax.f32 %v8027, 0.0
        %v8060 = vmax.f32 %v8028, 0.0
        %v8061 = vmax.f32 %v8029, 0.0
        %v8062 = vmax.f32 %v8030, 0.0
        %v8063 = vmax.f32 %v8031, 0.0
        %v8064 = vmax.f32 %v8032, 0.0
        %v8065 = vmax.f32 %v8033, 0.0
        %v8066 = vmax.f32 %v8034, 0.0
        %v8067 = vmax.f32 %v8035, 0.0
        %v8068 = vmax.f32 %v8036, 0.0
        %v8069 = vsel %vm5217, %v8037, 0.0
        %v8070 = vsel %vm5217, %v8038, 0.0
        %v8071 = vadd.f32 %v8069, %v8070
        %v8072 = vsel %vm5217, %v8039, 0.0
        %v8073 = vadd.f32 %v8071, %v8072
        %v8074 = vsel %vm5217, %v8040, 0.0
        %v8075 = vadd.f32 %v8073, %v8074
        %v8076 = vsel %vm5217, %v8041, 0.0
        %v8077 = vadd.f32 %v8075, %v8076
        %v8078 = vsel %vm5217, %v8042, 0.0
        %v8079 = vadd.f32 %v8077, %v8078
        %v8080 = vsel %vm5217, %v8043, 0.0
        %v8081 = vadd.f32 %v8079, %v8080
        %v8082 = vsel %vm5217, %v8044, 0.0
        %v8083 = vadd.f32 %v8081, %v8082
        %v8084 = vsel %vm5217, %v8045, 0.0
        %v8085 = vadd.f32 %v8083, %v8084
        %v8086 = vsel %vm5217, %v8046, 0.0
        %v8087 = vadd.f32 %v8085, %v8086
        %v8088 = vsel %vm5217, %v8047, 0.0
        %v8089 = vadd.f32 %v8087, %v8088
        %v8090 = vsel %vm5217, %v8048, 0.0
        %v8091 = vadd.f32 %v8089, %v8090
        %v8092 = vsel %vm5217, %v8049, 0.0
        %v8093 = vadd.f32 %v8091, %v8092
        %v8094 = vsel %vm5217, %v8050, 0.0
        %v8095 = vadd.f32 %v8093, %v8094
        %v8096 = vsel %vm5217, %v8051, 0.0
        %v8097 = vadd.f32 %v8095, %v8096
        %v8098 = vsel %vm5217, %v8052, 0.0
        %v8099 = vadd.f32 %v8097, %v8098
        %v8100 = vsel %vm5217, %v8053, 0.0
        %v8101 = vadd.f32 %v8099, %v8100
        %v8102 = vsel %vm5217, %v8054, 0.0
        %v8103 = vadd.f32 %v8101, %v8102
        %v8104 = vsel %vm5217, %v8055, 0.0
        %v8105 = vadd.f32 %v8103, %v8104
        %v8106 = vsel %vm5217, %v8056, 0.0
        %v8107 = vadd.f32 %v8105, %v8106
        %v8108 = vsel %vm5217, %v8057, 0.0
        %v8109 = vadd.f32 %v8107, %v8108
        %v8110 = vsel %vm5217, %v8058, 0.0
        %v8111 = vadd.f32 %v8109, %v8110
        %v8112 = vsel %vm5217, %v8059, 0.0
        %v8113 = vadd.f32 %v8111, %v8112
        %v8114 = vsel %vm5217, %v8060, 0.0
        %v8115 = vadd.f32 %v8113, %v8114
        %v8116 = vsel %vm5217, %v8061, 0.0
        %v8117 = vadd.f32 %v8115, %v8116
        %v8118 = vsel %vm5217, %v8062, 0.0
        %v8119 = vadd.f32 %v8117, %v8118
        %v8120 = vsel %vm5217, %v8063, 0.0
        %v8121 = vadd.f32 %v8119, %v8120
        %v8122 = vsel %vm5217, %v8064, 0.0
        %v8123 = vadd.f32 %v8121, %v8122
        %v8124 = vsel %vm5217, %v8065, 0.0
        %v8125 = vadd.f32 %v8123, %v8124
        %v8126 = vsel %vm5217, %v8066, 0.0
        %v8127 = vadd.f32 %v8125, %v8126
        %v8128 = vsel %vm5217, %v8067, 0.0
        %v8129 = vadd.f32 %v8127, %v8128
        %v8130 = vsel %vm5217, %v8068, 0.0
        %v8131 = vadd.f32 %v8129, %v8130
        %v8132 = vrot.slane %v8131, 4
        %v8133 = vadd.f32 %v8131, %v8132
        %v8134 = vrot.slane %v8133, 2
        %v8135 = vadd.f32 %v8133, %v8134
        %v8136 = vrot.slane %v8135, 1
        %v8137 = vadd.f32 %v8135, %v8136
        %v8138 = vrcp.pop 256.0
        %v8139 = vmul.f32 %v8137, %v8138
        %v8140 = vld [vmem:[%s8] sm:$0xf]
        %v8141 = vld [vmem:[%s9] sm:$0x1]
        %v8143 = vsel %vm5217, %v8139, 0
        %vm8145 = vcmask 1043456
        %v8147 = vsel %vm8145, %v8140, 0
        %8149 = vmatprep.subr.mxu0 0.0
        %8150 = vmatpush1.msra.mxu0 %v8147
        %8151 = vmatprep.subr.mxu0 0.0
        %8152 = vmatpush1.msra.mxu0 0.0
        %8153 = vmatprep.subr.mxu0 0.0
        %8154 = vmatpush1.msra.mxu0 0.0
        %8155 = vmatprep.subr.mxu0 0.0
        %8156 = vmatpush1.msra.mxu0 0.0
        %8157 = vmatprep.subr.mxu0 0.0
        %8158 = vmatpush1.msra.mxu0 0.0
        %8159 = vmatprep.subr.mxu0 0.0
        %8160 = vmatpush1.msra.mxu0 0.0
        %8161 = vmatprep.subr.mxu0 0.0
        %8162 = vmatpush1.msra.mxu0 0.0
        %8163 = vmatprep.subr.mxu0 0.0
        %8164 = vmatpush1.msra.mxu0 0.0
        %8165 = vmatprep.subr.mxu0 0.0
        %8166 = vmatpush1.msra.mxu0 0.0
        %8167 = vmatprep.subr.mxu0 0.0
        %8168 = vmatpush1.msra.mxu0 0.0
        %8169 = vmatprep.subr.mxu0 0.0
        %8170 = vmatpush1.msra.mxu0 0.0
        %8171 = vmatprep.subr.mxu0 0.0
        %8172 = vmatpush1.msra.mxu0 0.0
        %8173 = vmatprep.subr.mxu0 0.0
        %8174 = vmatpush1.msra.mxu0 0.0
        %8175 = vmatprep.subr.mxu0 0.0
        %8176 = vmatpush1.msra.mxu0 0.0
        %8177 = vmatprep.subr.mxu0 0.0
        %8178 = vmatpush1.msra.mxu0 0.0
        %8179 = vmatprep.subr.mxu0 0.0
        %8180 = vmatpush1.msra.mxu0 0.0
        %8181 = vmatprep.subr.mxu0 0.0
        %8182 = vmatpush1.msra.mxu0 0.0
        %8183 = vmatprep.subr.mxu0 0.0
        %8184 = vmatpush1.msra.mxu0 0.0
        %8185 = vmatprep.subr.mxu0 0.0
        %8186 = vmatpush1.msra.mxu0 0.0
        %8187 = vmatprep.subr.mxu0 0.0
        %8188 = vmatpush1.msra.mxu0 0.0
        %8189 = vmatprep.subr.mxu0 0.0
        %8190 = vmatpush1.msra.mxu0 0.0
        %8191 = vmatprep.subr.mxu0 0.0
        %8192 = vmatpush1.msra.mxu0 0.0
        %8193 = vmatprep.subr.mxu0 0.0
        %8194 = vmatpush1.msra.mxu0 0.0
        %8195 = vmatprep.subr.mxu0 0.0
        %8196 = vmatpush1.msra.mxu0 0.0
        %8197 = vmatprep.subr.mxu0 0.0
        %8198 = vmatpush1.msra.mxu0 0.0
        %8199 = vmatprep.subr.mxu0 0.0
        %8200 = vmatpush1.msra.mxu0 0.0
        %8201 = vmatprep.subr.mxu0 0.0
        %8202 = vmatpush1.msra.mxu0 0.0
        %8203 = vmatprep.subr.mxu0 0.0
        %8204 = vmatpush1.msra.mxu0 0.0
        %8205 = vmatprep.subr.mxu0 0.0
        %8206 = vmatpush1.msra.mxu0 0.0
        %8207 = vmatprep.subr.mxu0 0.0
        %8208 = vmatpush1.msra.mxu0 0.0
        %8209 = vmatprep.subr.mxu0 0.0
        %8210 = vmatpush1.msra.mxu0 0.0
        %8211 = vmatprep.subr.mxu0 0.0
        %8212 = vmatpush1.msra.mxu0 0.0
        %8213 = vmatprep.mubr.f32.mxu0 0.0
        %8214 = vmatmul.mubr.f32.gmra.mrb[0].mxu0 %v8143
        %v8215 = vpop.f32.mrb[0].mxu0
        %v8216 = vadd.f32 %v8141, %v8215
        %v8217 = vpop.f32.mrb[0].mxu0
        %8218 = vdwg.mxu0
        %v8219 = vld [vmem:[%s10] sm:$0x1]
        %v8220 = vmul.f32 %v8216, %v8219
        %v8221 = vld [vmem:[%s11] sm:$0x1]
        %v8222 = vadd.f32 %v8220, %v8221
        %v8223 = vmax.f32 %v8222, 0.0
        %v8224 = vld [vmem:[%s12] sm:$0xff]
        %v8225 = vld [vmem:[%s12 + $0x8] sm:$0xff]
        %v8226 = vld [vmem:[%s12 + $0x10] sm:$0xff]
        %v8227 = vld [vmem:[%s12 + $0x18] sm:$0xff]
        %v8228 = vld [vmem:[%s13] sm:$0x1]
        %vm8229 = vcmask 261120
        %v8231 = vsel %vm8229, %v8223, 0
        %8233 = vmatprep.subr.mxu0 0.0
        %8234 = vmatpush1.msra.mxu0 %v8224
        %8235 = vmatprep.subr.mxu0 0.0
        %8236 = vmatpush1.msra.mxu0 %v8225
        %8237 = vmatprep.subr.mxu0 0.0
        %8238 = vmatpush1.msra.mxu0 %v8226
        %8239 = vmatprep.subr.mxu0 0.0
        %8240 = vmatpush1.msra.mxu0 %v8227
        %8241 = vmatprep.subr.mxu0 0.0
        %8242 = vmatpush1.msra.mxu0 0.0
        %8243 = vmatprep.subr.mxu0 0.0
        %8244 = vmatpush1.msra.mxu0 0.0
        %8245 = vmatprep.subr.mxu0 0.0
        %8246 = vmatpush1.msra.mxu0 0.0
        %8247 = vmatprep.subr.mxu0 0.0
        %8248 = vmatpush1.msra.mxu0 0.0
        %8249 = vmatprep.subr.mxu0 0.0
        %8250 = vmatpush1.msra.mxu0 0.0
        %8251 = vmatprep.subr.mxu0 0.0
        %8252 = vmatpush1.msra.mxu0 0.0
        %8253 = vmatprep.subr.mxu0 0.0
        %8254 = vmatpush1.msra.mxu0 0.0
        %8255 = vmatprep.subr.mxu0 0.0
        %8256 = vmatpush1.msra.mxu0 0.0
        %8257 = vmatprep.subr.mxu0 0.0
        %8258 = vmatpush1.msra.mxu0 0.0
        %8259 = vmatprep.subr.mxu0 0.0
        %8260 = vmatpush1.msra.mxu0 0.0
        %8261 = vmatprep.subr.mxu0 0.0
        %8262 = vmatpush1.msra.mxu0 0.0
        %8263 = vmatprep.subr.mxu0 0.0
        %8264 = vmatpush1.msra.mxu0 0.0
        %8265 = vmatprep.subr.mxu0 0.0
        %8266 = vmatpush1.msra.mxu0 0.0
        %8267 = vmatprep.subr.mxu0 0.0
        %8268 = vmatpush1.msra.mxu0 0.0
        %8269 = vmatprep.subr.mxu0 0.0
        %8270 = vmatpush1.msra.mxu0 0.0
        %8271 = vmatprep.subr.mxu0 0.0
        %8272 = vmatpush1.msra.mxu0 0.0
        %8273 = vmatprep.subr.mxu0 0.0
        %8274 = vmatpush1.msra.mxu0 0.0
        %8275 = vmatprep.subr.mxu0 0.0
        %8276 = vmatpush1.msra.mxu0 0.0
        %8277 = vmatprep.subr.mxu0 0.0
        %8278 = vmatpush1.msra.mxu0 0.0
        %8279 = vmatprep.subr.mxu0 0.0
        %8280 = vmatpush1.msra.mxu0 0.0
        %8281 = vmatprep.subr.mxu0 0.0
        %8282 = vmatpush1.msra.mxu0 0.0
        %8283 = vmatprep.subr.mxu0 0.0
        %8284 = vmatpush1.msra.mxu0 0.0
        %8285 = vmatprep.subr.mxu0 0.0
        %8286 = vmatpush1.msra.mxu0 0.0
        %8287 = vmatprep.subr.mxu0 0.0
        %8288 = vmatpush1.msra.mxu0 0.0
        %8289 = vmatprep.subr.mxu0 0.0
        %8290 = vmatpush1.msra.mxu0 0.0
        %8291 = vmatprep.subr.mxu0 0.0
        %8292 = vmatpush1.msra.mxu0 0.0
        %8293 = vmatprep.subr.mxu0 0.0
        %8294 = vmatpush1.msra.mxu0 0.0
        %8295 = vmatprep.subr.mxu0 0.0
        %8296 = vmatpush1.msra.mxu0 0.0
        %8297 = vmatprep.mubr.f32.mxu0 0.0
        %8298 = vmatmul.mubr.f32.gmra.mrb[0].mxu0 %v8231
        %v8299 = vpop.f32.mrb[0].mxu0
        %v8300 = vadd.f32 %v8228, %v8299
        %v8301 = vpop.f32.mrb[0].mxu0
        %8302 = vdwg.mxu0
        %v8303 = vxor.u32 %v8300, 2147483648
        %v8304 = vmul.f32 %v8303, 1.442695
        %v8305 = vpow.pop %v8304
        %v8306 = vadd.f32 %v8305, 1.0
        %v8307 = vrcp.pop %v8306
        %v8308 = vmul.f32 1.0, %v8307
        %v8309 = vlaneseq
        %v8310 = vshrl.u32 %v8309, 7
        %v8311 = vsub.s32 0, %v8310
        %v8312 = vrot.slane %v8308, %v8311
        %v8313 = vmul.f32 %v8037, %v8312
        %v8314 = vmul.f32 %v8038, %v8312
        %v8315 = vmul.f32 %v8039, %v8312
        %v8316 = vmul.f32 %v8040, %v8312
        %v8317 = vmul.f32 %v8041, %v8312
        %v8318 = vmul.f32 %v8042, %v8312
        %v8319 = vmul.f32 %v8043, %v8312
        %v8320 = vmul.f32 %v8044, %v8312
        %v8321 = vmul.f32 %v8045, %v8312
        %v8322 = vmul.f32 %v8046, %v8312
        %v8323 = vmul.f32 %v8047, %v8312
        %v8324 = vmul.f32 %v8048, %v8312
        %v8325 = vmul.f32 %v8049, %v8312
        %v8326 = vmul.f32 %v8050, %v8312
        %v8327 = vmul.f32 %v8051, %v8312
        %v8328 = vmul.f32 %v8052, %v8312
        %v8329 = vmul.f32 %v8053, %v8312
        %v8330 = vmul.f32 %v8054, %v8312
        %v8331 = vmul.f32 %v8055, %v8312
        %v8332 = vmul.f32 %v8056, %v8312
        %v8333 = vmul.f32 %v8057, %v8312
        %v8334 = vmul.f32 %v8058, %v8312
        %v8335 = vmul.f32 %v8059, %v8312
        %v8336 = vmul.f32 %v8060, %v8312
        %v8337 = vmul.f32 %v8061, %v8312
        %v8338 = vmul.f32 %v8062, %v8312
        %v8339 = vmul.f32 %v8063, %v8312
        %v8340 = vmul.f32 %v8064, %v8312
        %v8341 = vmul.f32 %v8065, %v8312
        %v8342 = vmul.f32 %v8066, %v8312
        %v8343 = vmul.f32 %v8067, %v8312
        %v8344 = vmul.f32 %v8068, %v8312
        %v8345 = vpack.c.bf16 %v8314, %v8313
        %v8346 = vpack.c.bf16 %v8316, %v8315
        %v8347 = vpack.c.bf16 %v8318, %v8317
        %v8348 = vpack.c.bf16 %v8320, %v8319
        %v8349 = vpack.c.bf16 %v8322, %v8321
        %v8350 = vpack.c.bf16 %v8324, %v8323
        %v8351 = vpack.c.bf16 %v8326, %v8325
        %v8352 = vpack.c.bf16 %v8328, %v8327
        %v8353 = vpack.c.bf16 %v8330, %v8329
        %v8354 = vpack.c.bf16 %v8332, %v8331
        %v8355 = vpack.c.bf16 %v8334, %v8333
        %v8356 = vpack.c.bf16 %v8336, %v8335
        %v8357 = vpack.c.bf16 %v8338, %v8337
        %v8358 = vpack.c.bf16 %v8340, %v8339
        %v8359 = vpack.c.bf16 %v8342, %v8341
        %v8360 = vpack.c.bf16 %v8344, %v8343
        %v8361 = vld [vmem:[%s14] sm:$0x3]
        %v8363 = vsel %vm5217, %v8345, 0
        %v8366 = vsel %vm5217, %v8346, 0
        %v8369 = vsel %vm5217, %v8347, 0
        %v8372 = vsel %vm5217, %v8348, 0
        %v8375 = vsel %vm5217, %v8349, 0
        %v8378 = vsel %vm5217, %v8350, 0
        %v8381 = vsel %vm5217, %v8351, 0
        %v8384 = vsel %vm5217, %v8352, 0
        %v8387 = vsel %vm5217, %v8353, 0
        %v8390 = vsel %vm5217, %v8354, 0
        %v8393 = vsel %vm5217, %v8355, 0
        %v8396 = vsel %vm5217, %v8356, 0
        %v8399 = vsel %vm5217, %v8357, 0
        %v8402 = vsel %vm5217, %v8358, 0
        %v8405 = vsel %vm5217, %v8359, 0
        %v8408 = vsel %vm5217, %v8360, 0
        %v8411 = vsel %vm5266, %v8361, 0
        %8413 = vmatprep.subr.bf16.mxu0 0
        %8414 = vmatpush1.bf16.msra.mxu0 %v8411
        %8415 = vmatprep.subr.bf16.mxu0 0
        %8416 = vmatpush1.bf16.msra.mxu0 0
        %8417 = vmatprep.subr.bf16.mxu0 0
        %8418 = vmatpush1.bf16.msra.mxu0 0
        %8419 = vmatprep.subr.bf16.mxu0 0
        %8420 = vmatpush1.bf16.msra.mxu0 0
        %8421 = vmatprep.subr.bf16.mxu0 0
        %8422 = vmatpush1.bf16.msra.mxu0 0
        %8423 = vmatprep.subr.bf16.mxu0 0
        %8424 = vmatpush1.bf16.msra.mxu0 0
        %8425 = vmatprep.subr.bf16.mxu0 0
        %8426 = vmatpush1.bf16.msra.mxu0 0
        %8427 = vmatprep.subr.bf16.mxu0 0
        %8428 = vmatpush1.bf16.msra.mxu0 0
        %8429 = vmatprep.subr.bf16.mxu0 0
        %8430 = vmatpush1.bf16.msra.mxu0 0
        %8431 = vmatprep.subr.bf16.mxu0 0
        %8432 = vmatpush1.bf16.msra.mxu0 0
        %8433 = vmatprep.subr.bf16.mxu0 0
        %8434 = vmatpush1.bf16.msra.mxu0 0
        %8435 = vmatprep.subr.bf16.mxu0 0
        %8436 = vmatpush1.bf16.msra.mxu0 0
        %8437 = vmatprep.subr.bf16.mxu0 0
        %8438 = vmatpush1.bf16.msra.mxu0 0
        %8439 = vmatprep.subr.bf16.mxu0 0
        %8440 = vmatpush1.bf16.msra.mxu0 0
        %8441 = vmatprep.subr.bf16.mxu0 0
        %8442 = vmatpush1.bf16.msra.mxu0 0
        %8443 = vmatprep.subr.bf16.mxu0 0
        %8444 = vmatpush1.bf16.msra.mxu0 0
        %8445 = vmatprep.mubr.bf16.mxu0 0
        %8446 = vmatmul.mubr.bf16.gmra.mrb[0].mxu0 %v8363
        %v8447 = vpop.f32.mrb[0].mxu0
        %v8448 = vadd.f32 0.0, %v8447
        %v8449 = vpop.f32.mrb[0].mxu0
        %v8450 = vpop.f32.mrb[0].mxu0
        %v8451 = vadd.f32 0.0, %v8450
        %v8452 = vpop.f32.mrb[0].mxu0
        %8453 = vmatprep.mubr.bf16.mxu0 0
        %8454 = vmatmul.mubr.bf16.gmra.mrb[0].mxu0 %v8366
        %v8455 = vpop.f32.mrb[0].mxu0
        %v8456 = vadd.f32 0.0, %v8455
        %v8457 = vpop.f32.mrb[0].mxu0
        %v8458 = vpop.f32.mrb[0].mxu0
        %v8459 = vadd.f32 0.0, %v8458
        %v8460 = vpop.f32.mrb[0].mxu0
        %8461 = vmatprep.mubr.bf16.mxu0 0
        %8462 = vmatmul.mubr.bf16.gmra.mrb[0].mxu0 %v8369
        %v8463 = vpop.f32.mrb[0].mxu0
        %v8464 = vadd.f32 0.0, %v8463
        %v8465 = vpop.f32.mrb[0].mxu0
        %v8466 = vpop.f32.mrb[0].mxu0
        %v8467 = vadd.f32 0.0, %v8466
        %v8468 = vpop.f32.mrb[0].mxu0
        %8469 = vmatprep.mubr.bf16.mxu0 0
        %8470 = vmatmul.mubr.bf16.gmra.mrb[0].mxu0 %v8372
        %v8471 = vpop.f32.mrb[0].mxu0
        %v8472 = vadd.f32 0.0, %v8471
        %v8473 = vpop.f32.mrb[0].mxu0
        %v8474 = vpop.f32.mrb[0].mxu0
        %v8475 = vadd.f32 0.0, %v8474
        %v8476 = vpop.f32.mrb[0].mxu0
        %8477 = vmatprep.mubr.bf16.mxu0 0
        %8478 = vmatmul.mubr.bf16.gmra.mrb[0].mxu0 %v8375
        %v8479 = vpop.f32.mrb[0].mxu0
        %v8480 = vadd.f32 0.0, %v8479
        %v8481 = vpop.f32.mrb[0].mxu0
        %v8482 = vpop.f32.mrb[0].mxu0
        %v8483 = vadd.f32 0.0, %v8482
        %v8484 = vpop.f32.mrb[0].mxu0
        %8485 = vmatprep.mubr.bf16.mxu0 0
        %8486 = vmatmul.mubr.bf16.gmra.mrb[0].mxu0 %v8378
        %v8487 = vpop.f32.mrb[0].mxu0
        %v8488 = vadd.f32 0.0, %v8487
        %v8489 = vpop.f32.mrb[0].mxu0
        %v8490 = vpop.f32.mrb[0].mxu0
        %v8491 = vadd.f32 0.0, %v8490
        %v8492 = vpop.f32.mrb[0].mxu0
        %8493 = vmatprep.mubr.bf16.mxu0 0
        %8494 = vmatmul.mubr.bf16.gmra.mrb[0].mxu0 %v8381
        %v8495 = vpop.f32.mrb[0].mxu0
        %v8496 = vadd.f32 0.0, %v8495
        %v8497 = vpop.f32.mrb[0].mxu0
        %v8498 = vpop.f32.mrb[0].mxu0
        %v8499 = vadd.f32 0.0, %v8498
        %v8500 = vpop.f32.mrb[0].mxu0
        %8501 = vmatprep.mubr.bf16.mxu0 0
        %8502 = vmatmul.mubr.bf16.gmra.mrb[0].mxu0 %v8384
        %v8503 = vpop.f32.mrb[0].mxu0
        %v8504 = vadd.f32 0.0, %v8503
        %v8505 = vpop.f32.mrb[0].mxu0
        %v8506 = vpop.f32.mrb[0].mxu0
        %v8507 = vadd.f32 0.0, %v8506
        %v8508 = vpop.f32.mrb[0].mxu0
        %8509 = vmatprep.mubr.bf16.mxu0 0
        %8510 = vmatmul.mubr.bf16.gmra.mrb[0].mxu0 %v8387
        %v8511 = vpop.f32.mrb[0].mxu0
        %v8512 = vadd.f32 0.0, %v8511
        %v8513 = vpop.f32.mrb[0].mxu0
        %v8514 = vpop.f32.mrb[0].mxu0
        %v8515 = vadd.f32 0.0, %v8514
        %v8516 = vpop.f32.mrb[0].mxu0
        %8517 = vmatprep.mubr.bf16.mxu0 0
        %8518 = vmatmul.mubr.bf16.gmra.mrb[0].mxu0 %v8390
        %v8519 = vpop.f32.mrb[0].mxu0
        %v8520 = vadd.f32 0.0, %v8519
        %v8521 = vpop.f32.mrb[0].mxu0
        %v8522 = vpop.f32.mrb[0].mxu0
        %v8523 = vadd.f32 0.0, %v8522
        %v8524 = vpop.f32.mrb[0].mxu0
        %8525 = vmatprep.mubr.bf16.mxu0 0
        %8526 = vmatmul.mubr.bf16.gmra.mrb[0].mxu0 %v8393
        %v8527 = vpop.f32.mrb[0].mxu0
        %v8528 = vadd.f32 0.0, %v8527
        %v8529 = vpop.f32.mrb[0].mxu0
        %v8530 = vpop.f32.mrb[0].mxu0
        %v8531 = vadd.f32 0.0, %v8530
        %v8532 = vpop.f32.mrb[0].mxu0
        %8533 = vmatprep.mubr.bf16.mxu0 0
        %8534 = vmatmul.mubr.bf16.gmra.mrb[0].mxu0 %v8396
        %v8535 = vpop.f32.mrb[0].mxu0
        %v8536 = vadd.f32 0.0, %v8535
        %v8537 = vpop.f32.mrb[0].mxu0
        %v8538 = vpop.f32.mrb[0].mxu0
        %v8539 = vadd.f32 0.0, %v8538
        %v8540 = vpop.f32.mrb[0].mxu0
        %8541 = vmatprep.mubr.bf16.mxu0 0
        %8542 = vmatmul.mubr.bf16.gmra.mrb[0].mxu0 %v8399
        %v8543 = vpop.f32.mrb[0].mxu0
        %v8544 = vadd.f32 0.0, %v8543
        %v8545 = vpop.f32.mrb[0].mxu0
        %v8546 = vpop.f32.mrb[0].mxu0
        %v8547 = vadd.f32 0.0, %v8546
        %v8548 = vpop.f32.mrb[0].mxu0
        %8549 = vmatprep.mubr.bf16.mxu0 0
        %8550 = vmatmul.mubr.bf16.gmra.mrb[0].mxu0 %v8402
        %v8551 = vpop.f32.mrb[0].mxu0
        %v8552 = vadd.f32 0.0, %v8551
        %v8553 = vpop.f32.mrb[0].mxu0
        %v8554 = vpop.f32.mrb[0].mxu0
        %v8555 = vadd.f32 0.0, %v8554
        %v8556 = vpop.f32.mrb[0].mxu0
        %8557 = vmatprep.mubr.bf16.mxu0 0
        %8558 = vmatmul.mubr.bf16.gmra.mrb[0].mxu0 %v8405
        %v8559 = vpop.f32.mrb[0].mxu0
        %v8560 = vadd.f32 0.0, %v8559
        %v8561 = vpop.f32.mrb[0].mxu0
        %v8562 = vpop.f32.mrb[0].mxu0
        %v8563 = vadd.f32 0.0, %v8562
        %v8564 = vpop.f32.mrb[0].mxu0
        %8565 = vmatprep.mubr.bf16.mxu0 0
        %8566 = vmatmul.mubr.bf16.gmra.mrb[0].mxu0 %v8408
        %v8567 = vpop.f32.mrb[0].mxu0
        %v8568 = vadd.f32 0.0, %v8567
        %v8569 = vpop.f32.mrb[0].mxu0
        %v8570 = vpop.f32.mrb[0].mxu0
        %v8571 = vadd.f32 0.0, %v8570
        %v8572 = vpop.f32.mrb[0].mxu0
        %8573 = vdwg.mxu0
        %v8574 = vld [vmem:[%s15] sm:$0x1]
        %v8576 = vlaneseq
        %v8577 = vshrl.u32 %v8576, 7
        %v8578 = vsub.s32 0, %v8577
        %v8579 = vrot.slane %v8574, %v8578
        %v8581 = vmul.f32 %v8448, %v8579
        %v8582 = vmul.f32 %v8451, %v8579
        %v8583 = vmul.f32 %v8456, %v8579
        %v8584 = vmul.f32 %v8459, %v8579
        %v8585 = vmul.f32 %v8464, %v8579
        %v8586 = vmul.f32 %v8467, %v8579
        %v8587 = vmul.f32 %v8472, %v8579
        %v8588 = vmul.f32 %v8475, %v8579
        %v8589 = vmul.f32 %v8480, %v8579
        %v8590 = vmul.f32 %v8483, %v8579
        %v8591 = vmul.f32 %v8488, %v8579
        %v8592 = vmul.f32 %v8491, %v8579
        %v8593 = vmul.f32 %v8496, %v8579
        %v8594 = vmul.f32 %v8499, %v8579
        %v8595 = vmul.f32 %v8504, %v8579
        %v8596 = vmul.f32 %v8507, %v8579
        %v8597 = vmul.f32 %v8512, %v8579
        %v8598 = vmul.f32 %v8515, %v8579
        %v8599 = vmul.f32 %v8520, %v8579
        %v8600 = vmul.f32 %v8523, %v8579
        %v8601 = vmul.f32 %v8528, %v8579
        %v8602 = vmul.f32 %v8531, %v8579
        %v8603 = vmul.f32 %v8536, %v8579
        %v8604 = vmul.f32 %v8539, %v8579
        %v8605 = vmul.f32 %v8544, %v8579
        %v8606 = vmul.f32 %v8547, %v8579
        %v8607 = vmul.f32 %v8552, %v8579
        %v8608 = vmul.f32 %v8555, %v8579
        %v8609 = vmul.f32 %v8560, %v8579
        %v8610 = vmul.f32 %v8563, %v8579
        %v8611 = vmul.f32 %v8568, %v8579
        %v8612 = vmul.f32 %v8571, %v8579
        %v8613 = vld [vmem:[%s16] sm:$0x1]
        %v8615 = vlaneseq
        %v8616 = vshrl.u32 %v8615, 7
        %v8617 = vsub.s32 0, %v8616
        %v8618 = vrot.slane %v8613, %v8617
        %v8620 = vadd.f32 %v8581, %v8618
        %v8621 = vadd.f32 %v8582, %v8618
        %v8622 = vadd.f32 %v8583, %v8618
        %v8623 = vadd.f32 %v8584, %v8618
        %v8624 = vadd.f32 %v8585, %v8618
        %v8625 = vadd.f32 %v8586, %v8618
        %v8626 = vadd.f32 %v8587, %v8618
        %v8627 = vadd.f32 %v8588, %v8618
        %v8628 = vadd.f32 %v8589, %v8618
        %v8629 = vadd.f32 %v8590, %v8618
        %v8630 = vadd.f32 %v8591, %v8618
        %v8631 = vadd.f32 %v8592, %v8618
        %v8632 = vadd.f32 %v8593, %v8618
        %v8633 = vadd.f32 %v8594, %v8618
        %v8634 = vadd.f32 %v8595, %v8618
        %v8635 = vadd.f32 %v8596, %v8618
        %v8636 = vadd.f32 %v8597, %v8618
        %v8637 = vadd.f32 %v8598, %v8618
        %v8638 = vadd.f32 %v8599, %v8618
        %v8639 = vadd.f32 %v8600, %v8618
        %v8640 = vadd.f32 %v8601, %v8618
        %v8641 = vadd.f32 %v8602, %v8618
        %v8642 = vadd.f32 %v8603, %v8618
        %v8643 = vadd.f32 %v8604, %v8618
        %v8644 = vadd.f32 %v8605, %v8618
        %v8645 = vadd.f32 %v8606, %v8618
        %v8646 = vadd.f32 %v8607, %v8618
        %v8647 = vadd.f32 %v8608, %v8618
        %v8648 = vadd.f32 %v8609, %v8618
        %v8649 = vadd.f32 %v8610, %v8618
        %v8650 = vadd.f32 %v8611, %v8618
        %v8651 = vadd.f32 %v8612, %v8618
        %v8652 = vsel %vm2206, %v8620, 0.0
        %v8653 = vsel %vm2206, %v8621, 0.0
        %v8654 = vadd.f32 %v8652, %v8653
        %v8655 = vsel %vm2206, %v8622, 0.0
        %v8656 = vadd.f32 %v8654, %v8655
        %v8657 = vsel %vm2206, %v8623, 0.0
        %v8658 = vadd.f32 %v8656, %v8657
        %v8659 = vsel %vm2206, %v8624, 0.0
        %v8660 = vadd.f32 %v8658, %v8659
        %v8661 = vsel %vm2206, %v8625, 0.0
        %v8662 = vadd.f32 %v8660, %v8661
        %v8663 = vsel %vm2206, %v8626, 0.0
        %v8664 = vadd.f32 %v8662, %v8663
        %v8665 = vsel %vm2206, %v8627, 0.0
        %v8666 = vadd.f32 %v8664, %v8665
        %v8667 = vsel %vm2206, %v8628, 0.0
        %v8668 = vadd.f32 %v8666, %v8667
        %v8669 = vsel %vm2206, %v8629, 0.0
        %v8670 = vadd.f32 %v8668, %v8669
        %v8671 = vsel %vm2206, %v8630, 0.0
        %v8672 = vadd.f32 %v8670, %v8671
        %v8673 = vsel %vm2206, %v8631, 0.0
        %v8674 = vadd.f32 %v8672, %v8673
        %v8675 = vsel %vm2206, %v8632, 0.0
        %v8676 = vadd.f32 %v8674, %v8675
        %v8677 = vsel %vm2206, %v8633, 0.0
        %v8678 = vadd.f32 %v8676, %v8677
        %v8679 = vsel %vm2206, %v8634, 0.0
        %v8680 = vadd.f32 %v8678, %v8679
        %v8681 = vsel %vm2206, %v8635, 0.0
        %v8682 = vadd.f32 %v8680, %v8681
        %v8683 = vsel %vm2206, %v8636, 0.0
        %v8684 = vadd.f32 %v8682, %v8683
        %v8685 = vsel %vm2206, %v8637, 0.0
        %v8686 = vadd.f32 %v8684, %v8685
        %v8687 = vsel %vm2206, %v8638, 0.0
        %v8688 = vadd.f32 %v8686, %v8687
        %v8689 = vsel %vm2206, %v8639, 0.0
        %v8690 = vadd.f32 %v8688, %v8689
        %v8691 = vsel %vm2206, %v8640, 0.0
        %v8692 = vadd.f32 %v8690, %v8691
        %v8693 = vsel %vm2206, %v8641, 0.0
        %v8694 = vadd.f32 %v8692, %v8693
        %v8695 = vsel %vm2206, %v8642, 0.0
        %v8696 = vadd.f32 %v8694, %v8695
        %v8697 = vsel %vm2206, %v8643, 0.0
        %v8698 = vadd.f32 %v8696, %v8697
        %v8699 = vsel %vm2206, %v8644, 0.0
        %v8700 = vadd.f32 %v8698, %v8699
        %v8701 = vsel %vm2206, %v8645, 0.0
        %v8702 = vadd.f32 %v8700, %v8701
        %v8703 = vsel %vm2206, %v8646, 0.0
        %v8704 = vadd.f32 %v8702, %v8703
        %v8705 = vsel %vm2206, %v8647, 0.0
        %v8706 = vadd.f32 %v8704, %v8705
        %v8707 = vsel %vm2206, %v8648, 0.0
        %v8708 = vadd.f32 %v8706, %v8707
        %v8709 = vsel %vm2206, %v8649, 0.0
        %v8710 = vadd.f32 %v8708, %v8709
        %v8711 = vsel %vm2206, %v8650, 0.0
        %v8712 = vadd.f32 %v8710, %v8711
        %v8713 = vsel %vm2206, %v8651, 0.0
        %v8714 = vadd.f32 %v8712, %v8713
        %v8715 = vrot.slane %v8714, 4
        %v8716 = vadd.f32 %v8714, %v8715
        %v8717 = vrot.slane %v8716, 2
        %v8718 = vadd.f32 %v8716, %v8717
        %v8719 = vrot.slane %v8718, 1
        %v8720 = vadd.f32 %v8718, %v8719
        %v8721 = vmul.f32 %v8720, %v8138
        %v8722 = vld [vmem:[%s17] sm:$0xff]
        %v8723 = vld [vmem:[%s17 + $0x8] sm:$0xff]
        %v8725 = vsel %vm2206, %v8721, 0
        %8727 = vmatprep.subr.mxu0 0.0
        %8728 = vmatpush1.msra.mxu0 %v8722
        %8729 = vmatprep.subr.mxu0 0.0
        %8730 = vmatpush1.msra.mxu0 %v8723
        %8731 = vmatprep.subr.mxu0 0.0
        %8732 = vmatpush1.msra.mxu0 0.0
        %8733 = vmatprep.subr.mxu0 0.0
        %8734 = vmatpush1.msra.mxu0 0.0
        %8735 = vmatprep.subr.mxu0 0.0
        %8736 = vmatpush1.msra.mxu0 0.0
        %8737 = vmatprep.subr.mxu0 0.0
        %8738 = vmatpush1.msra.mxu0 0.0
        %8739 = vmatprep.subr.mxu0 0.0
        %8740 = vmatpush1.msra.mxu0 0.0
        %8741 = vmatprep.subr.mxu0 0.0
        %8742 = vmatpush1.msra.mxu0 0.0
        %8743 = vmatprep.subr.mxu0 0.0
        %8744 = vmatpush1.msra.mxu0 0.0
        %8745 = vmatprep.subr.mxu0 0.0
        %8746 = vmatpush1.msra.mxu0 0.0
        %8747 = vmatprep.subr.mxu0 0.0
        %8748 = vmatpush1.msra.mxu0 0.0
        %8749 = vmatprep.subr.mxu0 0.0
        %8750 = vmatpush1.msra.mxu0 0.0
        %8751 = vmatprep.subr.mxu0 0.0
        %8752 = vmatpush1.msra.mxu0 0.0
        %8753 = vmatprep.subr.mxu0 0.0
        %8754 = vmatpush1.msra.mxu0 0.0
        %8755 = vmatprep.subr.mxu0 0.0
        %8756 = vmatpush1.msra.mxu0 0.0
        %8757 = vmatprep.subr.mxu0 0.0
        %8758 = vmatpush1.msra.mxu0 0.0
        %8759 = vmatprep.subr.mxu0 0.0
        %8760 = vmatpush1.msra.mxu0 0.0
        %8761 = vmatprep.subr.mxu0 0.0
        %8762 = vmatpush1.msra.mxu0 0.0
        %8763 = vmatprep.subr.mxu0 0.0
        %8764 = vmatpush1.msra.mxu0 0.0
        %8765 = vmatprep.subr.mxu0 0.0
        %8766 = vmatpush1.msra.mxu0 0.0
        %8767 = vmatprep.subr.mxu0 0.0
        %8768 = vmatpush1.msra.mxu0 0.0
        %8769 = vmatprep.subr.mxu0 0.0
        %8770 = vmatpush1.msra.mxu0 0.0
        %8771 = vmatprep.subr.mxu0 0.0
        %8772 = vmatpush1.msra.mxu0 0.0
        %8773 = vmatprep.subr.mxu0 0.0
        %8774 = vmatpush1.msra.mxu0 0.0
        %8775 = vmatprep.subr.mxu0 0.0
        %8776 = vmatpush1.msra.mxu0 0.0
        %8777 = vmatprep.subr.mxu0 0.0
        %8778 = vmatpush1.msra.mxu0 0.0
        %8779 = vmatprep.subr.mxu0 0.0
        %8780 = vmatpush1.msra.mxu0 0.0
        %8781 = vmatprep.subr.mxu0 0.0
        %8782 = vmatpush1.msra.mxu0 0.0
        %8783 = vmatprep.subr.mxu0 0.0
        %8784 = vmatpush1.msra.mxu0 0.0
        %8785 = vmatprep.subr.mxu0 0.0
        %8786 = vmatpush1.msra.mxu0 0.0
        %8787 = vmatprep.subr.mxu0 0.0
        %8788 = vmatpush1.msra.mxu0 0.0
        %8789 = vmatprep.subr.mxu0 0.0
        %8790 = vmatpush1.msra.mxu0 0.0
        %8791 = vmatprep.mubr.f32.mxu0 0.0
        %8792 = vmatmul.mubr.f32.gmra.mrb[0].mxu0 %v8725
        %v8793 = vpop.f32.mrb[0].mxu0
        %v8794 = vadd.f32 0.0, %v8793
        %v8795 = vpop.f32.mrb[0].mxu0
        %8796 = vdwg.mxu0
        %vm8797 = vcmp.ge.f32.partialorder %v8794, 0.0
        %v8798 = vmul.f32 %v8794, 0.01
        %v8799 = vsel %vm8797, %v8794, %v8798
        %v8800 = vld [vmem:[%s18] sm:$0x1]
        %vm8801 = vcmask 7168
        %v8803 = vsel %vm8801, %v8799, 0
        %v8806 = vsel %vm4216, %v8800, 0
        %8808 = vmatprep.subr.mxu0 0.0
        %8809 = vmatpush1.msra.mxu0 %v8806
        %8810 = vmatprep.subr.mxu0 0.0
        %8811 = vmatpush1.msra.mxu0 0.0
        %8812 = vmatprep.subr.mxu0 0.0
        %8813 = vmatpush1.msra.mxu0 0.0
        %8814 = vmatprep.subr.mxu0 0.0
        %8815 = vmatpush1.msra.mxu0 0.0
        %8816 = vmatprep.subr.mxu0 0.0
        %8817 = vmatpush1.msra.mxu0 0.0
        %8818 = vmatprep.subr.mxu0 0.0
        %8819 = vmatpush1.msra.mxu0 0.0
        %8820 = vmatprep.subr.mxu0 0.0
        %8821 = vmatpush1.msra.mxu0 0.0
        %8822 = vmatprep.subr.mxu0 0.0
        %8823 = vmatpush1.msra.mxu0 0.0
        %8824 = vmatprep.subr.mxu0 0.0
        %8825 = vmatpush1.msra.mxu0 0.0
        %8826 = vmatprep.subr.mxu0 0.0
        %8827 = vmatpush1.msra.mxu0 0.0
        %8828 = vmatprep.subr.mxu0 0.0
        %8829 = vmatpush1.msra.mxu0 0.0
        %8830 = vmatprep.subr.mxu0 0.0
        %8831 = vmatpush1.msra.mxu0 0.0
        %8832 = vmatprep.subr.mxu0 0.0
        %8833 = vmatpush1.msra.mxu0 0.0
        %8834 = vmatprep.subr.mxu0 0.0
        %8835 = vmatpush1.msra.mxu0 0.0
        %8836 = vmatprep.subr.mxu0 0.0
        %8837 = vmatpush1.msra.mxu0 0.0
        %8838 = vmatprep.subr.mxu0 0.0
        %8839 = vmatpush1.msra.mxu0 0.0
        %8840 = vmatprep.subr.mxu0 0.0
        %8841 = vmatpush1.msra.mxu0 0.0
        %8842 = vmatprep.subr.mxu0 0.0
        %8843 = vmatpush1.msra.mxu0 0.0
        %8844 = vmatprep.subr.mxu0 0.0
        %8845 = vmatpush1.msra.mxu0 0.0
        %8846 = vmatprep.subr.mxu0 0.0
        %8847 = vmatpush1.msra.mxu0 0.0
        %8848 = vmatprep.subr.mxu0 0.0
        %8849 = vmatpush1.msra.mxu0 0.0
        %8850 = vmatprep.subr.mxu0 0.0
        %8851 = vmatpush1.msra.mxu0 0.0
        %8852 = vmatprep.subr.mxu0 0.0
        %8853 = vmatpush1.msra.mxu0 0.0
        %8854 = vmatprep.subr.mxu0 0.0
        %8855 = vmatpush1.msra.mxu0 0.0
        %8856 = vmatprep.subr.mxu0 0.0
        %8857 = vmatpush1.msra.mxu0 0.0
        %8858 = vmatprep.subr.mxu0 0.0
        %8859 = vmatpush1.msra.mxu0 0.0
        %8860 = vmatprep.subr.mxu0 0.0
        %8861 = vmatpush1.msra.mxu0 0.0
        %8862 = vmatprep.subr.mxu0 0.0
        %8863 = vmatpush1.msra.mxu0 0.0
        %8864 = vmatprep.subr.mxu0 0.0
        %8865 = vmatpush1.msra.mxu0 0.0
        %8866 = vmatprep.subr.mxu0 0.0
        %8867 = vmatpush1.msra.mxu0 0.0
        %8868 = vmatprep.subr.mxu0 0.0
        %8869 = vmatpush1.msra.mxu0 0.0
        %8870 = vmatprep.subr.mxu0 0.0
        %8871 = vmatpush1.msra.mxu0 0.0
        %8872 = vmatprep.mubr.f32.mxu0 0.0
        %8873 = vmatmul.mubr.f32.gmra.mrb[0].mxu0 %v8803
        %v8874 = vpop.f32.mrb[0].mxu0
        %v8875 = vadd.f32 0.0, %v8874
        %v8876 = vpop.f32.mrb[0].mxu0
        %8877 = vdwg.mxu0
        %v8878 = vxor.u32 %v8875, 2147483648
        %v8879 = vmul.f32 %v8878, 1.442695
        %v8880 = vpow.pop %v8879
        %v8881 = vadd.f32 %v8880, 1.0
        %v8882 = vrcp.pop %v8881
        %v8883 = vmul.f32 1.0, %v8882
        %vm8884 = vcmask 1046528
        %v8885 = vrot.slane %v605, 1
        %v8886 = vrot.slane %v606, 1
        %v8887 = vsel %vm8884, %v8885, %v8886
        %v8888 = vrot.slane %v607, 1
        %v8889 = vsel %vm8884, %v8886, %v8888
        %v8890 = vrot.slane %v608, 1
        %v8891 = vrot.slane %v609, 1
        %v8892 = vsel %vm8884, %v8890, %v8891
        %v8893 = vrot.slane %v610, 1
        %v8894 = vsel %vm8884, %v8891, %v8893
        %v8895 = vrot.slane %v611, 1
        %v8896 = vrot.slane %v612, 1
        %v8897 = vsel %vm8884, %v8895, %v8896
        %v8898 = vrot.slane %v613, 1
        %v8899 = vsel %vm8884, %v8896, %v8898
        %v8900 = vrot.slane %v614, 1
        %v8901 = vrot.slane %v615, 1
        %v8902 = vsel %vm8884, %v8900, %v8901
        %v8903 = vrot.slane %v616, 1
        %v8904 = vsel %vm8884, %v8901, %v8903
        %v8905 = vrot.slane %v617, 1
        %v8906 = vrot.slane %v618, 1
        %v8907 = vsel %vm8884, %v8905, %v8906
        %v8908 = vrot.slane %v619, 1
        %v8909 = vsel %vm8884, %v8906, %v8908
        %v8910 = vrot.slane %v620, 1
        %v8911 = vrot.slane %v621, 1
        %v8912 = vsel %vm8884, %v8910, %v8911
        %v8913 = vrot.slane %v622, 1
        %v8914 = vsel %vm8884, %v8911, %v8913
        %v8915 = vrot.slane %v623, 1
        %v8916 = vrot.slane %v624, 1
        %v8917 = vsel %vm8884, %v8915, %v8916
        %v8918 = vrot.slane %v625, 1
        %v8919 = vsel %vm8884, %v8916, %v8918
        %v8920 = vrot.slane %v626, 1
        %v8921 = vrot.slane %v627, 1
        %v8922 = vsel %vm8884, %v8920, %v8921
        %v8923 = vrot.slane %v628, 1
        %v8924 = vsel %vm8884, %v8921, %v8923
        %v8925 = vrot.slane %v629, 1
        %v8926 = vrot.slane %v630, 1
        %v8927 = vsel %vm8884, %v8925, %v8926
        %v8928 = vrot.slane %v631, 1
        %v8929 = vsel %vm8884, %v8926, %v8928
        %v8930 = vrot.slane %v632, 1
        %v8931 = vrot.slane %v633, 1
        %v8932 = vsel %vm8884, %v8930, %v8931
        %v8933 = vrot.slane %v634, 1
        %v8934 = vsel %vm8884, %v8931, %v8933
        %v8935 = vrot.slane %v635, 1
        %v8936 = vrot.slane %v636, 1
        %v8937 = vsel %vm8884, %v8935, %v8936
        %v8938 = vrot.slane %v637, 1
        %v8939 = vsel %vm8884, %v8936, %v8938
        %v8940 = vrot.slane %v638, 1
        %v8941 = vrot.slane %v639, 1
        %v8942 = vsel %vm8884, %v8940, %v8941
        %v8943 = vrot.slane %v640, 1
        %v8944 = vsel %vm8884, %v8941, %v8943
        %v8945 = vrot.slane %v641, 1
        %v8946 = vrot.slane %v642, 1
        %v8947 = vsel %vm8884, %v8945, %v8946
        %v8948 = vrot.slane %v643, 1
        %v8949 = vsel %vm8884, %v8946, %v8948
        %v8950 = vrot.slane %v644, 1
        %v8951 = vrot.slane %v645, 1
        %v8952 = vsel %vm8884, %v8950, %v8951
        %v8953 = vrot.slane %v646, 1
        %v8954 = vsel %vm8884, %v8951, %v8953
        %v8955 = vrot.slane %v647, 1
        %v8956 = vrot.slane %v648, 1
        %v8957 = vsel %vm8884, %v8955, %v8956
        %v8958 = vrot.slane %v649, 1
        %v8959 = vsel %vm8884, %v8956, %v8958
        %v8960 = vrot.slane %v650, 1
        %v8961 = vrot.slane %v651, 1
        %v8962 = vsel %vm8884, %v8960, %v8961
        %v8963 = vrot.slane %v652, 1
        %v8964 = vsel %vm8884, %v8961, %v8963
        %v8997 = vlaneseq
        %v8998 = vshrl.u32 %v8997, 7
        %v8999 = vsub.s32 0, %v8998
        %v9000 = vrot.slane %v8883, %v8999
        %v9001 = vmul.f32 %v9000, %v8620
        %v9002 = vmul.f32 %v9000, %v8621
        %v9003 = vmul.f32 %v9000, %v8622
        %v9004 = vmul.f32 %v9000, %v8623
        %v9005 = vmul.f32 %v9000, %v8624
        %v9006 = vmul.f32 %v9000, %v8625
        %v9007 = vmul.f32 %v9000, %v8626
        %v9008 = vmul.f32 %v9000, %v8627
        %v9009 = vmul.f32 %v9000, %v8628
        %v9010 = vmul.f32 %v9000, %v8629
        %v9011 = vmul.f32 %v9000, %v8630
        %v9012 = vmul.f32 %v9000, %v8631
        %v9013 = vmul.f32 %v9000, %v8632
        %v9014 = vmul.f32 %v9000, %v8633
        %v9015 = vmul.f32 %v9000, %v8634
        %v9016 = vmul.f32 %v9000, %v8635
        %v9017 = vmul.f32 %v9000, %v8636
        %v9018 = vmul.f32 %v9000, %v8637
        %v9019 = vmul.f32 %v9000, %v8638
        %v9020 = vmul.f32 %v9000, %v8639
        %v9021 = vmul.f32 %v9000, %v8640
        %v9022 = vmul.f32 %v9000, %v8641
        %v9023 = vmul.f32 %v9000, %v8642
        %v9024 = vmul.f32 %v9000, %v8643
        %v9025 = vmul.f32 %v9000, %v8644
        %v9026 = vmul.f32 %v9000, %v8645
        %v9027 = vmul.f32 %v9000, %v8646
        %v9028 = vmul.f32 %v9000, %v8647
        %v9029 = vmul.f32 %v9000, %v8648
        %v9030 = vmul.f32 %v9000, %v8649
        %v9031 = vmul.f32 %v9000, %v8650
        %v9032 = vmul.f32 %v9000, %v8651
        %v9033 = vadd.f32 %v9001, %v8887
        %v9034 = vadd.f32 %v9002, %v8889
        %v9035 = vadd.f32 %v9003, %v8892
        %v9036 = vadd.f32 %v9004, %v8894
        %v9037 = vadd.f32 %v9005, %v8897
        %v9038 = vadd.f32 %v9006, %v8899
        %v9039 = vadd.f32 %v9007, %v8902
        %v9040 = vadd.f32 %v9008, %v8904
        %v9041 = vadd.f32 %v9009, %v8907
        %v9042 = vadd.f32 %v9010, %v8909
        %v9043 = vadd.f32 %v9011, %v8912
        %v9044 = vadd.f32 %v9012, %v8914
        %v9045 = vadd.f32 %v9013, %v8917
        %v9046 = vadd.f32 %v9014, %v8919
        %v9047 = vadd.f32 %v9015, %v8922
        %v9048 = vadd.f32 %v9016, %v8924
        %v9049 = vadd.f32 %v9017, %v8927
        %v9050 = vadd.f32 %v9018, %v8929
        %v9051 = vadd.f32 %v9019, %v8932
        %v9052 = vadd.f32 %v9020, %v8934
        %v9053 = vadd.f32 %v9021, %v8937
        %v9054 = vadd.f32 %v9022, %v8939
        %v9055 = vadd.f32 %v9023, %v8942
        %v9056 = vadd.f32 %v9024, %v8944
        %v9057 = vadd.f32 %v9025, %v8947
        %v9058 = vadd.f32 %v9026, %v8949
        %v9059 = vadd.f32 %v9027, %v8952
        %v9060 = vadd.f32 %v9028, %v8954
        %v9061 = vadd.f32 %v9029, %v8957
        %v9062 = vadd.f32 %v9030, %v8959
        %v9063 = vadd.f32 %v9031, %v8962
        %v9064 = vadd.f32 %v9032, %v8964
        %v9065 = vmax.f32 %v9033, 0.0
        %v9066 = vmax.f32 %v9034, 0.0
        %v9067 = vmax.f32 %v9035, 0.0
        %v9068 = vmax.f32 %v9036, 0.0
        %v9069 = vmax.f32 %v9037, 0.0
        %v9070 = vmax.f32 %v9038, 0.0
        %v9071 = vmax.f32 %v9039, 0.0
        %v9072 = vmax.f32 %v9040, 0.0
        %v9073 = vmax.f32 %v9041, 0.0
        %v9074 = vmax.f32 %v9042, 0.0
        %v9075 = vmax.f32 %v9043, 0.0
        %v9076 = vmax.f32 %v9044, 0.0
        %v9077 = vmax.f32 %v9045, 0.0
        %v9078 = vmax.f32 %v9046, 0.0
        %v9079 = vmax.f32 %v9047, 0.0
        %v9080 = vmax.f32 %v9048, 0.0
        %v9081 = vmax.f32 %v9049, 0.0
        %v9082 = vmax.f32 %v9050, 0.0
        %v9083 = vmax.f32 %v9051, 0.0
        %v9084 = vmax.f32 %v9052, 0.0
        %v9085 = vmax.f32 %v9053, 0.0
        %v9086 = vmax.f32 %v9054, 0.0
        %v9087 = vmax.f32 %v9055, 0.0
        %v9088 = vmax.f32 %v9056, 0.0
        %v9089 = vmax.f32 %v9057, 0.0
        %v9090 = vmax.f32 %v9058, 0.0
        %v9091 = vmax.f32 %v9059, 0.0
        %v9092 = vmax.f32 %v9060, 0.0
        %v9093 = vmax.f32 %v9061, 0.0
        %v9094 = vmax.f32 %v9062, 0.0
        %v9095 = vmax.f32 %v9063, 0.0
        %v9096 = vmax.f32 %v9064, 0.0
        %9097 = vst.msk [vmem:[%s595] sm:$0xff] %vm2206, %v9065
        %9098 = vst.msk [vmem:[%s595 + $0x8] sm:$0xff] %vm2206, %v9066
        %9099 = vst.msk [vmem:[%s595 + $0x10] sm:$0xff] %vm2206, %v9067
        %9100 = vst.msk [vmem:[%s595 + $0x18] sm:$0xff] %vm2206, %v9068
        %9101 = vst.msk [vmem:[%s595 + $0x20] sm:$0xff] %vm2206, %v9069
        %9102 = vst.msk [vmem:[%s595 + $0x28] sm:$0xff] %vm2206, %v9070
        %9103 = vst.msk [vmem:[%s595 + $0x30] sm:$0xff] %vm2206, %v9071
        %9104 = vst.msk [vmem:[%s595 + $0x38] sm:$0xff] %vm2206, %v9072
        %9105 = vst.msk [vmem:[%s595 + $0x40] sm:$0xff] %vm2206, %v9073
        %9106 = vst.msk [vmem:[%s595 + $0x48] sm:$0xff] %vm2206, %v9074
        %9107 = vst.msk [vmem:[%s595 + $0x50] sm:$0xff] %vm2206, %v9075
        %9108 = vst.msk [vmem:[%s595 + $0x58] sm:$0xff] %vm2206, %v9076
        %9109 = vst.msk [vmem:[%s595 + $0x60] sm:$0xff] %vm2206, %v9077
        %9110 = vst.msk [vmem:[%s595 + $0x68] sm:$0xff] %vm2206, %v9078
        %9111 = vst.msk [vmem:[%s595 + $0x70] sm:$0xff] %vm2206, %v9079
        %9112 = vst.msk [vmem:[%s595 + $0x78] sm:$0xff] %vm2206, %v9080
        %9113 = vst.msk [vmem:[%s595 + $0x80] sm:$0xff] %vm2206, %v9081
        %9114 = vst.msk [vmem:[%s595 + $0x88] sm:$0xff] %vm2206, %v9082
        %9115 = vst.msk [vmem:[%s595 + $0x90] sm:$0xff] %vm2206, %v9083
        %9116 = vst.msk [vmem:[%s595 + $0x98] sm:$0xff] %vm2206, %v9084
        %9117 = vst.msk [vmem:[%s595 + $0xa0] sm:$0xff] %vm2206, %v9085
        %9118 = vst.msk [vmem:[%s595 + $0xa8] sm:$0xff] %vm2206, %v9086
        %9119 = vst.msk [vmem:[%s595 + $0xb0] sm:$0xff] %vm2206, %v9087
        %9120 = vst.msk [vmem:[%s595 + $0xb8] sm:$0xff] %vm2206, %v9088
        %9121 = vst.msk [vmem:[%s595 + $0xc0] sm:$0xff] %vm2206, %v9089
        %9122 = vst.msk [vmem:[%s595 + $0xc8] sm:$0xff] %vm2206, %v9090
        %9123 = vst.msk [vmem:[%s595 + $0xd0] sm:$0xff] %vm2206, %v9091
        %9124 = vst.msk [vmem:[%s595 + $0xd8] sm:$0xff] %vm2206, %v9092
        %9125 = vst.msk [vmem:[%s595 + $0xe0] sm:$0xff] %vm2206, %v9093
        %9126 = vst.msk [vmem:[%s595 + $0xe8] sm:$0xff] %vm2206, %v9094
        %9127 = vst.msk [vmem:[%s595 + $0xf0] sm:$0xff] %vm2206, %v9095
        %9128 = vst.msk [vmem:[%s595 + $0xf8] sm:$0xff] %vm2206, %v9096
        %s9129 = sand.u32 %s445, 1
        %s9130 = scalar_lea.sflag [#allocation3], %s9129
        %s9131 = sand.u32 %s445, 1
        %s9132 = smul.addr %s9131, 256
        %s9133 = scalar_lea.vmem [#allocation2], %s9132
        // Predicated region
        $region97: #{tpu_custom_call.1} parent=95 // pred_check
          %p9134 = pneg %p455
        $region98: #{tpu_custom_call.1} parent=95 // pred_check_branch
          %9136 = sbr.rel (%p9134) target = $region100
        $region99: #{tpu_custom_call.1} parent=95 // pred_region
          %s9138 = ssub.s32 4096, 4096
          %9139 = vsyncadd %s9130, %s9138
          %s9140 = smul.addr %s33, 32
          %s9141 = smul.addr %s9140, 128
          %s9142 = scalar_lea.hbm %s19, %s9141
          %s9143 = sshll.u32 %s9133, 4
          %s9144 = int_to_ptr.vmem [resolvable:$true] %s9143
          %9149 = dma.vmem_to_hbm [thread:$0]  %s9144, 4096, %s9142, %s9130, 128, 128, 8
        $region100: #{tpu_custom_call.1} parent=95 // pred_fallthru
          _
      $region96: #{tpu_custom_call.1} parent=5 // pred_fallthru
        _
      %p9150 = scmp.le.s32.totalorder 2, %s28
      // Predicated region
      $region101: #{tpu_custom_call.1} parent=5 // pred_check
        %p9151 = pneg %p9150
      $region102: #{tpu_custom_call.1} parent=5 // pred_check_branch
        %9153 = sbr.rel (%p9151) target = $region104
      $region103: #{tpu_custom_call.1} parent=5 // pred_region
        %s9154 = ssub.s32 %s28, 2
        // Predicated region
        $region105: #{tpu_custom_call.1} parent=103 // pred_check
          %p9155 = pneg %p461
        $region106: #{tpu_custom_call.1} parent=103 // pred_check_branch
          %9157 = sbr.rel (%p9155) target = $region108
        $region107: #{tpu_custom_call.1} parent=103 // pred_region
          %s9158 = sand.u32 %s446, 1
          %s9159 = scalar_lea.sflag [#allocation3], %s9158
          %s9160 = sand.u32 %s446, 1
          %s9161 = smul.addr %s9160, 256
          %s9162 = scalar_lea.vmem [#allocation2], %s9161
          %9163 = dma.done %s9159, 4096
        $region108: #{tpu_custom_call.1} parent=103 // pred_fallthru
          _
      $region104: #{tpu_custom_call.1} parent=5 // pred_fallthru
        _
    $region6: #{tpu_custom_call.1} parent=1 // loop_footer
      %s32 = sadd.s32 1, %s28
    $region7: #{tpu_custom_call.1} parent=1 // loop_footer_branch
      %27 = sbr.rel target = $region3
    $region8: #{tpu_custom_call.1} parent=1 // loop_exit
      _
    %9164 = vsyncpa [#allocation3], 1
    %s9165 = scalar_lea.sflag [#allocation3], 1
    %9166 = vsyncpa %s9165, 1

</llo_original>
